<compile_context>
chip_gen: v7x
topology: tpu7x:2x2x1
jax: 0.10.0
libtpu: 0.0.40
codegen_flags: <defaults>
</compile_context>

<pallas_src>
import math
import functools

import jax
import jax.numpy as jnp
from jax.experimental import pallas as pl
from jax.experimental.pallas import tpu as pltpu


_LN_EPS = 1e-5


# ---------------------------------------------------------------------------
# helpers
# ---------------------------------------------------------------------------
def _layernorm_f32(x, gamma, beta, eps=_LN_EPS):
    """fp32 LayerNorm with single-pass statistics (one sum + one sum-of-squares)."""
    xf = x.astype(jnp.float32)
    d = xf.shape[-1]
    s = jnp.sum(xf, axis=-1, keepdims=True)
    ss = jnp.sum(xf * xf, axis=-1, keepdims=True)
    mean = s * (1.0 / d)
    var = ss * (1.0 / d) - mean * mean
    return (xf - mean) * jax.lax.rsqrt(var + eps) * gamma + beta


def _pick_tile(n, preferred):
    """Largest preferred tile that evenly divides n (falls back to full dim)."""
    for t in preferred:
        if t <= n and n % t == 0:
            return t
    return n


def _vmem_limit(nbytes):
    """Explicit scoped-VMEM budget: computed bytes + margin, clamped to a
    range that is safe on v5e/v6e (128 MiB) and v7x (64 MiB) alike."""
    return int(min(max(nbytes + (4 << 20), 16 << 20), 48 << 20))


# ---------------------------------------------------------------------------
# Kernel A: LN1 + fused QKV projection (row-tiled)
# ---------------------------------------------------------------------------
def ln1_qkv_kernel(x_ref, g_ref, b_ref, wqkv_ref, qkv_ref):
    y = _layernorm_f32(x_ref[...], g_ref[...], b_ref[...])
    qkv = jnp.dot(y.astype(jnp.bfloat16), wqkv_ref[...],
                  preferred_element_type=jnp.float32)
    qkv_ref[...] = qkv.astype(qkv_ref.dtype)


def ln1_qkv_apply(x2d, g, b, wqkv, *, tm):
    NL, D = x2d.shape
    D3 = wqkv.shape[1]
    vmem = (2 * (tm * D * 4 + tm * D3 * 2)      # x in + qkv out, double-buffered
            + 2 * D * D3 * 2)                   # bf16 fused weight
    return pl.pallas_call(
        ln1_qkv_kernel,
        out_shape=jax.ShapeDtypeStruct((NL, D3), jnp.bfloat16),
        grid_spec=pltpu.PrefetchScalarGridSpec(
            num_scalar_prefetch=0,
            grid=(NL // tm,),
            in_specs=[
                pl.BlockSpec((tm, D), lambda i: (i, 0)),
                pl.BlockSpec((1, D), lambda i: (0, 0)),
                pl.BlockSpec((1, D), lambda i: (0, 0)),
                pl.BlockSpec((D, D3), lambda i: (0, 0)),
            ],
            out_specs=pl.BlockSpec((tm, D3), lambda i: (i, 0)),
        ),
        compiler_params=pltpu.CompilerParams(
            dimension_semantics=("parallel",),
            vmem_limit_bytes=_vmem_limit(vmem)),
    )(x2d, g, b, wqkv)


# ---------------------------------------------------------------------------
# Kernel B: flash attention (grid over batch*head, q-tile, kv-tile)
# ---------------------------------------------------------------------------
def flash_attn_kernel(q_ref, k_ref, v_ref, o_ref, m_scr, l_scr, acc_scr, *,
                      scale):
    ki = pl.program_id(2)

    @pl.when(ki == 0)
    def _():
        m_scr[...] = jnp.full(m_scr.shape, -jnp.inf, jnp.float32)
        l_scr[...] = jnp.zeros(l_scr.shape, jnp.float32)
        acc_scr[...] = jnp.zeros(acc_scr.shape, jnp.float32)

    q = q_ref[0]                                   # (TQ, hd) bf16
    k = k_ref[0]                                   # (TK, hd) bf16
    s = jax.lax.dot_general(q, k, (((1,), (1,)), ((), ())),
                            preferred_element_type=jnp.float32) * scale

    m_prev = m_scr[...]
    m_new = jnp.maximum(m_prev, jnp.max(s, axis=-1, keepdims=True))
    alpha = jnp.exp(m_prev - m_new)
    p = jnp.exp(s - m_new)
    l_scr[...] = alpha * l_scr[...] + jnp.sum(p, axis=-1, keepdims=True)
    acc_scr[...] = alpha * acc_scr[...] + jnp.dot(
        p.astype(jnp.bfloat16), v_ref[0], preferred_element_type=jnp.float32)
    m_scr[...] = m_new

    @pl.when(ki == pl.num_programs(2) - 1)
    def _():
        inv_l = pl.reciprocal(l_scr[...], approx=True)
        o_ref[0] = (acc_scr[...] * inv_l).astype(o_ref.dtype)


def flash_attn_apply(q, k, v, *, tq, tk):
    BH, L, hd = q.shape
    scale = 1.0 / math.sqrt(hd)
    kernel = functools.partial(flash_attn_kernel, scale=scale)
    vmem = (2 * (tq * hd * 2 + 2 * tk * hd * 2 + tq * hd * 4)
            + tq * (hd + 256) * 4)                 # scratch (m, l, acc) padded
    return pl.pallas_call(
        kernel,
        out_shape=jax.ShapeDtypeStruct((BH, L, hd), jnp.float32),
        grid_spec=pltpu.PrefetchScalarGridSpec(
            num_scalar_prefetch=0,
            grid=(BH, L // tq, L // tk),
            in_specs=[
                pl.BlockSpec((1, tq, hd), lambda b, qi, ki: (b, qi, 0)),
                pl.BlockSpec((1, tk, hd), lambda b, qi, ki: (b, ki, 0)),
                pl.BlockSpec((1, tk, hd), lambda b, qi, ki: (b, ki, 0)),
            ],
            out_specs=pl.BlockSpec((1, tq, hd), lambda b, qi, ki: (b, qi, 0)),
            scratch_shapes=[
                pltpu.VMEM((tq, 1), jnp.float32),    # running max
                pltpu.VMEM((tq, 1), jnp.float32),    # running denom
                pltpu.VMEM((tq, hd), jnp.float32),   # output accumulator
            ]),
        compiler_params=pltpu.CompilerParams(
            dimension_semantics=("parallel", "parallel", "arbitrary"),
            vmem_limit_bytes=_vmem_limit(vmem)),
    )(q, k, v)


# ---------------------------------------------------------------------------
# Kernel C: residual add + LN2 + MLP (QuickGELU) + residual (row-tiled)
# ---------------------------------------------------------------------------
def mlp_kernel(x_ref, a_ref, g_ref, b_ref, wfc_ref, bfc_ref, wpr_ref, bpr_ref,
               o_ref):
    x = x_ref[...].astype(jnp.float32) + a_ref[...]      # x + attention(LN1(x))
    y = _layernorm_f32(x, g_ref[...], b_ref[...])
    h = jnp.dot(y.astype(jnp.bfloat16), wfc_ref[...],
                preferred_element_type=jnp.float32) + bfc_ref[...]
    h = h * jax.nn.sigmoid(1.702 * h)                     # QuickGELU
    m = jnp.dot(h.astype(jnp.bfloat16), wpr_ref[...],
                preferred_element_type=jnp.float32) + bpr_ref[...]
    o_ref[...] = (x + m).astype(o_ref.dtype)


def mlp_apply(x2d, attn2d, g, b, wfc, bfc, wpr, bpr, *, tm):
    NL, D = x2d.shape
    Dh = wfc.shape[1]
    vmem = (2 * (3 * tm * D * 4)                 # x, attn in, out (double buf)
            + 2 * (D * Dh + Dh * D) * 2          # bf16 weights
            + tm * Dh * 4)                       # fc intermediate
    return pl.pallas_call(
        mlp_kernel,
        out_shape=jax.ShapeDtypeStruct((NL, D), jnp.float32),
        grid_spec=pltpu.PrefetchScalarGridSpec(
            num_scalar_prefetch=0,
            grid=(NL // tm,),
            in_specs=[
                pl.BlockSpec((tm, D), lambda i: (i, 0)),
                pl.BlockSpec((tm, D), lambda i: (i, 0)),
                pl.BlockSpec((1, D), lambda i: (0, 0)),
                pl.BlockSpec((1, D), lambda i: (0, 0)),
                pl.BlockSpec((D, Dh), lambda i: (0, 0)),
                pl.BlockSpec((1, Dh), lambda i: (0, 0)),
                pl.BlockSpec((Dh, D), lambda i: (0, 0)),
                pl.BlockSpec((1, D), lambda i: (0, 0)),
            ],
            out_specs=pl.BlockSpec((tm, D), lambda i: (i, 0)),
        ),
        compiler_params=pltpu.CompilerParams(
            dimension_semantics=("parallel",),
            vmem_limit_bytes=_vmem_limit(vmem)),
    )(x2d, attn2d, g, b, wfc, bfc, wpr, bpr)


# ---------------------------------------------------------------------------
# Residual block + Transformer forward
# ---------------------------------------------------------------------------
def resblock_apply(x2d, p, n_batch, seq_len, n_head, *, tm, tq, tk):
    NL, D = x2d.shape
    hd = D // n_head

    # A) LN1 + fused QKV projection (bf16 output, lane-dense 3D-wide store)
    qkv = ln1_qkv_apply(x2d, p["ln1_g"], p["ln1_b"], p["wqkv"], tm=tm)

    # layout glue (XLA): (N*L, 3D) -> (3, N*H, L, hd)
    qkv = qkv.reshape(n_batch, seq_len, 3, n_head, hd)
    qkv = jnp.transpose(qkv, (2, 0, 3, 1, 4)).reshape(
        3, n_batch * n_head, seq_len, hd)
    q, k, v = qkv[0], qkv[1], qkv[2]

    # B) flash attention; MultiheadAttentionFlashV2 has NO output projection
    o = flash_attn_apply(q, k, v, tq=tq, tk=tk)           # (N*H, L, hd) fp32
    o = o.reshape(n_batch, n_head, seq_len, hd)
    attn2d = jnp.transpose(o, (0, 2, 1, 3)).reshape(NL, D)

    # C) residual add + LN2 + MLP + residual
    return mlp_apply(x2d, attn2d, p["ln2_g"], p["ln2_b"],
                     p["w_fc"], p["b_fc"], p["w_proj"], p["b_proj"], tm=tm)


def transformer_forward(x_lnd, params, n_head):
    """x_lnd: (L, N, D) seq-first, like the PyTorch module."""
    L, N, D = x_lnd.shape
    NL = N * L
    tm = _pick_tile(NL, (256, 512, 128, 64, 32, 16, 8))   # row tile for LN/MLP
    tq = _pick_tile(L, (256, 128, 64, 32, 16, 8))         # 256-mult for v6e MXU
    tk = _pick_tile(L, (256, 128, 64, 32, 16, 8))
    x = jnp.transpose(x_lnd, (1, 0, 2)).reshape(NL, D).astype(jnp.float32)
    for p in params:
        x = resblock_apply(x, p, N, L, n_head, tm=tm, tq=tq, tk=tk)
    return jnp.transpose(x.reshape(N, L, D), (1, 0, 2))


# ---------------- deterministic parameter init (shapes from __init__) -------
def init_params(key, width, layers):
    params = []
    for layer in range(layers):
        keys = jax.random.split(jax.random.fold_in(key, layer), 7)

        def w(k, shape, scale=0.02):
            return (scale * jax.random.normal(k, shape)).astype(jnp.float32)

        # Linear weights stored as (in, out); kernels compute x @ W.
        params.append(dict(
            ln1_g=jnp.ones((1, width), jnp.float32),
            ln1_b=jnp.zeros((1, width), jnp.float32),
            wq=w(keys[0], (width, width)),
            wk=w(keys[1], (width, width)),
            wv=w(keys[2], (width, width)),
            ln2_g=jnp.ones((1, width), jnp.float32),
            ln2_b=jnp.zeros((1, width), jnp.float32),
            w_fc=w(keys[3], (width, 4 * width)),
            b_fc=w(keys[4], (1, 4 * width)),
            w_proj=w(keys[5], (4 * width, width)),
            b_proj=w(keys[6], (1, width)),
        ))
    return params


def pack_params(params):
    """Fuse Wq/Wk/Wv into one (D, 3D) matrix and down-cast MXU weights to bf16
    (biases and LayerNorm params stay fp32)."""
    packed = []
    for p in params:
        packed.append(dict(
            ln1_g=p["ln1_g"], ln1_b=p["ln1_b"],
            wqkv=jnp.concatenate(
                [p["wq"], p["wk"], p["wv"]], axis=1).astype(jnp.bfloat16),
            ln2_g=p["ln2_g"], ln2_b=p["ln2_b"],
            w_fc=p["w_fc"].astype(jnp.bfloat16),
            b_fc=p["b_fc"],
            w_proj=p["w_proj"].astype(jnp.bfloat16),
            b_proj=p["b_proj"],
        ))
    return packed


# ---------------- pure-JAX fp32 reference (correctness check) ---------------
def _ref_ln(x, g, b, eps=_LN_EPS):
    m = x.mean(-1, keepdims=True)
    v = ((x - m) ** 2).mean(-1, keepdims=True)
    return (x - m) * jax.lax.rsqrt(v + eps) * g[0] + b[0]


def ref_resblock(x_lnd, p, n_head):
    L, N, D = x_lnd.shape
    hd = D // n_head
    y = _ref_ln(x_lnd, p["ln1_g"], p["ln1_b"])
    yb = jnp.transpose(y, (1, 0, 2))                      # (N, L, D)
    q = (yb @ p["wq"]).reshape(N, L, n_head, hd)
    k = (yb @ p["wk"]).reshape(N, L, n_head, hd)
    v = (yb @ p["wv"]).reshape(N, L, n_head, hd)
    sim = jnp.einsum("nihd,njhd->nhij", q, k) / math.sqrt(hd)
    attn = jax.nn.softmax(sim, axis=-1)
    out = jnp.einsum("nhij,njhd->nihd", attn, v).reshape(N, L, D)
    x = x_lnd + jnp.transpose(out, (1, 0, 2))
    y = _ref_ln(x, p["ln2_g"], p["ln2_b"])
    h1 = y @ p["w_fc"] + p["b_fc"][0]
    h1 = h1 * jax.nn.sigmoid(1.702 * h1)
    h2 = h1 @ p["w_proj"] + p["b_proj"][0]
    return x + h2


def ref_transformer(x, params, n_head):
    for p in params:
        x = ref_resblock(x, p, n_head)
    return x


if __name__ == "__main__":
    # Transformer(width=128, layers=2, heads=4); input (L, N, D) = (512, 2, 128)
    width, layers, heads = 128, 2, 4
    L, N = 512, 2

    key = jax.random.PRNGKey(0)
    kx, kp = jax.random.split(key)
    x = jax.random.normal(kx, (L, N, width), dtype=jnp.float32)
    params = init_params(kp, width, layers)
    kparams = pack_params(params)

    fwd = jax.jit(functools.partial(transformer_forward, n_head=heads))
    out = jax.block_until_ready(fwd(x, kparams))

    ref = ref_transformer(x, params, heads)
    assert out.shape == (L, N, width)
    err = float(jnp.max(jnp.abs(out - ref)))
    # bf16 MXU inputs vs pure-fp32 reference -> small (~1e-3..1e-2) deviation.
    assert jnp.allclose(out, ref, atol=3e-2, rtol=3e-2), f"max abs err = {err}"

    print("KERNEL_OK")
</pallas_src>

<mosaic_0001>
module attributes {stable_mosaic.version = 11 : i64} {
  func.func @ln1_qkv_kernel(%arg0: i32, %arg1: memref<256x128xf32, #tpu.memory_space<vmem>>, %arg2: memref<1x128xf32, #tpu.memory_space<vmem>>, %arg3: memref<1x128xf32, #tpu.memory_space<vmem>>, %arg4: memref<128x384xbf16, #tpu.memory_space<vmem>>, %arg5: memref<256x384xbf16, #tpu.memory_space<vmem>>) attributes {dimension_semantics = [#tpu.dimension_semantics<parallel>], iteration_bounds = array<i64: 4>, scalar_prefetch = 0 : i64, scratch_operands = 0 : i64, tpu.core_type = #tpu.core_type<tc>, window_params = [{transform_indices = @transform_0, window_bounds = array<i64: 256, 128>}, {pipeline_mode = #tpu.pipeline_mode<synchronous>, transform_indices = @transform_1, window_bounds = array<i64: 1, 128>}, {pipeline_mode = #tpu.pipeline_mode<synchronous>, transform_indices = @transform_2, window_bounds = array<i64: 1, 128>}, {pipeline_mode = #tpu.pipeline_mode<synchronous>, transform_indices = @transform_3, window_bounds = array<i64: 128, 384>}, {transform_indices = @transform_4, window_bounds = array<i64: 256, 384>}]} {
    %c0 = arith.constant 0 : index
    %c0_0 = arith.constant 0 : index
    %0 = vector.load %arg1[%c0, %c0_0] : memref<256x128xf32, #tpu.memory_space<vmem>>, vector<256x128xf32>
    %c0_1 = arith.constant 0 : index
    %c0_2 = arith.constant 0 : index
    %1 = vector.load %arg2[%c0_1, %c0_2] : memref<1x128xf32, #tpu.memory_space<vmem>>, vector<1x128xf32>
    %c0_3 = arith.constant 0 : index
    %c0_4 = arith.constant 0 : index
    %2 = vector.load %arg3[%c0_3, %c0_4] : memref<1x128xf32, #tpu.memory_space<vmem>>, vector<1x128xf32>
    %cst = arith.constant dense<0.000000e+00> : vector<256xf32>
    %3 = vector.multi_reduction <add>, %0, %cst [1] : vector<256x128xf32> to vector<256xf32>
    %4 = vector.shape_cast %3 : vector<256xf32> to vector<256x1xf32>
    %5 = arith.mulf %0, %0 : vector<256x128xf32>
    %cst_5 = arith.constant dense<0.000000e+00> : vector<256xf32>
    %6 = vector.multi_reduction <add>, %5, %cst_5 [1] : vector<256x128xf32> to vector<256xf32>
    %7 = vector.shape_cast %6 : vector<256xf32> to vector<256x1xf32>
    %cst_6 = arith.constant 7.812500e-03 : f32
    %8 = vector.broadcast %cst_6 : f32 to vector<256x1xf32>
    %9 = arith.mulf %4, %8 : vector<256x1xf32>
    %cst_7 = arith.constant 7.812500e-03 : f32
    %10 = vector.broadcast %cst_7 : f32 to vector<256x1xf32>
    %11 = arith.mulf %7, %10 : vector<256x1xf32>
    %12 = arith.mulf %9, %9 : vector<256x1xf32>
    %13 = arith.subf %11, %12 : vector<256x1xf32>
    %14 = vector.broadcast %9 : vector<256x1xf32> to vector<256x128xf32>
    %15 = arith.subf %0, %14 : vector<256x128xf32>
    %cst_8 = arith.constant 9.99999974E-6 : f32
    %16 = vector.broadcast %cst_8 : f32 to vector<256x1xf32>
    %17 = arith.addf %13, %16 : vector<256x1xf32>
    %18 = math.rsqrt %17 : vector<256x1xf32>
    %19 = vector.broadcast %18 : vector<256x1xf32> to vector<256x128xf32>
    %20 = arith.mulf %15, %19 : vector<256x128xf32>
    %21 = vector.broadcast %1 : vector<1x128xf32> to vector<256x128xf32>
    %22 = arith.mulf %20, %21 : vector<256x128xf32>
    %23 = vector.broadcast %2 : vector<1x128xf32> to vector<256x128xf32>
    %24 = arith.addf %22, %23 : vector<256x128xf32>
    %25 = arith.truncf %24 : vector<256x128xf32> to vector<256x128xbf16>
    %c0_9 = arith.constant 0 : index
    %c0_10 = arith.constant 0 : index
    %26 = vector.load %arg4[%c0_9, %c0_10] : memref<128x384xbf16, #tpu.memory_space<vmem>>, vector<128x384xbf16>
    %cst_11 = arith.constant dense<0.000000e+00> : vector<256x384xf32>
    %27 = tpu.matmul %25, %26, %cst_11 {dimension_numbers = #tpu.dot_dimension_numbers<[1], [0], [0], [1], [0, 0, 1, 1], [], []>} : vector<256x128xbf16>, vector<128x384xbf16>, vector<256x384xf32> -> vector<256x384xf32>
    %28 = arith.truncf %27 : vector<256x384xf32> to vector<256x384xbf16>
    %c0_12 = arith.constant 0 : index
    %c0_13 = arith.constant 0 : index
    %29 = vector.load %arg5[%c0_12, %c0_13] : memref<256x384xbf16, #tpu.memory_space<vmem>>, vector<256x384xbf16>
    tpu.vector_store %arg5[%c0_12, %c0_13], %28 {strides = array<i32>} : memref<256x384xbf16, #tpu.memory_space<vmem>>, vector<256x384xbf16>,
    return
  }
  func.func @transform_0(%arg0: i32) -> (i32, i32) {
    %c0_i32 = arith.constant 0 : i32
    %c0_i32_0 = arith.constant 0 : i32
    return %arg0, %c0_i32 : i32, i32
  }
  func.func @transform_1(%arg0: i32) -> (i32, i32) {
    %c0_i32 = arith.constant 0 : i32
    %c0_i32_0 = arith.constant 0 : i32
    %c0_i32_1 = arith.constant 0 : i32
    return %c0_i32, %c0_i32_0 : i32, i32
  }
  func.func @transform_2(%arg0: i32) -> (i32, i32) {
    %c0_i32 = arith.constant 0 : i32
    %c0_i32_0 = arith.constant 0 : i32
    %c0_i32_1 = arith.constant 0 : i32
    return %c0_i32, %c0_i32_0 : i32, i32
  }
  func.func @transform_3(%arg0: i32) -> (i32, i32) {
    %c0_i32 = arith.constant 0 : i32
    %c0_i32_0 = arith.constant 0 : i32
    %c0_i32_1 = arith.constant 0 : i32
    return %c0_i32, %c0_i32_0 : i32, i32
  }
  func.func @transform_4(%arg0: i32) -> (i32, i32) {
    %c0_i32 = arith.constant 0 : i32
    %c0_i32_0 = arith.constant 0 : i32
    return %arg0, %c0_i32 : i32, i32
  }
}

module attributes {stable_mosaic.version = 11 : i64} {
  func.func @flash_attn_kernel(%arg0: i32, %arg1: i32, %arg2: i32, %arg3: memref<1x256x32xbf16, #tpu.memory_space<vmem>>, %arg4: memref<1x256x32xbf16, #tpu.memory_space<vmem>>, %arg5: memref<1x256x32xbf16, #tpu.memory_space<vmem>>, %arg6: memref<1x256x32xf32, #tpu.memory_space<vmem>>, %arg7: memref<256x1xf32, #tpu.memory_space<vmem>>, %arg8: memref<256x1xf32, #tpu.memory_space<vmem>>, %arg9: memref<256x32xf32, #tpu.memory_space<vmem>>) attributes {dimension_semantics = [#tpu.dimension_semantics<parallel>, #tpu.dimension_semantics<parallel>, #tpu.dimension_semantics<arbitrary>], iteration_bounds = array<i64: 8, 2, 2>, scalar_prefetch = 0 : i64, scratch_operands = 3 : i64, tpu.core_type = #tpu.core_type<tc>, window_params = [{transform_indices = @transform_0, window_bounds = array<i64: 1, 256, 32>}, {transform_indices = @transform_1, window_bounds = array<i64: 1, 256, 32>}, {transform_indices = @transform_2, window_bounds = array<i64: 1, 256, 32>}, {transform_indices = @transform_3, window_bounds = array<i64: 1, 256, 32>}]} {
    %c0_i32 = arith.constant 0 : i32
    %0 = arith.cmpi eq, %arg2, %c0_i32 : i32
    %1 = arith.extui %0 : i1 to i32
    %c0_i32_0 = arith.constant 0 : i32
    %2 = arith.cmpi ne, %1, %c0_i32_0 : i32
    scf.if %2 {
      %cst_26 = arith.constant 0xFF800000 : f32
      %38 = vector.broadcast %cst_26 : f32 to vector<256x1xf32>
      %c0_27 = arith.constant 0 : index
      %c0_28 = arith.constant 0 : index
      %39 = vector.load %arg7[%c0_27, %c0_28] : memref<256x1xf32, #tpu.memory_space<vmem>>, vector<256x1xf32>
      tpu.vector_store %arg7[%c0_27, %c0_28], %38 {strides = array<i32>} : memref<256x1xf32, #tpu.memory_space<vmem>>, vector<256x1xf32>,
      %cst_29 = arith.constant 0.000000e+00 : f32
      %40 = vector.broadcast %cst_29 : f32 to vector<256x1xf32>
      %c0_30 = arith.constant 0 : index
      %c0_31 = arith.constant 0 : index
      %41 = vector.load %arg8[%c0_30, %c0_31] : memref<256x1xf32, #tpu.memory_space<vmem>>, vector<256x1xf32>
      tpu.vector_store %arg8[%c0_30, %c0_31], %40 {strides = array<i32>} : memref<256x1xf32, #tpu.memory_space<vmem>>, vector<256x1xf32>,
      %cst_32 = arith.constant 0.000000e+00 : f32
      %42 = vector.broadcast %cst_32 : f32 to vector<256x32xf32>
      %c0_33 = arith.constant 0 : index
      %c0_34 = arith.constant 0 : index
      %43 = vector.load %arg9[%c0_33, %c0_34] : memref<256x32xf32, #tpu.memory_space<vmem>>, vector<256x32xf32>
      tpu.vector_store %arg9[%c0_33, %c0_34], %42 {strides = array<i32>} : memref<256x32xf32, #tpu.memory_space<vmem>>, vector<256x32xf32>,
    } else {
    }
    %c0 = arith.constant 0 : index
    %c0_1 = arith.constant 0 : index
    %c0_2 = arith.constant 0 : index
    %3 = vector.load %arg3[%c0, %c0_1, %c0_2] : memref<1x256x32xbf16, #tpu.memory_space<vmem>>, vector<1x256x32xbf16>
    %4 = vector.shape_cast %3 : vector<1x256x32xbf16> to vector<256x32xbf16>
    %c0_3 = arith.constant 0 : index
    %c0_4 = arith.constant 0 : index
    %c0_5 = arith.constant 0 : index
    %5 = vector.load %arg4[%c0_3, %c0_4, %c0_5] : memref<1x256x32xbf16, #tpu.memory_space<vmem>>, vector<1x256x32xbf16>
    %6 = vector.shape_cast %5 : vector<1x256x32xbf16> to vector<256x32xbf16>
    %cst = arith.constant dense<0.000000e+00> : vector<256x256xf32>
    %7 = tpu.matmul %4, %6, %cst {dimension_numbers = #tpu.dot_dimension_numbers<[1], [1], [0], [0], [0, 0, 1, 0], [], []>} : vector<256x32xbf16>, vector<256x32xbf16>, vector<256x256xf32> -> vector<256x256xf32>
    %cst_6 = arith.constant 0.176776692 : f32
    %8 = vector.broadcast %cst_6 : f32 to vector<256x256xf32>
    %9 = arith.mulf %7, %8 : vector<256x256xf32>
    %c0_7 = arith.constant 0 : index
    %c0_8 = arith.constant 0 : index
    %10 = vector.load %arg7[%c0_7, %c0_8] : memref<256x1xf32, #tpu.memory_space<vmem>>, vector<256x1xf32>
    %cst_9 = arith.constant dense<0xFF800000> : vector<256xf32>
    %11 = vector.multi_reduction <maximumf>, %9, %cst_9 [1] : vector<256x256xf32> to vector<256xf32>
    %12 = vector.shape_cast %11 : vector<256xf32> to vector<256x1xf32>
    %13 = arith.maximumf %10, %12 : vector<256x1xf32>
    %14 = arith.subf %10, %13 : vector<256x1xf32>
    %15 = math.exp %14 : vector<256x1xf32>
    %16 = vector.broadcast %13 : vector<256x1xf32> to vector<256x256xf32>
    %17 = arith.subf %9, %16 : vector<256x256xf32>
    %18 = math.exp %17 : vector<256x256xf32>
    %c0_10 = arith.constant 0 : index
    %c0_11 = arith.constant 0 : index
    %19 = vector.load %arg8[%c0_10, %c0_11] : memref<256x1xf32, #tpu.memory_space<vmem>>, vector<256x1xf32>
    %20 = arith.mulf %15, %19 : vector<256x1xf32>
    %cst_12 = arith.constant dense<0.000000e+00> : vector<256xf32>
    %21 = vector.multi_reduction <add>, %18, %cst_12 [1] : vector<256x256xf32> to vector<256xf32>
    %22 = vector.shape_cast %21 : vector<256xf32> to vector<256x1xf32>
    %23 = arith.addf %20, %22 : vector<256x1xf32>
    %c0_13 = arith.constant 0 : index
    %c0_14 = arith.constant 0 : index
    %24 = vector.load %arg8[%c0_13, %c0_14] : memref<256x1xf32, #tpu.memory_space<vmem>>, vector<256x1xf32>
    tpu.vector_store %arg8[%c0_13, %c0_14], %23 {strides = array<i32>} : memref<256x1xf32, #tpu.memory_space<vmem>>, vector<256x1xf32>,
    %c0_15 = arith.constant 0 : index
    %c0_16 = arith.constant 0 : index
    %25 = vector.load %arg9[%c0_15, %c0_16] : memref<256x32xf32, #tpu.memory_space<vmem>>, vector<256x32xf32>
    %26 = vector.broadcast %15 : vector<256x1xf32> to vector<256x32xf32>
    %27 = arith.mulf %26, %25 : vector<256x32xf32>
    %28 = arith.truncf %18 : vector<256x256xf32> to vector<256x256xbf16>
    %c0_17 = arith.constant 0 : index
    %c0_18 = arith.constant 0 : index
    %c0_19 = arith.constant 0 : index
    %29 = vector.load %arg5[%c0_17, %c0_18, %c0_19] : memref<1x256x32xbf16, #tpu.memory_space<vmem>>, vector<1x256x32xbf16>
    %30 = vector.shape_cast %29 : vector<1x256x32xbf16> to vector<256x32xbf16>
    %cst_20 = arith.constant dense<0.000000e+00> : vector<256x32xf32>
    %31 = tpu.matmul %28, %30, %cst_20 {dimension_numbers = #tpu.dot_dimension_numbers<[1], [0], [0], [1], [0, 0, 1, 1], [], []>} : vector<256x256xbf16>, vector<256x32xbf16>, vector<256x32xf32> -> vector<256x32xf32>
    %32 = arith.addf %27, %31 : vector<256x32xf32>
    %c0_21 = arith.constant 0 : index
    %c0_22 = arith.constant 0 : index
    %33 = vector.load %arg9[%c0_21, %c0_22] : memref<256x32xf32, #tpu.memory_space<vmem>>, vector<256x32xf32>
    tpu.vector_store %arg9[%c0_21, %c0_22], %32 {strides = array<i32>} : memref<256x32xf32, #tpu.memory_space<vmem>>, vector<256x32xf32>,
    %c0_23 = arith.constant 0 : index
    %c0_24 = arith.constant 0 : index
    %34 = vector.load %arg7[%c0_23, %c0_24] : memref<256x1xf32, #tpu.memory_space<vmem>>, vector<256x1xf32>
    tpu.vector_store %arg7[%c0_23, %c0_24], %13 {strides = array<i32>} : memref<256x1xf32, #tpu.memory_space<vmem>>, vector<256x1xf32>,
    %c1_i32 = arith.constant 1 : i32
    %35 = arith.cmpi eq, %arg2, %c1_i32 : i32
    %36 = arith.extui %35 : i1 to i32
    %c0_i32_25 = arith.constant 0 : i32
    %37 = arith.cmpi ne, %36, %c0_i32_25 : i32
    scf.if %37 {
      %c0_26 = arith.constant 0 : index
      %c0_27 = arith.constant 0 : index
      %38 = vector.load %arg8[%c0_26, %c0_27] : memref<256x1xf32, #tpu.memory_space<vmem>>, vector<256x1xf32>
      %39 = tpu.reciprocal %38 {approx = true} : vector<256x1xf32> -> vector<256x1xf32>
      %c0_28 = arith.constant 0 : index
      %c0_29 = arith.constant 0 : index
      %40 = vector.load %arg9[%c0_28, %c0_29] : memref<256x32xf32, #tpu.memory_space<vmem>>, vector<256x32xf32>
      %41 = vector.broadcast %39 : vector<256x1xf32> to vector<256x32xf32>
      %42 = arith.mulf %40, %41 : vector<256x32xf32>
      %c0_30 = arith.constant 0 : index
      %c0_31 = arith.constant 0 : index
      %c0_32 = arith.constant 0 : index
      %43 = vector.load %arg6[%c0_30, %c0_31, %c0_32] : memref<1x256x32xf32, #tpu.memory_space<vmem>>, vector<1x256x32xf32>
      %44 = vector.shape_cast %43 : vector<1x256x32xf32> to vector<256x32xf32>
      %45 = vector.shape_cast %42 : vector<256x32xf32> to vector<1x256x32xf32>
      tpu.vector_store %arg6[%c0_30, %c0_31, %c0_32], %45 {strides = array<i32>} : memref<1x256x32xf32, #tpu.memory_space<vmem>>, vector<1x256x32xf32>,
    } else {
    }
    return
  }
  func.func @transform_0(%arg0: i32, %arg1: i32, %arg2: i32) -> (i32, i32, i32) {
    %c0_i32 = arith.constant 0 : i32
    %c0_i32_0 = arith.constant 0 : i32
    return %arg0, %arg1, %c0_i32 : i32, i32, i32
  }
  func.func @transform_1(%arg0: i32, %arg1: i32, %arg2: i32) -> (i32, i32, i32) {
    %c0_i32 = arith.constant 0 : i32
    %c0_i32_0 = arith.constant 0 : i32
    return %arg0, %arg2, %c0_i32 : i32, i32, i32
  }
  func.func @transform_2(%arg0: i32, %arg1: i32, %arg2: i32) -> (i32, i32, i32) {
    %c0_i32 = arith.constant 0 : i32
    %c0_i32_0 = arith.constant 0 : i32
    return %arg0, %arg2, %c0_i32 : i32, i32, i32
  }
  func.func @transform_3(%arg0: i32, %arg1: i32, %arg2: i32) -> (i32, i32, i32) {
    %c0_i32 = arith.constant 0 : i32
    %c0_i32_0 = arith.constant 0 : i32
    return %arg0, %arg1, %c0_i32 : i32, i32, i32
  }
}

module attributes {stable_mosaic.version = 11 : i64} {
  func.func @mlp_kernel(%arg0: i32, %arg1: memref<256x128xf32, #tpu.memory_space<vmem>>, %arg2: memref<256x128xf32, #tpu.memory_space<vmem>>, %arg3: memref<1x128xf32, #tpu.memory_space<vmem>>, %arg4: memref<1x128xf32, #tpu.memory_space<vmem>>, %arg5: memref<128x512xbf16, #tpu.memory_space<vmem>>, %arg6: memref<1x512xf32, #tpu.memory_space<vmem>>, %arg7: memref<512x128xbf16, #tpu.memory_space<vmem>>, %arg8: memref<1x128xf32, #tpu.memory_space<vmem>>, %arg9: memref<256x128xf32, #tpu.memory_space<vmem>>) attributes {dimension_semantics = [#tpu.dimension_semantics<parallel>], iteration_bounds = array<i64: 4>, scalar_prefetch = 0 : i64, scratch_operands = 0 : i64, tpu.core_type = #tpu.core_type<tc>, window_params = [{transform_indices = @transform_0, window_bounds = array<i64: 256, 128>}, {transform_indices = @transform_1, window_bounds = array<i64: 256, 128>}, {pipeline_mode = #tpu.pipeline_mode<synchronous>, transform_indices = @transform_2, window_bounds = array<i64: 1, 128>}, {pipeline_mode = #tpu.pipeline_mode<synchronous>, transform_indices = @transform_3, window_bounds = array<i64: 1, 128>}, {pipeline_mode = #tpu.pipeline_mode<synchronous>, transform_indices = @transform_4, window_bounds = array<i64: 128, 512>}, {pipeline_mode = #tpu.pipeline_mode<synchronous>, transform_indices = @transform_5, window_bounds = array<i64: 1, 512>}, {pipeline_mode = #tpu.pipeline_mode<synchronous>, transform_indices = @transform_6, window_bounds = array<i64: 512, 128>}, {pipeline_mode = #tpu.pipeline_mode<synchronous>, transform_indices = @transform_7, window_bounds = array<i64: 1, 128>}, {transform_indices = @transform_8, window_bounds = array<i64: 256, 128>}]} {
    %c0 = arith.constant 0 : index
    %c0_0 = arith.constant 0 : index
    %0 = vector.load %arg1[%c0, %c0_0] : memref<256x128xf32, #tpu.memory_space<vmem>>, vector<256x128xf32>
    %c0_1 = arith.constant 0 : index
    %c0_2 = arith.constant 0 : index
    %1 = vector.load %arg2[%c0_1, %c0_2] : memref<256x128xf32, #tpu.memory_space<vmem>>, vector<256x128xf32>
    %2 = arith.addf %0, %1 : vector<256x128xf32>
    %c0_3 = arith.constant 0 : index
    %c0_4 = arith.constant 0 : index
    %3 = vector.load %arg3[%c0_3, %c0_4] : memref<1x128xf32, #tpu.memory_space<vmem>>, vector<1x128xf32>
    %c0_5 = arith.constant 0 : index
    %c0_6 = arith.constant 0 : index
    %4 = vector.load %arg4[%c0_5, %c0_6] : memref<1x128xf32, #tpu.memory_space<vmem>>, vector<1x128xf32>
    %cst = arith.constant dense<0.000000e+00> : vector<256xf32>
    %5 = vector.multi_reduction <add>, %2, %cst [1] : vector<256x128xf32> to vector<256xf32>
    %6 = vector.shape_cast %5 : vector<256xf32> to vector<256x1xf32>
    %7 = arith.mulf %2, %2 : vector<256x128xf32>
    %cst_7 = arith.constant dense<0.000000e+00> : vector<256xf32>
    %8 = vector.multi_reduction <add>, %7, %cst_7 [1] : vector<256x128xf32> to vector<256xf32>
    %9 = vector.shape_cast %8 : vector<256xf32> to vector<256x1xf32>
    %cst_8 = arith.constant 7.812500e-03 : f32
    %10 = vector.broadcast %cst_8 : f32 to vector<256x1xf32>
    %11 = arith.mulf %6, %10 : vector<256x1xf32>
    %cst_9 = arith.constant 7.812500e-03 : f32
    %12 = vector.broadcast %cst_9 : f32 to vector<256x1xf32>
    %13 = arith.mulf %9, %12 : vector<256x1xf32>
    %14 = arith.mulf %11, %11 : vector<256x1xf32>
    %15 = arith.subf %13, %14 : vector<256x1xf32>
    %16 = vector.broadcast %11 : vector<256x1xf32> to vector<256x128xf32>
    %17 = arith.subf %2, %16 : vector<256x128xf32>
    %cst_10 = arith.constant 9.99999974E-6 : f32
    %18 = vector.broadcast %cst_10 : f32 to vector<256x1xf32>
    %19 = arith.addf %15, %18 : vector<256x1xf32>
    %20 = math.rsqrt %19 : vector<256x1xf32>
    %21 = vector.broadcast %20 : vector<256x1xf32> to vector<256x128xf32>
    %22 = arith.mulf %17, %21 : vector<256x128xf32>
    %23 = vector.broadcast %3 : vector<1x128xf32> to vector<256x128xf32>
    %24 = arith.mulf %22, %23 : vector<256x128xf32>
    %25 = vector.broadcast %4 : vector<1x128xf32> to vector<256x128xf32>
    %26 = arith.addf %24, %25 : vector<256x128xf32>
    %27 = arith.truncf %26 : vector<256x128xf32> to vector<256x128xbf16>
    %c0_11 = arith.constant 0 : index
    %c0_12 = arith.constant 0 : index
    %28 = vector.load %arg5[%c0_11, %c0_12] : memref<128x512xbf16, #tpu.memory_space<vmem>>, vector<128x512xbf16>
    %cst_13 = arith.constant dense<0.000000e+00> : vector<256x512xf32>
    %29 = tpu.matmul %27, %28, %cst_13 {dimension_numbers = #tpu.dot_dimension_numbers<[1], [0], [0], [1], [0, 0, 1, 1], [], []>} : vector<256x128xbf16>, vector<128x512xbf16>, vector<256x512xf32> -> vector<256x512xf32>
    %c0_14 = arith.constant 0 : index
    %c0_15 = arith.constant 0 : index
    %30 = vector.load %arg6[%c0_14, %c0_15] : memref<1x512xf32, #tpu.memory_space<vmem>>, vector<1x512xf32>
    %31 = vector.broadcast %30 : vector<1x512xf32> to vector<256x512xf32>
    %32 = arith.addf %29, %31 : vector<256x512xf32>
    %cst_16 = arith.constant 1.702000e+00 : f32
    %33 = vector.broadcast %cst_16 : f32 to vector<256x512xf32>
    %34 = arith.mulf %33, %32 : vector<256x512xf32>
    %35 = arith.negf %34 : vector<256x512xf32>
    %36 = math.exp %35 : vector<256x512xf32>
    %cst_17 = arith.constant 1.000000e+00 : f32
    %37 = vector.broadcast %cst_17 : f32 to vector<256x512xf32>
    %38 = arith.addf %37, %36 : vector<256x512xf32>
    %39 = arith.divf %37, %38 : vector<256x512xf32>
    %40 = arith.mulf %32, %39 : vector<256x512xf32>
    %41 = arith.truncf %40 : vector<256x512xf32> to vector<256x512xbf16>
    %c0_18 = arith.constant 0 : index
    %c0_19 = arith.constant 0 : index
    %42 = vector.load %arg7[%c0_18, %c0_19] : memref<512x128xbf16, #tpu.memory_space<vmem>>, vector<512x128xbf16>
    %cst_20 = arith.constant dense<0.000000e+00> : vector<256x128xf32>
    %43 = tpu.matmul %41, %42, %cst_20 {dimension_numbers = #tpu.dot_dimension_numbers<[1], [0], [0], [1], [0, 0, 1, 1], [], []>} : vector<256x512xbf16>, vector<512x128xbf16>, vector<256x128xf32> -> vector<256x128xf32>
    %c0_21 = arith.constant 0 : index
    %c0_22 = arith.constant 0 : index
    %44 = vector.load %arg8[%c0_21, %c0_22] : memref<1x128xf32, #tpu.memory_space<vmem>>, vector<1x128xf32>
    %45 = vector.broadcast %44 : vector<1x128xf32> to vector<256x128xf32>
    %46 = arith.addf %43, %45 : vector<256x128xf32>
    %47 = arith.addf %2, %46 : vector<256x128xf32>
    %c0_23 = arith.constant 0 : index
    %c0_24 = arith.constant 0 : index
    %48 = vector.load %arg9[%c0_23, %c0_24] : memref<256x128xf32, #tpu.memory_space<vmem>>, vector<256x128xf32>
    tpu.vector_store %arg9[%c0_23, %c0_24], %47 {strides = array<i32>} : memref<256x128xf32, #tpu.memory_space<vmem>>, vector<256x128xf32>,
    return
  }
  func.func @transform_0(%arg0: i32) -> (i32, i32) {
    %c0_i32 = arith.constant 0 : i32
    %c0_i32_0 = arith.constant 0 : i32
    return %arg0, %c0_i32 : i32, i32
  }
  func.func @transform_1(%arg0: i32) -> (i32, i32) {
    %c0_i32 = arith.constant 0 : i32
    %c0_i32_0 = arith.constant 0 : i32
    return %arg0, %c0_i32 : i32, i32
  }
  func.func @transform_2(%arg0: i32) -> (i32, i32) {
    %c0_i32 = arith.constant 0 : i32
    %c0_i32_0 = arith.constant 0 : i32
    %c0_i32_1 = arith.constant 0 : i32
    return %c0_i32, %c0_i32_0 : i32, i32
  }
  func.func @transform_3(%arg0: i32) -> (i32, i32) {
    %c0_i32 = arith.constant 0 : i32
    %c0_i32_0 = arith.constant 0 : i32
    %c0_i32_1 = arith.constant 0 : i32
    return %c0_i32, %c0_i32_0 : i32, i32
  }
  func.func @transform_4(%arg0: i32) -> (i32, i32) {
    %c0_i32 = arith.constant 0 : i32
    %c0_i32_0 = arith.constant 0 : i32
    %c0_i32_1 = arith.constant 0 : i32
    return %c0_i32, %c0_i32_0 : i32, i32
  }
  func.func @transform_5(%arg0: i32) -> (i32, i32) {
    %c0_i32 = arith.constant 0 : i32
    %c0_i32_0 = arith.constant 0 : i32
    %c0_i32_1 = arith.constant 0 : i32
    return %c0_i32, %c0_i32_0 : i32, i32
  }
  func.func @transform_6(%arg0: i32) -> (i32, i32) {
    %c0_i32 = arith.constant 0 : i32
    %c0_i32_0 = arith.constant 0 : i32
    %c0_i32_1 = arith.constant 0 : i32
    return %c0_i32, %c0_i32_0 : i32, i32
  }
  func.func @transform_7(%arg0: i32) -> (i32, i32) {
    %c0_i32 = arith.constant 0 : i32
    %c0_i32_0 = arith.constant 0 : i32
    %c0_i32_1 = arith.constant 0 : i32
    return %c0_i32, %c0_i32_0 : i32, i32
  }
  func.func @transform_8(%arg0: i32) -> (i32, i32) {
    %c0_i32 = arith.constant 0 : i32
    %c0_i32_0 = arith.constant 0 : i32
    return %arg0, %c0_i32 : i32, i32
  }
}

module attributes {stable_mosaic.version = 11 : i64} {
  func.func @ln1_qkv_kernel(%arg0: i32, %arg1: memref<256x128xf32, #tpu.memory_space<vmem>>, %arg2: memref<1x128xf32, #tpu.memory_space<vmem>>, %arg3: memref<1x128xf32, #tpu.memory_space<vmem>>, %arg4: memref<128x384xbf16, #tpu.memory_space<vmem>>, %arg5: memref<256x384xbf16, #tpu.memory_space<vmem>>) attributes {dimension_semantics = [#tpu.dimension_semantics<parallel>], iteration_bounds = array<i64: 4>, scalar_prefetch = 0 : i64, scratch_operands = 0 : i64, tpu.core_type = #tpu.core_type<tc>, window_params = [{transform_indices = @transform_0, window_bounds = array<i64: 256, 128>}, {pipeline_mode = #tpu.pipeline_mode<synchronous>, transform_indices = @transform_1, window_bounds = array<i64: 1, 128>}, {pipeline_mode = #tpu.pipeline_mode<synchronous>, transform_indices = @transform_2, window_bounds = array<i64: 1, 128>}, {pipeline_mode = #tpu.pipeline_mode<synchronous>, transform_indices = @transform_3, window_bounds = array<i64: 128, 384>}, {transform_indices = @transform_4, window_bounds = array<i64: 256, 384>}]} {
    %c0 = arith.constant 0 : index
    %c0_0 = arith.constant 0 : index
    %0 = vector.load %arg1[%c0, %c0_0] : memref<256x128xf32, #tpu.memory_space<vmem>>, vector<256x128xf32>
    %c0_1 = arith.constant 0 : index
    %c0_2 = arith.constant 0 : index
    %1 = vector.load %arg2[%c0_1, %c0_2] : memref<1x128xf32, #tpu.memory_space<vmem>>, vector<1x128xf32>
    %c0_3 = arith.constant 0 : index
    %c0_4 = arith.constant 0 : index
    %2 = vector.load %arg3[%c0_3, %c0_4] : memref<1x128xf32, #tpu.memory_space<vmem>>, vector<1x128xf32>
    %cst = arith.constant dense<0.000000e+00> : vector<256xf32>
    %3 = vector.multi_reduction <add>, %0, %cst [1] : vector<256x128xf32> to vector<256xf32>
    %4 = vector.shape_cast %3 : vector<256xf32> to vector<256x1xf32>
    %5 = arith.mulf %0, %0 : vector<256x128xf32>
    %cst_5 = arith.constant dense<0.000000e+00> : vector<256xf32>
    %6 = vector.multi_reduction <add>, %5, %cst_5 [1] : vector<256x128xf32> to vector<256xf32>
    %7 = vector.shape_cast %6 : vector<256xf32> to vector<256x1xf32>
    %cst_6 = arith.constant 7.812500e-03 : f32
    %8 = vector.broadcast %cst_6 : f32 to vector<256x1xf32>
    %9 = arith.mulf %4, %8 : vector<256x1xf32>
    %cst_7 = arith.constant 7.812500e-03 : f32
    %10 = vector.broadcast %cst_7 : f32 to vector<256x1xf32>
    %11 = arith.mulf %7, %10 : vector<256x1xf32>
    %12 = arith.mulf %9, %9 : vector<256x1xf32>
    %13 = arith.subf %11, %12 : vector<256x1xf32>
    %14 = vector.broadcast %9 : vector<256x1xf32> to vector<256x128xf32>
    %15 = arith.subf %0, %14 : vector<256x128xf32>
    %cst_8 = arith.constant 9.99999974E-6 : f32
    %16 = vector.broadcast %cst_8 : f32 to vector<256x1xf32>
    %17 = arith.addf %13, %16 : vector<256x1xf32>
    %18 = math.rsqrt %17 : vector<256x1xf32>
    %19 = vector.broadcast %18 : vector<256x1xf32> to vector<256x128xf32>
    %20 = arith.mulf %15, %19 : vector<256x128xf32>
    %21 = vector.broadcast %1 : vector<1x128xf32> to vector<256x128xf32>
    %22 = arith.mulf %20, %21 : vector<256x128xf32>
    %23 = vector.broadcast %2 : vector<1x128xf32> to vector<256x128xf32>
    %24 = arith.addf %22, %23 : vector<256x128xf32>
    %25 = arith.truncf %24 : vector<256x128xf32> to vector<256x128xbf16>
    %c0_9 = arith.constant 0 : index
    %c0_10 = arith.constant 0 : index
    %26 = vector.load %arg4[%c0_9, %c0_10] : memref<128x384xbf16, #tpu.memory_space<vmem>>, vector<128x384xbf16>
    %cst_11 = arith.constant dense<0.000000e+00> : vector<256x384xf32>
    %27 = tpu.matmul %25, %26, %cst_11 {dimension_numbers = #tpu.dot_dimension_numbers<[1], [0], [0], [1], [0, 0, 1, 1], [], []>} : vector<256x128xbf16>, vector<128x384xbf16>, vector<256x384xf32> -> vector<256x384xf32>
    %28 = arith.truncf %27 : vector<256x384xf32> to vector<256x384xbf16>
    %c0_12 = arith.constant 0 : index
    %c0_13 = arith.constant 0 : index
    %29 = vector.load %arg5[%c0_12, %c0_13] : memref<256x384xbf16, #tpu.memory_space<vmem>>, vector<256x384xbf16>
    tpu.vector_store %arg5[%c0_12, %c0_13], %28 {strides = array<i32>} : memref<256x384xbf16, #tpu.memory_space<vmem>>, vector<256x384xbf16>,
    return
  }
  func.func @transform_0(%arg0: i32) -> (i32, i32) {
    %c0_i32 = arith.constant 0 : i32
    %c0_i32_0 = arith.constant 0 : i32
    return %arg0, %c0_i32 : i32, i32
  }
  func.func @transform_1(%arg0: i32) -> (i32, i32) {
    %c0_i32 = arith.constant 0 : i32
    %c0_i32_0 = arith.constant 0 : i32
    %c0_i32_1 = arith.constant 0 : i32
    return %c0_i32, %c0_i32_0 : i32, i32
  }
  func.func @transform_2(%arg0: i32) -> (i32, i32) {
    %c0_i32 = arith.constant 0 : i32
    %c0_i32_0 = arith.constant 0 : i32
    %c0_i32_1 = arith.constant 0 : i32
    return %c0_i32, %c0_i32_0 : i32, i32
  }
  func.func @transform_3(%arg0: i32) -> (i32, i32) {
    %c0_i32 = arith.constant 0 : i32
    %c0_i32_0 = arith.constant 0 : i32
    %c0_i32_1 = arith.constant 0 : i32
    return %c0_i32, %c0_i32_0 : i32, i32
  }
  func.func @transform_4(%arg0: i32) -> (i32, i32) {
    %c0_i32 = arith.constant 0 : i32
    %c0_i32_0 = arith.constant 0 : i32
    return %arg0, %c0_i32 : i32, i32
  }
}

</mosaic_0001>

<llo_original>
// kernel: transformer_forward.6
$region0: #{transformer_forward.6}
  #allocation0 [shape = 'u32[]', space=smem, size = 0x4, offset = 0x4, fixed_abs, tag = 'smem constant byte address 0x4 - core index']
  #allocation1 [shape = 'u32[144,128]{1,0:T(1,128)}', space=vmem, size = 0x12000, scoped, tag = 'internal scratch']
  %s0 = inlined_call_operand.vmem [shape: f32[1024,128], index: 0, kind: input, shape index: {}]
  %s1 = inlined_call_operand.hbm [shape: f32[1,128], index: 1, kind: input, shape index: {}]
  %s2 = inlined_call_operand.hbm [shape: f32[1,128], index: 2, kind: input, shape index: {}]
  %s3 = inlined_call_operand.hbm [shape: bf16[128,384], index: 3, kind: input, shape index: {}]
  %s4 = inlined_call_operand.vmem [shape: bf16[1024,384], index: 4, kind: output, shape index: {}]
  %s5 = sld [smem:[#allocation0]]
  $region61: #{transformer_forward.6} parent=0
    _
  %s7 = ssub.s32 1, %s5
  %s8 = scalar_select 0, %s7, %s5
  $region1: #{transformer_forward.6} parent=0
    #allocation2 [shape = 'u8[512]{0}', space=vmem, size = 0x400, scoped, tag = 'input window, operand 1, single buffered']
    #allocation3 [shape = 's32[2]{0}', space=sflag, size = 0x8, scoped, tag = 'scoped memory for transformer_forward.6']
    #allocation4 [shape = 'u8[512]{0}', space=vmem, size = 0x400, scoped, tag = 'input window, operand 2, single buffered']
    #allocation5 [shape = 's32[1]{0}', space=sflag, size = 0x4, scoped, tag = 'scoped memory for transformer_forward.6']
    #allocation6 [shape = 'u8[98304]{0}', space=vmem, size = 0x18000, scoped, tag = 'input window, operand 3, single buffered']
    %9 = vsyncpa [#allocation3], 0
    %10 = vsyncpa [#allocation5], 0
    loop: start=0, step=1, limit=6
    $region2: #{transformer_forward.6} parent=1 // loop_pre_header
      _
    $region3: #{transformer_forward.6} parent=1 // loop_header
      %s12 = sphi 0, %s16
      %p13 = scmp.ge.s32.totalorder %s12, 6
      %s22 = sphi 0, %s24
      %s25 = sphi 0, %s22
      %s26 = sphi 0, %s25
      %s42 = sphi 0, %s26
      %s46 = sphi 0, %s46
      %s48 = sphi 0, %s46
      %s49 = sphi 0, %s48
      %s63 = sphi 0, %s49
      %s67 = sphi 0, %s67
      %s69 = sphi 0, %s67
      %s70 = sphi 0, %s69
      %s84 = sphi 0, %s70
      %s88 = sphi 0, %s88
      %s90 = sphi 0, %s88
      %s91 = sphi 0, %s90
      %s105 = sphi 0, %s91
      %s111 = sphi 0, %s113
      %s114 = sphi 0, %s111
      %s115 = sphi 0, %s114
      %s131 = sphi 0, %s115
    $region4: #{transformer_forward.6} parent=1 // loop_header_branch
      %15 = sbr.rel (%p13) target = $region8
    $region5: #{transformer_forward.6} parent=1 // loop_body
      %s17 = ssub.s32 %s12, 1
      %s18 = ssub.s32 %s12, 2
      %s19 = sadd.s32 %s12, 1
      %s20 = ssub.s32 %s12, %s19
      %p21 = scmp.eq.s32.totalorder %s20, 0
      %s23 = sadd.s32 %s22, 1
      %s24 = scalar_select %p21, %s22, %s23
      %p27 = pneg %p21
      %p28 = scmp.eq.s32.totalorder %s12, 3
      %p29 = por %p27, %p28
      %p30 = scmp.ne.s32.totalorder %s22, %s25
      %p31 = scmp.eq.s32.totalorder %s12, 0
      %p32 = por %p30, %p31
      %p33 = scmp.ne.s32.totalorder %s22, %s25
      %p34 = scmp.eq.s32.totalorder %s17, 3
      %p35 = por %p33, %p34
      %p36 = scmp.ne.s32.totalorder %s25, %s26
      %p37 = scmp.eq.s32.totalorder %s17, 0
      %p38 = por %p36, %p37
      %p39 = scmp.ne.s32.totalorder %s25, %s26
      %p40 = scmp.eq.s32.totalorder %s18, 3
      %p41 = por %p39, %p40
      %p43 = scmp.ne.s32.totalorder %s26, %s42
      %p44 = scmp.eq.s32.totalorder %s18, 0
      %p45 = por %p43, %p44
      %s47 = sadd.s32 %s46, 1
      %p50 = scmp.eq.s32.totalorder %s12, 3
      %p51 = scmp.ne.s32.totalorder %s46, %s48
      %p52 = scmp.eq.s32.totalorder %s12, 0
      %p53 = por %p51, %p52
      %p54 = scmp.ne.s32.totalorder %s46, %s48
      %p55 = scmp.eq.s32.totalorder %s17, 3
      %p56 = por %p54, %p55
      %p57 = scmp.ne.s32.totalorder %s48, %s49
      %p58 = scmp.eq.s32.totalorder %s17, 0
      %p59 = por %p57, %p58
      %p60 = scmp.ne.s32.totalorder %s48, %s49
      %p61 = scmp.eq.s32.totalorder %s18, 3
      %p62 = por %p60, %p61
      %p64 = scmp.ne.s32.totalorder %s49, %s63
      %p65 = scmp.eq.s32.totalorder %s18, 0
      %p66 = por %p64, %p65
      %s68 = sadd.s32 %s67, 1
      %p71 = scmp.eq.s32.totalorder %s12, 3
      %p72 = scmp.ne.s32.totalorder %s67, %s69
      %p73 = scmp.eq.s32.totalorder %s12, 0
      %p74 = por %p72, %p73
      %p75 = scmp.ne.s32.totalorder %s67, %s69
      %p76 = scmp.eq.s32.totalorder %s17, 3
      %p77 = por %p75, %p76
      %p78 = scmp.ne.s32.totalorder %s69, %s70
      %p79 = scmp.eq.s32.totalorder %s17, 0
      %p80 = por %p78, %p79
      %p81 = scmp.ne.s32.totalorder %s69, %s70
      %p82 = scmp.eq.s32.totalorder %s18, 3
      %p83 = por %p81, %p82
      %p85 = scmp.ne.s32.totalorder %s70, %s84
      %p86 = scmp.eq.s32.totalorder %s18, 0
      %p87 = por %p85, %p86
      %s89 = sadd.s32 %s88, 1
      %p92 = scmp.eq.s32.totalorder %s12, 3
      %p93 = scmp.ne.s32.totalorder %s88, %s90
      %p94 = scmp.eq.s32.totalorder %s12, 0
      %p95 = por %p93, %p94
      %p96 = scmp.ne.s32.totalorder %s88, %s90
      %p97 = scmp.eq.s32.totalorder %s17, 3
      %p98 = por %p96, %p97
      %p99 = scmp.ne.s32.totalorder %s90, %s91
      %p100 = scmp.eq.s32.totalorder %s17, 0
      %p101 = por %p99, %p100
      %p102 = scmp.ne.s32.totalorder %s90, %s91
      %p103 = scmp.eq.s32.totalorder %s18, 3
      %p104 = por %p102, %p103
      %p106 = scmp.ne.s32.totalorder %s91, %s105
      %p107 = scmp.eq.s32.totalorder %s18, 0
      %p108 = por %p106, %p107
      %s109 = ssub.s32 %s12, %s19
      %p110 = scmp.eq.s32.totalorder %s109, 0
      %s112 = sadd.s32 %s111, 1
      %s113 = scalar_select %p110, %s111, %s112
      %p116 = pneg %p110
      %p117 = scmp.eq.s32.totalorder %s12, 3
      %p118 = por %p116, %p117
      %p119 = scmp.ne.s32.totalorder %s111, %s114
      %p120 = scmp.eq.s32.totalorder %s12, 0
      %p121 = por %p119, %p120
      %p122 = scmp.ne.s32.totalorder %s111, %s114
      %p123 = scmp.eq.s32.totalorder %s17, 3
      %p124 = por %p122, %p123
      %p125 = scmp.ne.s32.totalorder %s114, %s115
      %p126 = scmp.eq.s32.totalorder %s17, 0
      %p127 = por %p125, %p126
      %p128 = scmp.ne.s32.totalorder %s114, %s115
      %p129 = scmp.eq.s32.totalorder %s18, 3
      %p130 = por %p128, %p129
      %p132 = scmp.ne.s32.totalorder %s115, %s131
      %p133 = scmp.eq.s32.totalorder %s18, 0
      %p134 = por %p132, %p133
      %p135 = scmp.le.s32.totalorder 1, %s12
      %p136 = scmp.lt.s32.totalorder %s12, 5
      %p137 = pnand %p135, %p136
      %p138 = pneg %p137
      // Predicated region
      $region9: #{transformer_forward.6} parent=5 // pred_check
        _
      $region10: #{transformer_forward.6} parent=5 // pred_check_branch
        %140 = sbr.rel (%p137) target = $region12
      $region11: #{transformer_forward.6} parent=5 // pred_region
        %s141 = ssub.s32 %s12, 1
        // Predicated region
        $region13: #{transformer_forward.6} parent=11 // pred_check
          %p142 = pneg %p59
        $region14: #{transformer_forward.6} parent=11 // pred_check_branch
          %144 = sbr.rel (%p142) target = $region16
        $region15: #{transformer_forward.6} parent=11 // pred_region
          %s146 = ssub.s32 16, 16
          %147 = vsyncadd [#allocation3], %s146
          %s149 = sshll.u32 [#allocation2], 4
          %s150 = int_to_ptr.vmem [resolvable:$true] %s149
          %152 = dma.hbm_to_vmem [thread:$0]  %s1, 16, %s150, [#allocation3]
        $region16: #{transformer_forward.6} parent=11 // pred_fallthru
          _
        // Predicated region
        $region17: #{transformer_forward.6} parent=11 // pred_check
          %p153 = pneg %p80
        $region18: #{transformer_forward.6} parent=11 // pred_check_branch
          %155 = sbr.rel (%p153) target = $region20
        $region19: #{transformer_forward.6} parent=11 // pred_region
          %s157 = ssub.s32 16, 16
          %158 = vsyncadd [#allocation5], %s157
          %s160 = sshll.u32 [#allocation4], 4
          %s161 = int_to_ptr.vmem [resolvable:$true] %s160
          %163 = dma.hbm_to_vmem [thread:$0]  %s2, 16, %s161, [#allocation5]
        $region20: #{transformer_forward.6} parent=11 // pred_fallthru
          _
        // Predicated region
        $region21: #{transformer_forward.6} parent=11 // pred_check
          %p164 = pneg %p101
        $region22: #{transformer_forward.6} parent=11 // pred_check_branch
          %166 = sbr.rel (%p164) target = $region24
        $region23: #{transformer_forward.6} parent=11 // pred_region
          %s168 = ssub.s32 3072, 3072
          %169 = vsyncadd [#allocation5], %s168
          %s170 = sshll.u32 [#allocation6], 4
          %s171 = int_to_ptr.vmem [resolvable:$true] %s170
          %176 = dma.hbm_to_vmem [thread:$0]  %s3, 3072, %s171, [#allocation5], 192, 192, 12
        $region24: #{transformer_forward.6} parent=11 // pred_fallthru
          _
      $region12: #{transformer_forward.6} parent=5 // pred_fallthru
        _
      %p177 = scmp.lt.s32.totalorder %s12, 4
      // Predicated region
      $region25: #{transformer_forward.6} parent=5 // pred_check
        %p178 = pneg %p177
      $region26: #{transformer_forward.6} parent=5 // pred_check_branch
        %180 = sbr.rel (%p178) target = $region28
      $region27: #{transformer_forward.6} parent=5 // pred_region
        // Predicated region
        $region29: #{transformer_forward.6} parent=27 // pred_check
          %p181 = pneg %p32
        $region30: #{transformer_forward.6} parent=27 // pred_check_branch
          %183 = sbr.rel (%p181) target = $region32
        $region31: #{transformer_forward.6} parent=27 // pred_region
          %s184 = smul.u32 32, %s12
          %p185 = scmp.lt.s32.totalorder %s184, 127
          %s186 = scalar_select %p185, %s184, 127
          %s187 = smul.addr %s186, 8
          %s188 = scalar_lea.vmem %s0, %s187
          %s189 = smul.u32 32, %s12
        $region32: #{transformer_forward.6} parent=27 // pred_fallthru
          _
      $region28: #{transformer_forward.6} parent=5 // pred_fallthru
        _
      %p190 = scmp.le.s32.totalorder 1, %s12
      %p191 = scmp.lt.s32.totalorder %s12, 5
      %p192 = pnand %p190, %p191
      %p193 = pneg %p192
      // Predicated region
      $region33: #{transformer_forward.6} parent=5 // pred_check
        _
      $region34: #{transformer_forward.6} parent=5 // pred_check_branch
        %195 = sbr.rel (%p192) target = $region36
      $region35: #{transformer_forward.6} parent=5 // pred_region
        %s196 = ssub.s32 %s12, 1
        // Predicated region
        $region37: #{transformer_forward.6} parent=35 // pred_check
          %p197 = pneg %p59
        $region38: #{transformer_forward.6} parent=35 // pred_check_branch
          %199 = sbr.rel (%p197) target = $region40
        $region39: #{transformer_forward.6} parent=35 // pred_region
          %200 = dma.done [#allocation3], 16
        $region40: #{transformer_forward.6} parent=35 // pred_fallthru
          _
        // Predicated region
        $region41: #{transformer_forward.6} parent=35 // pred_check
          %p201 = pneg %p80
        $region42: #{transformer_forward.6} parent=35 // pred_check_branch
          %203 = sbr.rel (%p201) target = $region44
        $region43: #{transformer_forward.6} parent=35 // pred_region
          %204 = dma.done [#allocation5], 16
        $region44: #{transformer_forward.6} parent=35 // pred_fallthru
          _
        // Predicated region
        $region45: #{transformer_forward.6} parent=35 // pred_check
          %p205 = pneg %p101
        $region46: #{transformer_forward.6} parent=35 // pred_check_branch
          %207 = sbr.rel (%p205) target = $region48
        $region47: #{transformer_forward.6} parent=35 // pred_region
          %208 = dma.done [#allocation5], 3072
        $region48: #{transformer_forward.6} parent=35 // pred_fallthru
          _
        %s209 = smul.u32 32, %s17
        %p210 = scmp.lt.s32.totalorder %s209, 127
        %s211 = scalar_select %p210, %s209, 127
        %s212 = smul.addr %s211, 8
        %s213 = scalar_lea.vmem %s0, %s212
        %p214 = pneg %p38
        %p215 = pneg %p35
        %p216 = pneg %p59
        %p217 = pneg %p56
        %p218 = pneg %p80
        %p219 = pneg %p77
        %p220 = pneg %p101
        %p221 = pneg %p98
        %p222 = pneg %p127
        %p223 = pneg %p124
        %s224 = smul.u32 32, %s17
        %p225 = scmp.lt.s32.totalorder %s224, 127
        %s226 = scalar_select %p225, %s224, 127
        %s227 = smul.addr %s226, 3
        %s228 = smul.addr %s227, 4
        %s229 = scalar_lea.vmem %s4, %s228
        %s230 = smul.u32 32, %s17
        %p231 = scmp.lt.s32.totalorder %s230, 127
        %s232 = scalar_select %p231, %s230, 127
        %s233 = smul.addr %s232, 8
        %s234 = scalar_lea.vmem %s0, %s233
        %s235 = smul.u32 32, %s17
        %s236 = smul.u32 32, %s17
        %p237 = scmp.lt.s32.totalorder %s236, 127
        %s238 = scalar_select %p237, %s236, 127
        %s239 = smul.addr %s238, 3
        %s240 = smul.addr %s239, 4
        %s241 = scalar_lea.vmem %s4, %s240
        %s242 = smul.u32 32, %s17
        %v244 = vld [vmem:[%s234] sm:$0xff]
        %v245 = vld [vmem:[%s234 + $0x8] sm:$0xff]
        %v246 = vld [vmem:[%s234 + $0x10] sm:$0xff]
        %v247 = vld [vmem:[%s234 + $0x18] sm:$0xff]
        %v248 = vld [vmem:[%s234 + $0x20] sm:$0xff]
        %v249 = vld [vmem:[%s234 + $0x28] sm:$0xff]
        %v250 = vld [vmem:[%s234 + $0x30] sm:$0xff]
        %v251 = vld [vmem:[%s234 + $0x38] sm:$0xff]
        %v252 = vld [vmem:[%s234 + $0x40] sm:$0xff]
        %v253 = vld [vmem:[%s234 + $0x48] sm:$0xff]
        %v254 = vld [vmem:[%s234 + $0x50] sm:$0xff]
        %v255 = vld [vmem:[%s234 + $0x58] sm:$0xff]
        %v256 = vld [vmem:[%s234 + $0x60] sm:$0xff]
        %v257 = vld [vmem:[%s234 + $0x68] sm:$0xff]
        %v258 = vld [vmem:[%s234 + $0x70] sm:$0xff]
        %v259 = vld [vmem:[%s234 + $0x78] sm:$0xff]
        %v260 = vld [vmem:[%s234 + $0x80] sm:$0xff]
        %v261 = vld [vmem:[%s234 + $0x88] sm:$0xff]
        %v262 = vld [vmem:[%s234 + $0x90] sm:$0xff]
        %v263 = vld [vmem:[%s234 + $0x98] sm:$0xff]
        %v264 = vld [vmem:[%s234 + $0xa0] sm:$0xff]
        %v265 = vld [vmem:[%s234 + $0xa8] sm:$0xff]
        %v266 = vld [vmem:[%s234 + $0xb0] sm:$0xff]
        %v267 = vld [vmem:[%s234 + $0xb8] sm:$0xff]
        %v268 = vld [vmem:[%s234 + $0xc0] sm:$0xff]
        %v269 = vld [vmem:[%s234 + $0xc8] sm:$0xff]
        %v270 = vld [vmem:[%s234 + $0xd0] sm:$0xff]
        %v271 = vld [vmem:[%s234 + $0xd8] sm:$0xff]
        %v272 = vld [vmem:[%s234 + $0xe0] sm:$0xff]
        %v273 = vld [vmem:[%s234 + $0xe8] sm:$0xff]
        %v274 = vld [vmem:[%s234 + $0xf0] sm:$0xff]
        %v275 = vld [vmem:[%s234 + $0xf8] sm:$0xff]
        %v276 = vld [vmem:[#allocation2] sm:$0x1]
        %v277 = vld [vmem:[#allocation4] sm:$0x1]
        %278 = vadd.xlane.f32.xlu0 %v244
        %v279 = vpop.xlane.xlu0 %278
        %280 = vadd.xlane.f32.xlu0 %v245
        %v281 = vpop.xlane.xlu0 %280
        %282 = vadd.xlane.f32.xlu0 %v246
        %v283 = vpop.xlane.xlu0 %282
        %284 = vadd.xlane.f32.xlu0 %v247
        %v285 = vpop.xlane.xlu0 %284
        %286 = vadd.xlane.f32.xlu0 %v248
        %v287 = vpop.xlane.xlu0 %286
        %288 = vadd.xlane.f32.xlu0 %v249
        %v289 = vpop.xlane.xlu0 %288
        %290 = vadd.xlane.f32.xlu0 %v250
        %v291 = vpop.xlane.xlu0 %290
        %292 = vadd.xlane.f32.xlu0 %v251
        %v293 = vpop.xlane.xlu0 %292
        %294 = vadd.xlane.f32.xlu0 %v252
        %v295 = vpop.xlane.xlu0 %294
        %296 = vadd.xlane.f32.xlu0 %v253
        %v297 = vpop.xlane.xlu0 %296
        %298 = vadd.xlane.f32.xlu0 %v254
        %v299 = vpop.xlane.xlu0 %298
        %300 = vadd.xlane.f32.xlu0 %v255
        %v301 = vpop.xlane.xlu0 %300
        %302 = vadd.xlane.f32.xlu0 %v256
        %v303 = vpop.xlane.xlu0 %302
        %304 = vadd.xlane.f32.xlu0 %v257
        %v305 = vpop.xlane.xlu0 %304
        %306 = vadd.xlane.f32.xlu0 %v258
        %v307 = vpop.xlane.xlu0 %306
        %308 = vadd.xlane.f32.xlu0 %v259
        %v309 = vpop.xlane.xlu0 %308
        %310 = vadd.xlane.f32.xlu0 %v260
        %v311 = vpop.xlane.xlu0 %310
        %312 = vadd.xlane.f32.xlu0 %v261
        %v313 = vpop.xlane.xlu0 %312
        %314 = vadd.xlane.f32.xlu0 %v262
        %v315 = vpop.xlane.xlu0 %314
        %316 = vadd.xlane.f32.xlu0 %v263
        %v317 = vpop.xlane.xlu0 %316
        %318 = vadd.xlane.f32.xlu0 %v264
        %v319 = vpop.xlane.xlu0 %318
        %320 = vadd.xlane.f32.xlu0 %v265
        %v321 = vpop.xlane.xlu0 %320
        %322 = vadd.xlane.f32.xlu0 %v266
        %v323 = vpop.xlane.xlu0 %322
        %324 = vadd.xlane.f32.xlu0 %v267
        %v325 = vpop.xlane.xlu0 %324
        %326 = vadd.xlane.f32.xlu0 %v268
        %v327 = vpop.xlane.xlu0 %326
        %328 = vadd.xlane.f32.xlu0 %v269
        %v329 = vpop.xlane.xlu0 %328
        %330 = vadd.xlane.f32.xlu0 %v270
        %v331 = vpop.xlane.xlu0 %330
        %332 = vadd.xlane.f32.xlu0 %v271
        %v333 = vpop.xlane.xlu0 %332
        %334 = vadd.xlane.f32.xlu0 %v272
        %v335 = vpop.xlane.xlu0 %334
        %336 = vadd.xlane.f32.xlu0 %v273
        %v337 = vpop.xlane.xlu0 %336
        %338 = vadd.xlane.f32.xlu0 %v274
        %v339 = vpop.xlane.xlu0 %338
        %340 = vadd.xlane.f32.xlu0 %v275
        %v341 = vpop.xlane.xlu0 %340
        %v342 = vmul.f32 %v244, %v244
        %v343 = vmul.f32 %v245, %v245
        %v344 = vmul.f32 %v246, %v246
        %v345 = vmul.f32 %v247, %v247
        %v346 = vmul.f32 %v248, %v248
        %v347 = vmul.f32 %v249, %v249
        %v348 = vmul.f32 %v250, %v250
        %v349 = vmul.f32 %v251, %v251
        %v350 = vmul.f32 %v252, %v252
        %v351 = vmul.f32 %v253, %v253
        %v352 = vmul.f32 %v254, %v254
        %v353 = vmul.f32 %v255, %v255
        %v354 = vmul.f32 %v256, %v256
        %v355 = vmul.f32 %v257, %v257
        %v356 = vmul.f32 %v258, %v258
        %v357 = vmul.f32 %v259, %v259
        %v358 = vmul.f32 %v260, %v260
        %v359 = vmul.f32 %v261, %v261
        %v360 = vmul.f32 %v262, %v262
        %v361 = vmul.f32 %v263, %v263
        %v362 = vmul.f32 %v264, %v264
        %v363 = vmul.f32 %v265, %v265
        %v364 = vmul.f32 %v266, %v266
        %v365 = vmul.f32 %v267, %v267
        %v366 = vmul.f32 %v268, %v268
        %v367 = vmul.f32 %v269, %v269
        %v368 = vmul.f32 %v270, %v270
        %v369 = vmul.f32 %v271, %v271
        %v370 = vmul.f32 %v272, %v272
        %v371 = vmul.f32 %v273, %v273
        %v372 = vmul.f32 %v274, %v274
        %v373 = vmul.f32 %v275, %v275
        %374 = vadd.xlane.f32.xlu0 %v342
        %v375 = vpop.xlane.xlu0 %374
        %376 = vadd.xlane.f32.xlu0 %v343
        %v377 = vpop.xlane.xlu0 %376
        %378 = vadd.xlane.f32.xlu0 %v344
        %v379 = vpop.xlane.xlu0 %378
        %380 = vadd.xlane.f32.xlu0 %v345
        %v381 = vpop.xlane.xlu0 %380
        %382 = vadd.xlane.f32.xlu0 %v346
        %v383 = vpop.xlane.xlu0 %382
        %384 = vadd.xlane.f32.xlu0 %v347
        %v385 = vpop.xlane.xlu0 %384
        %386 = vadd.xlane.f32.xlu0 %v348
        %v387 = vpop.xlane.xlu0 %386
        %388 = vadd.xlane.f32.xlu0 %v349
        %v389 = vpop.xlane.xlu0 %388
        %390 = vadd.xlane.f32.xlu0 %v350
        %v391 = vpop.xlane.xlu0 %390
        %392 = vadd.xlane.f32.xlu0 %v351
        %v393 = vpop.xlane.xlu0 %392
        %394 = vadd.xlane.f32.xlu0 %v352
        %v395 = vpop.xlane.xlu0 %394
        %396 = vadd.xlane.f32.xlu0 %v353
        %v397 = vpop.xlane.xlu0 %396
        %398 = vadd.xlane.f32.xlu0 %v354
        %v399 = vpop.xlane.xlu0 %398
        %400 = vadd.xlane.f32.xlu0 %v355
        %v401 = vpop.xlane.xlu0 %400
        %402 = vadd.xlane.f32.xlu0 %v356
        %v403 = vpop.xlane.xlu0 %402
        %404 = vadd.xlane.f32.xlu0 %v357
        %v405 = vpop.xlane.xlu0 %404
        %406 = vadd.xlane.f32.xlu0 %v358
        %v407 = vpop.xlane.xlu0 %406
        %408 = vadd.xlane.f32.xlu0 %v359
        %v409 = vpop.xlane.xlu0 %408
        %410 = vadd.xlane.f32.xlu0 %v360
        %v411 = vpop.xlane.xlu0 %410
        %412 = vadd.xlane.f32.xlu0 %v361
        %v413 = vpop.xlane.xlu0 %412
        %414 = vadd.xlane.f32.xlu0 %v362
        %v415 = vpop.xlane.xlu0 %414
        %416 = vadd.xlane.f32.xlu0 %v363
        %v417 = vpop.xlane.xlu0 %416
        %418 = vadd.xlane.f32.xlu0 %v364
        %v419 = vpop.xlane.xlu0 %418
        %420 = vadd.xlane.f32.xlu0 %v365
        %v421 = vpop.xlane.xlu0 %420
        %422 = vadd.xlane.f32.xlu0 %v366
        %v423 = vpop.xlane.xlu0 %422
        %424 = vadd.xlane.f32.xlu0 %v367
        %v425 = vpop.xlane.xlu0 %424
        %426 = vadd.xlane.f32.xlu0 %v368
        %v427 = vpop.xlane.xlu0 %426
        %428 = vadd.xlane.f32.xlu0 %v369
        %v429 = vpop.xlane.xlu0 %428
        %430 = vadd.xlane.f32.xlu0 %v370
        %v431 = vpop.xlane.xlu0 %430
        %432 = vadd.xlane.f32.xlu0 %v371
        %v433 = vpop.xlane.xlu0 %432
        %434 = vadd.xlane.f32.xlu0 %v372
        %v435 = vpop.xlane.xlu0 %434
        %436 = vadd.xlane.f32.xlu0 %v373
        %v437 = vpop.xlane.xlu0 %436
        %v438 = vmul.f32 %v279, 0.0078125
        %v439 = vmul.f32 %v281, 0.0078125
        %v440 = vmul.f32 %v283, 0.0078125
        %v441 = vmul.f32 %v285, 0.0078125
        %v442 = vmul.f32 %v287, 0.0078125
        %v443 = vmul.f32 %v289, 0.0078125
        %v444 = vmul.f32 %v291, 0.0078125
        %v445 = vmul.f32 %v293, 0.0078125
        %v446 = vmul.f32 %v295, 0.0078125
        %v447 = vmul.f32 %v297, 0.0078125
        %v448 = vmul.f32 %v299, 0.0078125
        %v449 = vmul.f32 %v301, 0.0078125
        %v450 = vmul.f32 %v303, 0.0078125
        %v451 = vmul.f32 %v305, 0.0078125
        %v452 = vmul.f32 %v307, 0.0078125
        %v453 = vmul.f32 %v309, 0.0078125
        %v454 = vmul.f32 %v311, 0.0078125
        %v455 = vmul.f32 %v313, 0.0078125
        %v456 = vmul.f32 %v315, 0.0078125
        %v457 = vmul.f32 %v317, 0.0078125
        %v458 = vmul.f32 %v319, 0.0078125
        %v459 = vmul.f32 %v321, 0.0078125
        %v460 = vmul.f32 %v323, 0.0078125
        %v461 = vmul.f32 %v325, 0.0078125
        %v462 = vmul.f32 %v327, 0.0078125
        %v463 = vmul.f32 %v329, 0.0078125
        %v464 = vmul.f32 %v331, 0.0078125
        %v465 = vmul.f32 %v333, 0.0078125
        %v466 = vmul.f32 %v335, 0.0078125
        %v467 = vmul.f32 %v337, 0.0078125
        %v468 = vmul.f32 %v339, 0.0078125
        %v469 = vmul.f32 %v341, 0.0078125
        %v470 = vmul.f32 %v375, 0.0078125
        %v471 = vmul.f32 %v377, 0.0078125
        %v472 = vmul.f32 %v379, 0.0078125
        %v473 = vmul.f32 %v381, 0.0078125
        %v474 = vmul.f32 %v383, 0.0078125
        %v475 = vmul.f32 %v385, 0.0078125
        %v476 = vmul.f32 %v387, 0.0078125
        %v477 = vmul.f32 %v389, 0.0078125
        %v478 = vmul.f32 %v391, 0.0078125
        %v479 = vmul.f32 %v393, 0.0078125
        %v480 = vmul.f32 %v395, 0.0078125
        %v481 = vmul.f32 %v397, 0.0078125
        %v482 = vmul.f32 %v399, 0.0078125
        %v483 = vmul.f32 %v401, 0.0078125
        %v484 = vmul.f32 %v403, 0.0078125
        %v485 = vmul.f32 %v405, 0.0078125
        %v486 = vmul.f32 %v407, 0.0078125
        %v487 = vmul.f32 %v409, 0.0078125
        %v488 = vmul.f32 %v411, 0.0078125
        %v489 = vmul.f32 %v413, 0.0078125
        %v490 = vmul.f32 %v415, 0.0078125
        %v491 = vmul.f32 %v417, 0.0078125
        %v492 = vmul.f32 %v419, 0.0078125
        %v493 = vmul.f32 %v421, 0.0078125
        %v494 = vmul.f32 %v423, 0.0078125
        %v495 = vmul.f32 %v425, 0.0078125
        %v496 = vmul.f32 %v427, 0.0078125
        %v497 = vmul.f32 %v429, 0.0078125
        %v498 = vmul.f32 %v431, 0.0078125
        %v499 = vmul.f32 %v433, 0.0078125
        %v500 = vmul.f32 %v435, 0.0078125
        %v501 = vmul.f32 %v437, 0.0078125
        %v502 = vmul.f32 %v438, %v438
        %v503 = vmul.f32 %v439, %v439
        %v504 = vmul.f32 %v440, %v440
        %v505 = vmul.f32 %v441, %v441
        %v506 = vmul.f32 %v442, %v442
        %v507 = vmul.f32 %v443, %v443
        %v508 = vmul.f32 %v444, %v444
        %v509 = vmul.f32 %v445, %v445
        %v510 = vmul.f32 %v446, %v446
        %v511 = vmul.f32 %v447, %v447
        %v512 = vmul.f32 %v448, %v448
        %v513 = vmul.f32 %v449, %v449
        %v514 = vmul.f32 %v450, %v450
        %v515 = vmul.f32 %v451, %v451
        %v516 = vmul.f32 %v452, %v452
        %v517 = vmul.f32 %v453, %v453
        %v518 = vmul.f32 %v454, %v454
        %v519 = vmul.f32 %v455, %v455
        %v520 = vmul.f32 %v456, %v456
        %v521 = vmul.f32 %v457, %v457
        %v522 = vmul.f32 %v458, %v458
        %v523 = vmul.f32 %v459, %v459
        %v524 = vmul.f32 %v460, %v460
        %v525 = vmul.f32 %v461, %v461
        %v526 = vmul.f32 %v462, %v462
        %v527 = vmul.f32 %v463, %v463
        %v528 = vmul.f32 %v464, %v464
        %v529 = vmul.f32 %v465, %v465
        %v530 = vmul.f32 %v466, %v466
        %v531 = vmul.f32 %v467, %v467
        %v532 = vmul.f32 %v468, %v468
        %v533 = vmul.f32 %v469, %v469
        %v534 = vsub.f32 %v470, %v502
        %v535 = vsub.f32 %v471, %v503
        %v536 = vsub.f32 %v472, %v504
        %v537 = vsub.f32 %v473, %v505
        %v538 = vsub.f32 %v474, %v506
        %v539 = vsub.f32 %v475, %v507
        %v540 = vsub.f32 %v476, %v508
        %v541 = vsub.f32 %v477, %v509
        %v542 = vsub.f32 %v478, %v510
        %v543 = vsub.f32 %v479, %v511
        %v544 = vsub.f32 %v480, %v512
        %v545 = vsub.f32 %v481, %v513
        %v546 = vsub.f32 %v482, %v514
        %v547 = vsub.f32 %v483, %v515
        %v548 = vsub.f32 %v484, %v516
        %v549 = vsub.f32 %v485, %v517
        %v550 = vsub.f32 %v486, %v518
        %v551 = vsub.f32 %v487, %v519
        %v552 = vsub.f32 %v488, %v520
        %v553 = vsub.f32 %v489, %v521
        %v554 = vsub.f32 %v490, %v522
        %v555 = vsub.f32 %v491, %v523
        %v556 = vsub.f32 %v492, %v524
        %v557 = vsub.f32 %v493, %v525
        %v558 = vsub.f32 %v494, %v526
        %v559 = vsub.f32 %v495, %v527
        %v560 = vsub.f32 %v496, %v528
        %v561 = vsub.f32 %v497, %v529
        %v562 = vsub.f32 %v498, %v530
        %v563 = vsub.f32 %v499, %v531
        %v564 = vsub.f32 %v500, %v532
        %v565 = vsub.f32 %v501, %v533
        %v566 = vsub.f32 %v244, %v438
        %v567 = vsub.f32 %v245, %v439
        %v568 = vsub.f32 %v246, %v440
        %v569 = vsub.f32 %v247, %v441
        %v570 = vsub.f32 %v248, %v442
        %v571 = vsub.f32 %v249, %v443
        %v572 = vsub.f32 %v250, %v444
        %v573 = vsub.f32 %v251, %v445
        %v574 = vsub.f32 %v252, %v446
        %v575 = vsub.f32 %v253, %v447
        %v576 = vsub.f32 %v254, %v448
        %v577 = vsub.f32 %v255, %v449
        %v578 = vsub.f32 %v256, %v450
        %v579 = vsub.f32 %v257, %v451
        %v580 = vsub.f32 %v258, %v452
        %v581 = vsub.f32 %v259, %v453
        %v582 = vsub.f32 %v260, %v454
        %v583 = vsub.f32 %v261, %v455
        %v584 = vsub.f32 %v262, %v456
        %v585 = vsub.f32 %v263, %v457
        %v586 = vsub.f32 %v264, %v458
        %v587 = vsub.f32 %v265, %v459
        %v588 = vsub.f32 %v266, %v460
        %v589 = vsub.f32 %v267, %v461
        %v590 = vsub.f32 %v268, %v462
        %v591 = vsub.f32 %v269, %v463
        %v592 = vsub.f32 %v270, %v464
        %v593 = vsub.f32 %v271, %v465
        %v594 = vsub.f32 %v272, %v466
        %v595 = vsub.f32 %v273, %v467
        %v596 = vsub.f32 %v274, %v468
        %v597 = vsub.f32 %v275, %v469
        %v598 = vadd.f32 %v534, 1e-05
        %v599 = vadd.f32 %v535, 1e-05
        %v600 = vadd.f32 %v536, 1e-05
        %v601 = vadd.f32 %v537, 1e-05
        %v602 = vadd.f32 %v538, 1e-05
        %v603 = vadd.f32 %v539, 1e-05
        %v604 = vadd.f32 %v540, 1e-05
        %v605 = vadd.f32 %v541, 1e-05
        %v606 = vadd.f32 %v542, 1e-05
        %v607 = vadd.f32 %v543, 1e-05
        %v608 = vadd.f32 %v544, 1e-05
        %v609 = vadd.f32 %v545, 1e-05
        %v610 = vadd.f32 %v546, 1e-05
        %v611 = vadd.f32 %v547, 1e-05
        %v612 = vadd.f32 %v548, 1e-05
        %v613 = vadd.f32 %v549, 1e-05
        %v614 = vadd.f32 %v550, 1e-05
        %v615 = vadd.f32 %v551, 1e-05
        %v616 = vadd.f32 %v552, 1e-05
        %v617 = vadd.f32 %v553, 1e-05
        %v618 = vadd.f32 %v554, 1e-05
        %v619 = vadd.f32 %v555, 1e-05
        %v620 = vadd.f32 %v556, 1e-05
        %v621 = vadd.f32 %v557, 1e-05
        %v622 = vadd.f32 %v558, 1e-05
        %v623 = vadd.f32 %v559, 1e-05
        %v624 = vadd.f32 %v560, 1e-05
        %v625 = vadd.f32 %v561, 1e-05
        %v626 = vadd.f32 %v562, 1e-05
        %v627 = vadd.f32 %v563, 1e-05
        %v628 = vadd.f32 %v564, 1e-05
        %v629 = vadd.f32 %v565, 1e-05
        %v630 = vrsqrt.pop %v598
        %v631 = vrsqrt.pop %v599
        %v632 = vrsqrt.pop %v600
        %v633 = vrsqrt.pop %v601
        %v634 = vrsqrt.pop %v602
        %v635 = vrsqrt.pop %v603
        %v636 = vrsqrt.pop %v604
        %v637 = vrsqrt.pop %v605
        %v638 = vrsqrt.pop %v606
        %v639 = vrsqrt.pop %v607
        %v640 = vrsqrt.pop %v608
        %v641 = vrsqrt.pop %v609
        %v642 = vrsqrt.pop %v610
        %v643 = vrsqrt.pop %v611
        %v644 = vrsqrt.pop %v612
        %v645 = vrsqrt.pop %v613
        %v646 = vrsqrt.pop %v614
        %v647 = vrsqrt.pop %v615
        %v648 = vrsqrt.pop %v616
        %v649 = vrsqrt.pop %v617
        %v650 = vrsqrt.pop %v618
        %v651 = vrsqrt.pop %v619
        %v652 = vrsqrt.pop %v620
        %v653 = vrsqrt.pop %v621
        %v654 = vrsqrt.pop %v622
        %v655 = vrsqrt.pop %v623
        %v656 = vrsqrt.pop %v624
        %v657 = vrsqrt.pop %v625
        %v658 = vrsqrt.pop %v626
        %v659 = vrsqrt.pop %v627
        %v660 = vrsqrt.pop %v628
        %v661 = vrsqrt.pop %v629
        %v662 = vmul.f32 %v566, %v630
        %v663 = vmul.f32 %v567, %v631
        %v664 = vmul.f32 %v568, %v632
        %v665 = vmul.f32 %v569, %v633
        %v666 = vmul.f32 %v570, %v634
        %v667 = vmul.f32 %v571, %v635
        %v668 = vmul.f32 %v572, %v636
        %v669 = vmul.f32 %v573, %v637
        %v670 = vmul.f32 %v574, %v638
        %v671 = vmul.f32 %v575, %v639
        %v672 = vmul.f32 %v576, %v640
        %v673 = vmul.f32 %v577, %v641
        %v674 = vmul.f32 %v578, %v642
        %v675 = vmul.f32 %v579, %v643
        %v676 = vmul.f32 %v580, %v644
        %v677 = vmul.f32 %v581, %v645
        %v678 = vmul.f32 %v582, %v646
        %v679 = vmul.f32 %v583, %v647
        %v680 = vmul.f32 %v584, %v648
        %v681 = vmul.f32 %v585, %v649
        %v682 = vmul.f32 %v586, %v650
        %v683 = vmul.f32 %v587, %v651
        %v684 = vmul.f32 %v588, %v652
        %v685 = vmul.f32 %v589, %v653
        %v686 = vmul.f32 %v590, %v654
        %v687 = vmul.f32 %v591, %v655
        %v688 = vmul.f32 %v592, %v656
        %v689 = vmul.f32 %v593, %v657
        %v690 = vmul.f32 %v594, %v658
        %v691 = vmul.f32 %v595, %v659
        %v692 = vmul.f32 %v596, %v660
        %v693 = vmul.f32 %v597, %v661
        %v695 = vlaneseq
        %v696 = vshrl.u32 %v695, 7
        %v697 = vsub.s32 0, %v696
        %v698 = vrot.slane %v276, %v697
        %v700 = vmul.f32 %v662, %v698
        %v701 = vmul.f32 %v663, %v698
        %v702 = vmul.f32 %v664, %v698
        %v703 = vmul.f32 %v665, %v698
        %v704 = vmul.f32 %v666, %v698
        %v705 = vmul.f32 %v667, %v698
        %v706 = vmul.f32 %v668, %v698
        %v707 = vmul.f32 %v669, %v698
        %v708 = vmul.f32 %v670, %v698
        %v709 = vmul.f32 %v671, %v698
        %v710 = vmul.f32 %v672, %v698
        %v711 = vmul.f32 %v673, %v698
        %v712 = vmul.f32 %v674, %v698
        %v713 = vmul.f32 %v675, %v698
        %v714 = vmul.f32 %v676, %v698
        %v715 = vmul.f32 %v677, %v698
        %v716 = vmul.f32 %v678, %v698
        %v717 = vmul.f32 %v679, %v698
        %v718 = vmul.f32 %v680, %v698
        %v719 = vmul.f32 %v681, %v698
        %v720 = vmul.f32 %v682, %v698
        %v721 = vmul.f32 %v683, %v698
        %v722 = vmul.f32 %v684, %v698
        %v723 = vmul.f32 %v685, %v698
        %v724 = vmul.f32 %v686, %v698
        %v725 = vmul.f32 %v687, %v698
        %v726 = vmul.f32 %v688, %v698
        %v727 = vmul.f32 %v689, %v698
        %v728 = vmul.f32 %v690, %v698
        %v729 = vmul.f32 %v691, %v698
        %v730 = vmul.f32 %v692, %v698
        %v731 = vmul.f32 %v693, %v698
        %v733 = vlaneseq
        %v734 = vshrl.u32 %v733, 7
        %v735 = vsub.s32 0, %v734
        %v736 = vrot.slane %v277, %v735
        %v738 = vadd.f32 %v700, %v736
        %v739 = vadd.f32 %v701, %v736
        %v740 = vadd.f32 %v702, %v736
        %v741 = vadd.f32 %v703, %v736
        %v742 = vadd.f32 %v704, %v736
        %v743 = vadd.f32 %v705, %v736
        %v744 = vadd.f32 %v706, %v736
        %v745 = vadd.f32 %v707, %v736
        %v746 = vadd.f32 %v708, %v736
        %v747 = vadd.f32 %v709, %v736
        %v748 = vadd.f32 %v710, %v736
        %v749 = vadd.f32 %v711, %v736
        %v750 = vadd.f32 %v712, %v736
        %v751 = vadd.f32 %v713, %v736
        %v752 = vadd.f32 %v714, %v736
        %v753 = vadd.f32 %v715, %v736
        %v754 = vadd.f32 %v716, %v736
        %v755 = vadd.f32 %v717, %v736
        %v756 = vadd.f32 %v718, %v736
        %v757 = vadd.f32 %v719, %v736
        %v758 = vadd.f32 %v720, %v736
        %v759 = vadd.f32 %v721, %v736
        %v760 = vadd.f32 %v722, %v736
        %v761 = vadd.f32 %v723, %v736
        %v762 = vadd.f32 %v724, %v736
        %v763 = vadd.f32 %v725, %v736
        %v764 = vadd.f32 %v726, %v736
        %v765 = vadd.f32 %v727, %v736
        %v766 = vadd.f32 %v728, %v736
        %v767 = vadd.f32 %v729, %v736
        %v768 = vadd.f32 %v730, %v736
        %v769 = vadd.f32 %v731, %v736
        %v770 = vpack.c.bf16 %v739, %v738
        %v771 = vpack.c.bf16 %v741, %v740
        %v772 = vpack.c.bf16 %v743, %v742
        %v773 = vpack.c.bf16 %v745, %v744
        %v774 = vpack.c.bf16 %v747, %v746
        %v775 = vpack.c.bf16 %v749, %v748
        %v776 = vpack.c.bf16 %v751, %v750
        %v777 = vpack.c.bf16 %v753, %v752
        %v778 = vpack.c.bf16 %v755, %v754
        %v779 = vpack.c.bf16 %v757, %v756
        %v780 = vpack.c.bf16 %v759, %v758
        %v781 = vpack.c.bf16 %v761, %v760
        %v782 = vpack.c.bf16 %v763, %v762
        %v783 = vpack.c.bf16 %v765, %v764
        %v784 = vpack.c.bf16 %v767, %v766
        %v785 = vpack.c.bf16 %v769, %v768
        %v786 = vld [vmem:[#allocation6] sm:$0xff]
        %v787 = vld [vmem:[#allocation6 + $0x8] sm:$0xf]
        %v788 = vld [vmem:[#allocation6 + $0xc] sm:$0xff]
        %v789 = vld [vmem:[#allocation6 + $0x14] sm:$0xf]
        %v790 = vld [vmem:[#allocation6 + $0x18] sm:$0xff]
        %v791 = vld [vmem:[#allocation6 + $0x20] sm:$0xf]
        %v792 = vld [vmem:[#allocation6 + $0x24] sm:$0xff]
        %v793 = vld [vmem:[#allocation6 + $0x2c] sm:$0xf]
        %v794 = vld [vmem:[#allocation6 + $0x30] sm:$0xff]
        %v795 = vld [vmem:[#allocation6 + $0x38] sm:$0xf]
        %v796 = vld [vmem:[#allocation6 + $0x3c] sm:$0xff]
        %v797 = vld [vmem:[#allocation6 + $0x44] sm:$0xf]
        %v798 = vld [vmem:[#allocation6 + $0x48] sm:$0xff]
        %v799 = vld [vmem:[#allocation6 + $0x50] sm:$0xf]
        %v800 = vld [vmem:[#allocation6 + $0x54] sm:$0xff]
        %v801 = vld [vmem:[#allocation6 + $0x5c] sm:$0xf]
        %v802 = vld [vmem:[#allocation6 + $0x60] sm:$0xff]
        %v803 = vld [vmem:[#allocation6 + $0x68] sm:$0xf]
        %v804 = vld [vmem:[#allocation6 + $0x6c] sm:$0xff]
        %v805 = vld [vmem:[#allocation6 + $0x74] sm:$0xf]
        %v806 = vld [vmem:[#allocation6 + $0x78] sm:$0xff]
        %v807 = vld [vmem:[#allocation6 + $0x80] sm:$0xf]
        %v808 = vld [vmem:[#allocation6 + $0x84] sm:$0xff]
        %v809 = vld [vmem:[#allocation6 + $0x8c] sm:$0xf]
        %v810 = vld [vmem:[#allocation6 + $0x90] sm:$0xff]
        %v811 = vld [vmem:[#allocation6 + $0x98] sm:$0xf]
        %v812 = vld [vmem:[#allocation6 + $0x9c] sm:$0xff]
        %v813 = vld [vmem:[#allocation6 + $0xa4] sm:$0xf]
        %v814 = vld [vmem:[#allocation6 + $0xa8] sm:$0xff]
        %v815 = vld [vmem:[#allocation6 + $0xb0] sm:$0xf]
        %v816 = vld [vmem:[#allocation6 + $0xb4] sm:$0xff]
        %v817 = vld [vmem:[#allocation6 + $0xbc] sm:$0xf]
        %v850 = vunpack.c.l.b16 %v786
        %v851 = vunpack.c.h.b16 %v786
        %v852 = vunpack.c.l.b16 %v787
        %v853 = vunpack.c.l.b16 %v788
        %v854 = vunpack.c.h.b16 %v788
        %v855 = vunpack.c.l.b16 %v789
        %v856 = vunpack.c.l.b16 %v790
        %v857 = vunpack.c.h.b16 %v790
        %v858 = vunpack.c.l.b16 %v791
        %v859 = vunpack.c.l.b16 %v792
        %v860 = vunpack.c.h.b16 %v792
        %v861 = vunpack.c.l.b16 %v793
        %v862 = vunpack.c.l.b16 %v794
        %v863 = vunpack.c.h.b16 %v794
        %v864 = vunpack.c.l.b16 %v795
        %v865 = vunpack.c.l.b16 %v796
        %v866 = vunpack.c.h.b16 %v796
        %v867 = vunpack.c.l.b16 %v797
        %v868 = vunpack.c.l.b16 %v798
        %v869 = vunpack.c.h.b16 %v798
        %v870 = vunpack.c.l.b16 %v799
        %v871 = vunpack.c.l.b16 %v800
        %v872 = vunpack.c.h.b16 %v800
        %v873 = vunpack.c.l.b16 %v801
        %v874 = vunpack.c.l.b16 %v802
        %v875 = vunpack.c.h.b16 %v802
        %v876 = vunpack.c.l.b16 %v803
        %v877 = vunpack.c.l.b16 %v804
        %v878 = vunpack.c.h.b16 %v804
        %v879 = vunpack.c.l.b16 %v805
        %v880 = vunpack.c.l.b16 %v806
        %v881 = vunpack.c.h.b16 %v806
        %v882 = vunpack.c.l.b16 %v807
        %v883 = vunpack.c.l.b16 %v808
        %v884 = vunpack.c.h.b16 %v808
        %v885 = vunpack.c.l.b16 %v809
        %v886 = vunpack.c.l.b16 %v810
        %v887 = vunpack.c.h.b16 %v810
        %v888 = vunpack.c.l.b16 %v811
        %v889 = vunpack.c.l.b16 %v812
        %v890 = vunpack.c.h.b16 %v812
        %v891 = vunpack.c.l.b16 %v813
        %v892 = vunpack.c.l.b16 %v814
        %v893 = vunpack.c.h.b16 %v814
        %v894 = vunpack.c.l.b16 %v815
        %v895 = vunpack.c.l.b16 %v816
        %v896 = vunpack.c.h.b16 %v816
        %v897 = vunpack.c.l.b16 %v817
        %v898 = vpack.c.b16 %v853, %v850
        %v899 = vpack.c.b16 %v854, %v851
        %v900 = vpack.c.b16 %v855, %v852
        %v901 = vpack.c.b16 %v859, %v856
        %v902 = vpack.c.b16 %v860, %v857
        %v903 = vpack.c.b16 %v861, %v858
        %v904 = vpack.c.b16 %v865, %v862
        %v905 = vpack.c.b16 %v866, %v863
        %v906 = vpack.c.b16 %v867, %v864
        %v907 = vpack.c.b16 %v871, %v868
        %v908 = vpack.c.b16 %v872, %v869
        %v909 = vpack.c.b16 %v873, %v870
        %v910 = vpack.c.b16 %v877, %v874
        %v911 = vpack.c.b16 %v878, %v875
        %v912 = vpack.c.b16 %v879, %v876
        %v913 = vpack.c.b16 %v883, %v880
        %v914 = vpack.c.b16 %v884, %v881
        %v915 = vpack.c.b16 %v885, %v882
        %v916 = vpack.c.b16 %v889, %v886
        %v917 = vpack.c.b16 %v890, %v887
        %v918 = vpack.c.b16 %v891, %v888
        %v919 = vpack.c.b16 %v895, %v892
        %v920 = vpack.c.b16 %v896, %v893
        %v921 = vpack.c.b16 %v897, %v894
        %946 = vmatprep.subr.bf16.mxu0 %v899
        %947 = vmatpush1.bf16.msra.mxu0 %v898
        %948 = vmatprep.subr.bf16.mxu0 %v902
        %949 = vmatpush1.bf16.msra.mxu0 %v901
        %950 = vmatprep.subr.bf16.mxu0 %v905
        %951 = vmatpush1.bf16.msra.mxu0 %v904
        %952 = vmatprep.subr.bf16.mxu0 %v908
        %953 = vmatpush1.bf16.msra.mxu0 %v907
        %954 = vmatprep.subr.bf16.mxu0 %v911
        %955 = vmatpush1.bf16.msra.mxu0 %v910
        %956 = vmatprep.subr.bf16.mxu0 %v914
        %957 = vmatpush1.bf16.msra.mxu0 %v913
        %958 = vmatprep.subr.bf16.mxu0 %v917
        %959 = vmatpush1.bf16.msra.mxu0 %v916
        %960 = vmatprep.subr.bf16.mxu0 %v920
        %961 = vmatpush1.bf16.msra.mxu0 %v919
        %962 = vmatprep.subr.bf16.mxu0 0
        %963 = vmatpush1.bf16.msra.mxu0 0
        %964 = vmatprep.subr.bf16.mxu0 0
        %965 = vmatpush1.bf16.msra.mxu0 0
        %966 = vmatprep.subr.bf16.mxu0 0
        %967 = vmatpush1.bf16.msra.mxu0 0
        %968 = vmatprep.subr.bf16.mxu0 0
        %969 = vmatpush1.bf16.msra.mxu0 0
        %970 = vmatprep.subr.bf16.mxu0 0
        %971 = vmatpush1.bf16.msra.mxu0 0
        %972 = vmatprep.subr.bf16.mxu0 0
        %973 = vmatpush1.bf16.msra.mxu0 0
        %974 = vmatprep.subr.bf16.mxu0 0
        %975 = vmatpush1.bf16.msra.mxu0 0
        %976 = vmatprep.subr.bf16.mxu0 0
        %977 = vmatpush1.bf16.msra.mxu0 0
        %978 = vmatprep.mubr.bf16.mxu0 0
        %979 = vmatmul.mubr.bf16.gmra.mrb[0].mxu0 %v770
        %v980 = vpop.f32.mrb[0].mxu0
        %v981 = vadd.f32 0.0, %v980
        %v982 = vpop.f32.mrb[0].mxu0
        %v983 = vadd.f32 0.0, %v982
        %v984 = vpop.f32.mrb[0].mxu0
        %v985 = vadd.f32 0.0, %v984
        %v986 = vpop.f32.mrb[0].mxu0
        %v987 = vadd.f32 0.0, %v986
        %988 = vmatprep.mubr.bf16.mxu0 0
        %989 = vmatmul.mubr.bf16.gmra.mrb[0].mxu0 %v771
        %v990 = vpop.f32.mrb[0].mxu0
        %v991 = vadd.f32 0.0, %v990
        %v992 = vpop.f32.mrb[0].mxu0
        %v993 = vadd.f32 0.0, %v992
        %v994 = vpop.f32.mrb[0].mxu0
        %v995 = vadd.f32 0.0, %v994
        %v996 = vpop.f32.mrb[0].mxu0
        %v997 = vadd.f32 0.0, %v996
        %998 = vmatprep.mubr.bf16.mxu0 0
        %999 = vmatmul.mubr.bf16.gmra.mrb[0].mxu0 %v772
        %v1000 = vpop.f32.mrb[0].mxu0
        %v1001 = vadd.f32 0.0, %v1000
        %v1002 = vpop.f32.mrb[0].mxu0
        %v1003 = vadd.f32 0.0, %v1002
        %v1004 = vpop.f32.mrb[0].mxu0
        %v1005 = vadd.f32 0.0, %v1004
        %v1006 = vpop.f32.mrb[0].mxu0
        %v1007 = vadd.f32 0.0, %v1006
        %1008 = vmatprep.mubr.bf16.mxu0 0
        %1009 = vmatmul.mubr.bf16.gmra.mrb[0].mxu0 %v773
        %v1010 = vpop.f32.mrb[0].mxu0
        %v1011 = vadd.f32 0.0, %v1010
        %v1012 = vpop.f32.mrb[0].mxu0
        %v1013 = vadd.f32 0.0, %v1012
        %v1014 = vpop.f32.mrb[0].mxu0
        %v1015 = vadd.f32 0.0, %v1014
        %v1016 = vpop.f32.mrb[0].mxu0
        %v1017 = vadd.f32 0.0, %v1016
        %1018 = vmatprep.mubr.bf16.mxu0 0
        %1019 = vmatmul.mubr.bf16.gmra.mrb[0].mxu0 %v774
        %v1020 = vpop.f32.mrb[0].mxu0
        %v1021 = vadd.f32 0.0, %v1020
        %v1022 = vpop.f32.mrb[0].mxu0
        %v1023 = vadd.f32 0.0, %v1022
        %v1024 = vpop.f32.mrb[0].mxu0
        %v1025 = vadd.f32 0.0, %v1024
        %v1026 = vpop.f32.mrb[0].mxu0
        %v1027 = vadd.f32 0.0, %v1026
        %1028 = vmatprep.mubr.bf16.mxu0 0
        %1029 = vmatmul.mubr.bf16.gmra.mrb[0].mxu0 %v775
        %v1030 = vpop.f32.mrb[0].mxu0
        %v1031 = vadd.f32 0.0, %v1030
        %v1032 = vpop.f32.mrb[0].mxu0
        %v1033 = vadd.f32 0.0, %v1032
        %v1034 = vpop.f32.mrb[0].mxu0
        %v1035 = vadd.f32 0.0, %v1034
        %v1036 = vpop.f32.mrb[0].mxu0
        %v1037 = vadd.f32 0.0, %v1036
        %1038 = vmatprep.mubr.bf16.mxu0 0
        %1039 = vmatmul.mubr.bf16.gmra.mrb[0].mxu0 %v776
        %v1040 = vpop.f32.mrb[0].mxu0
        %v1041 = vadd.f32 0.0, %v1040
        %v1042 = vpop.f32.mrb[0].mxu0
        %v1043 = vadd.f32 0.0, %v1042
        %v1044 = vpop.f32.mrb[0].mxu0
        %v1045 = vadd.f32 0.0, %v1044
        %v1046 = vpop.f32.mrb[0].mxu0
        %v1047 = vadd.f32 0.0, %v1046
        %1048 = vmatprep.mubr.bf16.mxu0 0
        %1049 = vmatmul.mubr.bf16.gmra.mrb[0].mxu0 %v777
        %v1050 = vpop.f32.mrb[0].mxu0
        %v1051 = vadd.f32 0.0, %v1050
        %v1052 = vpop.f32.mrb[0].mxu0
        %v1053 = vadd.f32 0.0, %v1052
        %v1054 = vpop.f32.mrb[0].mxu0
        %v1055 = vadd.f32 0.0, %v1054
        %v1056 = vpop.f32.mrb[0].mxu0
        %v1057 = vadd.f32 0.0, %v1056
        %1058 = vmatprep.mubr.bf16.mxu0 0
        %1059 = vmatmul.mubr.bf16.gmra.mrb[0].mxu0 %v778
        %v1060 = vpop.f32.mrb[0].mxu0
        %v1061 = vadd.f32 0.0, %v1060
        %v1062 = vpop.f32.mrb[0].mxu0
        %v1063 = vadd.f32 0.0, %v1062
        %v1064 = vpop.f32.mrb[0].mxu0
        %v1065 = vadd.f32 0.0, %v1064
        %v1066 = vpop.f32.mrb[0].mxu0
        %v1067 = vadd.f32 0.0, %v1066
        %1068 = vmatprep.mubr.bf16.mxu0 0
        %1069 = vmatmul.mubr.bf16.gmra.mrb[0].mxu0 %v779
        %v1070 = vpop.f32.mrb[0].mxu0
        %v1071 = vadd.f32 0.0, %v1070
        %v1072 = vpop.f32.mrb[0].mxu0
        %v1073 = vadd.f32 0.0, %v1072
        %v1074 = vpop.f32.mrb[0].mxu0
        %v1075 = vadd.f32 0.0, %v1074
        %v1076 = vpop.f32.mrb[0].mxu0
        %v1077 = vadd.f32 0.0, %v1076
        %1078 = vmatprep.mubr.bf16.mxu0 0
        %1079 = vmatmul.mubr.bf16.gmra.mrb[0].mxu0 %v780
        %v1080 = vpop.f32.mrb[0].mxu0
        %v1081 = vadd.f32 0.0, %v1080
        %v1082 = vpop.f32.mrb[0].mxu0
        %v1083 = vadd.f32 0.0, %v1082
        %v1084 = vpop.f32.mrb[0].mxu0
        %v1085 = vadd.f32 0.0, %v1084
        %v1086 = vpop.f32.mrb[0].mxu0
        %v1087 = vadd.f32 0.0, %v1086
        %1088 = vmatprep.mubr.bf16.mxu0 0
        %1089 = vmatmul.mubr.bf16.gmra.mrb[0].mxu0 %v781
        %v1090 = vpop.f32.mrb[0].mxu0
        %v1091 = vadd.f32 0.0, %v1090
        %v1092 = vpop.f32.mrb[0].mxu0
        %v1093 = vadd.f32 0.0, %v1092
        %v1094 = vpop.f32.mrb[0].mxu0
        %v1095 = vadd.f32 0.0, %v1094
        %v1096 = vpop.f32.mrb[0].mxu0
        %v1097 = vadd.f32 0.0, %v1096
        %1098 = vmatprep.mubr.bf16.mxu0 0
        %1099 = vmatmul.mubr.bf16.gmra.mrb[0].mxu0 %v782
        %v1100 = vpop.f32.mrb[0].mxu0
        %v1101 = vadd.f32 0.0, %v1100
        %v1102 = vpop.f32.mrb[0].mxu0
        %v1103 = vadd.f32 0.0, %v1102
        %v1104 = vpop.f32.mrb[0].mxu0
        %v1105 = vadd.f32 0.0, %v1104
        %v1106 = vpop.f32.mrb[0].mxu0
        %v1107 = vadd.f32 0.0, %v1106
        %1108 = vmatprep.mubr.bf16.mxu0 0
        %1109 = vmatmul.mubr.bf16.gmra.mrb[0].mxu0 %v783
        %v1110 = vpop.f32.mrb[0].mxu0
        %v1111 = vadd.f32 0.0, %v1110
        %v1112 = vpop.f32.mrb[0].mxu0
        %v1113 = vadd.f32 0.0, %v1112
        %v1114 = vpop.f32.mrb[0].mxu0
        %v1115 = vadd.f32 0.0, %v1114
        %v1116 = vpop.f32.mrb[0].mxu0
        %v1117 = vadd.f32 0.0, %v1116
        %1118 = vmatprep.mubr.bf16.mxu0 0
        %1119 = vmatmul.mubr.bf16.gmra.mrb[0].mxu0 %v784
        %v1120 = vpop.f32.mrb[0].mxu0
        %v1121 = vadd.f32 0.0, %v1120
        %v1122 = vpop.f32.mrb[0].mxu0
        %v1123 = vadd.f32 0.0, %v1122
        %v1124 = vpop.f32.mrb[0].mxu0
        %v1125 = vadd.f32 0.0, %v1124
        %v1126 = vpop.f32.mrb[0].mxu0
        %v1127 = vadd.f32 0.0, %v1126
        %1128 = vmatprep.mubr.bf16.mxu0 0
        %1129 = vmatmul.mubr.bf16.gmra.mrb[0].mxu0 %v785
        %v1130 = vpop.f32.mrb[0].mxu0
        %v1131 = vadd.f32 0.0, %v1130
        %v1132 = vpop.f32.mrb[0].mxu0
        %v1133 = vadd.f32 0.0, %v1132
        %v1134 = vpop.f32.mrb[0].mxu0
        %v1135 = vadd.f32 0.0, %v1134
        %v1136 = vpop.f32.mrb[0].mxu0
        %v1137 = vadd.f32 0.0, %v1136
        %1138 = vdwg.mxu0
        %1139 = vmatprep.subr.bf16.mxu0 0
        %1140 = vmatpush1.bf16.msra.mxu0 %v900
        %1141 = vmatprep.subr.bf16.mxu0 0
        %1142 = vmatpush1.bf16.msra.mxu0 %v903
        %1143 = vmatprep.subr.bf16.mxu0 0
        %1144 = vmatpush1.bf16.msra.mxu0 %v906
        %1145 = vmatprep.subr.bf16.mxu0 0
        %1146 = vmatpush1.bf16.msra.mxu0 %v909
        %1147 = vmatprep.subr.bf16.mxu0 0
        %1148 = vmatpush1.bf16.msra.mxu0 %v912
        %1149 = vmatprep.subr.bf16.mxu0 0
        %1150 = vmatpush1.bf16.msra.mxu0 %v915
        %1151 = vmatprep.subr.bf16.mxu0 0
        %1152 = vmatpush1.bf16.msra.mxu0 %v918
        %1153 = vmatprep.subr.bf16.mxu0 0
        %1154 = vmatpush1.bf16.msra.mxu0 %v921
        %1155 = vmatprep.subr.bf16.mxu0 0
        %1156 = vmatpush1.bf16.msra.mxu0 0
        %1157 = vmatprep.subr.bf16.mxu0 0
        %1158 = vmatpush1.bf16.msra.mxu0 0
        %1159 = vmatprep.subr.bf16.mxu0 0
        %1160 = vmatpush1.bf16.msra.mxu0 0
        %1161 = vmatprep.subr.bf16.mxu0 0
        %1162 = vmatpush1.bf16.msra.mxu0 0
        %1163 = vmatprep.subr.bf16.mxu0 0
        %1164 = vmatpush1.bf16.msra.mxu0 0
        %1165 = vmatprep.subr.bf16.mxu0 0
        %1166 = vmatpush1.bf16.msra.mxu0 0
        %1167 = vmatprep.subr.bf16.mxu0 0
        %1168 = vmatpush1.bf16.msra.mxu0 0
        %1169 = vmatprep.subr.bf16.mxu0 0
        %1170 = vmatpush1.bf16.msra.mxu0 0
        %1171 = vmatprep.mubr.bf16.mxu0 0
        %1172 = vmatmul.mubr.bf16.gmra.mrb[0].mxu0 %v770
        %v1173 = vpop.f32.mrb[0].mxu0
        %v1174 = vadd.f32 0.0, %v1173
        %v1175 = vpop.f32.mrb[0].mxu0
        %v1176 = vpop.f32.mrb[0].mxu0
        %v1177 = vadd.f32 0.0, %v1176
        %v1178 = vpop.f32.mrb[0].mxu0
        %1179 = vmatprep.mubr.bf16.mxu0 0
        %1180 = vmatmul.mubr.bf16.gmra.mrb[0].mxu0 %v771
        %v1181 = vpop.f32.mrb[0].mxu0
        %v1182 = vadd.f32 0.0, %v1181
        %v1183 = vpop.f32.mrb[0].mxu0
        %v1184 = vpop.f32.mrb[0].mxu0
        %v1185 = vadd.f32 0.0, %v1184
        %v1186 = vpop.f32.mrb[0].mxu0
        %1187 = vmatprep.mubr.bf16.mxu0 0
        %1188 = vmatmul.mubr.bf16.gmra.mrb[0].mxu0 %v772
        %v1189 = vpop.f32.mrb[0].mxu0
        %v1190 = vadd.f32 0.0, %v1189
        %v1191 = vpop.f32.mrb[0].mxu0
        %v1192 = vpop.f32.mrb[0].mxu0
        %v1193 = vadd.f32 0.0, %v1192
        %v1194 = vpop.f32.mrb[0].mxu0
        %1195 = vmatprep.mubr.bf16.mxu0 0
        %1196 = vmatmul.mubr.bf16.gmra.mrb[0].mxu0 %v773
        %v1197 = vpop.f32.mrb[0].mxu0
        %v1198 = vadd.f32 0.0, %v1197
        %v1199 = vpop.f32.mrb[0].mxu0
        %v1200 = vpop.f32.mrb[0].mxu0
        %v1201 = vadd.f32 0.0, %v1200
        %v1202 = vpop.f32.mrb[0].mxu0
        %1203 = vmatprep.mubr.bf16.mxu0 0
        %1204 = vmatmul.mubr.bf16.gmra.mrb[0].mxu0 %v774
        %v1205 = vpop.f32.mrb[0].mxu0
        %v1206 = vadd.f32 0.0, %v1205
        %v1207 = vpop.f32.mrb[0].mxu0
        %v1208 = vpop.f32.mrb[0].mxu0
        %v1209 = vadd.f32 0.0, %v1208
        %v1210 = vpop.f32.mrb[0].mxu0
        %1211 = vmatprep.mubr.bf16.mxu0 0
        %1212 = vmatmul.mubr.bf16.gmra.mrb[0].mxu0 %v775
        %v1213 = vpop.f32.mrb[0].mxu0
        %v1214 = vadd.f32 0.0, %v1213
        %v1215 = vpop.f32.mrb[0].mxu0
        %v1216 = vpop.f32.mrb[0].mxu0
        %v1217 = vadd.f32 0.0, %v1216
        %v1218 = vpop.f32.mrb[0].mxu0
        %1219 = vmatprep.mubr.bf16.mxu0 0
        %1220 = vmatmul.mubr.bf16.gmra.mrb[0].mxu0 %v776
        %v1221 = vpop.f32.mrb[0].mxu0
        %v1222 = vadd.f32 0.0, %v1221
        %v1223 = vpop.f32.mrb[0].mxu0
        %v1224 = vpop.f32.mrb[0].mxu0
        %v1225 = vadd.f32 0.0, %v1224
        %v1226 = vpop.f32.mrb[0].mxu0
        %1227 = vmatprep.mubr.bf16.mxu0 0
        %1228 = vmatmul.mubr.bf16.gmra.mrb[0].mxu0 %v777
        %v1229 = vpop.f32.mrb[0].mxu0
        %v1230 = vadd.f32 0.0, %v1229
        %v1231 = vpop.f32.mrb[0].mxu0
        %v1232 = vpop.f32.mrb[0].mxu0
        %v1233 = vadd.f32 0.0, %v1232
        %v1234 = vpop.f32.mrb[0].mxu0
        %1235 = vmatprep.mubr.bf16.mxu0 0
        %1236 = vmatmul.mubr.bf16.gmra.mrb[0].mxu0 %v778
        %v1237 = vpop.f32.mrb[0].mxu0
        %v1238 = vadd.f32 0.0, %v1237
        %v1239 = vpop.f32.mrb[0].mxu0
        %v1240 = vpop.f32.mrb[0].mxu0
        %v1241 = vadd.f32 0.0, %v1240
        %v1242 = vpop.f32.mrb[0].mxu0
        %1243 = vmatprep.mubr.bf16.mxu0 0
        %1244 = vmatmul.mubr.bf16.gmra.mrb[0].mxu0 %v779
        %v1245 = vpop.f32.mrb[0].mxu0
        %v1246 = vadd.f32 0.0, %v1245
        %v1247 = vpop.f32.mrb[0].mxu0
        %v1248 = vpop.f32.mrb[0].mxu0
        %v1249 = vadd.f32 0.0, %v1248
        %v1250 = vpop.f32.mrb[0].mxu0
        %1251 = vmatprep.mubr.bf16.mxu0 0
        %1252 = vmatmul.mubr.bf16.gmra.mrb[0].mxu0 %v780
        %v1253 = vpop.f32.mrb[0].mxu0
        %v1254 = vadd.f32 0.0, %v1253
        %v1255 = vpop.f32.mrb[0].mxu0
        %v1256 = vpop.f32.mrb[0].mxu0
        %v1257 = vadd.f32 0.0, %v1256
        %v1258 = vpop.f32.mrb[0].mxu0
        %1259 = vmatprep.mubr.bf16.mxu0 0
        %1260 = vmatmul.mubr.bf16.gmra.mrb[0].mxu0 %v781
        %v1261 = vpop.f32.mrb[0].mxu0
        %v1262 = vadd.f32 0.0, %v1261
        %v1263 = vpop.f32.mrb[0].mxu0
        %v1264 = vpop.f32.mrb[0].mxu0
        %v1265 = vadd.f32 0.0, %v1264
        %v1266 = vpop.f32.mrb[0].mxu0
        %1267 = vmatprep.mubr.bf16.mxu0 0
        %1268 = vmatmul.mubr.bf16.gmra.mrb[0].mxu0 %v782
        %v1269 = vpop.f32.mrb[0].mxu0
        %v1270 = vadd.f32 0.0, %v1269
        %v1271 = vpop.f32.mrb[0].mxu0
        %v1272 = vpop.f32.mrb[0].mxu0
        %v1273 = vadd.f32 0.0, %v1272
        %v1274 = vpop.f32.mrb[0].mxu0
        %1275 = vmatprep.mubr.bf16.mxu0 0
        %1276 = vmatmul.mubr.bf16.gmra.mrb[0].mxu0 %v783
        %v1277 = vpop.f32.mrb[0].mxu0
        %v1278 = vadd.f32 0.0, %v1277
        %v1279 = vpop.f32.mrb[0].mxu0
        %v1280 = vpop.f32.mrb[0].mxu0
        %v1281 = vadd.f32 0.0, %v1280
        %v1282 = vpop.f32.mrb[0].mxu0
        %1283 = vmatprep.mubr.bf16.mxu0 0
        %1284 = vmatmul.mubr.bf16.gmra.mrb[0].mxu0 %v784
        %v1285 = vpop.f32.mrb[0].mxu0
        %v1286 = vadd.f32 0.0, %v1285
        %v1287 = vpop.f32.mrb[0].mxu0
        %v1288 = vpop.f32.mrb[0].mxu0
        %v1289 = vadd.f32 0.0, %v1288
        %v1290 = vpop.f32.mrb[0].mxu0
        %1291 = vmatprep.mubr.bf16.mxu0 0
        %1292 = vmatmul.mubr.bf16.gmra.mrb[0].mxu0 %v785
        %v1293 = vpop.f32.mrb[0].mxu0
        %v1294 = vadd.f32 0.0, %v1293
        %v1295 = vpop.f32.mrb[0].mxu0
        %v1296 = vpop.f32.mrb[0].mxu0
        %v1297 = vadd.f32 0.0, %v1296
        %v1298 = vpop.f32.mrb[0].mxu0
        %1299 = vdwg.mxu0
        %v1300 = vpack.c.bf16 %v985, %v981
        %v1301 = vpack.c.bf16 %v987, %v983
        %v1302 = vpack.c.bf16 %v1177, %v1174
        %v1303 = vpack.c.bf16 %v995, %v991
        %v1304 = vpack.c.bf16 %v997, %v993
        %v1305 = vpack.c.bf16 %v1185, %v1182
        %v1306 = vpack.c.bf16 %v1005, %v1001
        %v1307 = vpack.c.bf16 %v1007, %v1003
        %v1308 = vpack.c.bf16 %v1193, %v1190
        %v1309 = vpack.c.bf16 %v1015, %v1011
        %v1310 = vpack.c.bf16 %v1017, %v1013
        %v1311 = vpack.c.bf16 %v1201, %v1198
        %v1312 = vpack.c.bf16 %v1025, %v1021
        %v1313 = vpack.c.bf16 %v1027, %v1023
        %v1314 = vpack.c.bf16 %v1209, %v1206
        %v1315 = vpack.c.bf16 %v1035, %v1031
        %v1316 = vpack.c.bf16 %v1037, %v1033
        %v1317 = vpack.c.bf16 %v1217, %v1214
        %v1318 = vpack.c.bf16 %v1045, %v1041
        %v1319 = vpack.c.bf16 %v1047, %v1043
        %v1320 = vpack.c.bf16 %v1225, %v1222
        %v1321 = vpack.c.bf16 %v1055, %v1051
        %v1322 = vpack.c.bf16 %v1057, %v1053
        %v1323 = vpack.c.bf16 %v1233, %v1230
        %v1324 = vpack.c.bf16 %v1065, %v1061
        %v1325 = vpack.c.bf16 %v1067, %v1063
        %v1326 = vpack.c.bf16 %v1241, %v1238
        %v1327 = vpack.c.bf16 %v1075, %v1071
        %v1328 = vpack.c.bf16 %v1077, %v1073
        %v1329 = vpack.c.bf16 %v1249, %v1246
        %v1330 = vpack.c.bf16 %v1085, %v1081
        %v1331 = vpack.c.bf16 %v1087, %v1083
        %v1332 = vpack.c.bf16 %v1257, %v1254
        %v1333 = vpack.c.bf16 %v1095, %v1091
        %v1334 = vpack.c.bf16 %v1097, %v1093
        %v1335 = vpack.c.bf16 %v1265, %v1262
        %v1336 = vpack.c.bf16 %v1105, %v1101
        %v1337 = vpack.c.bf16 %v1107, %v1103
        %v1338 = vpack.c.bf16 %v1273, %v1270
        %v1339 = vpack.c.bf16 %v1115, %v1111
        %v1340 = vpack.c.bf16 %v1117, %v1113
        %v1341 = vpack.c.bf16 %v1281, %v1278
        %v1342 = vpack.c.bf16 %v1125, %v1121
        %v1343 = vpack.c.bf16 %v1127, %v1123
        %v1344 = vpack.c.bf16 %v1289, %v1286
        %v1345 = vpack.c.bf16 %v1135, %v1131
        %v1346 = vpack.c.bf16 %v1137, %v1133
        %v1347 = vpack.c.bf16 %v1297, %v1294
        %v1396 = vunpack.c.l.b16 %v1300
        %v1397 = vunpack.c.l.b16 %v1301
        %v1398 = vunpack.c.l.b16 %v1302
        %v1399 = vunpack.c.h.b16 %v1300
        %v1400 = vunpack.c.h.b16 %v1301
        %v1401 = vunpack.c.h.b16 %v1302
        %v1402 = vunpack.c.l.b16 %v1303
        %v1403 = vunpack.c.l.b16 %v1304
        %v1404 = vunpack.c.l.b16 %v1305
        %v1405 = vunpack.c.h.b16 %v1303
        %v1406 = vunpack.c.h.b16 %v1304
        %v1407 = vunpack.c.h.b16 %v1305
        %v1408 = vunpack.c.l.b16 %v1306
        %v1409 = vunpack.c.l.b16 %v1307
        %v1410 = vunpack.c.l.b16 %v1308
        %v1411 = vunpack.c.h.b16 %v1306
        %v1412 = vunpack.c.h.b16 %v1307
        %v1413 = vunpack.c.h.b16 %v1308
        %v1414 = vunpack.c.l.b16 %v1309
        %v1415 = vunpack.c.l.b16 %v1310
        %v1416 = vunpack.c.l.b16 %v1311
        %v1417 = vunpack.c.h.b16 %v1309
        %v1418 = vunpack.c.h.b16 %v1310
        %v1419 = vunpack.c.h.b16 %v1311
        %v1420 = vunpack.c.l.b16 %v1312
        %v1421 = vunpack.c.l.b16 %v1313
        %v1422 = vunpack.c.l.b16 %v1314
        %v1423 = vunpack.c.h.b16 %v1312
        %v1424 = vunpack.c.h.b16 %v1313
        %v1425 = vunpack.c.h.b16 %v1314
        %v1426 = vunpack.c.l.b16 %v1315
        %v1427 = vunpack.c.l.b16 %v1316
        %v1428 = vunpack.c.l.b16 %v1317
        %v1429 = vunpack.c.h.b16 %v1315
        %v1430 = vunpack.c.h.b16 %v1316
        %v1431 = vunpack.c.h.b16 %v1317
        %v1432 = vunpack.c.l.b16 %v1318
        %v1433 = vunpack.c.l.b16 %v1319
        %v1434 = vunpack.c.l.b16 %v1320
        %v1435 = vunpack.c.h.b16 %v1318
        %v1436 = vunpack.c.h.b16 %v1319
        %v1437 = vunpack.c.h.b16 %v1320
        %v1438 = vunpack.c.l.b16 %v1321
        %v1439 = vunpack.c.l.b16 %v1322
        %v1440 = vunpack.c.l.b16 %v1323
        %v1441 = vunpack.c.h.b16 %v1321
        %v1442 = vunpack.c.h.b16 %v1322
        %v1443 = vunpack.c.h.b16 %v1323
        %v1444 = vunpack.c.l.b16 %v1324
        %v1445 = vunpack.c.l.b16 %v1325
        %v1446 = vunpack.c.l.b16 %v1326
        %v1447 = vunpack.c.h.b16 %v1324
        %v1448 = vunpack.c.h.b16 %v1325
        %v1449 = vunpack.c.h.b16 %v1326
        %v1450 = vunpack.c.l.b16 %v1327
        %v1451 = vunpack.c.l.b16 %v1328
        %v1452 = vunpack.c.l.b16 %v1329
        %v1453 = vunpack.c.h.b16 %v1327
        %v1454 = vunpack.c.h.b16 %v1328
        %v1455 = vunpack.c.h.b16 %v1329
        %v1456 = vunpack.c.l.b16 %v1330
        %v1457 = vunpack.c.l.b16 %v1331
        %v1458 = vunpack.c.l.b16 %v1332
        %v1459 = vunpack.c.h.b16 %v1330
        %v1460 = vunpack.c.h.b16 %v1331
        %v1461 = vunpack.c.h.b16 %v1332
        %v1462 = vunpack.c.l.b16 %v1333
        %v1463 = vunpack.c.l.b16 %v1334
        %v1464 = vunpack.c.l.b16 %v1335
        %v1465 = vunpack.c.h.b16 %v1333
        %v1466 = vunpack.c.h.b16 %v1334
        %v1467 = vunpack.c.h.b16 %v1335
        %v1468 = vunpack.c.l.b16 %v1336
        %v1469 = vunpack.c.l.b16 %v1337
        %v1470 = vunpack.c.l.b16 %v1338
        %v1471 = vunpack.c.h.b16 %v1336
        %v1472 = vunpack.c.h.b16 %v1337
        %v1473 = vunpack.c.h.b16 %v1338
        %v1474 = vunpack.c.l.b16 %v1339
        %v1475 = vunpack.c.l.b16 %v1340
        %v1476 = vunpack.c.l.b16 %v1341
        %v1477 = vunpack.c.h.b16 %v1339
        %v1478 = vunpack.c.h.b16 %v1340
        %v1479 = vunpack.c.h.b16 %v1341
        %v1480 = vunpack.c.l.b16 %v1342
        %v1481 = vunpack.c.l.b16 %v1343
        %v1482 = vunpack.c.l.b16 %v1344
        %v1483 = vunpack.c.h.b16 %v1342
        %v1484 = vunpack.c.h.b16 %v1343
        %v1485 = vunpack.c.h.b16 %v1344
        %v1486 = vunpack.c.l.b16 %v1345
        %v1487 = vunpack.c.l.b16 %v1346
        %v1488 = vunpack.c.l.b16 %v1347
        %v1489 = vunpack.c.h.b16 %v1345
        %v1490 = vunpack.c.h.b16 %v1346
        %v1491 = vunpack.c.h.b16 %v1347
        %v1492 = vpack.c.b16 %v1397, %v1396
        %v1493 = vpack.c.b16 %v1398, %v1398
        %v1494 = vpack.c.b16 %v1400, %v1399
        %v1495 = vpack.c.b16 %v1401, %v1401
        %v1496 = vpack.c.b16 %v1403, %v1402
        %v1497 = vpack.c.b16 %v1404, %v1404
        %v1498 = vpack.c.b16 %v1406, %v1405
        %v1499 = vpack.c.b16 %v1407, %v1407
        %v1500 = vpack.c.b16 %v1409, %v1408
        %v1501 = vpack.c.b16 %v1410, %v1410
        %v1502 = vpack.c.b16 %v1412, %v1411
        %v1503 = vpack.c.b16 %v1413, %v1413
        %v1504 = vpack.c.b16 %v1415, %v1414
        %v1505 = vpack.c.b16 %v1416, %v1416
        %v1506 = vpack.c.b16 %v1418, %v1417
        %v1507 = vpack.c.b16 %v1419, %v1419
        %v1508 = vpack.c.b16 %v1421, %v1420
        %v1509 = vpack.c.b16 %v1422, %v1422
        %v1510 = vpack.c.b16 %v1424, %v1423
        %v1511 = vpack.c.b16 %v1425, %v1425
        %v1512 = vpack.c.b16 %v1427, %v1426
        %v1513 = vpack.c.b16 %v1428, %v1428
        %v1514 = vpack.c.b16 %v1430, %v1429
        %v1515 = vpack.c.b16 %v1431, %v1431
        %v1516 = vpack.c.b16 %v1433, %v1432
        %v1517 = vpack.c.b16 %v1434, %v1434
        %v1518 = vpack.c.b16 %v1436, %v1435
        %v1519 = vpack.c.b16 %v1437, %v1437
        %v1520 = vpack.c.b16 %v1439, %v1438
        %v1521 = vpack.c.b16 %v1440, %v1440
        %v1522 = vpack.c.b16 %v1442, %v1441
        %v1523 = vpack.c.b16 %v1443, %v1443
        %v1524 = vpack.c.b16 %v1445, %v1444
        %v1525 = vpack.c.b16 %v1446, %v1446
        %v1526 = vpack.c.b16 %v1448, %v1447
        %v1527 = vpack.c.b16 %v1449, %v1449
        %v1528 = vpack.c.b16 %v1451, %v1450
        %v1529 = vpack.c.b16 %v1452, %v1452
        %v1530 = vpack.c.b16 %v1454, %v1453
        %v1531 = vpack.c.b16 %v1455, %v1455
        %v1532 = vpack.c.b16 %v1457, %v1456
        %v1533 = vpack.c.b16 %v1458, %v1458
        %v1534 = vpack.c.b16 %v1460, %v1459
        %v1535 = vpack.c.b16 %v1461, %v1461
        %v1536 = vpack.c.b16 %v1463, %v1462
        %v1537 = vpack.c.b16 %v1464, %v1464
        %v1538 = vpack.c.b16 %v1466, %v1465
        %v1539 = vpack.c.b16 %v1467, %v1467
        %v1540 = vpack.c.b16 %v1469, %v1468
        %v1541 = vpack.c.b16 %v1470, %v1470
        %v1542 = vpack.c.b16 %v1472, %v1471
        %v1543 = vpack.c.b16 %v1473, %v1473
        %v1544 = vpack.c.b16 %v1475, %v1474
        %v1545 = vpack.c.b16 %v1476, %v1476
        %v1546 = vpack.c.b16 %v1478, %v1477
        %v1547 = vpack.c.b16 %v1479, %v1479
        %v1548 = vpack.c.b16 %v1481, %v1480
        %v1549 = vpack.c.b16 %v1482, %v1482
        %v1550 = vpack.c.b16 %v1484, %v1483
        %v1551 = vpack.c.b16 %v1485, %v1485
        %v1552 = vpack.c.b16 %v1487, %v1486
        %v1553 = vpack.c.b16 %v1488, %v1488
        %v1554 = vpack.c.b16 %v1490, %v1489
        %v1555 = vpack.c.b16 %v1491, %v1491
        %1620 = vst [vmem:[%s241] sm:$0xff] %v1492
        %1621 = vst [vmem:[%s241 + $0x8] sm:$0xf] %v1493
        %1622 = vst [vmem:[%s241 + $0xc] sm:$0xff] %v1494
        %1623 = vst [vmem:[%s241 + $0x14] sm:$0xf] %v1495
        %1624 = vst [vmem:[%s241 + $0x18] sm:$0xff] %v1496
        %1625 = vst [vmem:[%s241 + $0x20] sm:$0xf] %v1497
        %1626 = vst [vmem:[%s241 + $0x24] sm:$0xff] %v1498
        %1627 = vst [vmem:[%s241 + $0x2c] sm:$0xf] %v1499
        %1628 = vst [vmem:[%s241 + $0x30] sm:$0xff] %v1500
        %1629 = vst [vmem:[%s241 + $0x38] sm:$0xf] %v1501
        %1630 = vst [vmem:[%s241 + $0x3c] sm:$0xff] %v1502
        %1631 = vst [vmem:[%s241 + $0x44] sm:$0xf] %v1503
        %1632 = vst [vmem:[%s241 + $0x48] sm:$0xff] %v1504
        %1633 = vst [vmem:[%s241 + $0x50] sm:$0xf] %v1505
        %1634 = vst [vmem:[%s241 + $0x54] sm:$0xff] %v1506
        %1635 = vst [vmem:[%s241 + $0x5c] sm:$0xf] %v1507
        %1636 = vst [vmem:[%s241 + $0x60] sm:$0xff] %v1508
        %1637 = vst [vmem:[%s241 + $0x68] sm:$0xf] %v1509
        %1638 = vst [vmem:[%s241 + $0x6c] sm:$0xff] %v1510
        %1639 = vst [vmem:[%s241 + $0x74] sm:$0xf] %v1511
        %1640 = vst [vmem:[%s241 + $0x78] sm:$0xff] %v1512
        %1641 = vst [vmem:[%s241 + $0x80] sm:$0xf] %v1513
        %1642 = vst [vmem:[%s241 + $0x84] sm:$0xff] %v1514
        %1643 = vst [vmem:[%s241 + $0x8c] sm:$0xf] %v1515
        %1644 = vst [vmem:[%s241 + $0x90] sm:$0xff] %v1516
        %1645 = vst [vmem:[%s241 + $0x98] sm:$0xf] %v1517
        %1646 = vst [vmem:[%s241 + $0x9c] sm:$0xff] %v1518
        %1647 = vst [vmem:[%s241 + $0xa4] sm:$0xf] %v1519
        %1648 = vst [vmem:[%s241 + $0xa8] sm:$0xff] %v1520
        %1649 = vst [vmem:[%s241 + $0xb0] sm:$0xf] %v1521
        %1650 = vst [vmem:[%s241 + $0xb4] sm:$0xff] %v1522
        %1651 = vst [vmem:[%s241 + $0xbc] sm:$0xf] %v1523
        %1652 = vst [vmem:[%s241 + $0xc0] sm:$0xff] %v1524
        %1653 = vst [vmem:[%s241 + $0xc8] sm:$0xf] %v1525
        %1654 = vst [vmem:[%s241 + $0xcc] sm:$0xff] %v1526
        %1655 = vst [vmem:[%s241 + $0xd4] sm:$0xf] %v1527
        %1656 = vst [vmem:[%s241 + $0xd8] sm:$0xff] %v1528
        %1657 = vst [vmem:[%s241 + $0xe0] sm:$0xf] %v1529
        %1658 = vst [vmem:[%s241 + $0xe4] sm:$0xff] %v1530
        %1659 = vst [vmem:[%s241 + $0xec] sm:$0xf] %v1531
        %1660 = vst [vmem:[%s241 + $0xf0] sm:$0xff] %v1532
        %1661 = vst [vmem:[%s241 + $0xf8] sm:$0xf] %v1533
        %1662 = vst [vmem:[%s241 + $0xfc] sm:$0xff] %v1534
        %1663 = vst [vmem:[%s241 + $0x104] sm:$0xf] %v1535
        %1664 = vst [vmem:[%s241 + $0x108] sm:$0xff] %v1536
        %1665 = vst [vmem:[%s241 + $0x110] sm:$0xf] %v1537
        %1666 = vst [vmem:[%s241 + $0x114] sm:$0xff] %v1538
        %1667 = vst [vmem:[%s241 + $0x11c] sm:$0xf] %v1539
        %1668 = vst [vmem:[%s241 + $0x120] sm:$0xff] %v1540
        %1669 = vst [vmem:[%s241 + $0x128] sm:$0xf] %v1541
        %1670 = vst [vmem:[%s241 + $0x12c] sm:$0xff] %v1542
        %1671 = vst [vmem:[%s241 + $0x134] sm:$0xf] %v1543
        %1672 = vst [vmem:[%s241 + $0x138] sm:$0xff] %v1544
        %1673 = vst [vmem:[%s241 + $0x140] sm:$0xf] %v1545
        %1674 = vst [vmem:[%s241 + $0x144] sm:$0xff] %v1546
        %1675 = vst [vmem:[%s241 + $0x14c] sm:$0xf] %v1547
        %1676 = vst [vmem:[%s241 + $0x150] sm:$0xff] %v1548
        %1677 = vst [vmem:[%s241 + $0x158] sm:$0xf] %v1549
        %1678 = vst [vmem:[%s241 + $0x15c] sm:$0xff] %v1550
        %1679 = vst [vmem:[%s241 + $0x164] sm:$0xf] %v1551
        %1680 = vst [vmem:[%s241 + $0x168] sm:$0xff] %v1552
        %1681 = vst [vmem:[%s241 + $0x170] sm:$0xf] %v1553
        %1682 = vst [vmem:[%s241 + $0x174] sm:$0xff] %v1554
        %1683 = vst [vmem:[%s241 + $0x17c] sm:$0xf] %v1555
        %s1684 = smul.u32 32, %s17
        %p1685 = scmp.lt.s32.totalorder %s1684, 127
        %s1686 = scalar_select %p1685, %s1684, 127
        %s1687 = smul.addr %s1686, 3
        %s1688 = smul.addr %s1687, 4
        %s1689 = scalar_lea.vmem %s4, %s1688
        // Predicated region
        $region49: #{transformer_forward.6} parent=35 // pred_check
          %p1690 = pneg %p124
        $region50: #{transformer_forward.6} parent=35 // pred_check_branch
          %1692 = sbr.rel (%p1690) target = $region52
        $region51: #{transformer_forward.6} parent=35 // pred_region
          %s1693 = smul.u32 32, %s17
        $region52: #{transformer_forward.6} parent=35 // pred_fallthru
          _
      $region36: #{transformer_forward.6} parent=5 // pred_fallthru
        _
      %p1694 = scmp.le.s32.totalorder 2, %s12
      // Predicated region
      $region53: #{transformer_forward.6} parent=5 // pred_check
        %p1695 = pneg %p1694
      $region54: #{transformer_forward.6} parent=5 // pred_check_branch
        %1697 = sbr.rel (%p1695) target = $region56
      $region55: #{transformer_forward.6} parent=5 // pred_region
        %s1698 = ssub.s32 %s12, 2
        // Predicated region
        $region57: #{transformer_forward.6} parent=55 // pred_check
          %p1699 = pneg %p130
        $region58: #{transformer_forward.6} parent=55 // pred_check_branch
          %1701 = sbr.rel (%p1699) target = $region60
        $region59: #{transformer_forward.6} parent=55 // pred_region
          %s1702 = smul.u32 32, %s18
          %p1703 = scmp.lt.s32.totalorder %s1702, 127
          %s1704 = scalar_select %p1703, %s1702, 127
          %s1705 = smul.addr %s1704, 3
          %s1706 = smul.addr %s1705, 4
          %s1707 = scalar_lea.vmem %s4, %s1706
        $region60: #{transformer_forward.6} parent=55 // pred_fallthru
          _
      $region56: #{transformer_forward.6} parent=5 // pred_fallthru
        _
    $region6: #{transformer_forward.6} parent=1 // loop_footer
      %s16 = sadd.s32 1, %s12
    $region7: #{transformer_forward.6} parent=1 // loop_footer_branch
      %11 = sbr.rel target = $region3
    $region8: #{transformer_forward.6} parent=1 // loop_exit
      _
    %1708 = vsyncpa [#allocation3], 1
    %s1709 = scalar_lea.sflag [#allocation3], 1
    %1710 = vsyncpa %s1709, 1
    %1711 = vsyncpa [#allocation5], 1

// kernel: transformer_forward.7
$region0: #{transformer_forward.7}
  #allocation0 [shape = 'u32[]', space=smem, size = 0x4, offset = 0x4, fixed_abs, tag = 'smem constant byte address 0x4 - core index']
  #allocation1 [shape = 'u32[144,128]{1,0:T(1,128)}', space=vmem, size = 0x12000, scoped, tag = 'internal scratch']
  #allocation2 [shape = 'f32[256,1]{1,0:T(8,128)}', space=vmem, size = 0x20000, scoped, tag = 'scratch operand']
  #allocation3 [shape = 'f32[256,1]{1,0:T(8,128)}', space=vmem, size = 0x20000, scoped, tag = 'scratch operand']
  #allocation4 [shape = 'f32[256,32]{1,0:T(8,128)}', space=vmem, size = 0x20000, scoped, tag = 'scratch operand']
  %s0 = inlined_call_operand.vmem [shape: bf16[8,512,32], index: 0, kind: input, shape index: {}]
  %s1 = inlined_call_operand.vmem [shape: bf16[8,512,32], index: 1, kind: input, shape index: {}]
  %s2 = inlined_call_operand.vmem [shape: bf16[8,512,32], index: 2, kind: input, shape index: {}]
  %s3 = inlined_call_operand.vmem [shape: f32[8,512,32], index: 3, kind: output, shape index: {}]
  %s4 = sld [smem:[#allocation0]]
  $region53: #{transformer_forward.7} parent=0
    _
  %s6 = ssub.s32 1, %s4
  %s7 = scalar_select 0, %s6, %s4
  loop: start=0, step=1, limit=34
  $region2: #{transformer_forward.7} parent=0 // loop_pre_header
    _
  $region3: #{transformer_forward.7} parent=0 // loop_header
    %s9 = sphi 0, %s13
    %p10 = scmp.ge.s32.totalorder %s9, 34
    %s16 = sphi 0, %s35
    %s17 = sphi 0, %s31
    %s18 = sphi 0, %s27
    %s19 = sphi 0, %s16
    %s20 = sphi 0, %s17
    %s21 = sphi 0, %s18
    %s22 = sphi 0, %s19
    %s23 = sphi 0, %s20
    %s24 = sphi 0, %s21
    %s40 = sphi 0, %s42
    %s43 = sphi 0, %s40
    %s44 = sphi 0, %s43
    %s60 = sphi 0, %s44
    %s68 = sphi 0, %s70
    %s71 = sphi 0, %s68
    %s72 = sphi 0, %s71
    %s88 = sphi 0, %s72
    %s96 = sphi 0, %s98
    %s99 = sphi 0, %s96
    %s100 = sphi 0, %s99
    %s116 = sphi 0, %s100
    %s124 = sphi 0, %s126
    %s127 = sphi 0, %s124
    %s128 = sphi 0, %s127
    %s144 = sphi 0, %s128
  $region4: #{transformer_forward.7} parent=0 // loop_header_branch
    %12 = sbr.rel (%p10) target = $region8
  $region5: #{transformer_forward.7} parent=0 // loop_body
    %s14 = ssub.s32 %s9, 1
    %s15 = ssub.s32 %s9, 2
    %s25 = sadd.s32 1, %s18
    %p26 = scmp.ge.s32.totalorder %s25, 2
    %s27 = scalar_select %p26, 0, %s25
    %s28 = sadd.s32 1, %s17
    %s29 = scalar_select %p26, %s28, %s17
    %p30 = scmp.ge.s32.totalorder %s29, 2
    %s31 = scalar_select %p30, 0, %s29
    %s32 = sadd.s32 1, %s16
    %s33 = scalar_select %p30, %s32, %s16
    %p34 = scmp.ge.s32.totalorder %s33, 8
    %s35 = scalar_select %p34, 0, %s33
    %s36 = ssub.s32 %s16, %s35
    %s37 = ssub.s32 %s17, %s31
    %s38 = sor.u32 %s36, %s37
    %p39 = scmp.eq.s32.totalorder %s38, 0
    %s41 = sadd.s32 %s40, 1
    %s42 = scalar_select %p39, %s40, %s41
    %p45 = pneg %p39
    %p46 = scmp.eq.s32.totalorder %s9, 31
    %p47 = por %p45, %p46
    %p48 = scmp.ne.s32.totalorder %s40, %s43
    %p49 = scmp.eq.s32.totalorder %s9, 0
    %p50 = por %p48, %p49
    %p51 = scmp.ne.s32.totalorder %s40, %s43
    %p52 = scmp.eq.s32.totalorder %s14, 31
    %p53 = por %p51, %p52
    %p54 = scmp.ne.s32.totalorder %s43, %s44
    %p55 = scmp.eq.s32.totalorder %s14, 0
    %p56 = por %p54, %p55
    %p57 = scmp.ne.s32.totalorder %s43, %s44
    %p58 = scmp.eq.s32.totalorder %s15, 31
    %p59 = por %p57, %p58
    %p61 = scmp.ne.s32.totalorder %s44, %s60
    %p62 = scmp.eq.s32.totalorder %s15, 0
    %p63 = por %p61, %p62
    %s64 = ssub.s32 %s16, %s35
    %s65 = ssub.s32 %s18, %s27
    %s66 = sor.u32 %s64, %s65
    %p67 = scmp.eq.s32.totalorder %s66, 0
    %s69 = sadd.s32 %s68, 1
    %s70 = scalar_select %p67, %s68, %s69
    %p73 = pneg %p67
    %p74 = scmp.eq.s32.totalorder %s9, 31
    %p75 = por %p73, %p74
    %p76 = scmp.ne.s32.totalorder %s68, %s71
    %p77 = scmp.eq.s32.totalorder %s9, 0
    %p78 = por %p76, %p77
    %p79 = scmp.ne.s32.totalorder %s68, %s71
    %p80 = scmp.eq.s32.totalorder %s14, 31
    %p81 = por %p79, %p80
    %p82 = scmp.ne.s32.totalorder %s71, %s72
    %p83 = scmp.eq.s32.totalorder %s14, 0
    %p84 = por %p82, %p83
    %p85 = scmp.ne.s32.totalorder %s71, %s72
    %p86 = scmp.eq.s32.totalorder %s15, 31
    %p87 = por %p85, %p86
    %p89 = scmp.ne.s32.totalorder %s72, %s88
    %p90 = scmp.eq.s32.totalorder %s15, 0
    %p91 = por %p89, %p90
    %s92 = ssub.s32 %s16, %s35
    %s93 = ssub.s32 %s18, %s27
    %s94 = sor.u32 %s92, %s93
    %p95 = scmp.eq.s32.totalorder %s94, 0
    %s97 = sadd.s32 %s96, 1
    %s98 = scalar_select %p95, %s96, %s97
    %p101 = pneg %p95
    %p102 = scmp.eq.s32.totalorder %s9, 31
    %p103 = por %p101, %p102
    %p104 = scmp.ne.s32.totalorder %s96, %s99
    %p105 = scmp.eq.s32.totalorder %s9, 0
    %p106 = por %p104, %p105
    %p107 = scmp.ne.s32.totalorder %s96, %s99
    %p108 = scmp.eq.s32.totalorder %s14, 31
    %p109 = por %p107, %p108
    %p110 = scmp.ne.s32.totalorder %s99, %s100
    %p111 = scmp.eq.s32.totalorder %s14, 0
    %p112 = por %p110, %p111
    %p113 = scmp.ne.s32.totalorder %s99, %s100
    %p114 = scmp.eq.s32.totalorder %s15, 31
    %p115 = por %p113, %p114
    %p117 = scmp.ne.s32.totalorder %s100, %s116
    %p118 = scmp.eq.s32.totalorder %s15, 0
    %p119 = por %p117, %p118
    %s120 = ssub.s32 %s16, %s35
    %s121 = ssub.s32 %s17, %s31
    %s122 = sor.u32 %s120, %s121
    %p123 = scmp.eq.s32.totalorder %s122, 0
    %s125 = sadd.s32 %s124, 1
    %s126 = scalar_select %p123, %s124, %s125
    %p129 = pneg %p123
    %p130 = scmp.eq.s32.totalorder %s9, 31
    %p131 = por %p129, %p130
    %p132 = scmp.ne.s32.totalorder %s124, %s127
    %p133 = scmp.eq.s32.totalorder %s9, 0
    %p134 = por %p132, %p133
    %p135 = scmp.ne.s32.totalorder %s124, %s127
    %p136 = scmp.eq.s32.totalorder %s14, 31
    %p137 = por %p135, %p136
    %p138 = scmp.ne.s32.totalorder %s127, %s128
    %p139 = scmp.eq.s32.totalorder %s14, 0
    %p140 = por %p138, %p139
    %p141 = scmp.ne.s32.totalorder %s127, %s128
    %p142 = scmp.eq.s32.totalorder %s15, 31
    %p143 = por %p141, %p142
    %p145 = scmp.ne.s32.totalorder %s128, %s144
    %p146 = scmp.eq.s32.totalorder %s15, 0
    %p147 = por %p145, %p146
    %p148 = scmp.le.s32.totalorder 1, %s9
    %p149 = scmp.lt.s32.totalorder %s9, 33
    %p150 = pnand %p148, %p149
    %p151 = pneg %p150
    // Predicated region
    $region9: #{transformer_forward.7} parent=5 // pred_check
      _
    $region10: #{transformer_forward.7} parent=5 // pred_check_branch
      %153 = sbr.rel (%p150) target = $region12
    $region11: #{transformer_forward.7} parent=5 // pred_region
      %s154 = ssub.s32 %s9, 1
    $region12: #{transformer_forward.7} parent=5 // pred_fallthru
      _
    %p155 = scmp.lt.s32.totalorder %s9, 32
    // Predicated region
    $region13: #{transformer_forward.7} parent=5 // pred_check
      %p156 = pneg %p155
    $region14: #{transformer_forward.7} parent=5 // pred_check_branch
      %158 = sbr.rel (%p156) target = $region16
    $region15: #{transformer_forward.7} parent=5 // pred_region
      // Predicated region
      $region17: #{transformer_forward.7} parent=15 // pred_check
        %p159 = pneg %p50
      $region18: #{transformer_forward.7} parent=15 // pred_check_branch
        %161 = sbr.rel (%p159) target = $region20
      $region19: #{transformer_forward.7} parent=15 // pred_region
        %s162 = smul.u32 32, %s17
        %p163 = scmp.lt.s32.totalorder %s16, 7
        %s164 = scalar_select %p163, %s16, 7
        %p165 = scmp.lt.s32.totalorder %s162, 63
        %s166 = scalar_select %p165, %s162, 63
        %s167 = smul.addr %s164, 64
        %s168 = sadd.s32 %s166, %s167
        %s169 = smul.addr %s168, 4
        %s170 = scalar_lea.vmem %s0, %s169
        %s171 = smul.u32 32, %s17
      $region20: #{transformer_forward.7} parent=15 // pred_fallthru
        _
      // Predicated region
      $region21: #{transformer_forward.7} parent=15 // pred_check
        %p172 = pneg %p78
      $region22: #{transformer_forward.7} parent=15 // pred_check_branch
        %174 = sbr.rel (%p172) target = $region24
      $region23: #{transformer_forward.7} parent=15 // pred_region
        %s175 = smul.u32 32, %s18
        %p176 = scmp.lt.s32.totalorder %s16, 7
        %s177 = scalar_select %p176, %s16, 7
        %p178 = scmp.lt.s32.totalorder %s175, 63
        %s179 = scalar_select %p178, %s175, 63
        %s180 = smul.addr %s177, 64
        %s181 = sadd.s32 %s179, %s180
        %s182 = smul.addr %s181, 4
        %s183 = scalar_lea.vmem %s1, %s182
        %s184 = smul.u32 32, %s18
      $region24: #{transformer_forward.7} parent=15 // pred_fallthru
        _
      // Predicated region
      $region25: #{transformer_forward.7} parent=15 // pred_check
        %p185 = pneg %p106
      $region26: #{transformer_forward.7} parent=15 // pred_check_branch
        %187 = sbr.rel (%p185) target = $region28
      $region27: #{transformer_forward.7} parent=15 // pred_region
        %s188 = smul.u32 32, %s18
        %p189 = scmp.lt.s32.totalorder %s16, 7
        %s190 = scalar_select %p189, %s16, 7
        %p191 = scmp.lt.s32.totalorder %s188, 63
        %s192 = scalar_select %p191, %s188, 63
        %s193 = smul.addr %s190, 64
        %s194 = sadd.s32 %s192, %s193
        %s195 = smul.addr %s194, 4
        %s196 = scalar_lea.vmem %s2, %s195
        %s197 = smul.u32 32, %s18
      $region28: #{transformer_forward.7} parent=15 // pred_fallthru
        _
    $region16: #{transformer_forward.7} parent=5 // pred_fallthru
      _
    %p198 = scmp.le.s32.totalorder 1, %s9
    %p199 = scmp.lt.s32.totalorder %s9, 33
    %p200 = pnand %p198, %p199
    %p201 = pneg %p200
    // Predicated region
    $region29: #{transformer_forward.7} parent=5 // pred_check
      _
    $region30: #{transformer_forward.7} parent=5 // pred_check_branch
      %203 = sbr.rel (%p200) target = $region32
    $region31: #{transformer_forward.7} parent=5 // pred_region
      %s204 = ssub.s32 %s9, 1
      %s205 = smul.u32 32, %s20
      %p206 = scmp.lt.s32.totalorder %s19, 7
      %s207 = scalar_select %p206, %s19, 7
      %p208 = scmp.lt.s32.totalorder %s205, 63
      %s209 = scalar_select %p208, %s205, 63
      %s210 = smul.addr %s207, 64
      %s211 = sadd.s32 %s209, %s210
      %s212 = smul.addr %s211, 4
      %s213 = scalar_lea.vmem %s0, %s212
      %p214 = pneg %p56
      %p215 = pneg %p53
      %s216 = smul.u32 32, %s21
      %p217 = scmp.lt.s32.totalorder %s19, 7
      %s218 = scalar_select %p217, %s19, 7
      %p219 = scmp.lt.s32.totalorder %s216, 63
      %s220 = scalar_select %p219, %s216, 63
      %s221 = smul.addr %s218, 64
      %s222 = sadd.s32 %s220, %s221
      %s223 = smul.addr %s222, 4
      %s224 = scalar_lea.vmem %s1, %s223
      %p225 = pneg %p84
      %p226 = pneg %p81
      %s227 = smul.u32 32, %s21
      %p228 = scmp.lt.s32.totalorder %s19, 7
      %s229 = scalar_select %p228, %s19, 7
      %p230 = scmp.lt.s32.totalorder %s227, 63
      %s231 = scalar_select %p230, %s227, 63
      %s232 = smul.addr %s229, 64
      %s233 = sadd.s32 %s231, %s232
      %s234 = smul.addr %s233, 4
      %s235 = scalar_lea.vmem %s2, %s234
      %p236 = pneg %p112
      %p237 = pneg %p109
      %p238 = pneg %p140
      %p239 = pneg %p137
      %s240 = smul.u32 32, %s20
      %p241 = scmp.lt.s32.totalorder %s19, 7
      %s242 = scalar_select %p241, %s19, 7
      %p243 = scmp.lt.s32.totalorder %s240, 63
      %s244 = scalar_select %p243, %s240, 63
      %s245 = smul.addr %s242, 64
      %s246 = sadd.s32 %s244, %s245
      %s247 = smul.addr %s246, 8
      %s248 = scalar_lea.vmem %s3, %s247
      %s249 = smul.u32 32, %s20
      %p250 = scmp.lt.s32.totalorder %s19, 7
      %s251 = scalar_select %p250, %s19, 7
      %p252 = scmp.lt.s32.totalorder %s249, 63
      %s253 = scalar_select %p252, %s249, 63
      %s254 = smul.addr %s251, 64
      %s255 = sadd.s32 %s253, %s254
      %s256 = smul.addr %s255, 4
      %s257 = scalar_lea.vmem %s0, %s256
      %s258 = smul.u32 32, %s20
      %s259 = smul.u32 32, %s21
      %p260 = scmp.lt.s32.totalorder %s19, 7
      %s261 = scalar_select %p260, %s19, 7
      %p262 = scmp.lt.s32.totalorder %s259, 63
      %s263 = scalar_select %p262, %s259, 63
      %s264 = smul.addr %s261, 64
      %s265 = sadd.s32 %s263, %s264
      %s266 = smul.addr %s265, 4
      %s267 = scalar_lea.vmem %s1, %s266
      %s268 = smul.u32 32, %s21
      %s269 = smul.u32 32, %s21
      %p270 = scmp.lt.s32.totalorder %s19, 7
      %s271 = scalar_select %p270, %s19, 7
      %p272 = scmp.lt.s32.totalorder %s269, 63
      %s273 = scalar_select %p272, %s269, 63
      %s274 = smul.addr %s271, 64
      %s275 = sadd.s32 %s273, %s274
      %s276 = smul.addr %s275, 4
      %s277 = scalar_lea.vmem %s2, %s276
      %s278 = smul.u32 32, %s21
      %s279 = smul.u32 32, %s20
      %p280 = scmp.lt.s32.totalorder %s19, 7
      %s281 = scalar_select %p280, %s19, 7
      %p282 = scmp.lt.s32.totalorder %s279, 63
      %s283 = scalar_select %p282, %s279, 63
      %s284 = smul.addr %s281, 64
      %s285 = sadd.s32 %s283, %s284
      %s286 = smul.addr %s285, 8
      %s287 = scalar_lea.vmem %s3, %s286
      %s288 = smul.u32 32, %s20
      %p290 = scmp.eq.s32.totalorder %s21, 0
      // Predicated region
      $region33: #{transformer_forward.7} parent=31 // pred_check
        %p291 = pneg %p290
      $region34: #{transformer_forward.7} parent=31 // pred_check_branch
        %293 = sbr.rel (%p291) target = $region36
      $region35: #{transformer_forward.7} parent=31 // pred_region
        %vm294 = vcmask 7168
        %295 = vst.msk [vmem:[#allocation2] sm:$0xff] %vm294, -inf
        %296 = vst.msk [vmem:[#allocation2 + $0x8] sm:$0xff] %vm294, -inf
        %297 = vst.msk [vmem:[#allocation2 + $0x10] sm:$0xff] %vm294, -inf
        %298 = vst.msk [vmem:[#allocation2 + $0x18] sm:$0xff] %vm294, -inf
        %299 = vst.msk [vmem:[#allocation2 + $0x20] sm:$0xff] %vm294, -inf
        %300 = vst.msk [vmem:[#allocation2 + $0x28] sm:$0xff] %vm294, -inf
        %301 = vst.msk [vmem:[#allocation2 + $0x30] sm:$0xff] %vm294, -inf
        %302 = vst.msk [vmem:[#allocation2 + $0x38] sm:$0xff] %vm294, -inf
        %303 = vst.msk [vmem:[#allocation2 + $0x40] sm:$0xff] %vm294, -inf
        %304 = vst.msk [vmem:[#allocation2 + $0x48] sm:$0xff] %vm294, -inf
        %305 = vst.msk [vmem:[#allocation2 + $0x50] sm:$0xff] %vm294, -inf
        %306 = vst.msk [vmem:[#allocation2 + $0x58] sm:$0xff] %vm294, -inf
        %307 = vst.msk [vmem:[#allocation2 + $0x60] sm:$0xff] %vm294, -inf
        %308 = vst.msk [vmem:[#allocation2 + $0x68] sm:$0xff] %vm294, -inf
        %309 = vst.msk [vmem:[#allocation2 + $0x70] sm:$0xff] %vm294, -inf
        %310 = vst.msk [vmem:[#allocation2 + $0x78] sm:$0xff] %vm294, -inf
        %311 = vst.msk [vmem:[#allocation2 + $0x80] sm:$0xff] %vm294, -inf
        %312 = vst.msk [vmem:[#allocation2 + $0x88] sm:$0xff] %vm294, -inf
        %313 = vst.msk [vmem:[#allocation2 + $0x90] sm:$0xff] %vm294, -inf
        %314 = vst.msk [vmem:[#allocation2 + $0x98] sm:$0xff] %vm294, -inf
        %315 = vst.msk [vmem:[#allocation2 + $0xa0] sm:$0xff] %vm294, -inf
        %316 = vst.msk [vmem:[#allocation2 + $0xa8] sm:$0xff] %vm294, -inf
        %317 = vst.msk [vmem:[#allocation2 + $0xb0] sm:$0xff] %vm294, -inf
        %318 = vst.msk [vmem:[#allocation2 + $0xb8] sm:$0xff] %vm294, -inf
        %319 = vst.msk [vmem:[#allocation2 + $0xc0] sm:$0xff] %vm294, -inf
        %320 = vst.msk [vmem:[#allocation2 + $0xc8] sm:$0xff] %vm294, -inf
        %321 = vst.msk [vmem:[#allocation2 + $0xd0] sm:$0xff] %vm294, -inf
        %322 = vst.msk [vmem:[#allocation2 + $0xd8] sm:$0xff] %vm294, -inf
        %323 = vst.msk [vmem:[#allocation2 + $0xe0] sm:$0xff] %vm294, -inf
        %324 = vst.msk [vmem:[#allocation2 + $0xe8] sm:$0xff] %vm294, -inf
        %325 = vst.msk [vmem:[#allocation2 + $0xf0] sm:$0xff] %vm294, -inf
        %326 = vst.msk [vmem:[#allocation2 + $0xf8] sm:$0xff] %vm294, -inf
        %327 = vst.msk [vmem:[#allocation3] sm:$0xff] %vm294, 0.0
        %328 = vst.msk [vmem:[#allocation3 + $0x8] sm:$0xff] %vm294, 0.0
        %329 = vst.msk [vmem:[#allocation3 + $0x10] sm:$0xff] %vm294, 0.0
        %330 = vst.msk [vmem:[#allocation3 + $0x18] sm:$0xff] %vm294, 0.0
        %331 = vst.msk [vmem:[#allocation3 + $0x20] sm:$0xff] %vm294, 0.0
        %332 = vst.msk [vmem:[#allocation3 + $0x28] sm:$0xff] %vm294, 0.0
        %333 = vst.msk [vmem:[#allocation3 + $0x30] sm:$0xff] %vm294, 0.0
        %334 = vst.msk [vmem:[#allocation3 + $0x38] sm:$0xff] %vm294, 0.0
        %335 = vst.msk [vmem:[#allocation3 + $0x40] sm:$0xff] %vm294, 0.0
        %336 = vst.msk [vmem:[#allocation3 + $0x48] sm:$0xff] %vm294, 0.0
        %337 = vst.msk [vmem:[#allocation3 + $0x50] sm:$0xff] %vm294, 0.0
        %338 = vst.msk [vmem:[#allocation3 + $0x58] sm:$0xff] %vm294, 0.0
        %339 = vst.msk [vmem:[#allocation3 + $0x60] sm:$0xff] %vm294, 0.0
        %340 = vst.msk [vmem:[#allocation3 + $0x68] sm:$0xff] %vm294, 0.0
        %341 = vst.msk [vmem:[#allocation3 + $0x70] sm:$0xff] %vm294, 0.0
        %342 = vst.msk [vmem:[#allocation3 + $0x78] sm:$0xff] %vm294, 0.0
        %343 = vst.msk [vmem:[#allocation3 + $0x80] sm:$0xff] %vm294, 0.0
        %344 = vst.msk [vmem:[#allocation3 + $0x88] sm:$0xff] %vm294, 0.0
        %345 = vst.msk [vmem:[#allocation3 + $0x90] sm:$0xff] %vm294, 0.0
        %346 = vst.msk [vmem:[#allocation3 + $0x98] sm:$0xff] %vm294, 0.0
        %347 = vst.msk [vmem:[#allocation3 + $0xa0] sm:$0xff] %vm294, 0.0
        %348 = vst.msk [vmem:[#allocation3 + $0xa8] sm:$0xff] %vm294, 0.0
        %349 = vst.msk [vmem:[#allocation3 + $0xb0] sm:$0xff] %vm294, 0.0
        %350 = vst.msk [vmem:[#allocation3 + $0xb8] sm:$0xff] %vm294, 0.0
        %351 = vst.msk [vmem:[#allocation3 + $0xc0] sm:$0xff] %vm294, 0.0
        %352 = vst.msk [vmem:[#allocation3 + $0xc8] sm:$0xff] %vm294, 0.0
        %353 = vst.msk [vmem:[#allocation3 + $0xd0] sm:$0xff] %vm294, 0.0
        %354 = vst.msk [vmem:[#allocation3 + $0xd8] sm:$0xff] %vm294, 0.0
        %355 = vst.msk [vmem:[#allocation3 + $0xe0] sm:$0xff] %vm294, 0.0
        %356 = vst.msk [vmem:[#allocation3 + $0xe8] sm:$0xff] %vm294, 0.0
        %357 = vst.msk [vmem:[#allocation3 + $0xf0] sm:$0xff] %vm294, 0.0
        %358 = vst.msk [vmem:[#allocation3 + $0xf8] sm:$0xff] %vm294, 0.0
        %vm359 = vcmask 261120
        %360 = vst.msk [vmem:[#allocation4] sm:$0xff] %vm359, 0.0
        %361 = vst.msk [vmem:[#allocation4 + $0x8] sm:$0xff] %vm359, 0.0
        %362 = vst.msk [vmem:[#allocation4 + $0x10] sm:$0xff] %vm359, 0.0
        %363 = vst.msk [vmem:[#allocation4 + $0x18] sm:$0xff] %vm359, 0.0
        %364 = vst.msk [vmem:[#allocation4 + $0x20] sm:$0xff] %vm359, 0.0
        %365 = vst.msk [vmem:[#allocation4 + $0x28] sm:$0xff] %vm359, 0.0
        %366 = vst.msk [vmem:[#allocation4 + $0x30] sm:$0xff] %vm359, 0.0
        %367 = vst.msk [vmem:[#allocation4 + $0x38] sm:$0xff] %vm359, 0.0
        %368 = vst.msk [vmem:[#allocation4 + $0x40] sm:$0xff] %vm359, 0.0
        %369 = vst.msk [vmem:[#allocation4 + $0x48] sm:$0xff] %vm359, 0.0
        %370 = vst.msk [vmem:[#allocation4 + $0x50] sm:$0xff] %vm359, 0.0
        %371 = vst.msk [vmem:[#allocation4 + $0x58] sm:$0xff] %vm359, 0.0
        %372 = vst.msk [vmem:[#allocation4 + $0x60] sm:$0xff] %vm359, 0.0
        %373 = vst.msk [vmem:[#allocation4 + $0x68] sm:$0xff] %vm359, 0.0
        %374 = vst.msk [vmem:[#allocation4 + $0x70] sm:$0xff] %vm359, 0.0
        %375 = vst.msk [vmem:[#allocation4 + $0x78] sm:$0xff] %vm359, 0.0
        %376 = vst.msk [vmem:[#allocation4 + $0x80] sm:$0xff] %vm359, 0.0
        %377 = vst.msk [vmem:[#allocation4 + $0x88] sm:$0xff] %vm359, 0.0
        %378 = vst.msk [vmem:[#allocation4 + $0x90] sm:$0xff] %vm359, 0.0
        %379 = vst.msk [vmem:[#allocation4 + $0x98] sm:$0xff] %vm359, 0.0
        %380 = vst.msk [vmem:[#allocation4 + $0xa0] sm:$0xff] %vm359, 0.0
        %381 = vst.msk [vmem:[#allocation4 + $0xa8] sm:$0xff] %vm359, 0.0
        %382 = vst.msk [vmem:[#allocation4 + $0xb0] sm:$0xff] %vm359, 0.0
        %383 = vst.msk [vmem:[#allocation4 + $0xb8] sm:$0xff] %vm359, 0.0
        %384 = vst.msk [vmem:[#allocation4 + $0xc0] sm:$0xff] %vm359, 0.0
        %385 = vst.msk [vmem:[#allocation4 + $0xc8] sm:$0xff] %vm359, 0.0
        %386 = vst.msk [vmem:[#allocation4 + $0xd0] sm:$0xff] %vm359, 0.0
        %387 = vst.msk [vmem:[#allocation4 + $0xd8] sm:$0xff] %vm359, 0.0
        %388 = vst.msk [vmem:[#allocation4 + $0xe0] sm:$0xff] %vm359, 0.0
        %389 = vst.msk [vmem:[#allocation4 + $0xe8] sm:$0xff] %vm359, 0.0
        %390 = vst.msk [vmem:[#allocation4 + $0xf0] sm:$0xff] %vm359, 0.0
        %391 = vst.msk [vmem:[#allocation4 + $0xf8] sm:$0xff] %vm359, 0.0
      $region36: #{transformer_forward.7} parent=31 // pred_fallthru
        _
      %v392 = vld [vmem:[%s257] sm:$0xf]
      %v393 = vld [vmem:[%s257 + $0x4] sm:$0xf]
      %v394 = vld [vmem:[%s257 + $0x8] sm:$0xf]
      %v395 = vld [vmem:[%s257 + $0xc] sm:$0xf]
      %v396 = vld [vmem:[%s257 + $0x10] sm:$0xf]
      %v397 = vld [vmem:[%s257 + $0x14] sm:$0xf]
      %v398 = vld [vmem:[%s257 + $0x18] sm:$0xf]
      %v399 = vld [vmem:[%s257 + $0x1c] sm:$0xf]
      %v400 = vld [vmem:[%s257 + $0x20] sm:$0xf]
      %v401 = vld [vmem:[%s257 + $0x24] sm:$0xf]
      %v402 = vld [vmem:[%s257 + $0x28] sm:$0xf]
      %v403 = vld [vmem:[%s257 + $0x2c] sm:$0xf]
      %v404 = vld [vmem:[%s257 + $0x30] sm:$0xf]
      %v405 = vld [vmem:[%s257 + $0x34] sm:$0xf]
      %v406 = vld [vmem:[%s257 + $0x38] sm:$0xf]
      %v407 = vld [vmem:[%s257 + $0x3c] sm:$0xf]
      %v408 = vld [vmem:[%s257 + $0x40] sm:$0xf]
      %v409 = vld [vmem:[%s257 + $0x44] sm:$0xf]
      %v410 = vld [vmem:[%s257 + $0x48] sm:$0xf]
      %v411 = vld [vmem:[%s257 + $0x4c] sm:$0xf]
      %v412 = vld [vmem:[%s257 + $0x50] sm:$0xf]
      %v413 = vld [vmem:[%s257 + $0x54] sm:$0xf]
      %v414 = vld [vmem:[%s257 + $0x58] sm:$0xf]
      %v415 = vld [vmem:[%s257 + $0x5c] sm:$0xf]
      %v416 = vld [vmem:[%s257 + $0x60] sm:$0xf]
      %v417 = vld [vmem:[%s257 + $0x64] sm:$0xf]
      %v418 = vld [vmem:[%s257 + $0x68] sm:$0xf]
      %v419 = vld [vmem:[%s257 + $0x6c] sm:$0xf]
      %v420 = vld [vmem:[%s257 + $0x70] sm:$0xf]
      %v421 = vld [vmem:[%s257 + $0x74] sm:$0xf]
      %v422 = vld [vmem:[%s257 + $0x78] sm:$0xf]
      %v423 = vld [vmem:[%s257 + $0x7c] sm:$0xf]
      %v424 = vld [vmem:[%s267] sm:$0xf]
      %v425 = vld [vmem:[%s267 + $0x4] sm:$0xf]
      %v426 = vld [vmem:[%s267 + $0x8] sm:$0xf]
      %v427 = vld [vmem:[%s267 + $0xc] sm:$0xf]
      %v428 = vld [vmem:[%s267 + $0x10] sm:$0xf]
      %v429 = vld [vmem:[%s267 + $0x14] sm:$0xf]
      %v430 = vld [vmem:[%s267 + $0x18] sm:$0xf]
      %v431 = vld [vmem:[%s267 + $0x1c] sm:$0xf]
      %v432 = vld [vmem:[%s267 + $0x20] sm:$0xf]
      %v433 = vld [vmem:[%s267 + $0x24] sm:$0xf]
      %v434 = vld [vmem:[%s267 + $0x28] sm:$0xf]
      %v435 = vld [vmem:[%s267 + $0x2c] sm:$0xf]
      %v436 = vld [vmem:[%s267 + $0x30] sm:$0xf]
      %v437 = vld [vmem:[%s267 + $0x34] sm:$0xf]
      %v438 = vld [vmem:[%s267 + $0x38] sm:$0xf]
      %v439 = vld [vmem:[%s267 + $0x3c] sm:$0xf]
      %v440 = vld [vmem:[%s267 + $0x40] sm:$0xf]
      %v441 = vld [vmem:[%s267 + $0x44] sm:$0xf]
      %v442 = vld [vmem:[%s267 + $0x48] sm:$0xf]
      %v443 = vld [vmem:[%s267 + $0x4c] sm:$0xf]
      %v444 = vld [vmem:[%s267 + $0x50] sm:$0xf]
      %v445 = vld [vmem:[%s267 + $0x54] sm:$0xf]
      %v446 = vld [vmem:[%s267 + $0x58] sm:$0xf]
      %v447 = vld [vmem:[%s267 + $0x5c] sm:$0xf]
      %v448 = vld [vmem:[%s267 + $0x60] sm:$0xf]
      %v449 = vld [vmem:[%s267 + $0x64] sm:$0xf]
      %v450 = vld [vmem:[%s267 + $0x68] sm:$0xf]
      %v451 = vld [vmem:[%s267 + $0x6c] sm:$0xf]
      %v452 = vld [vmem:[%s267 + $0x70] sm:$0xf]
      %v453 = vld [vmem:[%s267 + $0x74] sm:$0xf]
      %v454 = vld [vmem:[%s267 + $0x78] sm:$0xf]
      %v455 = vld [vmem:[%s267 + $0x7c] sm:$0xf]
      %v488 = vunpack.c.l.b16 %v392
      %v489 = vunpack.c.l.b16 %v393
      %v490 = vunpack.c.l.b16 %v394
      %v491 = vunpack.c.l.b16 %v395
      %v492 = vunpack.c.l.b16 %v396
      %v493 = vunpack.c.l.b16 %v397
      %v494 = vunpack.c.l.b16 %v398
      %v495 = vunpack.c.l.b16 %v399
      %v496 = vunpack.c.l.b16 %v400
      %v497 = vunpack.c.l.b16 %v401
      %v498 = vunpack.c.l.b16 %v402
      %v499 = vunpack.c.l.b16 %v403
      %v500 = vunpack.c.l.b16 %v404
      %v501 = vunpack.c.l.b16 %v405
      %v502 = vunpack.c.l.b16 %v406
      %v503 = vunpack.c.l.b16 %v407
      %v504 = vunpack.c.l.b16 %v408
      %v505 = vunpack.c.l.b16 %v409
      %v506 = vunpack.c.l.b16 %v410
      %v507 = vunpack.c.l.b16 %v411
      %v508 = vunpack.c.l.b16 %v412
      %v509 = vunpack.c.l.b16 %v413
      %v510 = vunpack.c.l.b16 %v414
      %v511 = vunpack.c.l.b16 %v415
      %v512 = vunpack.c.l.b16 %v416
      %v513 = vunpack.c.l.b16 %v417
      %v514 = vunpack.c.l.b16 %v418
      %v515 = vunpack.c.l.b16 %v419
      %v516 = vunpack.c.l.b16 %v420
      %v517 = vunpack.c.l.b16 %v421
      %v518 = vunpack.c.l.b16 %v422
      %v519 = vunpack.c.l.b16 %v423
      %v520 = vpack.c.b16 %v489, %v488
      %v521 = vpack.c.b16 %v491, %v490
      %v522 = vpack.c.b16 %v493, %v492
      %v523 = vpack.c.b16 %v495, %v494
      %v524 = vpack.c.b16 %v497, %v496
      %v525 = vpack.c.b16 %v499, %v498
      %v526 = vpack.c.b16 %v501, %v500
      %v527 = vpack.c.b16 %v503, %v502
      %v528 = vpack.c.b16 %v505, %v504
      %v529 = vpack.c.b16 %v507, %v506
      %v530 = vpack.c.b16 %v509, %v508
      %v531 = vpack.c.b16 %v511, %v510
      %v532 = vpack.c.b16 %v513, %v512
      %v533 = vpack.c.b16 %v515, %v514
      %v534 = vpack.c.b16 %v517, %v516
      %v535 = vpack.c.b16 %v519, %v518
      %v568 = vunpack.c.l.b16 %v424
      %v569 = vunpack.c.l.b16 %v425
      %v570 = vunpack.c.l.b16 %v426
      %v571 = vunpack.c.l.b16 %v427
      %v572 = vunpack.c.l.b16 %v428
      %v573 = vunpack.c.l.b16 %v429
      %v574 = vunpack.c.l.b16 %v430
      %v575 = vunpack.c.l.b16 %v431
      %v576 = vunpack.c.l.b16 %v432
      %v577 = vunpack.c.l.b16 %v433
      %v578 = vunpack.c.l.b16 %v434
      %v579 = vunpack.c.l.b16 %v435
      %v580 = vunpack.c.l.b16 %v436
      %v581 = vunpack.c.l.b16 %v437
      %v582 = vunpack.c.l.b16 %v438
      %v583 = vunpack.c.l.b16 %v439
      %v584 = vunpack.c.l.b16 %v440
      %v585 = vunpack.c.l.b16 %v441
      %v586 = vunpack.c.l.b16 %v442
      %v587 = vunpack.c.l.b16 %v443
      %v588 = vunpack.c.l.b16 %v444
      %v589 = vunpack.c.l.b16 %v445
      %v590 = vunpack.c.l.b16 %v446
      %v591 = vunpack.c.l.b16 %v447
      %v592 = vunpack.c.l.b16 %v448
      %v593 = vunpack.c.l.b16 %v449
      %v594 = vunpack.c.l.b16 %v450
      %v595 = vunpack.c.l.b16 %v451
      %v596 = vunpack.c.l.b16 %v452
      %v597 = vunpack.c.l.b16 %v453
      %v598 = vunpack.c.l.b16 %v454
      %v599 = vunpack.c.l.b16 %v455
      %v600 = vpack.c.b16 %v569, %v568
      %v601 = vpack.c.b16 %v571, %v570
      %v602 = vpack.c.b16 %v573, %v572
      %v603 = vpack.c.b16 %v575, %v574
      %v604 = vpack.c.b16 %v577, %v576
      %v605 = vpack.c.b16 %v579, %v578
      %v606 = vpack.c.b16 %v581, %v580
      %v607 = vpack.c.b16 %v583, %v582
      %v608 = vpack.c.b16 %v585, %v584
      %v609 = vpack.c.b16 %v587, %v586
      %v610 = vpack.c.b16 %v589, %v588
      %v611 = vpack.c.b16 %v591, %v590
      %v612 = vpack.c.b16 %v593, %v592
      %v613 = vpack.c.b16 %v595, %v594
      %v614 = vpack.c.b16 %v597, %v596
      %v615 = vpack.c.b16 %v599, %v598
      %vm616 = vcmask 261120
      %v618 = vsel %vm616, %v520, 0
      %v621 = vsel %vm616, %v521, 0
      %v624 = vsel %vm616, %v522, 0
      %v627 = vsel %vm616, %v523, 0
      %v630 = vsel %vm616, %v524, 0
      %v633 = vsel %vm616, %v525, 0
      %v636 = vsel %vm616, %v526, 0
      %v639 = vsel %vm616, %v527, 0
      %v642 = vsel %vm616, %v528, 0
      %v645 = vsel %vm616, %v529, 0
      %v648 = vsel %vm616, %v530, 0
      %v651 = vsel %vm616, %v531, 0
      %v654 = vsel %vm616, %v532, 0
      %v657 = vsel %vm616, %v533, 0
      %v660 = vsel %vm616, %v534, 0
      %v663 = vsel %vm616, %v535, 0
      %v666 = vsel %vm616, %v600, 0
      %v669 = vsel %vm616, %v601, 0
      %v672 = vsel %vm616, %v602, 0
      %v675 = vsel %vm616, %v603, 0
      %v678 = vsel %vm616, %v604, 0
      %v681 = vsel %vm616, %v605, 0
      %v684 = vsel %vm616, %v606, 0
      %v687 = vsel %vm616, %v607, 0
      %v690 = vsel %vm616, %v608, 0
      %v693 = vsel %vm616, %v609, 0
      %v696 = vsel %vm616, %v610, 0
      %v699 = vsel %vm616, %v611, 0
      %v702 = vsel %vm616, %v612, 0
      %v705 = vsel %vm616, %v613, 0
      %v708 = vsel %vm616, %v614, 0
      %v711 = vsel %vm616, %v615, 0
      %713 = vmatprep.subr.bf16.mxu0 0
      %714 = vmatpush1.bf16.xpose.msra.mxu0 %v666
      %715 = vmatprep.subr.bf16.mxu0 0
      %716 = vmatpush1.bf16.xpose.msra.mxu0 %v669
      %717 = vmatprep.subr.bf16.mxu0 0
      %718 = vmatpush1.bf16.xpose.msra.mxu0 %v672
      %719 = vmatprep.subr.bf16.mxu0 0
      %720 = vmatpush1.bf16.xpose.msra.mxu0 %v675
      %721 = vmatprep.subr.bf16.mxu0 0
      %722 = vmatpush1.bf16.xpose.msra.mxu0 %v678
      %723 = vmatprep.subr.bf16.mxu0 0
      %724 = vmatpush1.bf16.xpose.msra.mxu0 %v681
      %725 = vmatprep.subr.bf16.mxu0 0
      %726 = vmatpush1.bf16.xpose.msra.mxu0 %v684
      %727 = vmatprep.subr.bf16.mxu0 0
      %728 = vmatpush1.bf16.xpose.msra.mxu0 %v687
      %729 = vmatprep.subr.bf16.mxu0 0
      %730 = vmatpush1.bf16.xpose.msra.mxu0 %v690
      %731 = vmatprep.subr.bf16.mxu0 0
      %732 = vmatpush1.bf16.xpose.msra.mxu0 %v693
      %733 = vmatprep.subr.bf16.mxu0 0
      %734 = vmatpush1.bf16.xpose.msra.mxu0 %v696
      %735 = vmatprep.subr.bf16.mxu0 0
      %736 = vmatpush1.bf16.xpose.msra.mxu0 %v699
      %737 = vmatprep.subr.bf16.mxu0 0
      %738 = vmatpush1.bf16.xpose.msra.mxu0 %v702
      %739 = vmatprep.subr.bf16.mxu0 0
      %740 = vmatpush1.bf16.xpose.msra.mxu0 %v705
      %741 = vmatprep.subr.bf16.mxu0 0
      %742 = vmatpush1.bf16.xpose.msra.mxu0 %v708
      %743 = vmatprep.subr.bf16.mxu0 0
      %744 = vmatpush1.bf16.xpose.msra.mxu0 %v711
      %745 = vmatprep.mubr.bf16.mxu0 0
      %746 = vmatmul.mubr.bf16.gmra.mrb[0].mxu0 %v618
      %v747 = vpop.f32.mrb[0].mxu0
      %v748 = vadd.f32 0.0, %v747
      %v749 = vpop.f32.mrb[0].mxu0
      %v750 = vadd.f32 0.0, %v749
      %v751 = vpop.f32.mrb[0].mxu0
      %v752 = vadd.f32 0.0, %v751
      %v753 = vpop.f32.mrb[0].mxu0
      %v754 = vadd.f32 0.0, %v753
      %755 = vmatprep.mubr.bf16.mxu0 0
      %756 = vmatmul.mubr.bf16.gmra.mrb[0].mxu0 %v621
      %v757 = vpop.f32.mrb[0].mxu0
      %v758 = vadd.f32 0.0, %v757
      %v759 = vpop.f32.mrb[0].mxu0
      %v760 = vadd.f32 0.0, %v759
      %v761 = vpop.f32.mrb[0].mxu0
      %v762 = vadd.f32 0.0, %v761
      %v763 = vpop.f32.mrb[0].mxu0
      %v764 = vadd.f32 0.0, %v763
      %765 = vmatprep.mubr.bf16.mxu0 0
      %766 = vmatmul.mubr.bf16.gmra.mrb[0].mxu0 %v624
      %v767 = vpop.f32.mrb[0].mxu0
      %v768 = vadd.f32 0.0, %v767
      %v769 = vpop.f32.mrb[0].mxu0
      %v770 = vadd.f32 0.0, %v769
      %v771 = vpop.f32.mrb[0].mxu0
      %v772 = vadd.f32 0.0, %v771
      %v773 = vpop.f32.mrb[0].mxu0
      %v774 = vadd.f32 0.0, %v773
      %775 = vmatprep.mubr.bf16.mxu0 0
      %776 = vmatmul.mubr.bf16.gmra.mrb[0].mxu0 %v627
      %v777 = vpop.f32.mrb[0].mxu0
      %v778 = vadd.f32 0.0, %v777
      %v779 = vpop.f32.mrb[0].mxu0
      %v780 = vadd.f32 0.0, %v779
      %v781 = vpop.f32.mrb[0].mxu0
      %v782 = vadd.f32 0.0, %v781
      %v783 = vpop.f32.mrb[0].mxu0
      %v784 = vadd.f32 0.0, %v783
      %785 = vmatprep.mubr.bf16.mxu0 0
      %786 = vmatmul.mubr.bf16.gmra.mrb[0].mxu0 %v630
      %v787 = vpop.f32.mrb[0].mxu0
      %v788 = vadd.f32 0.0, %v787
      %v789 = vpop.f32.mrb[0].mxu0
      %v790 = vadd.f32 0.0, %v789
      %v791 = vpop.f32.mrb[0].mxu0
      %v792 = vadd.f32 0.0, %v791
      %v793 = vpop.f32.mrb[0].mxu0
      %v794 = vadd.f32 0.0, %v793
      %795 = vmatprep.mubr.bf16.mxu0 0
      %796 = vmatmul.mubr.bf16.gmra.mrb[0].mxu0 %v633
      %v797 = vpop.f32.mrb[0].mxu0
      %v798 = vadd.f32 0.0, %v797
      %v799 = vpop.f32.mrb[0].mxu0
      %v800 = vadd.f32 0.0, %v799
      %v801 = vpop.f32.mrb[0].mxu0
      %v802 = vadd.f32 0.0, %v801
      %v803 = vpop.f32.mrb[0].mxu0
      %v804 = vadd.f32 0.0, %v803
      %805 = vmatprep.mubr.bf16.mxu0 0
      %806 = vmatmul.mubr.bf16.gmra.mrb[0].mxu0 %v636
      %v807 = vpop.f32.mrb[0].mxu0
      %v808 = vadd.f32 0.0, %v807
      %v809 = vpop.f32.mrb[0].mxu0
      %v810 = vadd.f32 0.0, %v809
      %v811 = vpop.f32.mrb[0].mxu0
      %v812 = vadd.f32 0.0, %v811
      %v813 = vpop.f32.mrb[0].mxu0
      %v814 = vadd.f32 0.0, %v813
      %815 = vmatprep.mubr.bf16.mxu0 0
      %816 = vmatmul.mubr.bf16.gmra.mrb[0].mxu0 %v639
      %v817 = vpop.f32.mrb[0].mxu0
      %v818 = vadd.f32 0.0, %v817
      %v819 = vpop.f32.mrb[0].mxu0
      %v820 = vadd.f32 0.0, %v819
      %v821 = vpop.f32.mrb[0].mxu0
      %v822 = vadd.f32 0.0, %v821
      %v823 = vpop.f32.mrb[0].mxu0
      %v824 = vadd.f32 0.0, %v823
      %825 = vmatprep.mubr.bf16.mxu0 0
      %826 = vmatmul.mubr.bf16.gmra.mrb[0].mxu0 %v642
      %v827 = vpop.f32.mrb[0].mxu0
      %v828 = vadd.f32 0.0, %v827
      %v829 = vpop.f32.mrb[0].mxu0
      %v830 = vadd.f32 0.0, %v829
      %v831 = vpop.f32.mrb[0].mxu0
      %v832 = vadd.f32 0.0, %v831
      %v833 = vpop.f32.mrb[0].mxu0
      %v834 = vadd.f32 0.0, %v833
      %835 = vmatprep.mubr.bf16.mxu0 0
      %836 = vmatmul.mubr.bf16.gmra.mrb[0].mxu0 %v645
      %v837 = vpop.f32.mrb[0].mxu0
      %v838 = vadd.f32 0.0, %v837
      %v839 = vpop.f32.mrb[0].mxu0
      %v840 = vadd.f32 0.0, %v839
      %v841 = vpop.f32.mrb[0].mxu0
      %v842 = vadd.f32 0.0, %v841
      %v843 = vpop.f32.mrb[0].mxu0
      %v844 = vadd.f32 0.0, %v843
      %845 = vmatprep.mubr.bf16.mxu0 0
      %846 = vmatmul.mubr.bf16.gmra.mrb[0].mxu0 %v648
      %v847 = vpop.f32.mrb[0].mxu0
      %v848 = vadd.f32 0.0, %v847
      %v849 = vpop.f32.mrb[0].mxu0
      %v850 = vadd.f32 0.0, %v849
      %v851 = vpop.f32.mrb[0].mxu0
      %v852 = vadd.f32 0.0, %v851
      %v853 = vpop.f32.mrb[0].mxu0
      %v854 = vadd.f32 0.0, %v853
      %855 = vmatprep.mubr.bf16.mxu0 0
      %856 = vmatmul.mubr.bf16.gmra.mrb[0].mxu0 %v651
      %v857 = vpop.f32.mrb[0].mxu0
      %v858 = vadd.f32 0.0, %v857
      %v859 = vpop.f32.mrb[0].mxu0
      %v860 = vadd.f32 0.0, %v859
      %v861 = vpop.f32.mrb[0].mxu0
      %v862 = vadd.f32 0.0, %v861
      %v863 = vpop.f32.mrb[0].mxu0
      %v864 = vadd.f32 0.0, %v863
      %865 = vmatprep.mubr.bf16.mxu0 0
      %866 = vmatmul.mubr.bf16.gmra.mrb[0].mxu0 %v654
      %v867 = vpop.f32.mrb[0].mxu0
      %v868 = vadd.f32 0.0, %v867
      %v869 = vpop.f32.mrb[0].mxu0
      %v870 = vadd.f32 0.0, %v869
      %v871 = vpop.f32.mrb[0].mxu0
      %v872 = vadd.f32 0.0, %v871
      %v873 = vpop.f32.mrb[0].mxu0
      %v874 = vadd.f32 0.0, %v873
      %875 = vmatprep.mubr.bf16.mxu0 0
      %876 = vmatmul.mubr.bf16.gmra.mrb[0].mxu0 %v657
      %v877 = vpop.f32.mrb[0].mxu0
      %v878 = vadd.f32 0.0, %v877
      %v879 = vpop.f32.mrb[0].mxu0
      %v880 = vadd.f32 0.0, %v879
      %v881 = vpop.f32.mrb[0].mxu0
      %v882 = vadd.f32 0.0, %v881
      %v883 = vpop.f32.mrb[0].mxu0
      %v884 = vadd.f32 0.0, %v883
      %885 = vmatprep.mubr.bf16.mxu0 0
      %886 = vmatmul.mubr.bf16.gmra.mrb[0].mxu0 %v660
      %v887 = vpop.f32.mrb[0].mxu0
      %v888 = vadd.f32 0.0, %v887
      %v889 = vpop.f32.mrb[0].mxu0
      %v890 = vadd.f32 0.0, %v889
      %v891 = vpop.f32.mrb[0].mxu0
      %v892 = vadd.f32 0.0, %v891
      %v893 = vpop.f32.mrb[0].mxu0
      %v894 = vadd.f32 0.0, %v893
      %895 = vmatprep.mubr.bf16.mxu0 0
      %896 = vmatmul.mubr.bf16.gmra.mrb[0].mxu0 %v663
      %v897 = vpop.f32.mrb[0].mxu0
      %v898 = vadd.f32 0.0, %v897
      %v899 = vpop.f32.mrb[0].mxu0
      %v900 = vadd.f32 0.0, %v899
      %v901 = vpop.f32.mrb[0].mxu0
      %v902 = vadd.f32 0.0, %v901
      %v903 = vpop.f32.mrb[0].mxu0
      %v904 = vadd.f32 0.0, %v903
      %905 = vdwg.mxu0
      %v906 = vmul.f32 %v748, 0.17677669
      %v907 = vmul.f32 %v750, 0.17677669
      %v908 = vmul.f32 %v752, 0.17677669
      %v909 = vmul.f32 %v754, 0.17677669
      %v910 = vmul.f32 %v758, 0.17677669
      %v911 = vmul.f32 %v760, 0.17677669
      %v912 = vmul.f32 %v762, 0.17677669
      %v913 = vmul.f32 %v764, 0.17677669
      %v914 = vmul.f32 %v768, 0.17677669
      %v915 = vmul.f32 %v770, 0.17677669
      %v916 = vmul.f32 %v772, 0.17677669
      %v917 = vmul.f32 %v774, 0.17677669
      %v918 = vmul.f32 %v778, 0.17677669
      %v919 = vmul.f32 %v780, 0.17677669
      %v920 = vmul.f32 %v782, 0.17677669
      %v921 = vmul.f32 %v784, 0.17677669
      %v922 = vmul.f32 %v788, 0.17677669
      %v923 = vmul.f32 %v790, 0.17677669
      %v924 = vmul.f32 %v792, 0.17677669
      %v925 = vmul.f32 %v794, 0.17677669
      %v926 = vmul.f32 %v798, 0.17677669
      %v927 = vmul.f32 %v800, 0.17677669
      %v928 = vmul.f32 %v802, 0.17677669
      %v929 = vmul.f32 %v804, 0.17677669
      %v930 = vmul.f32 %v808, 0.17677669
      %v931 = vmul.f32 %v810, 0.17677669
      %v932 = vmul.f32 %v812, 0.17677669
      %v933 = vmul.f32 %v814, 0.17677669
      %v934 = vmul.f32 %v818, 0.17677669
      %v935 = vmul.f32 %v820, 0.17677669
      %v936 = vmul.f32 %v822, 0.17677669
      %v937 = vmul.f32 %v824, 0.17677669
      %v938 = vmul.f32 %v828, 0.17677669
      %v939 = vmul.f32 %v830, 0.17677669
      %v940 = vmul.f32 %v832, 0.17677669
      %v941 = vmul.f32 %v834, 0.17677669
      %v942 = vmul.f32 %v838, 0.17677669
      %v943 = vmul.f32 %v840, 0.17677669
      %v944 = vmul.f32 %v842, 0.17677669
      %v945 = vmul.f32 %v844, 0.17677669
      %v946 = vmul.f32 %v848, 0.17677669
      %v947 = vmul.f32 %v850, 0.17677669
      %v948 = vmul.f32 %v852, 0.17677669
      %v949 = vmul.f32 %v854, 0.17677669
      %v950 = vmul.f32 %v858, 0.17677669
      %v951 = vmul.f32 %v860, 0.17677669
      %v952 = vmul.f32 %v862, 0.17677669
      %v953 = vmul.f32 %v864, 0.17677669
      %v954 = vmul.f32 %v868, 0.17677669
      %v955 = vmul.f32 %v870, 0.17677669
      %v956 = vmul.f32 %v872, 0.17677669
      %v957 = vmul.f32 %v874, 0.17677669
      %v958 = vmul.f32 %v878, 0.17677669
      %v959 = vmul.f32 %v880, 0.17677669
      %v960 = vmul.f32 %v882, 0.17677669
      %v961 = vmul.f32 %v884, 0.17677669
      %v962 = vmul.f32 %v888, 0.17677669
      %v963 = vmul.f32 %v890, 0.17677669
      %v964 = vmul.f32 %v892, 0.17677669
      %v965 = vmul.f32 %v894, 0.17677669
      %v966 = vmul.f32 %v898, 0.17677669
      %v967 = vmul.f32 %v900, 0.17677669
      %v968 = vmul.f32 %v902, 0.17677669
      %v969 = vmul.f32 %v904, 0.17677669
      %v970 = vld [vmem:[#allocation2] sm:$0xff]
      %v971 = vld [vmem:[#allocation2 + $0x8] sm:$0xff]
      %v972 = vld [vmem:[#allocation2 + $0x10] sm:$0xff]
      %v973 = vld [vmem:[#allocation2 + $0x18] sm:$0xff]
      %v974 = vld [vmem:[#allocation2 + $0x20] sm:$0xff]
      %v975 = vld [vmem:[#allocation2 + $0x28] sm:$0xff]
      %v976 = vld [vmem:[#allocation2 + $0x30] sm:$0xff]
      %v977 = vld [vmem:[#allocation2 + $0x38] sm:$0xff]
      %v978 = vld [vmem:[#allocation2 + $0x40] sm:$0xff]
      %v979 = vld [vmem:[#allocation2 + $0x48] sm:$0xff]
      %v980 = vld [vmem:[#allocation2 + $0x50] sm:$0xff]
      %v981 = vld [vmem:[#allocation2 + $0x58] sm:$0xff]
      %v982 = vld [vmem:[#allocation2 + $0x60] sm:$0xff]
      %v983 = vld [vmem:[#allocation2 + $0x68] sm:$0xff]
      %v984 = vld [vmem:[#allocation2 + $0x70] sm:$0xff]
      %v985 = vld [vmem:[#allocation2 + $0x78] sm:$0xff]
      %v986 = vld [vmem:[#allocation2 + $0x80] sm:$0xff]
      %v987 = vld [vmem:[#allocation2 + $0x88] sm:$0xff]
      %v988 = vld [vmem:[#allocation2 + $0x90] sm:$0xff]
      %v989 = vld [vmem:[#allocation2 + $0x98] sm:$0xff]
      %v990 = vld [vmem:[#allocation2 + $0xa0] sm:$0xff]
      %v991 = vld [vmem:[#allocation2 + $0xa8] sm:$0xff]
      %v992 = vld [vmem:[#allocation2 + $0xb0] sm:$0xff]
      %v993 = vld [vmem:[#allocation2 + $0xb8] sm:$0xff]
      %v994 = vld [vmem:[#allocation2 + $0xc0] sm:$0xff]
      %v995 = vld [vmem:[#allocation2 + $0xc8] sm:$0xff]
      %v996 = vld [vmem:[#allocation2 + $0xd0] sm:$0xff]
      %v997 = vld [vmem:[#allocation2 + $0xd8] sm:$0xff]
      %v998 = vld [vmem:[#allocation2 + $0xe0] sm:$0xff]
      %v999 = vld [vmem:[#allocation2 + $0xe8] sm:$0xff]
      %v1000 = vld [vmem:[#allocation2 + $0xf0] sm:$0xff]
      %v1001 = vld [vmem:[#allocation2 + $0xf8] sm:$0xff]
      %v1002 = vmax.f32 %v906, %v907
      %1003 = vmax.xlane.f32.xlu0 %v1002
      %v1004 = vpop.xlane.xlu0 %1003
      %v1005 = vmax.f32 %v908, %v909
      %1006 = vmax.xlane.f32.xlu0 %v1005
      %v1007 = vpop.xlane.xlu0 %1006
      %v1008 = vmax.f32 %v910, %v911
      %1009 = vmax.xlane.f32.xlu0 %v1008
      %v1010 = vpop.xlane.xlu0 %1009
      %v1011 = vmax.f32 %v912, %v913
      %1012 = vmax.xlane.f32.xlu0 %v1011
      %v1013 = vpop.xlane.xlu0 %1012
      %v1014 = vmax.f32 %v914, %v915
      %1015 = vmax.xlane.f32.xlu0 %v1014
      %v1016 = vpop.xlane.xlu0 %1015
      %v1017 = vmax.f32 %v916, %v917
      %1018 = vmax.xlane.f32.xlu0 %v1017
      %v1019 = vpop.xlane.xlu0 %1018
      %v1020 = vmax.f32 %v918, %v919
      %1021 = vmax.xlane.f32.xlu0 %v1020
      %v1022 = vpop.xlane.xlu0 %1021
      %v1023 = vmax.f32 %v920, %v921
      %1024 = vmax.xlane.f32.xlu0 %v1023
      %v1025 = vpop.xlane.xlu0 %1024
      %v1026 = vmax.f32 %v922, %v923
      %1027 = vmax.xlane.f32.xlu0 %v1026
      %v1028 = vpop.xlane.xlu0 %1027
      %v1029 = vmax.f32 %v924, %v925
      %1030 = vmax.xlane.f32.xlu0 %v1029
      %v1031 = vpop.xlane.xlu0 %1030
      %v1032 = vmax.f32 %v926, %v927
      %1033 = vmax.xlane.f32.xlu0 %v1032
      %v1034 = vpop.xlane.xlu0 %1033
      %v1035 = vmax.f32 %v928, %v929
      %1036 = vmax.xlane.f32.xlu0 %v1035
      %v1037 = vpop.xlane.xlu0 %1036
      %v1038 = vmax.f32 %v930, %v931
      %1039 = vmax.xlane.f32.xlu0 %v1038
      %v1040 = vpop.xlane.xlu0 %1039
      %v1041 = vmax.f32 %v932, %v933
      %1042 = vmax.xlane.f32.xlu0 %v1041
      %v1043 = vpop.xlane.xlu0 %1042
      %v1044 = vmax.f32 %v934, %v935
      %1045 = vmax.xlane.f32.xlu0 %v1044
      %v1046 = vpop.xlane.xlu0 %1045
      %v1047 = vmax.f32 %v936, %v937
      %1048 = vmax.xlane.f32.xlu0 %v1047
      %v1049 = vpop.xlane.xlu0 %1048
      %v1050 = vmax.f32 %v938, %v939
      %1051 = vmax.xlane.f32.xlu0 %v1050
      %v1052 = vpop.xlane.xlu0 %1051
      %v1053 = vmax.f32 %v940, %v941
      %1054 = vmax.xlane.f32.xlu0 %v1053
      %v1055 = vpop.xlane.xlu0 %1054
      %v1056 = vmax.f32 %v942, %v943
      %1057 = vmax.xlane.f32.xlu0 %v1056
      %v1058 = vpop.xlane.xlu0 %1057
      %v1059 = vmax.f32 %v944, %v945
      %1060 = vmax.xlane.f32.xlu0 %v1059
      %v1061 = vpop.xlane.xlu0 %1060
      %v1062 = vmax.f32 %v946, %v947
      %1063 = vmax.xlane.f32.xlu0 %v1062
      %v1064 = vpop.xlane.xlu0 %1063
      %v1065 = vmax.f32 %v948, %v949
      %1066 = vmax.xlane.f32.xlu0 %v1065
      %v1067 = vpop.xlane.xlu0 %1066
      %v1068 = vmax.f32 %v950, %v951
      %1069 = vmax.xlane.f32.xlu0 %v1068
      %v1070 = vpop.xlane.xlu0 %1069
      %v1071 = vmax.f32 %v952, %v953
      %1072 = vmax.xlane.f32.xlu0 %v1071
      %v1073 = vpop.xlane.xlu0 %1072
      %v1074 = vmax.f32 %v954, %v955
      %1075 = vmax.xlane.f32.xlu0 %v1074
      %v1076 = vpop.xlane.xlu0 %1075
      %v1077 = vmax.f32 %v956, %v957
      %1078 = vmax.xlane.f32.xlu0 %v1077
      %v1079 = vpop.xlane.xlu0 %1078
      %v1080 = vmax.f32 %v958, %v959
      %1081 = vmax.xlane.f32.xlu0 %v1080
      %v1082 = vpop.xlane.xlu0 %1081
      %v1083 = vmax.f32 %v960, %v961
      %1084 = vmax.xlane.f32.xlu0 %v1083
      %v1085 = vpop.xlane.xlu0 %1084
      %v1086 = vmax.f32 %v962, %v963
      %1087 = vmax.xlane.f32.xlu0 %v1086
      %v1088 = vpop.xlane.xlu0 %1087
      %v1089 = vmax.f32 %v964, %v965
      %1090 = vmax.xlane.f32.xlu0 %v1089
      %v1091 = vpop.xlane.xlu0 %1090
      %v1092 = vmax.f32 %v966, %v967
      %1093 = vmax.xlane.f32.xlu0 %v1092
      %v1094 = vpop.xlane.xlu0 %1093
      %v1095 = vmax.f32 %v968, %v969
      %1096 = vmax.xlane.f32.xlu0 %v1095
      %v1097 = vpop.xlane.xlu0 %1096
      %v1098 = vmax.f32 %v970, %v1004
      %v1099 = vmax.f32 %v971, %v1007
      %v1100 = vmax.f32 %v972, %v1010
      %v1101 = vmax.f32 %v973, %v1013
      %v1102 = vmax.f32 %v974, %v1016
      %v1103 = vmax.f32 %v975, %v1019
      %v1104 = vmax.f32 %v976, %v1022
      %v1105 = vmax.f32 %v977, %v1025
      %v1106 = vmax.f32 %v978, %v1028
      %v1107 = vmax.f32 %v979, %v1031
      %v1108 = vmax.f32 %v980, %v1034
      %v1109 = vmax.f32 %v981, %v1037
      %v1110 = vmax.f32 %v982, %v1040
      %v1111 = vmax.f32 %v983, %v1043
      %v1112 = vmax.f32 %v984, %v1046
      %v1113 = vmax.f32 %v985, %v1049
      %v1114 = vmax.f32 %v986, %v1052
      %v1115 = vmax.f32 %v987, %v1055
      %v1116 = vmax.f32 %v988, %v1058
      %v1117 = vmax.f32 %v989, %v1061
      %v1118 = vmax.f32 %v990, %v1064
      %v1119 = vmax.f32 %v991, %v1067
      %v1120 = vmax.f32 %v992, %v1070
      %v1121 = vmax.f32 %v993, %v1073
      %v1122 = vmax.f32 %v994, %v1076
      %v1123 = vmax.f32 %v995, %v1079
      %v1124 = vmax.f32 %v996, %v1082
      %v1125 = vmax.f32 %v997, %v1085
      %v1126 = vmax.f32 %v998, %v1088
      %v1127 = vmax.f32 %v999, %v1091
      %v1128 = vmax.f32 %v1000, %v1094
      %v1129 = vmax.f32 %v1001, %v1097
      %v1130 = vsub.f32 %v970, %v1098
      %v1131 = vsub.f32 %v971, %v1099
      %v1132 = vsub.f32 %v972, %v1100
      %v1133 = vsub.f32 %v973, %v1101
      %v1134 = vsub.f32 %v974, %v1102
      %v1135 = vsub.f32 %v975, %v1103
      %v1136 = vsub.f32 %v976, %v1104
      %v1137 = vsub.f32 %v977, %v1105
      %v1138 = vsub.f32 %v978, %v1106
      %v1139 = vsub.f32 %v979, %v1107
      %v1140 = vsub.f32 %v980, %v1108
      %v1141 = vsub.f32 %v981, %v1109
      %v1142 = vsub.f32 %v982, %v1110
      %v1143 = vsub.f32 %v983, %v1111
      %v1144 = vsub.f32 %v984, %v1112
      %v1145 = vsub.f32 %v985, %v1113
      %v1146 = vsub.f32 %v986, %v1114
      %v1147 = vsub.f32 %v987, %v1115
      %v1148 = vsub.f32 %v988, %v1116
      %v1149 = vsub.f32 %v989, %v1117
      %v1150 = vsub.f32 %v990, %v1118
      %v1151 = vsub.f32 %v991, %v1119
      %v1152 = vsub.f32 %v992, %v1120
      %v1153 = vsub.f32 %v993, %v1121
      %v1154 = vsub.f32 %v994, %v1122
      %v1155 = vsub.f32 %v995, %v1123
      %v1156 = vsub.f32 %v996, %v1124
      %v1157 = vsub.f32 %v997, %v1125
      %v1158 = vsub.f32 %v998, %v1126
      %v1159 = vsub.f32 %v999, %v1127
      %v1160 = vsub.f32 %v1000, %v1128
      %v1161 = vsub.f32 %v1001, %v1129
      %v1162 = vmul.f32 %v1130, 1.442695
      %v1163 = vpow.pop %v1162
      %v1164 = vmul.f32 %v1131, 1.442695
      %v1165 = vpow.pop %v1164
      %v1166 = vmul.f32 %v1132, 1.442695
      %v1167 = vpow.pop %v1166
      %v1168 = vmul.f32 %v1133, 1.442695
      %v1169 = vpow.pop %v1168
      %v1170 = vmul.f32 %v1134, 1.442695
      %v1171 = vpow.pop %v1170
      %v1172 = vmul.f32 %v1135, 1.442695
      %v1173 = vpow.pop %v1172
      %v1174 = vmul.f32 %v1136, 1.442695
      %v1175 = vpow.pop %v1174
      %v1176 = vmul.f32 %v1137, 1.442695
      %v1177 = vpow.pop %v1176
      %v1178 = vmul.f32 %v1138, 1.442695
      %v1179 = vpow.pop %v1178
      %v1180 = vmul.f32 %v1139, 1.442695
      %v1181 = vpow.pop %v1180
      %v1182 = vmul.f32 %v1140, 1.442695
      %v1183 = vpow.pop %v1182
      %v1184 = vmul.f32 %v1141, 1.442695
      %v1185 = vpow.pop %v1184
      %v1186 = vmul.f32 %v1142, 1.442695
      %v1187 = vpow.pop %v1186
      %v1188 = vmul.f32 %v1143, 1.442695
      %v1189 = vpow.pop %v1188
      %v1190 = vmul.f32 %v1144, 1.442695
      %v1191 = vpow.pop %v1190
      %v1192 = vmul.f32 %v1145, 1.442695
      %v1193 = vpow.pop %v1192
      %v1194 = vmul.f32 %v1146, 1.442695
      %v1195 = vpow.pop %v1194
      %v1196 = vmul.f32 %v1147, 1.442695
      %v1197 = vpow.pop %v1196
      %v1198 = vmul.f32 %v1148, 1.442695
      %v1199 = vpow.pop %v1198
      %v1200 = vmul.f32 %v1149, 1.442695
      %v1201 = vpow.pop %v1200
      %v1202 = vmul.f32 %v1150, 1.442695
      %v1203 = vpow.pop %v1202
      %v1204 = vmul.f32 %v1151, 1.442695
      %v1205 = vpow.pop %v1204
      %v1206 = vmul.f32 %v1152, 1.442695
      %v1207 = vpow.pop %v1206
      %v1208 = vmul.f32 %v1153, 1.442695
      %v1209 = vpow.pop %v1208
      %v1210 = vmul.f32 %v1154, 1.442695
      %v1211 = vpow.pop %v1210
      %v1212 = vmul.f32 %v1155, 1.442695
      %v1213 = vpow.pop %v1212
      %v1214 = vmul.f32 %v1156, 1.442695
      %v1215 = vpow.pop %v1214
      %v1216 = vmul.f32 %v1157, 1.442695
      %v1217 = vpow.pop %v1216
      %v1218 = vmul.f32 %v1158, 1.442695
      %v1219 = vpow.pop %v1218
      %v1220 = vmul.f32 %v1159, 1.442695
      %v1221 = vpow.pop %v1220
      %v1222 = vmul.f32 %v1160, 1.442695
      %v1223 = vpow.pop %v1222
      %v1224 = vmul.f32 %v1161, 1.442695
      %v1225 = vpow.pop %v1224
      %1227 = vset.pattern.permute.xlu0 0
      %1228 = vperm.xlu0 %1227, %v1098
      %v1229 = vpop.permute.xlu0 %1228
      %1232 = vset.pattern.permute.xlu0 0
      %1233 = vperm.xlu0 %1232, %v1099
      %v1234 = vpop.permute.xlu0 %1233
      %1237 = vset.pattern.permute.xlu0 0
      %1238 = vperm.xlu0 %1237, %v1100
      %v1239 = vpop.permute.xlu0 %1238
      %1242 = vset.pattern.permute.xlu0 0
      %1243 = vperm.xlu0 %1242, %v1101
      %v1244 = vpop.permute.xlu0 %1243
      %1247 = vset.pattern.permute.xlu0 0
      %1248 = vperm.xlu0 %1247, %v1102
      %v1249 = vpop.permute.xlu0 %1248
      %1252 = vset.pattern.permute.xlu0 0
      %1253 = vperm.xlu0 %1252, %v1103
      %v1254 = vpop.permute.xlu0 %1253
      %1257 = vset.pattern.permute.xlu0 0
      %1258 = vperm.xlu0 %1257, %v1104
      %v1259 = vpop.permute.xlu0 %1258
      %1262 = vset.pattern.permute.xlu0 0
      %1263 = vperm.xlu0 %1262, %v1105
      %v1264 = vpop.permute.xlu0 %1263
      %1267 = vset.pattern.permute.xlu0 0
      %1268 = vperm.xlu0 %1267, %v1106
      %v1269 = vpop.permute.xlu0 %1268
      %1272 = vset.pattern.permute.xlu0 0
      %1273 = vperm.xlu0 %1272, %v1107
      %v1274 = vpop.permute.xlu0 %1273
      %1277 = vset.pattern.permute.xlu0 0
      %1278 = vperm.xlu0 %1277, %v1108
      %v1279 = vpop.permute.xlu0 %1278
      %1282 = vset.pattern.permute.xlu0 0
      %1283 = vperm.xlu0 %1282, %v1109
      %v1284 = vpop.permute.xlu0 %1283
      %1287 = vset.pattern.permute.xlu0 0
      %1288 = vperm.xlu0 %1287, %v1110
      %v1289 = vpop.permute.xlu0 %1288
      %1292 = vset.pattern.permute.xlu0 0
      %1293 = vperm.xlu0 %1292, %v1111
      %v1294 = vpop.permute.xlu0 %1293
      %1297 = vset.pattern.permute.xlu0 0
      %1298 = vperm.xlu0 %1297, %v1112
      %v1299 = vpop.permute.xlu0 %1298
      %1302 = vset.pattern.permute.xlu0 0
      %1303 = vperm.xlu0 %1302, %v1113
      %v1304 = vpop.permute.xlu0 %1303
      %1307 = vset.pattern.permute.xlu0 0
      %1308 = vperm.xlu0 %1307, %v1114
      %v1309 = vpop.permute.xlu0 %1308
      %1312 = vset.pattern.permute.xlu0 0
      %1313 = vperm.xlu0 %1312, %v1115
      %v1314 = vpop.permute.xlu0 %1313
      %1317 = vset.pattern.permute.xlu0 0
      %1318 = vperm.xlu0 %1317, %v1116
      %v1319 = vpop.permute.xlu0 %1318
      %1322 = vset.pattern.permute.xlu0 0
      %1323 = vperm.xlu0 %1322, %v1117
      %v1324 = vpop.permute.xlu0 %1323
      %1327 = vset.pattern.permute.xlu0 0
      %1328 = vperm.xlu0 %1327, %v1118
      %v1329 = vpop.permute.xlu0 %1328
      %1332 = vset.pattern.permute.xlu0 0
      %1333 = vperm.xlu0 %1332, %v1119
      %v1334 = vpop.permute.xlu0 %1333
      %1337 = vset.pattern.permute.xlu0 0
      %1338 = vperm.xlu0 %1337, %v1120
      %v1339 = vpop.permute.xlu0 %1338
      %1342 = vset.pattern.permute.xlu0 0
      %1343 = vperm.xlu0 %1342, %v1121
      %v1344 = vpop.permute.xlu0 %1343
      %1347 = vset.pattern.permute.xlu0 0
      %1348 = vperm.xlu0 %1347, %v1122
      %v1349 = vpop.permute.xlu0 %1348
      %1352 = vset.pattern.permute.xlu0 0
      %1353 = vperm.xlu0 %1352, %v1123
      %v1354 = vpop.permute.xlu0 %1353
      %1357 = vset.pattern.permute.xlu0 0
      %1358 = vperm.xlu0 %1357, %v1124
      %v1359 = vpop.permute.xlu0 %1358
      %1362 = vset.pattern.permute.xlu0 0
      %1363 = vperm.xlu0 %1362, %v1125
      %v1364 = vpop.permute.xlu0 %1363
      %1367 = vset.pattern.permute.xlu0 0
      %1368 = vperm.xlu0 %1367, %v1126
      %v1369 = vpop.permute.xlu0 %1368
      %1372 = vset.pattern.permute.xlu0 0
      %1373 = vperm.xlu0 %1372, %v1127
      %v1374 = vpop.permute.xlu0 %1373
      %1377 = vset.pattern.permute.xlu0 0
      %1378 = vperm.xlu0 %1377, %v1128
      %v1379 = vpop.permute.xlu0 %1378
      %1382 = vset.pattern.permute.xlu0 0
      %1383 = vperm.xlu0 %1382, %v1129
      %v1384 = vpop.permute.xlu0 %1383
      %v1386 = vsub.f32 %v906, %v1229
      %v1387 = vsub.f32 %v907, %v1229
      %v1388 = vsub.f32 %v908, %v1234
      %v1389 = vsub.f32 %v909, %v1234
      %v1390 = vsub.f32 %v910, %v1239
      %v1391 = vsub.f32 %v911, %v1239
      %v1392 = vsub.f32 %v912, %v1244
      %v1393 = vsub.f32 %v913, %v1244
      %v1394 = vsub.f32 %v914, %v1249
      %v1395 = vsub.f32 %v915, %v1249
      %v1396 = vsub.f32 %v916, %v1254
      %v1397 = vsub.f32 %v917, %v1254
      %v1398 = vsub.f32 %v918, %v1259
      %v1399 = vsub.f32 %v919, %v1259
      %v1400 = vsub.f32 %v920, %v1264
      %v1401 = vsub.f32 %v921, %v1264
      %v1402 = vsub.f32 %v922, %v1269
      %v1403 = vsub.f32 %v923, %v1269
      %v1404 = vsub.f32 %v924, %v1274
      %v1405 = vsub.f32 %v925, %v1274
      %v1406 = vsub.f32 %v926, %v1279
      %v1407 = vsub.f32 %v927, %v1279
      %v1408 = vsub.f32 %v928, %v1284
      %v1409 = vsub.f32 %v929, %v1284
      %v1410 = vsub.f32 %v930, %v1289
      %v1411 = vsub.f32 %v931, %v1289
      %v1412 = vsub.f32 %v932, %v1294
      %v1413 = vsub.f32 %v933, %v1294
      %v1414 = vsub.f32 %v934, %v1299
      %v1415 = vsub.f32 %v935, %v1299
      %v1416 = vsub.f32 %v936, %v1304
      %v1417 = vsub.f32 %v937, %v1304
      %v1418 = vsub.f32 %v938, %v1309
      %v1419 = vsub.f32 %v939, %v1309
      %v1420 = vsub.f32 %v940, %v1314
      %v1421 = vsub.f32 %v941, %v1314
      %v1422 = vsub.f32 %v942, %v1319
      %v1423 = vsub.f32 %v943, %v1319
      %v1424 = vsub.f32 %v944, %v1324
      %v1425 = vsub.f32 %v945, %v1324
      %v1426 = vsub.f32 %v946, %v1329
      %v1427 = vsub.f32 %v947, %v1329
      %v1428 = vsub.f32 %v948, %v1334
      %v1429 = vsub.f32 %v949, %v1334
      %v1430 = vsub.f32 %v950, %v1339
      %v1431 = vsub.f32 %v951, %v1339
      %v1432 = vsub.f32 %v952, %v1344
      %v1433 = vsub.f32 %v953, %v1344
      %v1434 = vsub.f32 %v954, %v1349
      %v1435 = vsub.f32 %v955, %v1349
      %v1436 = vsub.f32 %v956, %v1354
      %v1437 = vsub.f32 %v957, %v1354
      %v1438 = vsub.f32 %v958, %v1359
      %v1439 = vsub.f32 %v959, %v1359
      %v1440 = vsub.f32 %v960, %v1364
      %v1441 = vsub.f32 %v961, %v1364
      %v1442 = vsub.f32 %v962, %v1369
      %v1443 = vsub.f32 %v963, %v1369
      %v1444 = vsub.f32 %v964, %v1374
      %v1445 = vsub.f32 %v965, %v1374
      %v1446 = vsub.f32 %v966, %v1379
      %v1447 = vsub.f32 %v967, %v1379
      %v1448 = vsub.f32 %v968, %v1384
      %v1449 = vsub.f32 %v969, %v1384
      %v1450 = vmul.f32 %v1386, 1.442695
      %v1451 = vpow.pop %v1450
      %v1452 = vmul.f32 %v1387, 1.442695
      %v1453 = vpow.pop %v1452
      %v1454 = vmul.f32 %v1388, 1.442695
      %v1455 = vpow.pop %v1454
      %v1456 = vmul.f32 %v1389, 1.442695
      %v1457 = vpow.pop %v1456
      %v1458 = vmul.f32 %v1390, 1.442695
      %v1459 = vpow.pop %v1458
      %v1460 = vmul.f32 %v1391, 1.442695
      %v1461 = vpow.pop %v1460
      %v1462 = vmul.f32 %v1392, 1.442695
      %v1463 = vpow.pop %v1462
      %v1464 = vmul.f32 %v1393, 1.442695
      %v1465 = vpow.pop %v1464
      %v1466 = vmul.f32 %v1394, 1.442695
      %v1467 = vpow.pop %v1466
      %v1468 = vmul.f32 %v1395, 1.442695
      %v1469 = vpow.pop %v1468
      %v1470 = vmul.f32 %v1396, 1.442695
      %v1471 = vpow.pop %v1470
      %v1472 = vmul.f32 %v1397, 1.442695
      %v1473 = vpow.pop %v1472
      %v1474 = vmul.f32 %v1398, 1.442695
      %v1475 = vpow.pop %v1474
      %v1476 = vmul.f32 %v1399, 1.442695
      %v1477 = vpow.pop %v1476
      %v1478 = vmul.f32 %v1400, 1.442695
      %v1479 = vpow.pop %v1478
      %v1480 = vmul.f32 %v1401, 1.442695
      %v1481 = vpow.pop %v1480
      %v1482 = vmul.f32 %v1402, 1.442695
      %v1483 = vpow.pop %v1482
      %v1484 = vmul.f32 %v1403, 1.442695
      %v1485 = vpow.pop %v1484
      %v1486 = vmul.f32 %v1404, 1.442695
      %v1487 = vpow.pop %v1486
      %v1488 = vmul.f32 %v1405, 1.442695
      %v1489 = vpow.pop %v1488
      %v1490 = vmul.f32 %v1406, 1.442695
      %v1491 = vpow.pop %v1490
      %v1492 = vmul.f32 %v1407, 1.442695
      %v1493 = vpow.pop %v1492
      %v1494 = vmul.f32 %v1408, 1.442695
      %v1495 = vpow.pop %v1494
      %v1496 = vmul.f32 %v1409, 1.442695
      %v1497 = vpow.pop %v1496
      %v1498 = vmul.f32 %v1410, 1.442695
      %v1499 = vpow.pop %v1498
      %v1500 = vmul.f32 %v1411, 1.442695
      %v1501 = vpow.pop %v1500
      %v1502 = vmul.f32 %v1412, 1.442695
      %v1503 = vpow.pop %v1502
      %v1504 = vmul.f32 %v1413, 1.442695
      %v1505 = vpow.pop %v1504
      %v1506 = vmul.f32 %v1414, 1.442695
      %v1507 = vpow.pop %v1506
      %v1508 = vmul.f32 %v1415, 1.442695
      %v1509 = vpow.pop %v1508
      %v1510 = vmul.f32 %v1416, 1.442695
      %v1511 = vpow.pop %v1510
      %v1512 = vmul.f32 %v1417, 1.442695
      %v1513 = vpow.pop %v1512
      %v1514 = vmul.f32 %v1418, 1.442695
      %v1515 = vpow.pop %v1514
      %v1516 = vmul.f32 %v1419, 1.442695
      %v1517 = vpow.pop %v1516
      %v1518 = vmul.f32 %v1420, 1.442695
      %v1519 = vpow.pop %v1518
      %v1520 = vmul.f32 %v1421, 1.442695
      %v1521 = vpow.pop %v1520
      %v1522 = vmul.f32 %v1422, 1.442695
      %v1523 = vpow.pop %v1522
      %v1524 = vmul.f32 %v1423, 1.442695
      %v1525 = vpow.pop %v1524
      %v1526 = vmul.f32 %v1424, 1.442695
      %v1527 = vpow.pop %v1526
      %v1528 = vmul.f32 %v1425, 1.442695
      %v1529 = vpow.pop %v1528
      %v1530 = vmul.f32 %v1426, 1.442695
      %v1531 = vpow.pop %v1530
      %v1532 = vmul.f32 %v1427, 1.442695
      %v1533 = vpow.pop %v1532
      %v1534 = vmul.f32 %v1428, 1.442695
      %v1535 = vpow.pop %v1534
      %v1536 = vmul.f32 %v1429, 1.442695
      %v1537 = vpow.pop %v1536
      %v1538 = vmul.f32 %v1430, 1.442695
      %v1539 = vpow.pop %v1538
      %v1540 = vmul.f32 %v1431, 1.442695
      %v1541 = vpow.pop %v1540
      %v1542 = vmul.f32 %v1432, 1.442695
      %v1543 = vpow.pop %v1542
      %v1544 = vmul.f32 %v1433, 1.442695
      %v1545 = vpow.pop %v1544
      %v1546 = vmul.f32 %v1434, 1.442695
      %v1547 = vpow.pop %v1546
      %v1548 = vmul.f32 %v1435, 1.442695
      %v1549 = vpow.pop %v1548
      %v1550 = vmul.f32 %v1436, 1.442695
      %v1551 = vpow.pop %v1550
      %v1552 = vmul.f32 %v1437, 1.442695
      %v1553 = vpow.pop %v1552
      %v1554 = vmul.f32 %v1438, 1.442695
      %v1555 = vpow.pop %v1554
      %v1556 = vmul.f32 %v1439, 1.442695
      %v1557 = vpow.pop %v1556
      %v1558 = vmul.f32 %v1440, 1.442695
      %v1559 = vpow.pop %v1558
      %v1560 = vmul.f32 %v1441, 1.442695
      %v1561 = vpow.pop %v1560
      %v1562 = vmul.f32 %v1442, 1.442695
      %v1563 = vpow.pop %v1562
      %v1564 = vmul.f32 %v1443, 1.442695
      %v1565 = vpow.pop %v1564
      %v1566 = vmul.f32 %v1444, 1.442695
      %v1567 = vpow.pop %v1566
      %v1568 = vmul.f32 %v1445, 1.442695
      %v1569 = vpow.pop %v1568
      %v1570 = vmul.f32 %v1446, 1.442695
      %v1571 = vpow.pop %v1570
      %v1572 = vmul.f32 %v1447, 1.442695
      %v1573 = vpow.pop %v1572
      %v1574 = vmul.f32 %v1448, 1.442695
      %v1575 = vpow.pop %v1574
      %v1576 = vmul.f32 %v1449, 1.442695
      %v1577 = vpow.pop %v1576
      %v1578 = vld [vmem:[#allocation3] sm:$0xff]
      %v1579 = vld [vmem:[#allocation3 + $0x8] sm:$0xff]
      %v1580 = vld [vmem:[#allocation3 + $0x10] sm:$0xff]
      %v1581 = vld [vmem:[#allocation3 + $0x18] sm:$0xff]
      %v1582 = vld [vmem:[#allocation3 + $0x20] sm:$0xff]
      %v1583 = vld [vmem:[#allocation3 + $0x28] sm:$0xff]
      %v1584 = vld [vmem:[#allocation3 + $0x30] sm:$0xff]
      %v1585 = vld [vmem:[#allocation3 + $0x38] sm:$0xff]
      %v1586 = vld [vmem:[#allocation3 + $0x40] sm:$0xff]
      %v1587 = vld [vmem:[#allocation3 + $0x48] sm:$0xff]
      %v1588 = vld [vmem:[#allocation3 + $0x50] sm:$0xff]
      %v1589 = vld [vmem:[#allocation3 + $0x58] sm:$0xff]
      %v1590 = vld [vmem:[#allocation3 + $0x60] sm:$0xff]
      %v1591 = vld [vmem:[#allocation3 + $0x68] sm:$0xff]
      %v1592 = vld [vmem:[#allocation3 + $0x70] sm:$0xff]
      %v1593 = vld [vmem:[#allocation3 + $0x78] sm:$0xff]
      %v1594 = vld [vmem:[#allocation3 + $0x80] sm:$0xff]
      %v1595 = vld [vmem:[#allocation3 + $0x88] sm:$0xff]
      %v1596 = vld [vmem:[#allocation3 + $0x90] sm:$0xff]
      %v1597 = vld [vmem:[#allocation3 + $0x98] sm:$0xff]
      %v1598 = vld [vmem:[#allocation3 + $0xa0] sm:$0xff]
      %v1599 = vld [vmem:[#allocation3 + $0xa8] sm:$0xff]
      %v1600 = vld [vmem:[#allocation3 + $0xb0] sm:$0xff]
      %v1601 = vld [vmem:[#allocation3 + $0xb8] sm:$0xff]
      %v1602 = vld [vmem:[#allocation3 + $0xc0] sm:$0xff]
      %v1603 = vld [vmem:[#allocation3 + $0xc8] sm:$0xff]
      %v1604 = vld [vmem:[#allocation3 + $0xd0] sm:$0xff]
      %v1605 = vld [vmem:[#allocation3 + $0xd8] sm:$0xff]
      %v1606 = vld [vmem:[#allocation3 + $0xe0] sm:$0xff]
      %v1607 = vld [vmem:[#allocation3 + $0xe8] sm:$0xff]
      %v1608 = vld [vmem:[#allocation3 + $0xf0] sm:$0xff]
      %v1609 = vld [vmem:[#allocation3 + $0xf8] sm:$0xff]
      %v1610 = vmul.f32 %v1163, %v1578
      %v1611 = vmul.f32 %v1165, %v1579
      %v1612 = vmul.f32 %v1167, %v1580
      %v1613 = vmul.f32 %v1169, %v1581
      %v1614 = vmul.f32 %v1171, %v1582
      %v1615 = vmul.f32 %v1173, %v1583
      %v1616 = vmul.f32 %v1175, %v1584
      %v1617 = vmul.f32 %v1177, %v1585
      %v1618 = vmul.f32 %v1179, %v1586
      %v1619 = vmul.f32 %v1181, %v1587
      %v1620 = vmul.f32 %v1183, %v1588
      %v1621 = vmul.f32 %v1185, %v1589
      %v1622 = vmul.f32 %v1187, %v1590
      %v1623 = vmul.f32 %v1189, %v1591
      %v1624 = vmul.f32 %v1191, %v1592
      %v1625 = vmul.f32 %v1193, %v1593
      %v1626 = vmul.f32 %v1195, %v1594
      %v1627 = vmul.f32 %v1197, %v1595
      %v1628 = vmul.f32 %v1199, %v1596
      %v1629 = vmul.f32 %v1201, %v1597
      %v1630 = vmul.f32 %v1203, %v1598
      %v1631 = vmul.f32 %v1205, %v1599
      %v1632 = vmul.f32 %v1207, %v1600
      %v1633 = vmul.f32 %v1209, %v1601
      %v1634 = vmul.f32 %v1211, %v1602
      %v1635 = vmul.f32 %v1213, %v1603
      %v1636 = vmul.f32 %v1215, %v1604
      %v1637 = vmul.f32 %v1217, %v1605
      %v1638 = vmul.f32 %v1219, %v1606
      %v1639 = vmul.f32 %v1221, %v1607
      %v1640 = vmul.f32 %v1223, %v1608
      %v1641 = vmul.f32 %v1225, %v1609
      %v1642 = vadd.f32 %v1451, %v1453
      %1643 = vadd.xlane.f32.xlu0 %v1642
      %v1644 = vpop.xlane.xlu0 %1643
      %v1645 = vadd.f32 %v1455, %v1457
      %1646 = vadd.xlane.f32.xlu0 %v1645
      %v1647 = vpop.xlane.xlu0 %1646
      %v1648 = vadd.f32 %v1459, %v1461
      %1649 = vadd.xlane.f32.xlu0 %v1648
      %v1650 = vpop.xlane.xlu0 %1649
      %v1651 = vadd.f32 %v1463, %v1465
      %1652 = vadd.xlane.f32.xlu0 %v1651
      %v1653 = vpop.xlane.xlu0 %1652
      %v1654 = vadd.f32 %v1467, %v1469
      %1655 = vadd.xlane.f32.xlu0 %v1654
      %v1656 = vpop.xlane.xlu0 %1655
      %v1657 = vadd.f32 %v1471, %v1473
      %1658 = vadd.xlane.f32.xlu0 %v1657
      %v1659 = vpop.xlane.xlu0 %1658
      %v1660 = vadd.f32 %v1475, %v1477
      %1661 = vadd.xlane.f32.xlu0 %v1660
      %v1662 = vpop.xlane.xlu0 %1661
      %v1663 = vadd.f32 %v1479, %v1481
      %1664 = vadd.xlane.f32.xlu0 %v1663
      %v1665 = vpop.xlane.xlu0 %1664
      %v1666 = vadd.f32 %v1483, %v1485
      %1667 = vadd.xlane.f32.xlu0 %v1666
      %v1668 = vpop.xlane.xlu0 %1667
      %v1669 = vadd.f32 %v1487, %v1489
      %1670 = vadd.xlane.f32.xlu0 %v1669
      %v1671 = vpop.xlane.xlu0 %1670
      %v1672 = vadd.f32 %v1491, %v1493
      %1673 = vadd.xlane.f32.xlu0 %v1672
      %v1674 = vpop.xlane.xlu0 %1673
      %v1675 = vadd.f32 %v1495, %v1497
      %1676 = vadd.xlane.f32.xlu0 %v1675
      %v1677 = vpop.xlane.xlu0 %1676
      %v1678 = vadd.f32 %v1499, %v1501
      %1679 = vadd.xlane.f32.xlu0 %v1678
      %v1680 = vpop.xlane.xlu0 %1679
      %v1681 = vadd.f32 %v1503, %v1505
      %1682 = vadd.xlane.f32.xlu0 %v1681
      %v1683 = vpop.xlane.xlu0 %1682
      %v1684 = vadd.f32 %v1507, %v1509
      %1685 = vadd.xlane.f32.xlu0 %v1684
      %v1686 = vpop.xlane.xlu0 %1685
      %v1687 = vadd.f32 %v1511, %v1513
      %1688 = vadd.xlane.f32.xlu0 %v1687
      %v1689 = vpop.xlane.xlu0 %1688
      %v1690 = vadd.f32 %v1515, %v1517
      %1691 = vadd.xlane.f32.xlu0 %v1690
      %v1692 = vpop.xlane.xlu0 %1691
      %v1693 = vadd.f32 %v1519, %v1521
      %1694 = vadd.xlane.f32.xlu0 %v1693
      %v1695 = vpop.xlane.xlu0 %1694
      %v1696 = vadd.f32 %v1523, %v1525
      %1697 = vadd.xlane.f32.xlu0 %v1696
      %v1698 = vpop.xlane.xlu0 %1697
      %v1699 = vadd.f32 %v1527, %v1529
      %1700 = vadd.xlane.f32.xlu0 %v1699
      %v1701 = vpop.xlane.xlu0 %1700
      %v1702 = vadd.f32 %v1531, %v1533
      %1703 = vadd.xlane.f32.xlu0 %v1702
      %v1704 = vpop.xlane.xlu0 %1703
      %v1705 = vadd.f32 %v1535, %v1537
      %1706 = vadd.xlane.f32.xlu0 %v1705
      %v1707 = vpop.xlane.xlu0 %1706
      %v1708 = vadd.f32 %v1539, %v1541
      %1709 = vadd.xlane.f32.xlu0 %v1708
      %v1710 = vpop.xlane.xlu0 %1709
      %v1711 = vadd.f32 %v1543, %v1545
      %1712 = vadd.xlane.f32.xlu0 %v1711
      %v1713 = vpop.xlane.xlu0 %1712
      %v1714 = vadd.f32 %v1547, %v1549
      %1715 = vadd.xlane.f32.xlu0 %v1714
      %v1716 = vpop.xlane.xlu0 %1715
      %v1717 = vadd.f32 %v1551, %v1553
      %1718 = vadd.xlane.f32.xlu0 %v1717
      %v1719 = vpop.xlane.xlu0 %1718
      %v1720 = vadd.f32 %v1555, %v1557
      %1721 = vadd.xlane.f32.xlu0 %v1720
      %v1722 = vpop.xlane.xlu0 %1721
      %v1723 = vadd.f32 %v1559, %v1561
      %1724 = vadd.xlane.f32.xlu0 %v1723
      %v1725 = vpop.xlane.xlu0 %1724
      %v1726 = vadd.f32 %v1563, %v1565
      %1727 = vadd.xlane.f32.xlu0 %v1726
      %v1728 = vpop.xlane.xlu0 %1727
      %v1729 = vadd.f32 %v1567, %v1569
      %1730 = vadd.xlane.f32.xlu0 %v1729
      %v1731 = vpop.xlane.xlu0 %1730
      %v1732 = vadd.f32 %v1571, %v1573
      %1733 = vadd.xlane.f32.xlu0 %v1732
      %v1734 = vpop.xlane.xlu0 %1733
      %v1735 = vadd.f32 %v1575, %v1577
      %1736 = vadd.xlane.f32.xlu0 %v1735
      %v1737 = vpop.xlane.xlu0 %1736
      %v1738 = vadd.f32 %v1610, %v1644
      %v1739 = vadd.f32 %v1611, %v1647
      %v1740 = vadd.f32 %v1612, %v1650
      %v1741 = vadd.f32 %v1613, %v1653
      %v1742 = vadd.f32 %v1614, %v1656
      %v1743 = vadd.f32 %v1615, %v1659
      %v1744 = vadd.f32 %v1616, %v1662
      %v1745 = vadd.f32 %v1617, %v1665
      %v1746 = vadd.f32 %v1618, %v1668
      %v1747 = vadd.f32 %v1619, %v1671
      %v1748 = vadd.f32 %v1620, %v1674
      %v1749 = vadd.f32 %v1621, %v1677
      %v1750 = vadd.f32 %v1622, %v1680
      %v1751 = vadd.f32 %v1623, %v1683
      %v1752 = vadd.f32 %v1624, %v1686
      %v1753 = vadd.f32 %v1625, %v1689
      %v1754 = vadd.f32 %v1626, %v1692
      %v1755 = vadd.f32 %v1627, %v1695
      %v1756 = vadd.f32 %v1628, %v1698
      %v1757 = vadd.f32 %v1629, %v1701
      %v1758 = vadd.f32 %v1630, %v1704
      %v1759 = vadd.f32 %v1631, %v1707
      %v1760 = vadd.f32 %v1632, %v1710
      %v1761 = vadd.f32 %v1633, %v1713
      %v1762 = vadd.f32 %v1634, %v1716
      %v1763 = vadd.f32 %v1635, %v1719
      %v1764 = vadd.f32 %v1636, %v1722
      %v1765 = vadd.f32 %v1637, %v1725
      %v1766 = vadd.f32 %v1638, %v1728
      %v1767 = vadd.f32 %v1639, %v1731
      %v1768 = vadd.f32 %v1640, %v1734
      %v1769 = vadd.f32 %v1641, %v1737
      %vm1770 = vcmask 7168
      %1771 = vst.msk [vmem:[#allocation3] sm:$0xff] %vm1770, %v1738
      %1772 = vst.msk [vmem:[#allocation3 + $0x8] sm:$0xff] %vm1770, %v1739
      %1773 = vst.msk [vmem:[#allocation3 + $0x10] sm:$0xff] %vm1770, %v1740
      %1774 = vst.msk [vmem:[#allocation3 + $0x18] sm:$0xff] %vm1770, %v1741
      %1775 = vst.msk [vmem:[#allocation3 + $0x20] sm:$0xff] %vm1770, %v1742
      %1776 = vst.msk [vmem:[#allocation3 + $0x28] sm:$0xff] %vm1770, %v1743
      %1777 = vst.msk [vmem:[#allocation3 + $0x30] sm:$0xff] %vm1770, %v1744
      %1778 = vst.msk [vmem:[#allocation3 + $0x38] sm:$0xff] %vm1770, %v1745
      %1779 = vst.msk [vmem:[#allocation3 + $0x40] sm:$0xff] %vm1770, %v1746
      %1780 = vst.msk [vmem:[#allocation3 + $0x48] sm:$0xff] %vm1770, %v1747
      %1781 = vst.msk [vmem:[#allocation3 + $0x50] sm:$0xff] %vm1770, %v1748
      %1782 = vst.msk [vmem:[#allocation3 + $0x58] sm:$0xff] %vm1770, %v1749
      %1783 = vst.msk [vmem:[#allocation3 + $0x60] sm:$0xff] %vm1770, %v1750
      %1784 = vst.msk [vmem:[#allocation3 + $0x68] sm:$0xff] %vm1770, %v1751
      %1785 = vst.msk [vmem:[#allocation3 + $0x70] sm:$0xff] %vm1770, %v1752
      %1786 = vst.msk [vmem:[#allocation3 + $0x78] sm:$0xff] %vm1770, %v1753
      %1787 = vst.msk [vmem:[#allocation3 + $0x80] sm:$0xff] %vm1770, %v1754
      %1788 = vst.msk [vmem:[#allocation3 + $0x88] sm:$0xff] %vm1770, %v1755
      %1789 = vst.msk [vmem:[#allocation3 + $0x90] sm:$0xff] %vm1770, %v1756
      %1790 = vst.msk [vmem:[#allocation3 + $0x98] sm:$0xff] %vm1770, %v1757
      %1791 = vst.msk [vmem:[#allocation3 + $0xa0] sm:$0xff] %vm1770, %v1758
      %1792 = vst.msk [vmem:[#allocation3 + $0xa8] sm:$0xff] %vm1770, %v1759
      %1793 = vst.msk [vmem:[#allocation3 + $0xb0] sm:$0xff] %vm1770, %v1760
      %1794 = vst.msk [vmem:[#allocation3 + $0xb8] sm:$0xff] %vm1770, %v1761
      %1795 = vst.msk [vmem:[#allocation3 + $0xc0] sm:$0xff] %vm1770, %v1762
      %1796 = vst.msk [vmem:[#allocation3 + $0xc8] sm:$0xff] %vm1770, %v1763
      %1797 = vst.msk [vmem:[#allocation3 + $0xd0] sm:$0xff] %vm1770, %v1764
      %1798 = vst.msk [vmem:[#allocation3 + $0xd8] sm:$0xff] %vm1770, %v1765
      %1799 = vst.msk [vmem:[#allocation3 + $0xe0] sm:$0xff] %vm1770, %v1766
      %1800 = vst.msk [vmem:[#allocation3 + $0xe8] sm:$0xff] %vm1770, %v1767
      %1801 = vst.msk [vmem:[#allocation3 + $0xf0] sm:$0xff] %vm1770, %v1768
      %1802 = vst.msk [vmem:[#allocation3 + $0xf8] sm:$0xff] %vm1770, %v1769
      %v1803 = vld [vmem:[#allocation4] sm:$0xff]
      %v1804 = vld [vmem:[#allocation4 + $0x8] sm:$0xff]
      %v1805 = vld [vmem:[#allocation4 + $0x10] sm:$0xff]
      %v1806 = vld [vmem:[#allocation4 + $0x18] sm:$0xff]
      %v1807 = vld [vmem:[#allocation4 + $0x20] sm:$0xff]
      %v1808 = vld [vmem:[#allocation4 + $0x28] sm:$0xff]
      %v1809 = vld [vmem:[#allocation4 + $0x30] sm:$0xff]
      %v1810 = vld [vmem:[#allocation4 + $0x38] sm:$0xff]
      %v1811 = vld [vmem:[#allocation4 + $0x40] sm:$0xff]
      %v1812 = vld [vmem:[#allocation4 + $0x48] sm:$0xff]
      %v1813 = vld [vmem:[#allocation4 + $0x50] sm:$0xff]
      %v1814 = vld [vmem:[#allocation4 + $0x58] sm:$0xff]
      %v1815 = vld [vmem:[#allocation4 + $0x60] sm:$0xff]
      %v1816 = vld [vmem:[#allocation4 + $0x68] sm:$0xff]
      %v1817 = vld [vmem:[#allocation4 + $0x70] sm:$0xff]
      %v1818 = vld [vmem:[#allocation4 + $0x78] sm:$0xff]
      %v1819 = vld [vmem:[#allocation4 + $0x80] sm:$0xff]
      %v1820 = vld [vmem:[#allocation4 + $0x88] sm:$0xff]
      %v1821 = vld [vmem:[#allocation4 + $0x90] sm:$0xff]
      %v1822 = vld [vmem:[#allocation4 + $0x98] sm:$0xff]
      %v1823 = vld [vmem:[#allocation4 + $0xa0] sm:$0xff]
      %v1824 = vld [vmem:[#allocation4 + $0xa8] sm:$0xff]
      %v1825 = vld [vmem:[#allocation4 + $0xb0] sm:$0xff]
      %v1826 = vld [vmem:[#allocation4 + $0xb8] sm:$0xff]
      %v1827 = vld [vmem:[#allocation4 + $0xc0] sm:$0xff]
      %v1828 = vld [vmem:[#allocation4 + $0xc8] sm:$0xff]
      %v1829 = vld [vmem:[#allocation4 + $0xd0] sm:$0xff]
      %v1830 = vld [vmem:[#allocation4 + $0xd8] sm:$0xff]
      %v1831 = vld [vmem:[#allocation4 + $0xe0] sm:$0xff]
      %v1832 = vld [vmem:[#allocation4 + $0xe8] sm:$0xff]
      %v1833 = vld [vmem:[#allocation4 + $0xf0] sm:$0xff]
      %v1834 = vld [vmem:[#allocation4 + $0xf8] sm:$0xff]
      %1836 = vset.pattern.permute.xlu0 0
      %1837 = vperm.xlu0 %1836, %v1163
      %v1838 = vpop.permute.xlu0 %1837
      %1841 = vset.pattern.permute.xlu0 0
      %1842 = vperm.xlu0 %1841, %v1165
      %v1843 = vpop.permute.xlu0 %1842
      %1846 = vset.pattern.permute.xlu0 0
      %1847 = vperm.xlu0 %1846, %v1167
      %v1848 = vpop.permute.xlu0 %1847
      %1851 = vset.pattern.permute.xlu0 0
      %1852 = vperm.xlu0 %1851, %v1169
      %v1853 = vpop.permute.xlu0 %1852
      %1856 = vset.pattern.permute.xlu0 0
      %1857 = vperm.xlu0 %1856, %v1171
      %v1858 = vpop.permute.xlu0 %1857
      %1861 = vset.pattern.permute.xlu0 0
      %1862 = vperm.xlu0 %1861, %v1173
      %v1863 = vpop.permute.xlu0 %1862
      %1866 = vset.pattern.permute.xlu0 0
      %1867 = vperm.xlu0 %1866, %v1175
      %v1868 = vpop.permute.xlu0 %1867
      %1871 = vset.pattern.permute.xlu0 0
      %1872 = vperm.xlu0 %1871, %v1177
      %v1873 = vpop.permute.xlu0 %1872
      %1876 = vset.pattern.permute.xlu0 0
      %1877 = vperm.xlu0 %1876, %v1179
      %v1878 = vpop.permute.xlu0 %1877
      %1881 = vset.pattern.permute.xlu0 0
      %1882 = vperm.xlu0 %1881, %v1181
      %v1883 = vpop.permute.xlu0 %1882
      %1886 = vset.pattern.permute.xlu0 0
      %1887 = vperm.xlu0 %1886, %v1183
      %v1888 = vpop.permute.xlu0 %1887
      %1891 = vset.pattern.permute.xlu0 0
      %1892 = vperm.xlu0 %1891, %v1185
      %v1893 = vpop.permute.xlu0 %1892
      %1896 = vset.pattern.permute.xlu0 0
      %1897 = vperm.xlu0 %1896, %v1187
      %v1898 = vpop.permute.xlu0 %1897
      %1901 = vset.pattern.permute.xlu0 0
      %1902 = vperm.xlu0 %1901, %v1189
      %v1903 = vpop.permute.xlu0 %1902
      %1906 = vset.pattern.permute.xlu0 0
      %1907 = vperm.xlu0 %1906, %v1191
      %v1908 = vpop.permute.xlu0 %1907
      %1911 = vset.pattern.permute.xlu0 0
      %1912 = vperm.xlu0 %1911, %v1193
      %v1913 = vpop.permute.xlu0 %1912
      %1916 = vset.pattern.permute.xlu0 0
      %1917 = vperm.xlu0 %1916, %v1195
      %v1918 = vpop.permute.xlu0 %1917
      %1921 = vset.pattern.permute.xlu0 0
      %1922 = vperm.xlu0 %1921, %v1197
      %v1923 = vpop.permute.xlu0 %1922
      %1926 = vset.pattern.permute.xlu0 0
      %1927 = vperm.xlu0 %1926, %v1199
      %v1928 = vpop.permute.xlu0 %1927
      %1931 = vset.pattern.permute.xlu0 0
      %1932 = vperm.xlu0 %1931, %v1201
      %v1933 = vpop.permute.xlu0 %1932
      %1936 = vset.pattern.permute.xlu0 0
      %1937 = vperm.xlu0 %1936, %v1203
      %v1938 = vpop.permute.xlu0 %1937
      %1941 = vset.pattern.permute.xlu0 0
      %1942 = vperm.xlu0 %1941, %v1205
      %v1943 = vpop.permute.xlu0 %1942
      %1946 = vset.pattern.permute.xlu0 0
      %1947 = vperm.xlu0 %1946, %v1207
      %v1948 = vpop.permute.xlu0 %1947
      %1951 = vset.pattern.permute.xlu0 0
      %1952 = vperm.xlu0 %1951, %v1209
      %v1953 = vpop.permute.xlu0 %1952
      %1956 = vset.pattern.permute.xlu0 0
      %1957 = vperm.xlu0 %1956, %v1211
      %v1958 = vpop.permute.xlu0 %1957
      %1961 = vset.pattern.permute.xlu0 0
      %1962 = vperm.xlu0 %1961, %v1213
      %v1963 = vpop.permute.xlu0 %1962
      %1966 = vset.pattern.permute.xlu0 0
      %1967 = vperm.xlu0 %1966, %v1215
      %v1968 = vpop.permute.xlu0 %1967
      %1971 = vset.pattern.permute.xlu0 0
      %1972 = vperm.xlu0 %1971, %v1217
      %v1973 = vpop.permute.xlu0 %1972
      %1976 = vset.pattern.permute.xlu0 0
      %1977 = vperm.xlu0 %1976, %v1219
      %v1978 = vpop.permute.xlu0 %1977
      %1981 = vset.pattern.permute.xlu0 0
      %1982 = vperm.xlu0 %1981, %v1221
      %v1983 = vpop.permute.xlu0 %1982
      %1986 = vset.pattern.permute.xlu0 0
      %1987 = vperm.xlu0 %1986, %v1223
      %v1988 = vpop.permute.xlu0 %1987
      %1991 = vset.pattern.permute.xlu0 0
      %1992 = vperm.xlu0 %1991, %v1225
      %v1993 = vpop.permute.xlu0 %1992
      %v1995 = vmul.f32 %v1838, %v1803
      %v1996 = vmul.f32 %v1843, %v1804
      %v1997 = vmul.f32 %v1848, %v1805
      %v1998 = vmul.f32 %v1853, %v1806
      %v1999 = vmul.f32 %v1858, %v1807
      %v2000 = vmul.f32 %v1863, %v1808
      %v2001 = vmul.f32 %v1868, %v1809
      %v2002 = vmul.f32 %v1873, %v1810
      %v2003 = vmul.f32 %v1878, %v1811
      %v2004 = vmul.f32 %v1883, %v1812
      %v2005 = vmul.f32 %v1888, %v1813
      %v2006 = vmul.f32 %v1893, %v1814
      %v2007 = vmul.f32 %v1898, %v1815
      %v2008 = vmul.f32 %v1903, %v1816
      %v2009 = vmul.f32 %v1908, %v1817
      %v2010 = vmul.f32 %v1913, %v1818
      %v2011 = vmul.f32 %v1918, %v1819
      %v2012 = vmul.f32 %v1923, %v1820
      %v2013 = vmul.f32 %v1928, %v1821
      %v2014 = vmul.f32 %v1933, %v1822
      %v2015 = vmul.f32 %v1938, %v1823
      %v2016 = vmul.f32 %v1943, %v1824
      %v2017 = vmul.f32 %v1948, %v1825
      %v2018 = vmul.f32 %v1953, %v1826
      %v2019 = vmul.f32 %v1958, %v1827
      %v2020 = vmul.f32 %v1963, %v1828
      %v2021 = vmul.f32 %v1968, %v1829
      %v2022 = vmul.f32 %v1973, %v1830
      %v2023 = vmul.f32 %v1978, %v1831
      %v2024 = vmul.f32 %v1983, %v1832
      %v2025 = vmul.f32 %v1988, %v1833
      %v2026 = vmul.f32 %v1993, %v1834
      %v2027 = vpack.c.bf16 %v1455, %v1451
      %v2028 = vpack.c.bf16 %v1457, %v1453
      %v2029 = vpack.c.bf16 %v1463, %v1459
      %v2030 = vpack.c.bf16 %v1465, %v1461
      %v2031 = vpack.c.bf16 %v1471, %v1467
      %v2032 = vpack.c.bf16 %v1473, %v1469
      %v2033 = vpack.c.bf16 %v1479, %v1475
      %v2034 = vpack.c.bf16 %v1481, %v1477
      %v2035 = vpack.c.bf16 %v1487, %v1483
      %v2036 = vpack.c.bf16 %v1489, %v1485
      %v2037 = vpack.c.bf16 %v1495, %v1491
      %v2038 = vpack.c.bf16 %v1497, %v1493
      %v2039 = vpack.c.bf16 %v1503, %v1499
      %v2040 = vpack.c.bf16 %v1505, %v1501
      %v2041 = vpack.c.bf16 %v1511, %v1507
      %v2042 = vpack.c.bf16 %v1513, %v1509
      %v2043 = vpack.c.bf16 %v1519, %v1515
      %v2044 = vpack.c.bf16 %v1521, %v1517
      %v2045 = vpack.c.bf16 %v1527, %v1523
      %v2046 = vpack.c.bf16 %v1529, %v1525
      %v2047 = vpack.c.bf16 %v1535, %v1531
      %v2048 = vpack.c.bf16 %v1537, %v1533
      %v2049 = vpack.c.bf16 %v1543, %v1539
      %v2050 = vpack.c.bf16 %v1545, %v1541
      %v2051 = vpack.c.bf16 %v1551, %v1547
      %v2052 = vpack.c.bf16 %v1553, %v1549
      %v2053 = vpack.c.bf16 %v1559, %v1555
      %v2054 = vpack.c.bf16 %v1561, %v1557
      %v2055 = vpack.c.bf16 %v1567, %v1563
      %v2056 = vpack.c.bf16 %v1569, %v1565
      %v2057 = vpack.c.bf16 %v1575, %v1571
      %v2058 = vpack.c.bf16 %v1577, %v1573
      %v2059 = vld [vmem:[%s277] sm:$0xf]
      %v2060 = vld [vmem:[%s277 + $0x4] sm:$0xf]
      %v2061 = vld [vmem:[%s277 + $0x8] sm:$0xf]
      %v2062 = vld [vmem:[%s277 + $0xc] sm:$0xf]
      %v2063 = vld [vmem:[%s277 + $0x10] sm:$0xf]
      %v2064 = vld [vmem:[%s277 + $0x14] sm:$0xf]
      %v2065 = vld [vmem:[%s277 + $0x18] sm:$0xf]
      %v2066 = vld [vmem:[%s277 + $0x1c] sm:$0xf]
      %v2067 = vld [vmem:[%s277 + $0x20] sm:$0xf]
      %v2068 = vld [vmem:[%s277 + $0x24] sm:$0xf]
      %v2069 = vld [vmem:[%s277 + $0x28] sm:$0xf]
      %v2070 = vld [vmem:[%s277 + $0x2c] sm:$0xf]
      %v2071 = vld [vmem:[%s277 + $0x30] sm:$0xf]
      %v2072 = vld [vmem:[%s277 + $0x34] sm:$0xf]
      %v2073 = vld [vmem:[%s277 + $0x38] sm:$0xf]
      %v2074 = vld [vmem:[%s277 + $0x3c] sm:$0xf]
      %v2075 = vld [vmem:[%s277 + $0x40] sm:$0xf]
      %v2076 = vld [vmem:[%s277 + $0x44] sm:$0xf]
      %v2077 = vld [vmem:[%s277 + $0x48] sm:$0xf]
      %v2078 = vld [vmem:[%s277 + $0x4c] sm:$0xf]
      %v2079 = vld [vmem:[%s277 + $0x50] sm:$0xf]
      %v2080 = vld [vmem:[%s277 + $0x54] sm:$0xf]
      %v2081 = vld [vmem:[%s277 + $0x58] sm:$0xf]
      %v2082 = vld [vmem:[%s277 + $0x5c] sm:$0xf]
      %v2083 = vld [vmem:[%s277 + $0x60] sm:$0xf]
      %v2084 = vld [vmem:[%s277 + $0x64] sm:$0xf]
      %v2085 = vld [vmem:[%s277 + $0x68] sm:$0xf]
      %v2086 = vld [vmem:[%s277 + $0x6c] sm:$0xf]
      %v2087 = vld [vmem:[%s277 + $0x70] sm:$0xf]
      %v2088 = vld [vmem:[%s277 + $0x74] sm:$0xf]
      %v2089 = vld [vmem:[%s277 + $0x78] sm:$0xf]
      %v2090 = vld [vmem:[%s277 + $0x7c] sm:$0xf]
      %v2123 = vunpack.c.l.b16 %v2059
      %v2124 = vunpack.c.l.b16 %v2060
      %v2125 = vunpack.c.l.b16 %v2061
      %v2126 = vunpack.c.l.b16 %v2062
      %v2127 = vunpack.c.l.b16 %v2063
      %v2128 = vunpack.c.l.b16 %v2064
      %v2129 = vunpack.c.l.b16 %v2065
      %v2130 = vunpack.c.l.b16 %v2066
      %v2131 = vunpack.c.l.b16 %v2067
      %v2132 = vunpack.c.l.b16 %v2068
      %v2133 = vunpack.c.l.b16 %v2069
      %v2134 = vunpack.c.l.b16 %v2070
      %v2135 = vunpack.c.l.b16 %v2071
      %v2136 = vunpack.c.l.b16 %v2072
      %v2137 = vunpack.c.l.b16 %v2073
      %v2138 = vunpack.c.l.b16 %v2074
      %v2139 = vunpack.c.l.b16 %v2075
      %v2140 = vunpack.c.l.b16 %v2076
      %v2141 = vunpack.c.l.b16 %v2077
      %v2142 = vunpack.c.l.b16 %v2078
      %v2143 = vunpack.c.l.b16 %v2079
      %v2144 = vunpack.c.l.b16 %v2080
      %v2145 = vunpack.c.l.b16 %v2081
      %v2146 = vunpack.c.l.b16 %v2082
      %v2147 = vunpack.c.l.b16 %v2083
      %v2148 = vunpack.c.l.b16 %v2084
      %v2149 = vunpack.c.l.b16 %v2085
      %v2150 = vunpack.c.l.b16 %v2086
      %v2151 = vunpack.c.l.b16 %v2087
      %v2152 = vunpack.c.l.b16 %v2088
      %v2153 = vunpack.c.l.b16 %v2089
      %v2154 = vunpack.c.l.b16 %v2090
      %v2155 = vpack.c.b16 %v2124, %v2123
      %v2156 = vpack.c.b16 %v2126, %v2125
      %v2157 = vpack.c.b16 %v2128, %v2127
      %v2158 = vpack.c.b16 %v2130, %v2129
      %v2159 = vpack.c.b16 %v2132, %v2131
      %v2160 = vpack.c.b16 %v2134, %v2133
      %v2161 = vpack.c.b16 %v2136, %v2135
      %v2162 = vpack.c.b16 %v2138, %v2137
      %v2163 = vpack.c.b16 %v2140, %v2139
      %v2164 = vpack.c.b16 %v2142, %v2141
      %v2165 = vpack.c.b16 %v2144, %v2143
      %v2166 = vpack.c.b16 %v2146, %v2145
      %v2167 = vpack.c.b16 %v2148, %v2147
      %v2168 = vpack.c.b16 %v2150, %v2149
      %v2169 = vpack.c.b16 %v2152, %v2151
      %v2170 = vpack.c.b16 %v2154, %v2153
      %2187 = vmatprep.subr.bf16.mxu0 0
      %2188 = vmatpush1.bf16.msra.mxu0 %v2155
      %2189 = vmatprep.subr.bf16.mxu0 0
      %2190 = vmatpush1.bf16.msra.mxu0 %v2156
      %2191 = vmatprep.subr.bf16.mxu0 0
      %2192 = vmatpush1.bf16.msra.mxu0 %v2157
      %2193 = vmatprep.subr.bf16.mxu0 0
      %2194 = vmatpush1.bf16.msra.mxu0 %v2158
      %2195 = vmatprep.subr.bf16.mxu0 0
      %2196 = vmatpush1.bf16.msra.mxu0 %v2159
      %2197 = vmatprep.subr.bf16.mxu0 0
      %2198 = vmatpush1.bf16.msra.mxu0 %v2160
      %2199 = vmatprep.subr.bf16.mxu0 0
      %2200 = vmatpush1.bf16.msra.mxu0 %v2161
      %2201 = vmatprep.subr.bf16.mxu0 0
      %2202 = vmatpush1.bf16.msra.mxu0 %v2162
      %2203 = vmatprep.subr.bf16.mxu0 0
      %2204 = vmatpush1.bf16.msra.mxu0 %v2163
      %2205 = vmatprep.subr.bf16.mxu0 0
      %2206 = vmatpush1.bf16.msra.mxu0 %v2164
      %2207 = vmatprep.subr.bf16.mxu0 0
      %2208 = vmatpush1.bf16.msra.mxu0 %v2165
      %2209 = vmatprep.subr.bf16.mxu0 0
      %2210 = vmatpush1.bf16.msra.mxu0 %v2166
      %2211 = vmatprep.subr.bf16.mxu0 0
      %2212 = vmatpush1.bf16.msra.mxu0 %v2167
      %2213 = vmatprep.subr.bf16.mxu0 0
      %2214 = vmatpush1.bf16.msra.mxu0 %v2168
      %2215 = vmatprep.subr.bf16.mxu0 0
      %2216 = vmatpush1.bf16.msra.mxu0 %v2169
      %2217 = vmatprep.subr.bf16.mxu0 0
      %2218 = vmatpush1.bf16.msra.mxu0 %v2170
      %2219 = vmatprep.mubr.bf16.mxu0 %v2028
      %2220 = vmatmul.mubr.bf16.gmra.mrb[0].mxu0 %v2027
      %v2221 = vpop.f32.mrb[0].mxu0
      %v2222 = vadd.f32 0.0, %v2221
      %v2223 = vpop.f32.mrb[0].mxu0
      %v2224 = vpop.f32.mrb[0].mxu0
      %v2225 = vadd.f32 0.0, %v2224
      %v2226 = vpop.f32.mrb[0].mxu0
      %2227 = vmatprep.mubr.bf16.mxu0 %v2030
      %2228 = vmatmul.mubr.bf16.gmra.mrb[0].mxu0 %v2029
      %v2229 = vpop.f32.mrb[0].mxu0
      %v2230 = vadd.f32 0.0, %v2229
      %v2231 = vpop.f32.mrb[0].mxu0
      %v2232 = vpop.f32.mrb[0].mxu0
      %v2233 = vadd.f32 0.0, %v2232
      %v2234 = vpop.f32.mrb[0].mxu0
      %2235 = vmatprep.mubr.bf16.mxu0 %v2032
      %2236 = vmatmul.mubr.bf16.gmra.mrb[0].mxu0 %v2031
      %v2237 = vpop.f32.mrb[0].mxu0
      %v2238 = vadd.f32 0.0, %v2237
      %v2239 = vpop.f32.mrb[0].mxu0
      %v2240 = vpop.f32.mrb[0].mxu0
      %v2241 = vadd.f32 0.0, %v2240
      %v2242 = vpop.f32.mrb[0].mxu0
      %2243 = vmatprep.mubr.bf16.mxu0 %v2034
      %2244 = vmatmul.mubr.bf16.gmra.mrb[0].mxu0 %v2033
      %v2245 = vpop.f32.mrb[0].mxu0
      %v2246 = vadd.f32 0.0, %v2245
      %v2247 = vpop.f32.mrb[0].mxu0
      %v2248 = vpop.f32.mrb[0].mxu0
      %v2249 = vadd.f32 0.0, %v2248
      %v2250 = vpop.f32.mrb[0].mxu0
      %2251 = vmatprep.mubr.bf16.mxu0 %v2036
      %2252 = vmatmul.mubr.bf16.gmra.mrb[0].mxu0 %v2035
      %v2253 = vpop.f32.mrb[0].mxu0
      %v2254 = vadd.f32 0.0, %v2253
      %v2255 = vpop.f32.mrb[0].mxu0
      %v2256 = vpop.f32.mrb[0].mxu0
      %v2257 = vadd.f32 0.0, %v2256
      %v2258 = vpop.f32.mrb[0].mxu0
      %2259 = vmatprep.mubr.bf16.mxu0 %v2038
      %2260 = vmatmul.mubr.bf16.gmra.mrb[0].mxu0 %v2037
      %v2261 = vpop.f32.mrb[0].mxu0
      %v2262 = vadd.f32 0.0, %v2261
      %v2263 = vpop.f32.mrb[0].mxu0
      %v2264 = vpop.f32.mrb[0].mxu0
      %v2265 = vadd.f32 0.0, %v2264
      %v2266 = vpop.f32.mrb[0].mxu0
      %2267 = vmatprep.mubr.bf16.mxu0 %v2040
      %2268 = vmatmul.mubr.bf16.gmra.mrb[0].mxu0 %v2039
      %v2269 = vpop.f32.mrb[0].mxu0
      %v2270 = vadd.f32 0.0, %v2269
      %v2271 = vpop.f32.mrb[0].mxu0
      %v2272 = vpop.f32.mrb[0].mxu0
      %v2273 = vadd.f32 0.0, %v2272
      %v2274 = vpop.f32.mrb[0].mxu0
      %2275 = vmatprep.mubr.bf16.mxu0 %v2042
      %2276 = vmatmul.mubr.bf16.gmra.mrb[0].mxu0 %v2041
      %v2277 = vpop.f32.mrb[0].mxu0
      %v2278 = vadd.f32 0.0, %v2277
      %v2279 = vpop.f32.mrb[0].mxu0
      %v2280 = vpop.f32.mrb[0].mxu0
      %v2281 = vadd.f32 0.0, %v2280
      %v2282 = vpop.f32.mrb[0].mxu0
      %2283 = vmatprep.mubr.bf16.mxu0 %v2044
      %2284 = vmatmul.mubr.bf16.gmra.mrb[0].mxu0 %v2043
      %v2285 = vpop.f32.mrb[0].mxu0
      %v2286 = vadd.f32 0.0, %v2285
      %v2287 = vpop.f32.mrb[0].mxu0
      %v2288 = vpop.f32.mrb[0].mxu0
      %v2289 = vadd.f32 0.0, %v2288
      %v2290 = vpop.f32.mrb[0].mxu0
      %2291 = vmatprep.mubr.bf16.mxu0 %v2046
      %2292 = vmatmul.mubr.bf16.gmra.mrb[0].mxu0 %v2045
      %v2293 = vpop.f32.mrb[0].mxu0
      %v2294 = vadd.f32 0.0, %v2293
      %v2295 = vpop.f32.mrb[0].mxu0
      %v2296 = vpop.f32.mrb[0].mxu0
      %v2297 = vadd.f32 0.0, %v2296
      %v2298 = vpop.f32.mrb[0].mxu0
      %2299 = vmatprep.mubr.bf16.mxu0 %v2048
      %2300 = vmatmul.mubr.bf16.gmra.mrb[0].mxu0 %v2047
      %v2301 = vpop.f32.mrb[0].mxu0
      %v2302 = vadd.f32 0.0, %v2301
      %v2303 = vpop.f32.mrb[0].mxu0
      %v2304 = vpop.f32.mrb[0].mxu0
      %v2305 = vadd.f32 0.0, %v2304
      %v2306 = vpop.f32.mrb[0].mxu0
      %2307 = vmatprep.mubr.bf16.mxu0 %v2050
      %2308 = vmatmul.mubr.bf16.gmra.mrb[0].mxu0 %v2049
      %v2309 = vpop.f32.mrb[0].mxu0
      %v2310 = vadd.f32 0.0, %v2309
      %v2311 = vpop.f32.mrb[0].mxu0
      %v2312 = vpop.f32.mrb[0].mxu0
      %v2313 = vadd.f32 0.0, %v2312
      %v2314 = vpop.f32.mrb[0].mxu0
      %2315 = vmatprep.mubr.bf16.mxu0 %v2052
      %2316 = vmatmul.mubr.bf16.gmra.mrb[0].mxu0 %v2051
      %v2317 = vpop.f32.mrb[0].mxu0
      %v2318 = vadd.f32 0.0, %v2317
      %v2319 = vpop.f32.mrb[0].mxu0
      %v2320 = vpop.f32.mrb[0].mxu0
      %v2321 = vadd.f32 0.0, %v2320
      %v2322 = vpop.f32.mrb[0].mxu0
      %2323 = vmatprep.mubr.bf16.mxu0 %v2054
      %2324 = vmatmul.mubr.bf16.gmra.mrb[0].mxu0 %v2053
      %v2325 = vpop.f32.mrb[0].mxu0
      %v2326 = vadd.f32 0.0, %v2325
      %v2327 = vpop.f32.mrb[0].mxu0
      %v2328 = vpop.f32.mrb[0].mxu0
      %v2329 = vadd.f32 0.0, %v2328
      %v2330 = vpop.f32.mrb[0].mxu0
      %2331 = vmatprep.mubr.bf16.mxu0 %v2056
      %2332 = vmatmul.mubr.bf16.gmra.mrb[0].mxu0 %v2055
      %v2333 = vpop.f32.mrb[0].mxu0
      %v2334 = vadd.f32 0.0, %v2333
      %v2335 = vpop.f32.mrb[0].mxu0
      %v2336 = vpop.f32.mrb[0].mxu0
      %v2337 = vadd.f32 0.0, %v2336
      %v2338 = vpop.f32.mrb[0].mxu0
      %2339 = vmatprep.mubr.bf16.mxu0 %v2058
      %2340 = vmatmul.mubr.bf16.gmra.mrb[0].mxu0 %v2057
      %v2341 = vpop.f32.mrb[0].mxu0
      %v2342 = vadd.f32 0.0, %v2341
      %v2343 = vpop.f32.mrb[0].mxu0
      %v2344 = vpop.f32.mrb[0].mxu0
      %v2345 = vadd.f32 0.0, %v2344
      %v2346 = vpop.f32.mrb[0].mxu0
      %2347 = vdwg.mxu0
      %v2348 = vadd.f32 %v1995, %v2222
      %v2349 = vadd.f32 %v1996, %v2225
      %v2350 = vadd.f32 %v1997, %v2230
      %v2351 = vadd.f32 %v1998, %v2233
      %v2352 = vadd.f32 %v1999, %v2238
      %v2353 = vadd.f32 %v2000, %v2241
      %v2354 = vadd.f32 %v2001, %v2246
      %v2355 = vadd.f32 %v2002, %v2249
      %v2356 = vadd.f32 %v2003, %v2254
      %v2357 = vadd.f32 %v2004, %v2257
      %v2358 = vadd.f32 %v2005, %v2262
      %v2359 = vadd.f32 %v2006, %v2265
      %v2360 = vadd.f32 %v2007, %v2270
      %v2361 = vadd.f32 %v2008, %v2273
      %v2362 = vadd.f32 %v2009, %v2278
      %v2363 = vadd.f32 %v2010, %v2281
      %v2364 = vadd.f32 %v2011, %v2286
      %v2365 = vadd.f32 %v2012, %v2289
      %v2366 = vadd.f32 %v2013, %v2294
      %v2367 = vadd.f32 %v2014, %v2297
      %v2368 = vadd.f32 %v2015, %v2302
      %v2369 = vadd.f32 %v2016, %v2305
      %v2370 = vadd.f32 %v2017, %v2310
      %v2371 = vadd.f32 %v2018, %v2313
      %v2372 = vadd.f32 %v2019, %v2318
      %v2373 = vadd.f32 %v2020, %v2321
      %v2374 = vadd.f32 %v2021, %v2326
      %v2375 = vadd.f32 %v2022, %v2329
      %v2376 = vadd.f32 %v2023, %v2334
      %v2377 = vadd.f32 %v2024, %v2337
      %v2378 = vadd.f32 %v2025, %v2342
      %v2379 = vadd.f32 %v2026, %v2345
      %2380 = vst.msk [vmem:[#allocation4] sm:$0xff] %vm616, %v2348
      %2381 = vst.msk [vmem:[#allocation4 + $0x8] sm:$0xff] %vm616, %v2349
      %2382 = vst.msk [vmem:[#allocation4 + $0x10] sm:$0xff] %vm616, %v2350
      %2383 = vst.msk [vmem:[#allocation4 + $0x18] sm:$0xff] %vm616, %v2351
      %2384 = vst.msk [vmem:[#allocation4 + $0x20] sm:$0xff] %vm616, %v2352
      %2385 = vst.msk [vmem:[#allocation4 + $0x28] sm:$0xff] %vm616, %v2353
      %2386 = vst.msk [vmem:[#allocation4 + $0x30] sm:$0xff] %vm616, %v2354
      %2387 = vst.msk [vmem:[#allocation4 + $0x38] sm:$0xff] %vm616, %v2355
      %2388 = vst.msk [vmem:[#allocation4 + $0x40] sm:$0xff] %vm616, %v2356
      %2389 = vst.msk [vmem:[#allocation4 + $0x48] sm:$0xff] %vm616, %v2357
      %2390 = vst.msk [vmem:[#allocation4 + $0x50] sm:$0xff] %vm616, %v2358
      %2391 = vst.msk [vmem:[#allocation4 + $0x58] sm:$0xff] %vm616, %v2359
      %2392 = vst.msk [vmem:[#allocation4 + $0x60] sm:$0xff] %vm616, %v2360
      %2393 = vst.msk [vmem:[#allocation4 + $0x68] sm:$0xff] %vm616, %v2361
      %2394 = vst.msk [vmem:[#allocation4 + $0x70] sm:$0xff] %vm616, %v2362
      %2395 = vst.msk [vmem:[#allocation4 + $0x78] sm:$0xff] %vm616, %v2363
      %2396 = vst.msk [vmem:[#allocation4 + $0x80] sm:$0xff] %vm616, %v2364
      %2397 = vst.msk [vmem:[#allocation4 + $0x88] sm:$0xff] %vm616, %v2365
      %2398 = vst.msk [vmem:[#allocation4 + $0x90] sm:$0xff] %vm616, %v2366
      %2399 = vst.msk [vmem:[#allocation4 + $0x98] sm:$0xff] %vm616, %v2367
      %2400 = vst.msk [vmem:[#allocation4 + $0xa0] sm:$0xff] %vm616, %v2368
      %2401 = vst.msk [vmem:[#allocation4 + $0xa8] sm:$0xff] %vm616, %v2369
      %2402 = vst.msk [vmem:[#allocation4 + $0xb0] sm:$0xff] %vm616, %v2370
      %2403 = vst.msk [vmem:[#allocation4 + $0xb8] sm:$0xff] %vm616, %v2371
      %2404 = vst.msk [vmem:[#allocation4 + $0xc0] sm:$0xff] %vm616, %v2372
      %2405 = vst.msk [vmem:[#allocation4 + $0xc8] sm:$0xff] %vm616, %v2373
      %2406 = vst.msk [vmem:[#allocation4 + $0xd0] sm:$0xff] %vm616, %v2374
      %2407 = vst.msk [vmem:[#allocation4 + $0xd8] sm:$0xff] %vm616, %v2375
      %2408 = vst.msk [vmem:[#allocation4 + $0xe0] sm:$0xff] %vm616, %v2376
      %2409 = vst.msk [vmem:[#allocation4 + $0xe8] sm:$0xff] %vm616, %v2377
      %2410 = vst.msk [vmem:[#allocation4 + $0xf0] sm:$0xff] %vm616, %v2378
      %2411 = vst.msk [vmem:[#allocation4 + $0xf8] sm:$0xff] %vm616, %v2379
      %2412 = vst.msk [vmem:[#allocation2] sm:$0xff] %vm1770, %v1098
      %2413 = vst.msk [vmem:[#allocation2 + $0x8] sm:$0xff] %vm1770, %v1099
      %2414 = vst.msk [vmem:[#allocation2 + $0x10] sm:$0xff] %vm1770, %v1100
      %2415 = vst.msk [vmem:[#allocation2 + $0x18] sm:$0xff] %vm1770, %v1101
      %2416 = vst.msk [vmem:[#allocation2 + $0x20] sm:$0xff] %vm1770, %v1102
      %2417 = vst.msk [vmem:[#allocation2 + $0x28] sm:$0xff] %vm1770, %v1103
      %2418 = vst.msk [vmem:[#allocation2 + $0x30] sm:$0xff] %vm1770, %v1104
      %2419 = vst.msk [vmem:[#allocation2 + $0x38] sm:$0xff] %vm1770, %v1105
      %2420 = vst.msk [vmem:[#allocation2 + $0x40] sm:$0xff] %vm1770, %v1106
      %2421 = vst.msk [vmem:[#allocation2 + $0x48] sm:$0xff] %vm1770, %v1107
      %2422 = vst.msk [vmem:[#allocation2 + $0x50] sm:$0xff] %vm1770, %v1108
      %2423 = vst.msk [vmem:[#allocation2 + $0x58] sm:$0xff] %vm1770, %v1109
      %2424 = vst.msk [vmem:[#allocation2 + $0x60] sm:$0xff] %vm1770, %v1110
      %2425 = vst.msk [vmem:[#allocation2 + $0x68] sm:$0xff] %vm1770, %v1111
      %2426 = vst.msk [vmem:[#allocation2 + $0x70] sm:$0xff] %vm1770, %v1112
      %2427 = vst.msk [vmem:[#allocation2 + $0x78] sm:$0xff] %vm1770, %v1113
      %2428 = vst.msk [vmem:[#allocation2 + $0x80] sm:$0xff] %vm1770, %v1114
      %2429 = vst.msk [vmem:[#allocation2 + $0x88] sm:$0xff] %vm1770, %v1115
      %2430 = vst.msk [vmem:[#allocation2 + $0x90] sm:$0xff] %vm1770, %v1116
      %2431 = vst.msk [vmem:[#allocation2 + $0x98] sm:$0xff] %vm1770, %v1117
      %2432 = vst.msk [vmem:[#allocation2 + $0xa0] sm:$0xff] %vm1770, %v1118
      %2433 = vst.msk [vmem:[#allocation2 + $0xa8] sm:$0xff] %vm1770, %v1119
      %2434 = vst.msk [vmem:[#allocation2 + $0xb0] sm:$0xff] %vm1770, %v1120
      %2435 = vst.msk [vmem:[#allocation2 + $0xb8] sm:$0xff] %vm1770, %v1121
      %2436 = vst.msk [vmem:[#allocation2 + $0xc0] sm:$0xff] %vm1770, %v1122
      %2437 = vst.msk [vmem:[#allocation2 + $0xc8] sm:$0xff] %vm1770, %v1123
      %2438 = vst.msk [vmem:[#allocation2 + $0xd0] sm:$0xff] %vm1770, %v1124
      %2439 = vst.msk [vmem:[#allocation2 + $0xd8] sm:$0xff] %vm1770, %v1125
      %2440 = vst.msk [vmem:[#allocation2 + $0xe0] sm:$0xff] %vm1770, %v1126
      %2441 = vst.msk [vmem:[#allocation2 + $0xe8] sm:$0xff] %vm1770, %v1127
      %2442 = vst.msk [vmem:[#allocation2 + $0xf0] sm:$0xff] %vm1770, %v1128
      %2443 = vst.msk [vmem:[#allocation2 + $0xf8] sm:$0xff] %vm1770, %v1129
      %p2444 = scmp.eq.s32.totalorder %s21, 1
      // Predicated region
      $region37: #{transformer_forward.7} parent=31 // pred_check
        %p2445 = pneg %p2444
      $region38: #{transformer_forward.7} parent=31 // pred_check_branch
        %2447 = sbr.rel (%p2445) target = $region40
      $region39: #{transformer_forward.7} parent=31 // pred_region
        %v2448 = vld [vmem:[#allocation3] sm:$0xff]
        %v2449 = vld [vmem:[#allocation3 + $0x8] sm:$0xff]
        %v2450 = vld [vmem:[#allocation3 + $0x10] sm:$0xff]
        %v2451 = vld [vmem:[#allocation3 + $0x18] sm:$0xff]
        %v2452 = vld [vmem:[#allocation3 + $0x20] sm:$0xff]
        %v2453 = vld [vmem:[#allocation3 + $0x28] sm:$0xff]
        %v2454 = vld [vmem:[#allocation3 + $0x30] sm:$0xff]
        %v2455 = vld [vmem:[#allocation3 + $0x38] sm:$0xff]
        %v2456 = vld [vmem:[#allocation3 + $0x40] sm:$0xff]
        %v2457 = vld [vmem:[#allocation3 + $0x48] sm:$0xff]
        %v2458 = vld [vmem:[#allocation3 + $0x50] sm:$0xff]
        %v2459 = vld [vmem:[#allocation3 + $0x58] sm:$0xff]
        %v2460 = vld [vmem:[#allocation3 + $0x60] sm:$0xff]
        %v2461 = vld [vmem:[#allocation3 + $0x68] sm:$0xff]
        %v2462 = vld [vmem:[#allocation3 + $0x70] sm:$0xff]
        %v2463 = vld [vmem:[#allocation3 + $0x78] sm:$0xff]
        %v2464 = vld [vmem:[#allocation3 + $0x80] sm:$0xff]
        %v2465 = vld [vmem:[#allocation3 + $0x88] sm:$0xff]
        %v2466 = vld [vmem:[#allocation3 + $0x90] sm:$0xff]
        %v2467 = vld [vmem:[#allocation3 + $0x98] sm:$0xff]
        %v2468 = vld [vmem:[#allocation3 + $0xa0] sm:$0xff]
        %v2469 = vld [vmem:[#allocation3 + $0xa8] sm:$0xff]
        %v2470 = vld [vmem:[#allocation3 + $0xb0] sm:$0xff]
        %v2471 = vld [vmem:[#allocation3 + $0xb8] sm:$0xff]
        %v2472 = vld [vmem:[#allocation3 + $0xc0] sm:$0xff]
        %v2473 = vld [vmem:[#allocation3 + $0xc8] sm:$0xff]
        %v2474 = vld [vmem:[#allocation3 + $0xd0] sm:$0xff]
        %v2475 = vld [vmem:[#allocation3 + $0xd8] sm:$0xff]
        %v2476 = vld [vmem:[#allocation3 + $0xe0] sm:$0xff]
        %v2477 = vld [vmem:[#allocation3 + $0xe8] sm:$0xff]
        %v2478 = vld [vmem:[#allocation3 + $0xf0] sm:$0xff]
        %v2479 = vld [vmem:[#allocation3 + $0xf8] sm:$0xff]
        %v2480 = vrcp.pop %v2448
        %v2481 = vrcp.pop %v2449
        %v2482 = vrcp.pop %v2450
        %v2483 = vrcp.pop %v2451
        %v2484 = vrcp.pop %v2452
        %v2485 = vrcp.pop %v2453
        %v2486 = vrcp.pop %v2454
        %v2487 = vrcp.pop %v2455
        %v2488 = vrcp.pop %v2456
        %v2489 = vrcp.pop %v2457
        %v2490 = vrcp.pop %v2458
        %v2491 = vrcp.pop %v2459
        %v2492 = vrcp.pop %v2460
        %v2493 = vrcp.pop %v2461
        %v2494 = vrcp.pop %v2462
        %v2495 = vrcp.pop %v2463
        %v2496 = vrcp.pop %v2464
        %v2497 = vrcp.pop %v2465
        %v2498 = vrcp.pop %v2466
        %v2499 = vrcp.pop %v2467
        %v2500 = vrcp.pop %v2468
        %v2501 = vrcp.pop %v2469
        %v2502 = vrcp.pop %v2470
        %v2503 = vrcp.pop %v2471
        %v2504 = vrcp.pop %v2472
        %v2505 = vrcp.pop %v2473
        %v2506 = vrcp.pop %v2474
        %v2507 = vrcp.pop %v2475
        %v2508 = vrcp.pop %v2476
        %v2509 = vrcp.pop %v2477
        %v2510 = vrcp.pop %v2478
        %v2511 = vrcp.pop %v2479
        %v2512 = vld [vmem:[#allocation4] sm:$0xff]
        %v2513 = vld [vmem:[#allocation4 + $0x8] sm:$0xff]
        %v2514 = vld [vmem:[#allocation4 + $0x10] sm:$0xff]
        %v2515 = vld [vmem:[#allocation4 + $0x18] sm:$0xff]
        %v2516 = vld [vmem:[#allocation4 + $0x20] sm:$0xff]
        %v2517 = vld [vmem:[#allocation4 + $0x28] sm:$0xff]
        %v2518 = vld [vmem:[#allocation4 + $0x30] sm:$0xff]
        %v2519 = vld [vmem:[#allocation4 + $0x38] sm:$0xff]
        %v2520 = vld [vmem:[#allocation4 + $0x40] sm:$0xff]
        %v2521 = vld [vmem:[#allocation4 + $0x48] sm:$0xff]
        %v2522 = vld [vmem:[#allocation4 + $0x50] sm:$0xff]
        %v2523 = vld [vmem:[#allocation4 + $0x58] sm:$0xff]
        %v2524 = vld [vmem:[#allocation4 + $0x60] sm:$0xff]
        %v2525 = vld [vmem:[#allocation4 + $0x68] sm:$0xff]
        %v2526 = vld [vmem:[#allocation4 + $0x70] sm:$0xff]
        %v2527 = vld [vmem:[#allocation4 + $0x78] sm:$0xff]
        %v2528 = vld [vmem:[#allocation4 + $0x80] sm:$0xff]
        %v2529 = vld [vmem:[#allocation4 + $0x88] sm:$0xff]
        %v2530 = vld [vmem:[#allocation4 + $0x90] sm:$0xff]
        %v2531 = vld [vmem:[#allocation4 + $0x98] sm:$0xff]
        %v2532 = vld [vmem:[#allocation4 + $0xa0] sm:$0xff]
        %v2533 = vld [vmem:[#allocation4 + $0xa8] sm:$0xff]
        %v2534 = vld [vmem:[#allocation4 + $0xb0] sm:$0xff]
        %v2535 = vld [vmem:[#allocation4 + $0xb8] sm:$0xff]
        %v2536 = vld [vmem:[#allocation4 + $0xc0] sm:$0xff]
        %v2537 = vld [vmem:[#allocation4 + $0xc8] sm:$0xff]
        %v2538 = vld [vmem:[#allocation4 + $0xd0] sm:$0xff]
        %v2539 = vld [vmem:[#allocation4 + $0xd8] sm:$0xff]
        %v2540 = vld [vmem:[#allocation4 + $0xe0] sm:$0xff]
        %v2541 = vld [vmem:[#allocation4 + $0xe8] sm:$0xff]
        %v2542 = vld [vmem:[#allocation4 + $0xf0] sm:$0xff]
        %v2543 = vld [vmem:[#allocation4 + $0xf8] sm:$0xff]
        %2545 = vset.pattern.permute.xlu0 0
        %2546 = vperm.xlu0 %2545, %v2480
        %v2547 = vpop.permute.xlu0 %2546
        %2550 = vset.pattern.permute.xlu0 0
        %2551 = vperm.xlu0 %2550, %v2481
        %v2552 = vpop.permute.xlu0 %2551
        %2555 = vset.pattern.permute.xlu0 0
        %2556 = vperm.xlu0 %2555, %v2482
        %v2557 = vpop.permute.xlu0 %2556
        %2560 = vset.pattern.permute.xlu0 0
        %2561 = vperm.xlu0 %2560, %v2483
        %v2562 = vpop.permute.xlu0 %2561
        %2565 = vset.pattern.permute.xlu0 0
        %2566 = vperm.xlu0 %2565, %v2484
        %v2567 = vpop.permute.xlu0 %2566
        %2570 = vset.pattern.permute.xlu0 0
        %2571 = vperm.xlu0 %2570, %v2485
        %v2572 = vpop.permute.xlu0 %2571
        %2575 = vset.pattern.permute.xlu0 0
        %2576 = vperm.xlu0 %2575, %v2486
        %v2577 = vpop.permute.xlu0 %2576
        %2580 = vset.pattern.permute.xlu0 0
        %2581 = vperm.xlu0 %2580, %v2487
        %v2582 = vpop.permute.xlu0 %2581
        %2585 = vset.pattern.permute.xlu0 0
        %2586 = vperm.xlu0 %2585, %v2488
        %v2587 = vpop.permute.xlu0 %2586
        %2590 = vset.pattern.permute.xlu0 0
        %2591 = vperm.xlu0 %2590, %v2489
        %v2592 = vpop.permute.xlu0 %2591
        %2595 = vset.pattern.permute.xlu0 0
        %2596 = vperm.xlu0 %2595, %v2490
        %v2597 = vpop.permute.xlu0 %2596
        %2600 = vset.pattern.permute.xlu0 0
        %2601 = vperm.xlu0 %2600, %v2491
        %v2602 = vpop.permute.xlu0 %2601
        %2605 = vset.pattern.permute.xlu0 0
        %2606 = vperm.xlu0 %2605, %v2492
        %v2607 = vpop.permute.xlu0 %2606
        %2610 = vset.pattern.permute.xlu0 0
        %2611 = vperm.xlu0 %2610, %v2493
        %v2612 = vpop.permute.xlu0 %2611
        %2615 = vset.pattern.permute.xlu0 0
        %2616 = vperm.xlu0 %2615, %v2494
        %v2617 = vpop.permute.xlu0 %2616
        %2620 = vset.pattern.permute.xlu0 0
        %2621 = vperm.xlu0 %2620, %v2495
        %v2622 = vpop.permute.xlu0 %2621
        %2625 = vset.pattern.permute.xlu0 0
        %2626 = vperm.xlu0 %2625, %v2496
        %v2627 = vpop.permute.xlu0 %2626
        %2630 = vset.pattern.permute.xlu0 0
        %2631 = vperm.xlu0 %2630, %v2497
        %v2632 = vpop.permute.xlu0 %2631
        %2635 = vset.pattern.permute.xlu0 0
        %2636 = vperm.xlu0 %2635, %v2498
        %v2637 = vpop.permute.xlu0 %2636
        %2640 = vset.pattern.permute.xlu0 0
        %2641 = vperm.xlu0 %2640, %v2499
        %v2642 = vpop.permute.xlu0 %2641
        %2645 = vset.pattern.permute.xlu0 0
        %2646 = vperm.xlu0 %2645, %v2500
        %v2647 = vpop.permute.xlu0 %2646
        %2650 = vset.pattern.permute.xlu0 0
        %2651 = vperm.xlu0 %2650, %v2501
        %v2652 = vpop.permute.xlu0 %2651
        %2655 = vset.pattern.permute.xlu0 0
        %2656 = vperm.xlu0 %2655, %v2502
        %v2657 = vpop.permute.xlu0 %2656
        %2660 = vset.pattern.permute.xlu0 0
        %2661 = vperm.xlu0 %2660, %v2503
        %v2662 = vpop.permute.xlu0 %2661
        %2665 = vset.pattern.permute.xlu0 0
        %2666 = vperm.xlu0 %2665, %v2504
        %v2667 = vpop.permute.xlu0 %2666
        %2670 = vset.pattern.permute.xlu0 0
        %2671 = vperm.xlu0 %2670, %v2505
        %v2672 = vpop.permute.xlu0 %2671
        %2675 = vset.pattern.permute.xlu0 0
        %2676 = vperm.xlu0 %2675, %v2506
        %v2677 = vpop.permute.xlu0 %2676
        %2680 = vset.pattern.permute.xlu0 0
        %2681 = vperm.xlu0 %2680, %v2507
        %v2682 = vpop.permute.xlu0 %2681
        %2685 = vset.pattern.permute.xlu0 0
        %2686 = vperm.xlu0 %2685, %v2508
        %v2687 = vpop.permute.xlu0 %2686
        %2690 = vset.pattern.permute.xlu0 0
        %2691 = vperm.xlu0 %2690, %v2509
        %v2692 = vpop.permute.xlu0 %2691
        %2695 = vset.pattern.permute.xlu0 0
        %2696 = vperm.xlu0 %2695, %v2510
        %v2697 = vpop.permute.xlu0 %2696
        %2700 = vset.pattern.permute.xlu0 0
        %2701 = vperm.xlu0 %2700, %v2511
        %v2702 = vpop.permute.xlu0 %2701
        %v2704 = vmul.f32 %v2512, %v2547
        %v2705 = vmul.f32 %v2513, %v2552
        %v2706 = vmul.f32 %v2514, %v2557
        %v2707 = vmul.f32 %v2515, %v2562
        %v2708 = vmul.f32 %v2516, %v2567
        %v2709 = vmul.f32 %v2517, %v2572
        %v2710 = vmul.f32 %v2518, %v2577
        %v2711 = vmul.f32 %v2519, %v2582
        %v2712 = vmul.f32 %v2520, %v2587
        %v2713 = vmul.f32 %v2521, %v2592
        %v2714 = vmul.f32 %v2522, %v2597
        %v2715 = vmul.f32 %v2523, %v2602
        %v2716 = vmul.f32 %v2524, %v2607
        %v2717 = vmul.f32 %v2525, %v2612
        %v2718 = vmul.f32 %v2526, %v2617
        %v2719 = vmul.f32 %v2527, %v2622
        %v2720 = vmul.f32 %v2528, %v2627
        %v2721 = vmul.f32 %v2529, %v2632
        %v2722 = vmul.f32 %v2530, %v2637
        %v2723 = vmul.f32 %v2531, %v2642
        %v2724 = vmul.f32 %v2532, %v2647
        %v2725 = vmul.f32 %v2533, %v2652
        %v2726 = vmul.f32 %v2534, %v2657
        %v2727 = vmul.f32 %v2535, %v2662
        %v2728 = vmul.f32 %v2536, %v2667
        %v2729 = vmul.f32 %v2537, %v2672
        %v2730 = vmul.f32 %v2538, %v2677
        %v2731 = vmul.f32 %v2539, %v2682
        %v2732 = vmul.f32 %v2540, %v2687
        %v2733 = vmul.f32 %v2541, %v2692
        %v2734 = vmul.f32 %v2542, %v2697
        %v2735 = vmul.f32 %v2543, %v2702
        %2736 = vst.msk [vmem:[%s287] sm:$0xff] %vm616, %v2704
        %2737 = vst.msk [vmem:[%s287 + $0x8] sm:$0xff] %vm616, %v2705
        %2738 = vst.msk [vmem:[%s287 + $0x10] sm:$0xff] %vm616, %v2706
        %2739 = vst.msk [vmem:[%s287 + $0x18] sm:$0xff] %vm616, %v2707
        %2740 = vst.msk [vmem:[%s287 + $0x20] sm:$0xff] %vm616, %v2708
        %2741 = vst.msk [vmem:[%s287 + $0x28] sm:$0xff] %vm616, %v2709
        %2742 = vst.msk [vmem:[%s287 + $0x30] sm:$0xff] %vm616, %v2710
        %2743 = vst.msk [vmem:[%s287 + $0x38] sm:$0xff] %vm616, %v2711
        %2744 = vst.msk [vmem:[%s287 + $0x40] sm:$0xff] %vm616, %v2712
        %2745 = vst.msk [vmem:[%s287 + $0x48] sm:$0xff] %vm616, %v2713
        %2746 = vst.msk [vmem:[%s287 + $0x50] sm:$0xff] %vm616, %v2714
        %2747 = vst.msk [vmem:[%s287 + $0x58] sm:$0xff] %vm616, %v2715
        %2748 = vst.msk [vmem:[%s287 + $0x60] sm:$0xff] %vm616, %v2716
        %2749 = vst.msk [vmem:[%s287 + $0x68] sm:$0xff] %vm616, %v2717
        %2750 = vst.msk [vmem:[%s287 + $0x70] sm:$0xff] %vm616, %v2718
        %2751 = vst.msk [vmem:[%s287 + $0x78] sm:$0xff] %vm616, %v2719
        %2752 = vst.msk [vmem:[%s287 + $0x80] sm:$0xff] %vm616, %v2720
        %2753 = vst.msk [vmem:[%s287 + $0x88] sm:$0xff] %vm616, %v2721
        %2754 = vst.msk [vmem:[%s287 + $0x90] sm:$0xff] %vm616, %v2722
        %2755 = vst.msk [vmem:[%s287 + $0x98] sm:$0xff] %vm616, %v2723
        %2756 = vst.msk [vmem:[%s287 + $0xa0] sm:$0xff] %vm616, %v2724
        %2757 = vst.msk [vmem:[%s287 + $0xa8] sm:$0xff] %vm616, %v2725
        %2758 = vst.msk [vmem:[%s287 + $0xb0] sm:$0xff] %vm616, %v2726
        %2759 = vst.msk [vmem:[%s287 + $0xb8] sm:$0xff] %vm616, %v2727
        %2760 = vst.msk [vmem:[%s287 + $0xc0] sm:$0xff] %vm616, %v2728
        %2761 = vst.msk [vmem:[%s287 + $0xc8] sm:$0xff] %vm616, %v2729
        %2762 = vst.msk [vmem:[%s287 + $0xd0] sm:$0xff] %vm616, %v2730
        %2763 = vst.msk [vmem:[%s287 + $0xd8] sm:$0xff] %vm616, %v2731
        %2764 = vst.msk [vmem:[%s287 + $0xe0] sm:$0xff] %vm616, %v2732
        %2765 = vst.msk [vmem:[%s287 + $0xe8] sm:$0xff] %vm616, %v2733
        %2766 = vst.msk [vmem:[%s287 + $0xf0] sm:$0xff] %vm616, %v2734
        %2767 = vst.msk [vmem:[%s287 + $0xf8] sm:$0xff] %vm616, %v2735
      $region40: #{transformer_forward.7} parent=31 // pred_fallthru
        _
      %s2768 = smul.u32 32, %s20
      %p2769 = scmp.lt.s32.totalorder %s19, 7
      %s2770 = scalar_select %p2769, %s19, 7
      %p2771 = scmp.lt.s32.totalorder %s2768, 63
      %s2772 = scalar_select %p2771, %s2768, 63
      %s2773 = smul.addr %s2770, 64
      %s2774 = sadd.s32 %s2772, %s2773
      %s2775 = smul.addr %s2774, 8
      %s2776 = scalar_lea.vmem %s3, %s2775
      // Predicated region
      $region41: #{transformer_forward.7} parent=31 // pred_check
        %p2777 = pneg %p137
      $region42: #{transformer_forward.7} parent=31 // pred_check_branch
        %2779 = sbr.rel (%p2777) target = $region44
      $region43: #{transformer_forward.7} parent=31 // pred_region
        %s2780 = smul.u32 32, %s20
      $region44: #{transformer_forward.7} parent=31 // pred_fallthru
        _
    $region32: #{transformer_forward.7} parent=5 // pred_fallthru
      _
    %p2781 = scmp.le.s32.totalorder 2, %s9
    // Predicated region
    $region45: #{transformer_forward.7} parent=5 // pred_check
      %p2782 = pneg %p2781
    $region46: #{transformer_forward.7} parent=5 // pred_check_branch
      %2784 = sbr.rel (%p2782) target = $region48
    $region47: #{transformer_forward.7} parent=5 // pred_region
      %s2785 = ssub.s32 %s9, 2
      // Predicated region
      $region49: #{transformer_forward.7} parent=47 // pred_check
        %p2786 = pneg %p143
      $region50: #{transformer_forward.7} parent=47 // pred_check_branch
        %2788 = sbr.rel (%p2786) target = $region52
      $region51: #{transformer_forward.7} parent=47 // pred_region
        %s2789 = smul.u32 32, %s23
        %p2790 = scmp.lt.s32.totalorder %s22, 7
        %s2791 = scalar_select %p2790, %s22, 7
        %p2792 = scmp.lt.s32.totalorder %s2789, 63
        %s2793 = scalar_select %p2792, %s2789, 63
        %s2794 = smul.addr %s2791, 64
        %s2795 = sadd.s32 %s2793, %s2794
        %s2796 = smul.addr %s2795, 8
        %s2797 = scalar_lea.vmem %s3, %s2796
      $region52: #{transformer_forward.7} parent=47 // pred_fallthru
        _
    $region48: #{transformer_forward.7} parent=5 // pred_fallthru
      _
  $region6: #{transformer_forward.7} parent=0 // loop_footer
    %s13 = sadd.s32 1, %s9
  $region7: #{transformer_forward.7} parent=0 // loop_footer_branch
    %8 = sbr.rel target = $region3
  $region8: #{transformer_forward.7} parent=0 // loop_exit
    _

// kernel: transformer_forward.9
$region0: #{transformer_forward.9}
  #allocation0 [shape = 'u32[]', space=smem, size = 0x4, offset = 0x4, fixed_abs, tag = 'smem constant byte address 0x4 - core index']
  #allocation1 [shape = 'u32[144,128]{1,0:T(1,128)}', space=vmem, size = 0x12000, scoped, tag = 'internal scratch']
  %s0 = inlined_call_operand.vmem [shape: f32[1024,128], index: 0, kind: input, shape index: {}]
  %s1 = inlined_call_operand.vmem [shape: f32[1,128], index: 1, kind: input, shape index: {}]
  %s2 = inlined_call_operand.vmem [shape: f32[1,128], index: 2, kind: input, shape index: {}]
  %s3 = inlined_call_operand.vmem [shape: bf16[128,384], index: 3, kind: input, shape index: {}]
  %s4 = inlined_call_operand.vmem [shape: bf16[1024,384], index: 4, kind: output, shape index: {}]
  %s5 = sld [smem:[#allocation0]]
  $region49: #{transformer_forward.9} parent=0
    _
  %s7 = ssub.s32 1, %s5
  %s8 = scalar_select 0, %s7, %s5
  loop: start=0, step=1, limit=6
  $region2: #{transformer_forward.9} parent=0 // loop_pre_header
    _
  $region3: #{transformer_forward.9} parent=0 // loop_header
    %s10 = sphi 0, %s14
    %p11 = scmp.ge.s32.totalorder %s10, 6
    %s20 = sphi 0, %s22
    %s23 = sphi 0, %s20
    %s24 = sphi 0, %s23
    %s40 = sphi 0, %s24
    %s44 = sphi 0, %s44
    %s46 = sphi 0, %s44
    %s47 = sphi 0, %s46
    %s61 = sphi 0, %s47
    %s65 = sphi 0, %s65
    %s67 = sphi 0, %s65
    %s68 = sphi 0, %s67
    %s82 = sphi 0, %s68
    %s86 = sphi 0, %s86
    %s88 = sphi 0, %s86
    %s89 = sphi 0, %s88
    %s103 = sphi 0, %s89
    %s109 = sphi 0, %s111
    %s112 = sphi 0, %s109
    %s113 = sphi 0, %s112
    %s129 = sphi 0, %s113
  $region4: #{transformer_forward.9} parent=0 // loop_header_branch
    %13 = sbr.rel (%p11) target = $region8
  $region5: #{transformer_forward.9} parent=0 // loop_body
    %s15 = ssub.s32 %s10, 1
    %s16 = ssub.s32 %s10, 2
    %s17 = sadd.s32 %s10, 1
    %s18 = ssub.s32 %s10, %s17
    %p19 = scmp.eq.s32.totalorder %s18, 0
    %s21 = sadd.s32 %s20, 1
    %s22 = scalar_select %p19, %s20, %s21
    %p25 = pneg %p19
    %p26 = scmp.eq.s32.totalorder %s10, 3
    %p27 = por %p25, %p26
    %p28 = scmp.ne.s32.totalorder %s20, %s23
    %p29 = scmp.eq.s32.totalorder %s10, 0
    %p30 = por %p28, %p29
    %p31 = scmp.ne.s32.totalorder %s20, %s23
    %p32 = scmp.eq.s32.totalorder %s15, 3
    %p33 = por %p31, %p32
    %p34 = scmp.ne.s32.totalorder %s23, %s24
    %p35 = scmp.eq.s32.totalorder %s15, 0
    %p36 = por %p34, %p35
    %p37 = scmp.ne.s32.totalorder %s23, %s24
    %p38 = scmp.eq.s32.totalorder %s16, 3
    %p39 = por %p37, %p38
    %p41 = scmp.ne.s32.totalorder %s24, %s40
    %p42 = scmp.eq.s32.totalorder %s16, 0
    %p43 = por %p41, %p42
    %s45 = sadd.s32 %s44, 1
    %p48 = scmp.eq.s32.totalorder %s10, 3
    %p49 = scmp.ne.s32.totalorder %s44, %s46
    %p50 = scmp.eq.s32.totalorder %s10, 0
    %p51 = por %p49, %p50
    %p52 = scmp.ne.s32.totalorder %s44, %s46
    %p53 = scmp.eq.s32.totalorder %s15, 3
    %p54 = por %p52, %p53
    %p55 = scmp.ne.s32.totalorder %s46, %s47
    %p56 = scmp.eq.s32.totalorder %s15, 0
    %p57 = por %p55, %p56
    %p58 = scmp.ne.s32.totalorder %s46, %s47
    %p59 = scmp.eq.s32.totalorder %s16, 3
    %p60 = por %p58, %p59
    %p62 = scmp.ne.s32.totalorder %s47, %s61
    %p63 = scmp.eq.s32.totalorder %s16, 0
    %p64 = por %p62, %p63
    %s66 = sadd.s32 %s65, 1
    %p69 = scmp.eq.s32.totalorder %s10, 3
    %p70 = scmp.ne.s32.totalorder %s65, %s67
    %p71 = scmp.eq.s32.totalorder %s10, 0
    %p72 = por %p70, %p71
    %p73 = scmp.ne.s32.totalorder %s65, %s67
    %p74 = scmp.eq.s32.totalorder %s15, 3
    %p75 = por %p73, %p74
    %p76 = scmp.ne.s32.totalorder %s67, %s68
    %p77 = scmp.eq.s32.totalorder %s15, 0
    %p78 = por %p76, %p77
    %p79 = scmp.ne.s32.totalorder %s67, %s68
    %p80 = scmp.eq.s32.totalorder %s16, 3
    %p81 = por %p79, %p80
    %p83 = scmp.ne.s32.totalorder %s68, %s82
    %p84 = scmp.eq.s32.totalorder %s16, 0
    %p85 = por %p83, %p84
    %s87 = sadd.s32 %s86, 1
    %p90 = scmp.eq.s32.totalorder %s10, 3
    %p91 = scmp.ne.s32.totalorder %s86, %s88
    %p92 = scmp.eq.s32.totalorder %s10, 0
    %p93 = por %p91, %p92
    %p94 = scmp.ne.s32.totalorder %s86, %s88
    %p95 = scmp.eq.s32.totalorder %s15, 3
    %p96 = por %p94, %p95
    %p97 = scmp.ne.s32.totalorder %s88, %s89
    %p98 = scmp.eq.s32.totalorder %s15, 0
    %p99 = por %p97, %p98
    %p100 = scmp.ne.s32.totalorder %s88, %s89
    %p101 = scmp.eq.s32.totalorder %s16, 3
    %p102 = por %p100, %p101
    %p104 = scmp.ne.s32.totalorder %s89, %s103
    %p105 = scmp.eq.s32.totalorder %s16, 0
    %p106 = por %p104, %p105
    %s107 = ssub.s32 %s10, %s17
    %p108 = scmp.eq.s32.totalorder %s107, 0
    %s110 = sadd.s32 %s109, 1
    %s111 = scalar_select %p108, %s109, %s110
    %p114 = pneg %p108
    %p115 = scmp.eq.s32.totalorder %s10, 3
    %p116 = por %p114, %p115
    %p117 = scmp.ne.s32.totalorder %s109, %s112
    %p118 = scmp.eq.s32.totalorder %s10, 0
    %p119 = por %p117, %p118
    %p120 = scmp.ne.s32.totalorder %s109, %s112
    %p121 = scmp.eq.s32.totalorder %s15, 3
    %p122 = por %p120, %p121
    %p123 = scmp.ne.s32.totalorder %s112, %s113
    %p124 = scmp.eq.s32.totalorder %s15, 0
    %p125 = por %p123, %p124
    %p126 = scmp.ne.s32.totalorder %s112, %s113
    %p127 = scmp.eq.s32.totalorder %s16, 3
    %p128 = por %p126, %p127
    %p130 = scmp.ne.s32.totalorder %s113, %s129
    %p131 = scmp.eq.s32.totalorder %s16, 0
    %p132 = por %p130, %p131
    %p133 = scmp.le.s32.totalorder 1, %s10
    %p134 = scmp.lt.s32.totalorder %s10, 5
    %p135 = pnand %p133, %p134
    %p136 = pneg %p135
    // Predicated region
    $region9: #{transformer_forward.9} parent=5 // pred_check
      _
    $region10: #{transformer_forward.9} parent=5 // pred_check_branch
      %138 = sbr.rel (%p135) target = $region12
    $region11: #{transformer_forward.9} parent=5 // pred_region
      %s139 = ssub.s32 %s10, 1
      // Predicated region
      $region13: #{transformer_forward.9} parent=11 // pred_check
        %p140 = pneg %p57
      $region14: #{transformer_forward.9} parent=11 // pred_check_branch
        %142 = sbr.rel (%p140) target = $region16
      $region15: #{transformer_forward.9} parent=11 // pred_region
        _
      $region16: #{transformer_forward.9} parent=11 // pred_fallthru
        _
      // Predicated region
      $region17: #{transformer_forward.9} parent=11 // pred_check
        %p143 = pneg %p78
      $region18: #{transformer_forward.9} parent=11 // pred_check_branch
        %145 = sbr.rel (%p143) target = $region20
      $region19: #{transformer_forward.9} parent=11 // pred_region
        _
      $region20: #{transformer_forward.9} parent=11 // pred_fallthru
        _
      // Predicated region
      $region21: #{transformer_forward.9} parent=11 // pred_check
        %p146 = pneg %p99
      $region22: #{transformer_forward.9} parent=11 // pred_check_branch
        %148 = sbr.rel (%p146) target = $region24
      $region23: #{transformer_forward.9} parent=11 // pred_region
        _
      $region24: #{transformer_forward.9} parent=11 // pred_fallthru
        _
    $region12: #{transformer_forward.9} parent=5 // pred_fallthru
      _
    %p149 = scmp.lt.s32.totalorder %s10, 4
    // Predicated region
    $region25: #{transformer_forward.9} parent=5 // pred_check
      %p150 = pneg %p149
    $region26: #{transformer_forward.9} parent=5 // pred_check_branch
      %152 = sbr.rel (%p150) target = $region28
    $region27: #{transformer_forward.9} parent=5 // pred_region
      // Predicated region
      $region29: #{transformer_forward.9} parent=27 // pred_check
        %p153 = pneg %p30
      $region30: #{transformer_forward.9} parent=27 // pred_check_branch
        %155 = sbr.rel (%p153) target = $region32
      $region31: #{transformer_forward.9} parent=27 // pred_region
        %s156 = smul.u32 32, %s10
        %p157 = scmp.lt.s32.totalorder %s156, 127
        %s158 = scalar_select %p157, %s156, 127
        %s159 = smul.addr %s158, 8
        %s160 = scalar_lea.vmem %s0, %s159
        %s161 = smul.u32 32, %s10
      $region32: #{transformer_forward.9} parent=27 // pred_fallthru
        _
    $region28: #{transformer_forward.9} parent=5 // pred_fallthru
      _
    %p162 = scmp.le.s32.totalorder 1, %s10
    %p163 = scmp.lt.s32.totalorder %s10, 5
    %p164 = pnand %p162, %p163
    %p165 = pneg %p164
    // Predicated region
    $region33: #{transformer_forward.9} parent=5 // pred_check
      _
    $region34: #{transformer_forward.9} parent=5 // pred_check_branch
      %167 = sbr.rel (%p164) target = $region36
    $region35: #{transformer_forward.9} parent=5 // pred_region
      %s168 = ssub.s32 %s10, 1
      %s169 = smul.u32 32, %s15
      %p170 = scmp.lt.s32.totalorder %s169, 127
      %s171 = scalar_select %p170, %s169, 127
      %s172 = smul.addr %s171, 8
      %s173 = scalar_lea.vmem %s0, %s172
      %p174 = pneg %p36
      %p175 = pneg %p33
      %p176 = pneg %p57
      %p177 = pneg %p54
      %p178 = pneg %p78
      %p179 = pneg %p75
      %p180 = pneg %p99
      %p181 = pneg %p96
      %p182 = pneg %p125
      %p183 = pneg %p122
      %s184 = smul.u32 32, %s15
      %p185 = scmp.lt.s32.totalorder %s184, 127
      %s186 = scalar_select %p185, %s184, 127
      %s187 = smul.addr %s186, 3
      %s188 = smul.addr %s187, 4
      %s189 = scalar_lea.vmem %s4, %s188
      %s190 = smul.u32 32, %s15
      %p191 = scmp.lt.s32.totalorder %s190, 127
      %s192 = scalar_select %p191, %s190, 127
      %s193 = smul.addr %s192, 8
      %s194 = scalar_lea.vmem %s0, %s193
      %s195 = smul.u32 32, %s15
      %s196 = smul.u32 32, %s15
      %p197 = scmp.lt.s32.totalorder %s196, 127
      %s198 = scalar_select %p197, %s196, 127
      %s199 = smul.addr %s198, 3
      %s200 = smul.addr %s199, 4
      %s201 = scalar_lea.vmem %s4, %s200
      %s202 = smul.u32 32, %s15
      %v204 = vld [vmem:[%s194] sm:$0xff]
      %v205 = vld [vmem:[%s194 + $0x8] sm:$0xff]
      %v206 = vld [vmem:[%s194 + $0x10] sm:$0xff]
      %v207 = vld [vmem:[%s194 + $0x18] sm:$0xff]
      %v208 = vld [vmem:[%s194 + $0x20] sm:$0xff]
      %v209 = vld [vmem:[%s194 + $0x28] sm:$0xff]
      %v210 = vld [vmem:[%s194 + $0x30] sm:$0xff]
      %v211 = vld [vmem:[%s194 + $0x38] sm:$0xff]
      %v212 = vld [vmem:[%s194 + $0x40] sm:$0xff]
      %v213 = vld [vmem:[%s194 + $0x48] sm:$0xff]
      %v214 = vld [vmem:[%s194 + $0x50] sm:$0xff]
      %v215 = vld [vmem:[%s194 + $0x58] sm:$0xff]
      %v216 = vld [vmem:[%s194 + $0x60] sm:$0xff]
      %v217 = vld [vmem:[%s194 + $0x68] sm:$0xff]
      %v218 = vld [vmem:[%s194 + $0x70] sm:$0xff]
      %v219 = vld [vmem:[%s194 + $0x78] sm:$0xff]
      %v220 = vld [vmem:[%s194 + $0x80] sm:$0xff]
      %v221 = vld [vmem:[%s194 + $0x88] sm:$0xff]
      %v222 = vld [vmem:[%s194 + $0x90] sm:$0xff]
      %v223 = vld [vmem:[%s194 + $0x98] sm:$0xff]
      %v224 = vld [vmem:[%s194 + $0xa0] sm:$0xff]
      %v225 = vld [vmem:[%s194 + $0xa8] sm:$0xff]
      %v226 = vld [vmem:[%s194 + $0xb0] sm:$0xff]
      %v227 = vld [vmem:[%s194 + $0xb8] sm:$0xff]
      %v228 = vld [vmem:[%s194 + $0xc0] sm:$0xff]
      %v229 = vld [vmem:[%s194 + $0xc8] sm:$0xff]
      %v230 = vld [vmem:[%s194 + $0xd0] sm:$0xff]
      %v231 = vld [vmem:[%s194 + $0xd8] sm:$0xff]
      %v232 = vld [vmem:[%s194 + $0xe0] sm:$0xff]
      %v233 = vld [vmem:[%s194 + $0xe8] sm:$0xff]
      %v234 = vld [vmem:[%s194 + $0xf0] sm:$0xff]
      %v235 = vld [vmem:[%s194 + $0xf8] sm:$0xff]
      %v236 = vld [vmem:[%s1] sm:$0x1]
      %v237 = vld [vmem:[%s2] sm:$0x1]
      %238 = vadd.xlane.f32.xlu0 %v204
      %v239 = vpop.xlane.xlu0 %238
      %240 = vadd.xlane.f32.xlu0 %v205
      %v241 = vpop.xlane.xlu0 %240
      %242 = vadd.xlane.f32.xlu0 %v206
      %v243 = vpop.xlane.xlu0 %242
      %244 = vadd.xlane.f32.xlu0 %v207
      %v245 = vpop.xlane.xlu0 %244
      %246 = vadd.xlane.f32.xlu0 %v208
      %v247 = vpop.xlane.xlu0 %246
      %248 = vadd.xlane.f32.xlu0 %v209
      %v249 = vpop.xlane.xlu0 %248
      %250 = vadd.xlane.f32.xlu0 %v210
      %v251 = vpop.xlane.xlu0 %250
      %252 = vadd.xlane.f32.xlu0 %v211
      %v253 = vpop.xlane.xlu0 %252
      %254 = vadd.xlane.f32.xlu0 %v212
      %v255 = vpop.xlane.xlu0 %254
      %256 = vadd.xlane.f32.xlu0 %v213
      %v257 = vpop.xlane.xlu0 %256
      %258 = vadd.xlane.f32.xlu0 %v214
      %v259 = vpop.xlane.xlu0 %258
      %260 = vadd.xlane.f32.xlu0 %v215
      %v261 = vpop.xlane.xlu0 %260
      %262 = vadd.xlane.f32.xlu0 %v216
      %v263 = vpop.xlane.xlu0 %262
      %264 = vadd.xlane.f32.xlu0 %v217
      %v265 = vpop.xlane.xlu0 %264
      %266 = vadd.xlane.f32.xlu0 %v218
      %v267 = vpop.xlane.xlu0 %266
      %268 = vadd.xlane.f32.xlu0 %v219
      %v269 = vpop.xlane.xlu0 %268
      %270 = vadd.xlane.f32.xlu0 %v220
      %v271 = vpop.xlane.xlu0 %270
      %272 = vadd.xlane.f32.xlu0 %v221
      %v273 = vpop.xlane.xlu0 %272
      %274 = vadd.xlane.f32.xlu0 %v222
      %v275 = vpop.xlane.xlu0 %274
      %276 = vadd.xlane.f32.xlu0 %v223
      %v277 = vpop.xlane.xlu0 %276
      %278 = vadd.xlane.f32.xlu0 %v224
      %v279 = vpop.xlane.xlu0 %278
      %280 = vadd.xlane.f32.xlu0 %v225
      %v281 = vpop.xlane.xlu0 %280
      %282 = vadd.xlane.f32.xlu0 %v226
      %v283 = vpop.xlane.xlu0 %282
      %284 = vadd.xlane.f32.xlu0 %v227
      %v285 = vpop.xlane.xlu0 %284
      %286 = vadd.xlane.f32.xlu0 %v228
      %v287 = vpop.xlane.xlu0 %286
      %288 = vadd.xlane.f32.xlu0 %v229
      %v289 = vpop.xlane.xlu0 %288
      %290 = vadd.xlane.f32.xlu0 %v230
      %v291 = vpop.xlane.xlu0 %290
      %292 = vadd.xlane.f32.xlu0 %v231
      %v293 = vpop.xlane.xlu0 %292
      %294 = vadd.xlane.f32.xlu0 %v232
      %v295 = vpop.xlane.xlu0 %294
      %296 = vadd.xlane.f32.xlu0 %v233
      %v297 = vpop.xlane.xlu0 %296
      %298 = vadd.xlane.f32.xlu0 %v234
      %v299 = vpop.xlane.xlu0 %298
      %300 = vadd.xlane.f32.xlu0 %v235
      %v301 = vpop.xlane.xlu0 %300
      %v302 = vmul.f32 %v204, %v204
      %v303 = vmul.f32 %v205, %v205
      %v304 = vmul.f32 %v206, %v206
      %v305 = vmul.f32 %v207, %v207
      %v306 = vmul.f32 %v208, %v208
      %v307 = vmul.f32 %v209, %v209
      %v308 = vmul.f32 %v210, %v210
      %v309 = vmul.f32 %v211, %v211
      %v310 = vmul.f32 %v212, %v212
      %v311 = vmul.f32 %v213, %v213
      %v312 = vmul.f32 %v214, %v214
      %v313 = vmul.f32 %v215, %v215
      %v314 = vmul.f32 %v216, %v216
      %v315 = vmul.f32 %v217, %v217
      %v316 = vmul.f32 %v218, %v218
      %v317 = vmul.f32 %v219, %v219
      %v318 = vmul.f32 %v220, %v220
      %v319 = vmul.f32 %v221, %v221
      %v320 = vmul.f32 %v222, %v222
      %v321 = vmul.f32 %v223, %v223
      %v322 = vmul.f32 %v224, %v224
      %v323 = vmul.f32 %v225, %v225
      %v324 = vmul.f32 %v226, %v226
      %v325 = vmul.f32 %v227, %v227
      %v326 = vmul.f32 %v228, %v228
      %v327 = vmul.f32 %v229, %v229
      %v328 = vmul.f32 %v230, %v230
      %v329 = vmul.f32 %v231, %v231
      %v330 = vmul.f32 %v232, %v232
      %v331 = vmul.f32 %v233, %v233
      %v332 = vmul.f32 %v234, %v234
      %v333 = vmul.f32 %v235, %v235
      %334 = vadd.xlane.f32.xlu0 %v302
      %v335 = vpop.xlane.xlu0 %334
      %336 = vadd.xlane.f32.xlu0 %v303
      %v337 = vpop.xlane.xlu0 %336
      %338 = vadd.xlane.f32.xlu0 %v304
      %v339 = vpop.xlane.xlu0 %338
      %340 = vadd.xlane.f32.xlu0 %v305
      %v341 = vpop.xlane.xlu0 %340
      %342 = vadd.xlane.f32.xlu0 %v306
      %v343 = vpop.xlane.xlu0 %342
      %344 = vadd.xlane.f32.xlu0 %v307
      %v345 = vpop.xlane.xlu0 %344
      %346 = vadd.xlane.f32.xlu0 %v308
      %v347 = vpop.xlane.xlu0 %346
      %348 = vadd.xlane.f32.xlu0 %v309
      %v349 = vpop.xlane.xlu0 %348
      %350 = vadd.xlane.f32.xlu0 %v310
      %v351 = vpop.xlane.xlu0 %350
      %352 = vadd.xlane.f32.xlu0 %v311
      %v353 = vpop.xlane.xlu0 %352
      %354 = vadd.xlane.f32.xlu0 %v312
      %v355 = vpop.xlane.xlu0 %354
      %356 = vadd.xlane.f32.xlu0 %v313
      %v357 = vpop.xlane.xlu0 %356
      %358 = vadd.xlane.f32.xlu0 %v314
      %v359 = vpop.xlane.xlu0 %358
      %360 = vadd.xlane.f32.xlu0 %v315
      %v361 = vpop.xlane.xlu0 %360
      %362 = vadd.xlane.f32.xlu0 %v316
      %v363 = vpop.xlane.xlu0 %362
      %364 = vadd.xlane.f32.xlu0 %v317
      %v365 = vpop.xlane.xlu0 %364
      %366 = vadd.xlane.f32.xlu0 %v318
      %v367 = vpop.xlane.xlu0 %366
      %368 = vadd.xlane.f32.xlu0 %v319
      %v369 = vpop.xlane.xlu0 %368
      %370 = vadd.xlane.f32.xlu0 %v320
      %v371 = vpop.xlane.xlu0 %370
      %372 = vadd.xlane.f32.xlu0 %v321
      %v373 = vpop.xlane.xlu0 %372
      %374 = vadd.xlane.f32.xlu0 %v322
      %v375 = vpop.xlane.xlu0 %374
      %376 = vadd.xlane.f32.xlu0 %v323
      %v377 = vpop.xlane.xlu0 %376
      %378 = vadd.xlane.f32.xlu0 %v324
      %v379 = vpop.xlane.xlu0 %378
      %380 = vadd.xlane.f32.xlu0 %v325
      %v381 = vpop.xlane.xlu0 %380
      %382 = vadd.xlane.f32.xlu0 %v326
      %v383 = vpop.xlane.xlu0 %382
      %384 = vadd.xlane.f32.xlu0 %v327
      %v385 = vpop.xlane.xlu0 %384
      %386 = vadd.xlane.f32.xlu0 %v328
      %v387 = vpop.xlane.xlu0 %386
      %388 = vadd.xlane.f32.xlu0 %v329
      %v389 = vpop.xlane.xlu0 %388
      %390 = vadd.xlane.f32.xlu0 %v330
      %v391 = vpop.xlane.xlu0 %390
      %392 = vadd.xlane.f32.xlu0 %v331
      %v393 = vpop.xlane.xlu0 %392
      %394 = vadd.xlane.f32.xlu0 %v332
      %v395 = vpop.xlane.xlu0 %394
      %396 = vadd.xlane.f32.xlu0 %v333
      %v397 = vpop.xlane.xlu0 %396
      %v398 = vmul.f32 %v239, 0.0078125
      %v399 = vmul.f32 %v241, 0.0078125
      %v400 = vmul.f32 %v243, 0.0078125
      %v401 = vmul.f32 %v245, 0.0078125
      %v402 = vmul.f32 %v247, 0.0078125
      %v403 = vmul.f32 %v249, 0.0078125
      %v404 = vmul.f32 %v251, 0.0078125
      %v405 = vmul.f32 %v253, 0.0078125
      %v406 = vmul.f32 %v255, 0.0078125
      %v407 = vmul.f32 %v257, 0.0078125
      %v408 = vmul.f32 %v259, 0.0078125
      %v409 = vmul.f32 %v261, 0.0078125
      %v410 = vmul.f32 %v263, 0.0078125
      %v411 = vmul.f32 %v265, 0.0078125
      %v412 = vmul.f32 %v267, 0.0078125
      %v413 = vmul.f32 %v269, 0.0078125
      %v414 = vmul.f32 %v271, 0.0078125
      %v415 = vmul.f32 %v273, 0.0078125
      %v416 = vmul.f32 %v275, 0.0078125
      %v417 = vmul.f32 %v277, 0.0078125
      %v418 = vmul.f32 %v279, 0.0078125
      %v419 = vmul.f32 %v281, 0.0078125
      %v420 = vmul.f32 %v283, 0.0078125
      %v421 = vmul.f32 %v285, 0.0078125
      %v422 = vmul.f32 %v287, 0.0078125
      %v423 = vmul.f32 %v289, 0.0078125
      %v424 = vmul.f32 %v291, 0.0078125
      %v425 = vmul.f32 %v293, 0.0078125
      %v426 = vmul.f32 %v295, 0.0078125
      %v427 = vmul.f32 %v297, 0.0078125
      %v428 = vmul.f32 %v299, 0.0078125
      %v429 = vmul.f32 %v301, 0.0078125
      %v430 = vmul.f32 %v335, 0.0078125
      %v431 = vmul.f32 %v337, 0.0078125
      %v432 = vmul.f32 %v339, 0.0078125
      %v433 = vmul.f32 %v341, 0.0078125
      %v434 = vmul.f32 %v343, 0.0078125
      %v435 = vmul.f32 %v345, 0.0078125
      %v436 = vmul.f32 %v347, 0.0078125
      %v437 = vmul.f32 %v349, 0.0078125
      %v438 = vmul.f32 %v351, 0.0078125
      %v439 = vmul.f32 %v353, 0.0078125
      %v440 = vmul.f32 %v355, 0.0078125
      %v441 = vmul.f32 %v357, 0.0078125
      %v442 = vmul.f32 %v359, 0.0078125
      %v443 = vmul.f32 %v361, 0.0078125
      %v444 = vmul.f32 %v363, 0.0078125
      %v445 = vmul.f32 %v365, 0.0078125
      %v446 = vmul.f32 %v367, 0.0078125
      %v447 = vmul.f32 %v369, 0.0078125
      %v448 = vmul.f32 %v371, 0.0078125
      %v449 = vmul.f32 %v373, 0.0078125
      %v450 = vmul.f32 %v375, 0.0078125
      %v451 = vmul.f32 %v377, 0.0078125
      %v452 = vmul.f32 %v379, 0.0078125
      %v453 = vmul.f32 %v381, 0.0078125
      %v454 = vmul.f32 %v383, 0.0078125
      %v455 = vmul.f32 %v385, 0.0078125
      %v456 = vmul.f32 %v387, 0.0078125
      %v457 = vmul.f32 %v389, 0.0078125
      %v458 = vmul.f32 %v391, 0.0078125
      %v459 = vmul.f32 %v393, 0.0078125
      %v460 = vmul.f32 %v395, 0.0078125
      %v461 = vmul.f32 %v397, 0.0078125
      %v462 = vmul.f32 %v398, %v398
      %v463 = vmul.f32 %v399, %v399
      %v464 = vmul.f32 %v400, %v400
      %v465 = vmul.f32 %v401, %v401
      %v466 = vmul.f32 %v402, %v402
      %v467 = vmul.f32 %v403, %v403
      %v468 = vmul.f32 %v404, %v404
      %v469 = vmul.f32 %v405, %v405
      %v470 = vmul.f32 %v406, %v406
      %v471 = vmul.f32 %v407, %v407
      %v472 = vmul.f32 %v408, %v408
      %v473 = vmul.f32 %v409, %v409
      %v474 = vmul.f32 %v410, %v410
      %v475 = vmul.f32 %v411, %v411
      %v476 = vmul.f32 %v412, %v412
      %v477 = vmul.f32 %v413, %v413
      %v478 = vmul.f32 %v414, %v414
      %v479 = vmul.f32 %v415, %v415
      %v480 = vmul.f32 %v416, %v416
      %v481 = vmul.f32 %v417, %v417
      %v482 = vmul.f32 %v418, %v418
      %v483 = vmul.f32 %v419, %v419
      %v484 = vmul.f32 %v420, %v420
      %v485 = vmul.f32 %v421, %v421
      %v486 = vmul.f32 %v422, %v422
      %v487 = vmul.f32 %v423, %v423
      %v488 = vmul.f32 %v424, %v424
      %v489 = vmul.f32 %v425, %v425
      %v490 = vmul.f32 %v426, %v426
      %v491 = vmul.f32 %v427, %v427
      %v492 = vmul.f32 %v428, %v428
      %v493 = vmul.f32 %v429, %v429
      %v494 = vsub.f32 %v430, %v462
      %v495 = vsub.f32 %v431, %v463
      %v496 = vsub.f32 %v432, %v464
      %v497 = vsub.f32 %v433, %v465
      %v498 = vsub.f32 %v434, %v466
      %v499 = vsub.f32 %v435, %v467
      %v500 = vsub.f32 %v436, %v468
      %v501 = vsub.f32 %v437, %v469
      %v502 = vsub.f32 %v438, %v470
      %v503 = vsub.f32 %v439, %v471
      %v504 = vsub.f32 %v440, %v472
      %v505 = vsub.f32 %v441, %v473
      %v506 = vsub.f32 %v442, %v474
      %v507 = vsub.f32 %v443, %v475
      %v508 = vsub.f32 %v444, %v476
      %v509 = vsub.f32 %v445, %v477
      %v510 = vsub.f32 %v446, %v478
      %v511 = vsub.f32 %v447, %v479
      %v512 = vsub.f32 %v448, %v480
      %v513 = vsub.f32 %v449, %v481
      %v514 = vsub.f32 %v450, %v482
      %v515 = vsub.f32 %v451, %v483
      %v516 = vsub.f32 %v452, %v484
      %v517 = vsub.f32 %v453, %v485
      %v518 = vsub.f32 %v454, %v486
      %v519 = vsub.f32 %v455, %v487
      %v520 = vsub.f32 %v456, %v488
      %v521 = vsub.f32 %v457, %v489
      %v522 = vsub.f32 %v458, %v490
      %v523 = vsub.f32 %v459, %v491
      %v524 = vsub.f32 %v460, %v492
      %v525 = vsub.f32 %v461, %v493
      %v526 = vsub.f32 %v204, %v398
      %v527 = vsub.f32 %v205, %v399
      %v528 = vsub.f32 %v206, %v400
      %v529 = vsub.f32 %v207, %v401
      %v530 = vsub.f32 %v208, %v402
      %v531 = vsub.f32 %v209, %v403
      %v532 = vsub.f32 %v210, %v404
      %v533 = vsub.f32 %v211, %v405
      %v534 = vsub.f32 %v212, %v406
      %v535 = vsub.f32 %v213, %v407
      %v536 = vsub.f32 %v214, %v408
      %v537 = vsub.f32 %v215, %v409
      %v538 = vsub.f32 %v216, %v410
      %v539 = vsub.f32 %v217, %v411
      %v540 = vsub.f32 %v218, %v412
      %v541 = vsub.f32 %v219, %v413
      %v542 = vsub.f32 %v220, %v414
      %v543 = vsub.f32 %v221, %v415
      %v544 = vsub.f32 %v222, %v416
      %v545 = vsub.f32 %v223, %v417
      %v546 = vsub.f32 %v224, %v418
      %v547 = vsub.f32 %v225, %v419
      %v548 = vsub.f32 %v226, %v420
      %v549 = vsub.f32 %v227, %v421
      %v550 = vsub.f32 %v228, %v422
      %v551 = vsub.f32 %v229, %v423
      %v552 = vsub.f32 %v230, %v424
      %v553 = vsub.f32 %v231, %v425
      %v554 = vsub.f32 %v232, %v426
      %v555 = vsub.f32 %v233, %v427
      %v556 = vsub.f32 %v234, %v428
      %v557 = vsub.f32 %v235, %v429
      %v558 = vadd.f32 %v494, 1e-05
      %v559 = vadd.f32 %v495, 1e-05
      %v560 = vadd.f32 %v496, 1e-05
      %v561 = vadd.f32 %v497, 1e-05
      %v562 = vadd.f32 %v498, 1e-05
      %v563 = vadd.f32 %v499, 1e-05
      %v564 = vadd.f32 %v500, 1e-05
      %v565 = vadd.f32 %v501, 1e-05
      %v566 = vadd.f32 %v502, 1e-05
      %v567 = vadd.f32 %v503, 1e-05
      %v568 = vadd.f32 %v504, 1e-05
      %v569 = vadd.f32 %v505, 1e-05
      %v570 = vadd.f32 %v506, 1e-05
      %v571 = vadd.f32 %v507, 1e-05
      %v572 = vadd.f32 %v508, 1e-05
      %v573 = vadd.f32 %v509, 1e-05
      %v574 = vadd.f32 %v510, 1e-05
      %v575 = vadd.f32 %v511, 1e-05
      %v576 = vadd.f32 %v512, 1e-05
      %v577 = vadd.f32 %v513, 1e-05
      %v578 = vadd.f32 %v514, 1e-05
      %v579 = vadd.f32 %v515, 1e-05
      %v580 = vadd.f32 %v516, 1e-05
      %v581 = vadd.f32 %v517, 1e-05
      %v582 = vadd.f32 %v518, 1e-05
      %v583 = vadd.f32 %v519, 1e-05
      %v584 = vadd.f32 %v520, 1e-05
      %v585 = vadd.f32 %v521, 1e-05
      %v586 = vadd.f32 %v522, 1e-05
      %v587 = vadd.f32 %v523, 1e-05
      %v588 = vadd.f32 %v524, 1e-05
      %v589 = vadd.f32 %v525, 1e-05
      %v590 = vrsqrt.pop %v558
      %v591 = vrsqrt.pop %v559
      %v592 = vrsqrt.pop %v560
      %v593 = vrsqrt.pop %v561
      %v594 = vrsqrt.pop %v562
      %v595 = vrsqrt.pop %v563
      %v596 = vrsqrt.pop %v564
      %v597 = vrsqrt.pop %v565
      %v598 = vrsqrt.pop %v566
      %v599 = vrsqrt.pop %v567
      %v600 = vrsqrt.pop %v568
      %v601 = vrsqrt.pop %v569
      %v602 = vrsqrt.pop %v570
      %v603 = vrsqrt.pop %v571
      %v604 = vrsqrt.pop %v572
      %v605 = vrsqrt.pop %v573
      %v606 = vrsqrt.pop %v574
      %v607 = vrsqrt.pop %v575
      %v608 = vrsqrt.pop %v576
      %v609 = vrsqrt.pop %v577
      %v610 = vrsqrt.pop %v578
      %v611 = vrsqrt.pop %v579
      %v612 = vrsqrt.pop %v580
      %v613 = vrsqrt.pop %v581
      %v614 = vrsqrt.pop %v582
      %v615 = vrsqrt.pop %v583
      %v616 = vrsqrt.pop %v584
      %v617 = vrsqrt.pop %v585
      %v618 = vrsqrt.pop %v586
      %v619 = vrsqrt.pop %v587
      %v620 = vrsqrt.pop %v588
      %v621 = vrsqrt.pop %v589
      %v622 = vmul.f32 %v526, %v590
      %v623 = vmul.f32 %v527, %v591
      %v624 = vmul.f32 %v528, %v592
      %v625 = vmul.f32 %v529, %v593
      %v626 = vmul.f32 %v530, %v594
      %v627 = vmul.f32 %v531, %v595
      %v628 = vmul.f32 %v532, %v596
      %v629 = vmul.f32 %v533, %v597
      %v630 = vmul.f32 %v534, %v598
      %v631 = vmul.f32 %v535, %v599
      %v632 = vmul.f32 %v536, %v600
      %v633 = vmul.f32 %v537, %v601
      %v634 = vmul.f32 %v538, %v602
      %v635 = vmul.f32 %v539, %v603
      %v636 = vmul.f32 %v540, %v604
      %v637 = vmul.f32 %v541, %v605
      %v638 = vmul.f32 %v542, %v606
      %v639 = vmul.f32 %v543, %v607
      %v640 = vmul.f32 %v544, %v608
      %v641 = vmul.f32 %v545, %v609
      %v642 = vmul.f32 %v546, %v610
      %v643 = vmul.f32 %v547, %v611
      %v644 = vmul.f32 %v548, %v612
      %v645 = vmul.f32 %v549, %v613
      %v646 = vmul.f32 %v550, %v614
      %v647 = vmul.f32 %v551, %v615
      %v648 = vmul.f32 %v552, %v616
      %v649 = vmul.f32 %v553, %v617
      %v650 = vmul.f32 %v554, %v618
      %v651 = vmul.f32 %v555, %v619
      %v652 = vmul.f32 %v556, %v620
      %v653 = vmul.f32 %v557, %v621
      %v655 = vlaneseq
      %v656 = vshrl.u32 %v655, 7
      %v657 = vsub.s32 0, %v656
      %v658 = vrot.slane %v236, %v657
      %v660 = vmul.f32 %v622, %v658
      %v661 = vmul.f32 %v623, %v658
      %v662 = vmul.f32 %v624, %v658
      %v663 = vmul.f32 %v625, %v658
      %v664 = vmul.f32 %v626, %v658
      %v665 = vmul.f32 %v627, %v658
      %v666 = vmul.f32 %v628, %v658
      %v667 = vmul.f32 %v629, %v658
      %v668 = vmul.f32 %v630, %v658
      %v669 = vmul.f32 %v631, %v658
      %v670 = vmul.f32 %v632, %v658
      %v671 = vmul.f32 %v633, %v658
      %v672 = vmul.f32 %v634, %v658
      %v673 = vmul.f32 %v635, %v658
      %v674 = vmul.f32 %v636, %v658
      %v675 = vmul.f32 %v637, %v658
      %v676 = vmul.f32 %v638, %v658
      %v677 = vmul.f32 %v639, %v658
      %v678 = vmul.f32 %v640, %v658
      %v679 = vmul.f32 %v641, %v658
      %v680 = vmul.f32 %v642, %v658
      %v681 = vmul.f32 %v643, %v658
      %v682 = vmul.f32 %v644, %v658
      %v683 = vmul.f32 %v645, %v658
      %v684 = vmul.f32 %v646, %v658
      %v685 = vmul.f32 %v647, %v658
      %v686 = vmul.f32 %v648, %v658
      %v687 = vmul.f32 %v649, %v658
      %v688 = vmul.f32 %v650, %v658
      %v689 = vmul.f32 %v651, %v658
      %v690 = vmul.f32 %v652, %v658
      %v691 = vmul.f32 %v653, %v658
      %v693 = vlaneseq
      %v694 = vshrl.u32 %v693, 7
      %v695 = vsub.s32 0, %v694
      %v696 = vrot.slane %v237, %v695
      %v698 = vadd.f32 %v660, %v696
      %v699 = vadd.f32 %v661, %v696
      %v700 = vadd.f32 %v662, %v696
      %v701 = vadd.f32 %v663, %v696
      %v702 = vadd.f32 %v664, %v696
      %v703 = vadd.f32 %v665, %v696
      %v704 = vadd.f32 %v666, %v696
      %v705 = vadd.f32 %v667, %v696
      %v706 = vadd.f32 %v668, %v696
      %v707 = vadd.f32 %v669, %v696
      %v708 = vadd.f32 %v670, %v696
      %v709 = vadd.f32 %v671, %v696
      %v710 = vadd.f32 %v672, %v696
      %v711 = vadd.f32 %v673, %v696
      %v712 = vadd.f32 %v674, %v696
      %v713 = vadd.f32 %v675, %v696
      %v714 = vadd.f32 %v676, %v696
      %v715 = vadd.f32 %v677, %v696
      %v716 = vadd.f32 %v678, %v696
      %v717 = vadd.f32 %v679, %v696
      %v718 = vadd.f32 %v680, %v696
      %v719 = vadd.f32 %v681, %v696
      %v720 = vadd.f32 %v682, %v696
      %v721 = vadd.f32 %v683, %v696
      %v722 = vadd.f32 %v684, %v696
      %v723 = vadd.f32 %v685, %v696
      %v724 = vadd.f32 %v686, %v696
      %v725 = vadd.f32 %v687, %v696
      %v726 = vadd.f32 %v688, %v696
      %v727 = vadd.f32 %v689, %v696
      %v728 = vadd.f32 %v690, %v696
      %v729 = vadd.f32 %v691, %v696
      %v730 = vpack.c.bf16 %v699, %v698
      %v731 = vpack.c.bf16 %v701, %v700
      %v732 = vpack.c.bf16 %v703, %v702
      %v733 = vpack.c.bf16 %v705, %v704
      %v734 = vpack.c.bf16 %v707, %v706
      %v735 = vpack.c.bf16 %v709, %v708
      %v736 = vpack.c.bf16 %v711, %v710
      %v737 = vpack.c.bf16 %v713, %v712
      %v738 = vpack.c.bf16 %v715, %v714
      %v739 = vpack.c.bf16 %v717, %v716
      %v740 = vpack.c.bf16 %v719, %v718
      %v741 = vpack.c.bf16 %v721, %v720
      %v742 = vpack.c.bf16 %v723, %v722
      %v743 = vpack.c.bf16 %v725, %v724
      %v744 = vpack.c.bf16 %v727, %v726
      %v745 = vpack.c.bf16 %v729, %v728
      %v746 = vld [vmem:[%s3] sm:$0xff]
      %v747 = vld [vmem:[%s3 + $0x8] sm:$0xf]
      %v748 = vld [vmem:[%s3 + $0xc] sm:$0xff]
      %v749 = vld [vmem:[%s3 + $0x14] sm:$0xf]
      %v750 = vld [vmem:[%s3 + $0x18] sm:$0xff]
      %v751 = vld [vmem:[%s3 + $0x20] sm:$0xf]
      %v752 = vld [vmem:[%s3 + $0x24] sm:$0xff]
      %v753 = vld [vmem:[%s3 + $0x2c] sm:$0xf]
      %v754 = vld [vmem:[%s3 + $0x30] sm:$0xff]
      %v755 = vld [vmem:[%s3 + $0x38] sm:$0xf]
      %v756 = vld [vmem:[%s3 + $0x3c] sm:$0xff]
      %v757 = vld [vmem:[%s3 + $0x44] sm:$0xf]
      %v758 = vld [vmem:[%s3 + $0x48] sm:$0xff]
      %v759 = vld [vmem:[%s3 + $0x50] sm:$0xf]
      %v760 = vld [vmem:[%s3 + $0x54] sm:$0xff]
      %v761 = vld [vmem:[%s3 + $0x5c] sm:$0xf]
      %v762 = vld [vmem:[%s3 + $0x60] sm:$0xff]
      %v763 = vld [vmem:[%s3 + $0x68] sm:$0xf]
      %v764 = vld [vmem:[%s3 + $0x6c] sm:$0xff]
      %v765 = vld [vmem:[%s3 + $0x74] sm:$0xf]
      %v766 = vld [vmem:[%s3 + $0x78] sm:$0xff]
      %v767 = vld [vmem:[%s3 + $0x80] sm:$0xf]
      %v768 = vld [vmem:[%s3 + $0x84] sm:$0xff]
      %v769 = vld [vmem:[%s3 + $0x8c] sm:$0xf]
      %v770 = vld [vmem:[%s3 + $0x90] sm:$0xff]
      %v771 = vld [vmem:[%s3 + $0x98] sm:$0xf]
      %v772 = vld [vmem:[%s3 + $0x9c] sm:$0xff]
      %v773 = vld [vmem:[%s3 + $0xa4] sm:$0xf]
      %v774 = vld [vmem:[%s3 + $0xa8] sm:$0xff]
      %v775 = vld [vmem:[%s3 + $0xb0] sm:$0xf]
      %v776 = vld [vmem:[%s3 + $0xb4] sm:$0xff]
      %v777 = vld [vmem:[%s3 + $0xbc] sm:$0xf]
      %v810 = vunpack.c.l.b16 %v746
      %v811 = vunpack.c.h.b16 %v746
      %v812 = vunpack.c.l.b16 %v747
      %v813 = vunpack.c.l.b16 %v748
      %v814 = vunpack.c.h.b16 %v748
      %v815 = vunpack.c.l.b16 %v749
      %v816 = vunpack.c.l.b16 %v750
      %v817 = vunpack.c.h.b16 %v750
      %v818 = vunpack.c.l.b16 %v751
      %v819 = vunpack.c.l.b16 %v752
      %v820 = vunpack.c.h.b16 %v752
      %v821 = vunpack.c.l.b16 %v753
      %v822 = vunpack.c.l.b16 %v754
      %v823 = vunpack.c.h.b16 %v754
      %v824 = vunpack.c.l.b16 %v755
      %v825 = vunpack.c.l.b16 %v756
      %v826 = vunpack.c.h.b16 %v756
      %v827 = vunpack.c.l.b16 %v757
      %v828 = vunpack.c.l.b16 %v758
      %v829 = vunpack.c.h.b16 %v758
      %v830 = vunpack.c.l.b16 %v759
      %v831 = vunpack.c.l.b16 %v760
      %v832 = vunpack.c.h.b16 %v760
      %v833 = vunpack.c.l.b16 %v761
      %v834 = vunpack.c.l.b16 %v762
      %v835 = vunpack.c.h.b16 %v762
      %v836 = vunpack.c.l.b16 %v763
      %v837 = vunpack.c.l.b16 %v764
      %v838 = vunpack.c.h.b16 %v764
      %v839 = vunpack.c.l.b16 %v765
      %v840 = vunpack.c.l.b16 %v766
      %v841 = vunpack.c.h.b16 %v766
      %v842 = vunpack.c.l.b16 %v767
      %v843 = vunpack.c.l.b16 %v768
      %v844 = vunpack.c.h.b16 %v768
      %v845 = vunpack.c.l.b16 %v769
      %v846 = vunpack.c.l.b16 %v770
      %v847 = vunpack.c.h.b16 %v770
      %v848 = vunpack.c.l.b16 %v771
      %v849 = vunpack.c.l.b16 %v772
      %v850 = vunpack.c.h.b16 %v772
      %v851 = vunpack.c.l.b16 %v773
      %v852 = vunpack.c.l.b16 %v774
      %v853 = vunpack.c.h.b16 %v774
      %v854 = vunpack.c.l.b16 %v775
      %v855 = vunpack.c.l.b16 %v776
      %v856 = vunpack.c.h.b16 %v776
      %v857 = vunpack.c.l.b16 %v777
      %v858 = vpack.c.b16 %v813, %v810
      %v859 = vpack.c.b16 %v814, %v811
      %v860 = vpack.c.b16 %v815, %v812
      %v861 = vpack.c.b16 %v819, %v816
      %v862 = vpack.c.b16 %v820, %v817
      %v863 = vpack.c.b16 %v821, %v818
      %v864 = vpack.c.b16 %v825, %v822
      %v865 = vpack.c.b16 %v826, %v823
      %v866 = vpack.c.b16 %v827, %v824
      %v867 = vpack.c.b16 %v831, %v828
      %v868 = vpack.c.b16 %v832, %v829
      %v869 = vpack.c.b16 %v833, %v830
      %v870 = vpack.c.b16 %v837, %v834
      %v871 = vpack.c.b16 %v838, %v835
      %v872 = vpack.c.b16 %v839, %v836
      %v873 = vpack.c.b16 %v843, %v840
      %v874 = vpack.c.b16 %v844, %v841
      %v875 = vpack.c.b16 %v845, %v842
      %v876 = vpack.c.b16 %v849, %v846
      %v877 = vpack.c.b16 %v850, %v847
      %v878 = vpack.c.b16 %v851, %v848
      %v879 = vpack.c.b16 %v855, %v852
      %v880 = vpack.c.b16 %v856, %v853
      %v881 = vpack.c.b16 %v857, %v854
      %906 = vmatprep.subr.bf16.mxu0 %v859
      %907 = vmatpush1.bf16.msra.mxu0 %v858
      %908 = vmatprep.subr.bf16.mxu0 %v862
      %909 = vmatpush1.bf16.msra.mxu0 %v861
      %910 = vmatprep.subr.bf16.mxu0 %v865
      %911 = vmatpush1.bf16.msra.mxu0 %v864
      %912 = vmatprep.subr.bf16.mxu0 %v868
      %913 = vmatpush1.bf16.msra.mxu0 %v867
      %914 = vmatprep.subr.bf16.mxu0 %v871
      %915 = vmatpush1.bf16.msra.mxu0 %v870
      %916 = vmatprep.subr.bf16.mxu0 %v874
      %917 = vmatpush1.bf16.msra.mxu0 %v873
      %918 = vmatprep.subr.bf16.mxu0 %v877
      %919 = vmatpush1.bf16.msra.mxu0 %v876
      %920 = vmatprep.subr.bf16.mxu0 %v880
      %921 = vmatpush1.bf16.msra.mxu0 %v879
      %922 = vmatprep.subr.bf16.mxu0 0
      %923 = vmatpush1.bf16.msra.mxu0 0
      %924 = vmatprep.subr.bf16.mxu0 0
      %925 = vmatpush1.bf16.msra.mxu0 0
      %926 = vmatprep.subr.bf16.mxu0 0
      %927 = vmatpush1.bf16.msra.mxu0 0
      %928 = vmatprep.subr.bf16.mxu0 0
      %929 = vmatpush1.bf16.msra.mxu0 0
      %930 = vmatprep.subr.bf16.mxu0 0
      %931 = vmatpush1.bf16.msra.mxu0 0
      %932 = vmatprep.subr.bf16.mxu0 0
      %933 = vmatpush1.bf16.msra.mxu0 0
      %934 = vmatprep.subr.bf16.mxu0 0
      %935 = vmatpush1.bf16.msra.mxu0 0
      %936 = vmatprep.subr.bf16.mxu0 0
      %937 = vmatpush1.bf16.msra.mxu0 0
      %938 = vmatprep.mubr.bf16.mxu0 0
      %939 = vmatmul.mubr.bf16.gmra.mrb[0].mxu0 %v730
      %v940 = vpop.f32.mrb[0].mxu0
      %v941 = vadd.f32 0.0, %v940
      %v942 = vpop.f32.mrb[0].mxu0
      %v943 = vadd.f32 0.0, %v942
      %v944 = vpop.f32.mrb[0].mxu0
      %v945 = vadd.f32 0.0, %v944
      %v946 = vpop.f32.mrb[0].mxu0
      %v947 = vadd.f32 0.0, %v946
      %948 = vmatprep.mubr.bf16.mxu0 0
      %949 = vmatmul.mubr.bf16.gmra.mrb[0].mxu0 %v731
      %v950 = vpop.f32.mrb[0].mxu0
      %v951 = vadd.f32 0.0, %v950
      %v952 = vpop.f32.mrb[0].mxu0
      %v953 = vadd.f32 0.0, %v952
      %v954 = vpop.f32.mrb[0].mxu0
      %v955 = vadd.f32 0.0, %v954
      %v956 = vpop.f32.mrb[0].mxu0
      %v957 = vadd.f32 0.0, %v956
      %958 = vmatprep.mubr.bf16.mxu0 0
      %959 = vmatmul.mubr.bf16.gmra.mrb[0].mxu0 %v732
      %v960 = vpop.f32.mrb[0].mxu0
      %v961 = vadd.f32 0.0, %v960
      %v962 = vpop.f32.mrb[0].mxu0
      %v963 = vadd.f32 0.0, %v962
      %v964 = vpop.f32.mrb[0].mxu0
      %v965 = vadd.f32 0.0, %v964
      %v966 = vpop.f32.mrb[0].mxu0
      %v967 = vadd.f32 0.0, %v966
      %968 = vmatprep.mubr.bf16.mxu0 0
      %969 = vmatmul.mubr.bf16.gmra.mrb[0].mxu0 %v733
      %v970 = vpop.f32.mrb[0].mxu0
      %v971 = vadd.f32 0.0, %v970
      %v972 = vpop.f32.mrb[0].mxu0
      %v973 = vadd.f32 0.0, %v972
      %v974 = vpop.f32.mrb[0].mxu0
      %v975 = vadd.f32 0.0, %v974
      %v976 = vpop.f32.mrb[0].mxu0
      %v977 = vadd.f32 0.0, %v976
      %978 = vmatprep.mubr.bf16.mxu0 0
      %979 = vmatmul.mubr.bf16.gmra.mrb[0].mxu0 %v734
      %v980 = vpop.f32.mrb[0].mxu0
      %v981 = vadd.f32 0.0, %v980
      %v982 = vpop.f32.mrb[0].mxu0
      %v983 = vadd.f32 0.0, %v982
      %v984 = vpop.f32.mrb[0].mxu0
      %v985 = vadd.f32 0.0, %v984
      %v986 = vpop.f32.mrb[0].mxu0
      %v987 = vadd.f32 0.0, %v986
      %988 = vmatprep.mubr.bf16.mxu0 0
      %989 = vmatmul.mubr.bf16.gmra.mrb[0].mxu0 %v735
      %v990 = vpop.f32.mrb[0].mxu0
      %v991 = vadd.f32 0.0, %v990
      %v992 = vpop.f32.mrb[0].mxu0
      %v993 = vadd.f32 0.0, %v992
      %v994 = vpop.f32.mrb[0].mxu0
      %v995 = vadd.f32 0.0, %v994
      %v996 = vpop.f32.mrb[0].mxu0
      %v997 = vadd.f32 0.0, %v996
      %998 = vmatprep.mubr.bf16.mxu0 0
      %999 = vmatmul.mubr.bf16.gmra.mrb[0].mxu0 %v736
      %v1000 = vpop.f32.mrb[0].mxu0
      %v1001 = vadd.f32 0.0, %v1000
      %v1002 = vpop.f32.mrb[0].mxu0
      %v1003 = vadd.f32 0.0, %v1002
      %v1004 = vpop.f32.mrb[0].mxu0
      %v1005 = vadd.f32 0.0, %v1004
      %v1006 = vpop.f32.mrb[0].mxu0
      %v1007 = vadd.f32 0.0, %v1006
      %1008 = vmatprep.mubr.bf16.mxu0 0
      %1009 = vmatmul.mubr.bf16.gmra.mrb[0].mxu0 %v737
      %v1010 = vpop.f32.mrb[0].mxu0
      %v1011 = vadd.f32 0.0, %v1010
      %v1012 = vpop.f32.mrb[0].mxu0
      %v1013 = vadd.f32 0.0, %v1012
      %v1014 = vpop.f32.mrb[0].mxu0
      %v1015 = vadd.f32 0.0, %v1014
      %v1016 = vpop.f32.mrb[0].mxu0
      %v1017 = vadd.f32 0.0, %v1016
      %1018 = vmatprep.mubr.bf16.mxu0 0
      %1019 = vmatmul.mubr.bf16.gmra.mrb[0].mxu0 %v738
      %v1020 = vpop.f32.mrb[0].mxu0
      %v1021 = vadd.f32 0.0, %v1020
      %v1022 = vpop.f32.mrb[0].mxu0
      %v1023 = vadd.f32 0.0, %v1022
      %v1024 = vpop.f32.mrb[0].mxu0
      %v1025 = vadd.f32 0.0, %v1024
      %v1026 = vpop.f32.mrb[0].mxu0
      %v1027 = vadd.f32 0.0, %v1026
      %1028 = vmatprep.mubr.bf16.mxu0 0
      %1029 = vmatmul.mubr.bf16.gmra.mrb[0].mxu0 %v739
      %v1030 = vpop.f32.mrb[0].mxu0
      %v1031 = vadd.f32 0.0, %v1030
      %v1032 = vpop.f32.mrb[0].mxu0
      %v1033 = vadd.f32 0.0, %v1032
      %v1034 = vpop.f32.mrb[0].mxu0
      %v1035 = vadd.f32 0.0, %v1034
      %v1036 = vpop.f32.mrb[0].mxu0
      %v1037 = vadd.f32 0.0, %v1036
      %1038 = vmatprep.mubr.bf16.mxu0 0
      %1039 = vmatmul.mubr.bf16.gmra.mrb[0].mxu0 %v740
      %v1040 = vpop.f32.mrb[0].mxu0
      %v1041 = vadd.f32 0.0, %v1040
      %v1042 = vpop.f32.mrb[0].mxu0
      %v1043 = vadd.f32 0.0, %v1042
      %v1044 = vpop.f32.mrb[0].mxu0
      %v1045 = vadd.f32 0.0, %v1044
      %v1046 = vpop.f32.mrb[0].mxu0
      %v1047 = vadd.f32 0.0, %v1046
      %1048 = vmatprep.mubr.bf16.mxu0 0
      %1049 = vmatmul.mubr.bf16.gmra.mrb[0].mxu0 %v741
      %v1050 = vpop.f32.mrb[0].mxu0
      %v1051 = vadd.f32 0.0, %v1050
      %v1052 = vpop.f32.mrb[0].mxu0
      %v1053 = vadd.f32 0.0, %v1052
      %v1054 = vpop.f32.mrb[0].mxu0
      %v1055 = vadd.f32 0.0, %v1054
      %v1056 = vpop.f32.mrb[0].mxu0
      %v1057 = vadd.f32 0.0, %v1056
      %1058 = vmatprep.mubr.bf16.mxu0 0
      %1059 = vmatmul.mubr.bf16.gmra.mrb[0].mxu0 %v742
      %v1060 = vpop.f32.mrb[0].mxu0
      %v1061 = vadd.f32 0.0, %v1060
      %v1062 = vpop.f32.mrb[0].mxu0
      %v1063 = vadd.f32 0.0, %v1062
      %v1064 = vpop.f32.mrb[0].mxu0
      %v1065 = vadd.f32 0.0, %v1064
      %v1066 = vpop.f32.mrb[0].mxu0
      %v1067 = vadd.f32 0.0, %v1066
      %1068 = vmatprep.mubr.bf16.mxu0 0
      %1069 = vmatmul.mubr.bf16.gmra.mrb[0].mxu0 %v743
      %v1070 = vpop.f32.mrb[0].mxu0
      %v1071 = vadd.f32 0.0, %v1070
      %v1072 = vpop.f32.mrb[0].mxu0
      %v1073 = vadd.f32 0.0, %v1072
      %v1074 = vpop.f32.mrb[0].mxu0
      %v1075 = vadd.f32 0.0, %v1074
      %v1076 = vpop.f32.mrb[0].mxu0
      %v1077 = vadd.f32 0.0, %v1076
      %1078 = vmatprep.mubr.bf16.mxu0 0
      %1079 = vmatmul.mubr.bf16.gmra.mrb[0].mxu0 %v744
      %v1080 = vpop.f32.mrb[0].mxu0
      %v1081 = vadd.f32 0.0, %v1080
      %v1082 = vpop.f32.mrb[0].mxu0
      %v1083 = vadd.f32 0.0, %v1082
      %v1084 = vpop.f32.mrb[0].mxu0
      %v1085 = vadd.f32 0.0, %v1084
      %v1086 = vpop.f32.mrb[0].mxu0
      %v1087 = vadd.f32 0.0, %v1086
      %1088 = vmatprep.mubr.bf16.mxu0 0
      %1089 = vmatmul.mubr.bf16.gmra.mrb[0].mxu0 %v745
      %v1090 = vpop.f32.mrb[0].mxu0
      %v1091 = vadd.f32 0.0, %v1090
      %v1092 = vpop.f32.mrb[0].mxu0
      %v1093 = vadd.f32 0.0, %v1092
      %v1094 = vpop.f32.mrb[0].mxu0
      %v1095 = vadd.f32 0.0, %v1094
      %v1096 = vpop.f32.mrb[0].mxu0
      %v1097 = vadd.f32 0.0, %v1096
      %1098 = vdwg.mxu0
      %1099 = vmatprep.subr.bf16.mxu0 0
      %1100 = vmatpush1.bf16.msra.mxu0 %v860
      %1101 = vmatprep.subr.bf16.mxu0 0
      %1102 = vmatpush1.bf16.msra.mxu0 %v863
      %1103 = vmatprep.subr.bf16.mxu0 0
      %1104 = vmatpush1.bf16.msra.mxu0 %v866
      %1105 = vmatprep.subr.bf16.mxu0 0
      %1106 = vmatpush1.bf16.msra.mxu0 %v869
      %1107 = vmatprep.subr.bf16.mxu0 0
      %1108 = vmatpush1.bf16.msra.mxu0 %v872
      %1109 = vmatprep.subr.bf16.mxu0 0
      %1110 = vmatpush1.bf16.msra.mxu0 %v875
      %1111 = vmatprep.subr.bf16.mxu0 0
      %1112 = vmatpush1.bf16.msra.mxu0 %v878
      %1113 = vmatprep.subr.bf16.mxu0 0
      %1114 = vmatpush1.bf16.msra.mxu0 %v881
      %1115 = vmatprep.subr.bf16.mxu0 0
      %1116 = vmatpush1.bf16.msra.mxu0 0
      %1117 = vmatprep.subr.bf16.mxu0 0
      %1118 = vmatpush1.bf16.msra.mxu0 0
      %1119 = vmatprep.subr.bf16.mxu0 0
      %1120 = vmatpush1.bf16.msra.mxu0 0
      %1121 = vmatprep.subr.bf16.mxu0 0
      %1122 = vmatpush1.bf16.msra.mxu0 0
      %1123 = vmatprep.subr.bf16.mxu0 0
      %1124 = vmatpush1.bf16.msra.mxu0 0
      %1125 = vmatprep.subr.bf16.mxu0 0
      %1126 = vmatpush1.bf16.msra.mxu0 0
      %1127 = vmatprep.subr.bf16.mxu0 0
      %1128 = vmatpush1.bf16.msra.mxu0 0
      %1129 = vmatprep.subr.bf16.mxu0 0
      %1130 = vmatpush1.bf16.msra.mxu0 0
      %1131 = vmatprep.mubr.bf16.mxu0 0
      %1132 = vmatmul.mubr.bf16.gmra.mrb[0].mxu0 %v730
      %v1133 = vpop.f32.mrb[0].mxu0
      %v1134 = vadd.f32 0.0, %v1133
      %v1135 = vpop.f32.mrb[0].mxu0
      %v1136 = vpop.f32.mrb[0].mxu0
      %v1137 = vadd.f32 0.0, %v1136
      %v1138 = vpop.f32.mrb[0].mxu0
      %1139 = vmatprep.mubr.bf16.mxu0 0
      %1140 = vmatmul.mubr.bf16.gmra.mrb[0].mxu0 %v731
      %v1141 = vpop.f32.mrb[0].mxu0
      %v1142 = vadd.f32 0.0, %v1141
      %v1143 = vpop.f32.mrb[0].mxu0
      %v1144 = vpop.f32.mrb[0].mxu0
      %v1145 = vadd.f32 0.0, %v1144
      %v1146 = vpop.f32.mrb[0].mxu0
      %1147 = vmatprep.mubr.bf16.mxu0 0
      %1148 = vmatmul.mubr.bf16.gmra.mrb[0].mxu0 %v732
      %v1149 = vpop.f32.mrb[0].mxu0
      %v1150 = vadd.f32 0.0, %v1149
      %v1151 = vpop.f32.mrb[0].mxu0
      %v1152 = vpop.f32.mrb[0].mxu0
      %v1153 = vadd.f32 0.0, %v1152
      %v1154 = vpop.f32.mrb[0].mxu0
      %1155 = vmatprep.mubr.bf16.mxu0 0
      %1156 = vmatmul.mubr.bf16.gmra.mrb[0].mxu0 %v733
      %v1157 = vpop.f32.mrb[0].mxu0
      %v1158 = vadd.f32 0.0, %v1157
      %v1159 = vpop.f32.mrb[0].mxu0
      %v1160 = vpop.f32.mrb[0].mxu0
      %v1161 = vadd.f32 0.0, %v1160
      %v1162 = vpop.f32.mrb[0].mxu0
      %1163 = vmatprep.mubr.bf16.mxu0 0
      %1164 = vmatmul.mubr.bf16.gmra.mrb[0].mxu0 %v734
      %v1165 = vpop.f32.mrb[0].mxu0
      %v1166 = vadd.f32 0.0, %v1165
      %v1167 = vpop.f32.mrb[0].mxu0
      %v1168 = vpop.f32.mrb[0].mxu0
      %v1169 = vadd.f32 0.0, %v1168
      %v1170 = vpop.f32.mrb[0].mxu0
      %1171 = vmatprep.mubr.bf16.mxu0 0
      %1172 = vmatmul.mubr.bf16.gmra.mrb[0].mxu0 %v735
      %v1173 = vpop.f32.mrb[0].mxu0
      %v1174 = vadd.f32 0.0, %v1173
      %v1175 = vpop.f32.mrb[0].mxu0
      %v1176 = vpop.f32.mrb[0].mxu0
      %v1177 = vadd.f32 0.0, %v1176
      %v1178 = vpop.f32.mrb[0].mxu0
      %1179 = vmatprep.mubr.bf16.mxu0 0
      %1180 = vmatmul.mubr.bf16.gmra.mrb[0].mxu0 %v736
      %v1181 = vpop.f32.mrb[0].mxu0
      %v1182 = vadd.f32 0.0, %v1181
      %v1183 = vpop.f32.mrb[0].mxu0
      %v1184 = vpop.f32.mrb[0].mxu0
      %v1185 = vadd.f32 0.0, %v1184
      %v1186 = vpop.f32.mrb[0].mxu0
      %1187 = vmatprep.mubr.bf16.mxu0 0
      %1188 = vmatmul.mubr.bf16.gmra.mrb[0].mxu0 %v737
      %v1189 = vpop.f32.mrb[0].mxu0
      %v1190 = vadd.f32 0.0, %v1189
      %v1191 = vpop.f32.mrb[0].mxu0
      %v1192 = vpop.f32.mrb[0].mxu0
      %v1193 = vadd.f32 0.0, %v1192
      %v1194 = vpop.f32.mrb[0].mxu0
      %1195 = vmatprep.mubr.bf16.mxu0 0
      %1196 = vmatmul.mubr.bf16.gmra.mrb[0].mxu0 %v738
      %v1197 = vpop.f32.mrb[0].mxu0
      %v1198 = vadd.f32 0.0, %v1197
      %v1199 = vpop.f32.mrb[0].mxu0
      %v1200 = vpop.f32.mrb[0].mxu0
      %v1201 = vadd.f32 0.0, %v1200
      %v1202 = vpop.f32.mrb[0].mxu0
      %1203 = vmatprep.mubr.bf16.mxu0 0
      %1204 = vmatmul.mubr.bf16.gmra.mrb[0].mxu0 %v739
      %v1205 = vpop.f32.mrb[0].mxu0
      %v1206 = vadd.f32 0.0, %v1205
      %v1207 = vpop.f32.mrb[0].mxu0
      %v1208 = vpop.f32.mrb[0].mxu0
      %v1209 = vadd.f32 0.0, %v1208
      %v1210 = vpop.f32.mrb[0].mxu0
      %1211 = vmatprep.mubr.bf16.mxu0 0
      %1212 = vmatmul.mubr.bf16.gmra.mrb[0].mxu0 %v740
      %v1213 = vpop.f32.mrb[0].mxu0
      %v1214 = vadd.f32 0.0, %v1213
      %v1215 = vpop.f32.mrb[0].mxu0
      %v1216 = vpop.f32.mrb[0].mxu0
      %v1217 = vadd.f32 0.0, %v1216
      %v1218 = vpop.f32.mrb[0].mxu0
      %1219 = vmatprep.mubr.bf16.mxu0 0
      %1220 = vmatmul.mubr.bf16.gmra.mrb[0].mxu0 %v741
      %v1221 = vpop.f32.mrb[0].mxu0
      %v1222 = vadd.f32 0.0, %v1221
      %v1223 = vpop.f32.mrb[0].mxu0
      %v1224 = vpop.f32.mrb[0].mxu0
      %v1225 = vadd.f32 0.0, %v1224
      %v1226 = vpop.f32.mrb[0].mxu0
      %1227 = vmatprep.mubr.bf16.mxu0 0
      %1228 = vmatmul.mubr.bf16.gmra.mrb[0].mxu0 %v742
      %v1229 = vpop.f32.mrb[0].mxu0
      %v1230 = vadd.f32 0.0, %v1229
      %v1231 = vpop.f32.mrb[0].mxu0
      %v1232 = vpop.f32.mrb[0].mxu0
      %v1233 = vadd.f32 0.0, %v1232
      %v1234 = vpop.f32.mrb[0].mxu0
      %1235 = vmatprep.mubr.bf16.mxu0 0
      %1236 = vmatmul.mubr.bf16.gmra.mrb[0].mxu0 %v743
      %v1237 = vpop.f32.mrb[0].mxu0
      %v1238 = vadd.f32 0.0, %v1237
      %v1239 = vpop.f32.mrb[0].mxu0
      %v1240 = vpop.f32.mrb[0].mxu0
      %v1241 = vadd.f32 0.0, %v1240
      %v1242 = vpop.f32.mrb[0].mxu0
      %1243 = vmatprep.mubr.bf16.mxu0 0
      %1244 = vmatmul.mubr.bf16.gmra.mrb[0].mxu0 %v744
      %v1245 = vpop.f32.mrb[0].mxu0
      %v1246 = vadd.f32 0.0, %v1245
      %v1247 = vpop.f32.mrb[0].mxu0
      %v1248 = vpop.f32.mrb[0].mxu0
      %v1249 = vadd.f32 0.0, %v1248
      %v1250 = vpop.f32.mrb[0].mxu0
      %1251 = vmatprep.mubr.bf16.mxu0 0
      %1252 = vmatmul.mubr.bf16.gmra.mrb[0].mxu0 %v745
      %v1253 = vpop.f32.mrb[0].mxu0
      %v1254 = vadd.f32 0.0, %v1253
      %v1255 = vpop.f32.mrb[0].mxu0
      %v1256 = vpop.f32.mrb[0].mxu0
      %v1257 = vadd.f32 0.0, %v1256
      %v1258 = vpop.f32.mrb[0].mxu0
      %1259 = vdwg.mxu0
      %v1260 = vpack.c.bf16 %v945, %v941
      %v1261 = vpack.c.bf16 %v947, %v943
      %v1262 = vpack.c.bf16 %v1137, %v1134
      %v1263 = vpack.c.bf16 %v955, %v951
      %v1264 = vpack.c.bf16 %v957, %v953
      %v1265 = vpack.c.bf16 %v1145, %v1142
      %v1266 = vpack.c.bf16 %v965, %v961
      %v1267 = vpack.c.bf16 %v967, %v963
      %v1268 = vpack.c.bf16 %v1153, %v1150
      %v1269 = vpack.c.bf16 %v975, %v971
      %v1270 = vpack.c.bf16 %v977, %v973
      %v1271 = vpack.c.bf16 %v1161, %v1158
      %v1272 = vpack.c.bf16 %v985, %v981
      %v1273 = vpack.c.bf16 %v987, %v983
      %v1274 = vpack.c.bf16 %v1169, %v1166
      %v1275 = vpack.c.bf16 %v995, %v991
      %v1276 = vpack.c.bf16 %v997, %v993
      %v1277 = vpack.c.bf16 %v1177, %v1174
      %v1278 = vpack.c.bf16 %v1005, %v1001
      %v1279 = vpack.c.bf16 %v1007, %v1003
      %v1280 = vpack.c.bf16 %v1185, %v1182
      %v1281 = vpack.c.bf16 %v1015, %v1011
      %v1282 = vpack.c.bf16 %v1017, %v1013
      %v1283 = vpack.c.bf16 %v1193, %v1190
      %v1284 = vpack.c.bf16 %v1025, %v1021
      %v1285 = vpack.c.bf16 %v1027, %v1023
      %v1286 = vpack.c.bf16 %v1201, %v1198
      %v1287 = vpack.c.bf16 %v1035, %v1031
      %v1288 = vpack.c.bf16 %v1037, %v1033
      %v1289 = vpack.c.bf16 %v1209, %v1206
      %v1290 = vpack.c.bf16 %v1045, %v1041
      %v1291 = vpack.c.bf16 %v1047, %v1043
      %v1292 = vpack.c.bf16 %v1217, %v1214
      %v1293 = vpack.c.bf16 %v1055, %v1051
      %v1294 = vpack.c.bf16 %v1057, %v1053
      %v1295 = vpack.c.bf16 %v1225, %v1222
      %v1296 = vpack.c.bf16 %v1065, %v1061
      %v1297 = vpack.c.bf16 %v1067, %v1063
      %v1298 = vpack.c.bf16 %v1233, %v1230
      %v1299 = vpack.c.bf16 %v1075, %v1071
      %v1300 = vpack.c.bf16 %v1077, %v1073
      %v1301 = vpack.c.bf16 %v1241, %v1238
      %v1302 = vpack.c.bf16 %v1085, %v1081
      %v1303 = vpack.c.bf16 %v1087, %v1083
      %v1304 = vpack.c.bf16 %v1249, %v1246
      %v1305 = vpack.c.bf16 %v1095, %v1091
      %v1306 = vpack.c.bf16 %v1097, %v1093
      %v1307 = vpack.c.bf16 %v1257, %v1254
      %v1356 = vunpack.c.l.b16 %v1260
      %v1357 = vunpack.c.l.b16 %v1261
      %v1358 = vunpack.c.l.b16 %v1262
      %v1359 = vunpack.c.h.b16 %v1260
      %v1360 = vunpack.c.h.b16 %v1261
      %v1361 = vunpack.c.h.b16 %v1262
      %v1362 = vunpack.c.l.b16 %v1263
      %v1363 = vunpack.c.l.b16 %v1264
      %v1364 = vunpack.c.l.b16 %v1265
      %v1365 = vunpack.c.h.b16 %v1263
      %v1366 = vunpack.c.h.b16 %v1264
      %v1367 = vunpack.c.h.b16 %v1265
      %v1368 = vunpack.c.l.b16 %v1266
      %v1369 = vunpack.c.l.b16 %v1267
      %v1370 = vunpack.c.l.b16 %v1268
      %v1371 = vunpack.c.h.b16 %v1266
      %v1372 = vunpack.c.h.b16 %v1267
      %v1373 = vunpack.c.h.b16 %v1268
      %v1374 = vunpack.c.l.b16 %v1269
      %v1375 = vunpack.c.l.b16 %v1270
      %v1376 = vunpack.c.l.b16 %v1271
      %v1377 = vunpack.c.h.b16 %v1269
      %v1378 = vunpack.c.h.b16 %v1270
      %v1379 = vunpack.c.h.b16 %v1271
      %v1380 = vunpack.c.l.b16 %v1272
      %v1381 = vunpack.c.l.b16 %v1273
      %v1382 = vunpack.c.l.b16 %v1274
      %v1383 = vunpack.c.h.b16 %v1272
      %v1384 = vunpack.c.h.b16 %v1273
      %v1385 = vunpack.c.h.b16 %v1274
      %v1386 = vunpack.c.l.b16 %v1275
      %v1387 = vunpack.c.l.b16 %v1276
      %v1388 = vunpack.c.l.b16 %v1277
      %v1389 = vunpack.c.h.b16 %v1275
      %v1390 = vunpack.c.h.b16 %v1276
      %v1391 = vunpack.c.h.b16 %v1277
      %v1392 = vunpack.c.l.b16 %v1278
      %v1393 = vunpack.c.l.b16 %v1279
      %v1394 = vunpack.c.l.b16 %v1280
      %v1395 = vunpack.c.h.b16 %v1278
      %v1396 = vunpack.c.h.b16 %v1279
      %v1397 = vunpack.c.h.b16 %v1280
      %v1398 = vunpack.c.l.b16 %v1281
      %v1399 = vunpack.c.l.b16 %v1282
      %v1400 = vunpack.c.l.b16 %v1283
      %v1401 = vunpack.c.h.b16 %v1281
      %v1402 = vunpack.c.h.b16 %v1282
      %v1403 = vunpack.c.h.b16 %v1283
      %v1404 = vunpack.c.l.b16 %v1284
      %v1405 = vunpack.c.l.b16 %v1285
      %v1406 = vunpack.c.l.b16 %v1286
      %v1407 = vunpack.c.h.b16 %v1284
      %v1408 = vunpack.c.h.b16 %v1285
      %v1409 = vunpack.c.h.b16 %v1286
      %v1410 = vunpack.c.l.b16 %v1287
      %v1411 = vunpack.c.l.b16 %v1288
      %v1412 = vunpack.c.l.b16 %v1289
      %v1413 = vunpack.c.h.b16 %v1287
      %v1414 = vunpack.c.h.b16 %v1288
      %v1415 = vunpack.c.h.b16 %v1289
      %v1416 = vunpack.c.l.b16 %v1290
      %v1417 = vunpack.c.l.b16 %v1291
      %v1418 = vunpack.c.l.b16 %v1292
      %v1419 = vunpack.c.h.b16 %v1290
      %v1420 = vunpack.c.h.b16 %v1291
      %v1421 = vunpack.c.h.b16 %v1292
      %v1422 = vunpack.c.l.b16 %v1293
      %v1423 = vunpack.c.l.b16 %v1294
      %v1424 = vunpack.c.l.b16 %v1295
      %v1425 = vunpack.c.h.b16 %v1293
      %v1426 = vunpack.c.h.b16 %v1294
      %v1427 = vunpack.c.h.b16 %v1295
      %v1428 = vunpack.c.l.b16 %v1296
      %v1429 = vunpack.c.l.b16 %v1297
      %v1430 = vunpack.c.l.b16 %v1298
      %v1431 = vunpack.c.h.b16 %v1296
      %v1432 = vunpack.c.h.b16 %v1297
      %v1433 = vunpack.c.h.b16 %v1298
      %v1434 = vunpack.c.l.b16 %v1299
      %v1435 = vunpack.c.l.b16 %v1300
      %v1436 = vunpack.c.l.b16 %v1301
      %v1437 = vunpack.c.h.b16 %v1299
      %v1438 = vunpack.c.h.b16 %v1300
      %v1439 = vunpack.c.h.b16 %v1301
      %v1440 = vunpack.c.l.b16 %v1302
      %v1441 = vunpack.c.l.b16 %v1303
      %v1442 = vunpack.c.l.b16 %v1304
      %v1443 = vunpack.c.h.b16 %v1302
      %v1444 = vunpack.c.h.b16 %v1303
      %v1445 = vunpack.c.h.b16 %v1304
      %v1446 = vunpack.c.l.b16 %v1305
      %v1447 = vunpack.c.l.b16 %v1306
      %v1448 = vunpack.c.l.b16 %v1307
      %v1449 = vunpack.c.h.b16 %v1305
      %v1450 = vunpack.c.h.b16 %v1306
      %v1451 = vunpack.c.h.b16 %v1307
      %v1452 = vpack.c.b16 %v1357, %v1356
      %v1453 = vpack.c.b16 %v1358, %v1358
      %v1454 = vpack.c.b16 %v1360, %v1359
      %v1455 = vpack.c.b16 %v1361, %v1361
      %v1456 = vpack.c.b16 %v1363, %v1362
      %v1457 = vpack.c.b16 %v1364, %v1364
      %v1458 = vpack.c.b16 %v1366, %v1365
      %v1459 = vpack.c.b16 %v1367, %v1367
      %v1460 = vpack.c.b16 %v1369, %v1368
      %v1461 = vpack.c.b16 %v1370, %v1370
      %v1462 = vpack.c.b16 %v1372, %v1371
      %v1463 = vpack.c.b16 %v1373, %v1373
      %v1464 = vpack.c.b16 %v1375, %v1374
      %v1465 = vpack.c.b16 %v1376, %v1376
      %v1466 = vpack.c.b16 %v1378, %v1377
      %v1467 = vpack.c.b16 %v1379, %v1379
      %v1468 = vpack.c.b16 %v1381, %v1380
      %v1469 = vpack.c.b16 %v1382, %v1382
      %v1470 = vpack.c.b16 %v1384, %v1383
      %v1471 = vpack.c.b16 %v1385, %v1385
      %v1472 = vpack.c.b16 %v1387, %v1386
      %v1473 = vpack.c.b16 %v1388, %v1388
      %v1474 = vpack.c.b16 %v1390, %v1389
      %v1475 = vpack.c.b16 %v1391, %v1391
      %v1476 = vpack.c.b16 %v1393, %v1392
      %v1477 = vpack.c.b16 %v1394, %v1394
      %v1478 = vpack.c.b16 %v1396, %v1395
      %v1479 = vpack.c.b16 %v1397, %v1397
      %v1480 = vpack.c.b16 %v1399, %v1398
      %v1481 = vpack.c.b16 %v1400, %v1400
      %v1482 = vpack.c.b16 %v1402, %v1401
      %v1483 = vpack.c.b16 %v1403, %v1403
      %v1484 = vpack.c.b16 %v1405, %v1404
      %v1485 = vpack.c.b16 %v1406, %v1406
      %v1486 = vpack.c.b16 %v1408, %v1407
      %v1487 = vpack.c.b16 %v1409, %v1409
      %v1488 = vpack.c.b16 %v1411, %v1410
      %v1489 = vpack.c.b16 %v1412, %v1412
      %v1490 = vpack.c.b16 %v1414, %v1413
      %v1491 = vpack.c.b16 %v1415, %v1415
      %v1492 = vpack.c.b16 %v1417, %v1416
      %v1493 = vpack.c.b16 %v1418, %v1418
      %v1494 = vpack.c.b16 %v1420, %v1419
      %v1495 = vpack.c.b16 %v1421, %v1421
      %v1496 = vpack.c.b16 %v1423, %v1422
      %v1497 = vpack.c.b16 %v1424, %v1424
      %v1498 = vpack.c.b16 %v1426, %v1425
      %v1499 = vpack.c.b16 %v1427, %v1427
      %v1500 = vpack.c.b16 %v1429, %v1428
      %v1501 = vpack.c.b16 %v1430, %v1430
      %v1502 = vpack.c.b16 %v1432, %v1431
      %v1503 = vpack.c.b16 %v1433, %v1433
      %v1504 = vpack.c.b16 %v1435, %v1434
      %v1505 = vpack.c.b16 %v1436, %v1436
      %v1506 = vpack.c.b16 %v1438, %v1437
      %v1507 = vpack.c.b16 %v1439, %v1439
      %v1508 = vpack.c.b16 %v1441, %v1440
      %v1509 = vpack.c.b16 %v1442, %v1442
      %v1510 = vpack.c.b16 %v1444, %v1443
      %v1511 = vpack.c.b16 %v1445, %v1445
      %v1512 = vpack.c.b16 %v1447, %v1446
      %v1513 = vpack.c.b16 %v1448, %v1448
      %v1514 = vpack.c.b16 %v1450, %v1449
      %v1515 = vpack.c.b16 %v1451, %v1451
      %1580 = vst [vmem:[%s201] sm:$0xff] %v1452
      %1581 = vst [vmem:[%s201 + $0x8] sm:$0xf] %v1453
      %1582 = vst [vmem:[%s201 + $0xc] sm:$0xff] %v1454
      %1583 = vst [vmem:[%s201 + $0x14] sm:$0xf] %v1455
      %1584 = vst [vmem:[%s201 + $0x18] sm:$0xff] %v1456
      %1585 = vst [vmem:[%s201 + $0x20] sm:$0xf] %v1457
      %1586 = vst [vmem:[%s201 + $0x24] sm:$0xff] %v1458
      %1587 = vst [vmem:[%s201 + $0x2c] sm:$0xf] %v1459
      %1588 = vst [vmem:[%s201 + $0x30] sm:$0xff] %v1460
      %1589 = vst [vmem:[%s201 + $0x38] sm:$0xf] %v1461
      %1590 = vst [vmem:[%s201 + $0x3c] sm:$0xff] %v1462
      %1591 = vst [vmem:[%s201 + $0x44] sm:$0xf] %v1463
      %1592 = vst [vmem:[%s201 + $0x48] sm:$0xff] %v1464
      %1593 = vst [vmem:[%s201 + $0x50] sm:$0xf] %v1465
      %1594 = vst [vmem:[%s201 + $0x54] sm:$0xff] %v1466
      %1595 = vst [vmem:[%s201 + $0x5c] sm:$0xf] %v1467
      %1596 = vst [vmem:[%s201 + $0x60] sm:$0xff] %v1468
      %1597 = vst [vmem:[%s201 + $0x68] sm:$0xf] %v1469
      %1598 = vst [vmem:[%s201 + $0x6c] sm:$0xff] %v1470
      %1599 = vst [vmem:[%s201 + $0x74] sm:$0xf] %v1471
      %1600 = vst [vmem:[%s201 + $0x78] sm:$0xff] %v1472
      %1601 = vst [vmem:[%s201 + $0x80] sm:$0xf] %v1473
      %1602 = vst [vmem:[%s201 + $0x84] sm:$0xff] %v1474
      %1603 = vst [vmem:[%s201 + $0x8c] sm:$0xf] %v1475
      %1604 = vst [vmem:[%s201 + $0x90] sm:$0xff] %v1476
      %1605 = vst [vmem:[%s201 + $0x98] sm:$0xf] %v1477
      %1606 = vst [vmem:[%s201 + $0x9c] sm:$0xff] %v1478
      %1607 = vst [vmem:[%s201 + $0xa4] sm:$0xf] %v1479
      %1608 = vst [vmem:[%s201 + $0xa8] sm:$0xff] %v1480
      %1609 = vst [vmem:[%s201 + $0xb0] sm:$0xf] %v1481
      %1610 = vst [vmem:[%s201 + $0xb4] sm:$0xff] %v1482
      %1611 = vst [vmem:[%s201 + $0xbc] sm:$0xf] %v1483
      %1612 = vst [vmem:[%s201 + $0xc0] sm:$0xff] %v1484
      %1613 = vst [vmem:[%s201 + $0xc8] sm:$0xf] %v1485
      %1614 = vst [vmem:[%s201 + $0xcc] sm:$0xff] %v1486
      %1615 = vst [vmem:[%s201 + $0xd4] sm:$0xf] %v1487
      %1616 = vst [vmem:[%s201 + $0xd8] sm:$0xff] %v1488
      %1617 = vst [vmem:[%s201 + $0xe0] sm:$0xf] %v1489
      %1618 = vst [vmem:[%s201 + $0xe4] sm:$0xff] %v1490
      %1619 = vst [vmem:[%s201 + $0xec] sm:$0xf] %v1491
      %1620 = vst [vmem:[%s201 + $0xf0] sm:$0xff] %v1492
      %1621 = vst [vmem:[%s201 + $0xf8] sm:$0xf] %v1493
      %1622 = vst [vmem:[%s201 + $0xfc] sm:$0xff] %v1494
      %1623 = vst [vmem:[%s201 + $0x104] sm:$0xf] %v1495
      %1624 = vst [vmem:[%s201 + $0x108] sm:$0xff] %v1496
      %1625 = vst [vmem:[%s201 + $0x110] sm:$0xf] %v1497
      %1626 = vst [vmem:[%s201 + $0x114] sm:$0xff] %v1498
      %1627 = vst [vmem:[%s201 + $0x11c] sm:$0xf] %v1499
      %1628 = vst [vmem:[%s201 + $0x120] sm:$0xff] %v1500
      %1629 = vst [vmem:[%s201 + $0x128] sm:$0xf] %v1501
      %1630 = vst [vmem:[%s201 + $0x12c] sm:$0xff] %v1502
      %1631 = vst [vmem:[%s201 + $0x134] sm:$0xf] %v1503
      %1632 = vst [vmem:[%s201 + $0x138] sm:$0xff] %v1504
      %1633 = vst [vmem:[%s201 + $0x140] sm:$0xf] %v1505
      %1634 = vst [vmem:[%s201 + $0x144] sm:$0xff] %v1506
      %1635 = vst [vmem:[%s201 + $0x14c] sm:$0xf] %v1507
      %1636 = vst [vmem:[%s201 + $0x150] sm:$0xff] %v1508
      %1637 = vst [vmem:[%s201 + $0x158] sm:$0xf] %v1509
      %1638 = vst [vmem:[%s201 + $0x15c] sm:$0xff] %v1510
      %1639 = vst [vmem:[%s201 + $0x164] sm:$0xf] %v1511
      %1640 = vst [vmem:[%s201 + $0x168] sm:$0xff] %v1512
      %1641 = vst [vmem:[%s201 + $0x170] sm:$0xf] %v1513
      %1642 = vst [vmem:[%s201 + $0x174] sm:$0xff] %v1514
      %1643 = vst [vmem:[%s201 + $0x17c] sm:$0xf] %v1515
      %s1644 = smul.u32 32, %s15
      %p1645 = scmp.lt.s32.totalorder %s1644, 127
      %s1646 = scalar_select %p1645, %s1644, 127
      %s1647 = smul.addr %s1646, 3
      %s1648 = smul.addr %s1647, 4
      %s1649 = scalar_lea.vmem %s4, %s1648
      // Predicated region
      $region37: #{transformer_forward.9} parent=35 // pred_check
        %p1650 = pneg %p122
      $region38: #{transformer_forward.9} parent=35 // pred_check_branch
        %1652 = sbr.rel (%p1650) target = $region40
      $region39: #{transformer_forward.9} parent=35 // pred_region
        %s1653 = smul.u32 32, %s15
      $region40: #{transformer_forward.9} parent=35 // pred_fallthru
        _
    $region36: #{transformer_forward.9} parent=5 // pred_fallthru
      _
    %p1654 = scmp.le.s32.totalorder 2, %s10
    // Predicated region
    $region41: #{transformer_forward.9} parent=5 // pred_check
      %p1655 = pneg %p1654
    $region42: #{transformer_forward.9} parent=5 // pred_check_branch
      %1657 = sbr.rel (%p1655) target = $region44
    $region43: #{transformer_forward.9} parent=5 // pred_region
      %s1658 = ssub.s32 %s10, 2
      // Predicated region
      $region45: #{transformer_forward.9} parent=43 // pred_check
        %p1659 = pneg %p128
      $region46: #{transformer_forward.9} parent=43 // pred_check_branch
        %1661 = sbr.rel (%p1659) target = $region48
      $region47: #{transformer_forward.9} parent=43 // pred_region
        %s1662 = smul.u32 32, %s16
        %p1663 = scmp.lt.s32.totalorder %s1662, 127
        %s1664 = scalar_select %p1663, %s1662, 127
        %s1665 = smul.addr %s1664, 3
        %s1666 = smul.addr %s1665, 4
        %s1667 = scalar_lea.vmem %s4, %s1666
      $region48: #{transformer_forward.9} parent=43 // pred_fallthru
        _
    $region44: #{transformer_forward.9} parent=5 // pred_fallthru
      _
  $region6: #{transformer_forward.9} parent=0 // loop_footer
    %s14 = sadd.s32 1, %s10
  $region7: #{transformer_forward.9} parent=0 // loop_footer_branch
    %9 = sbr.rel target = $region3
  $region8: #{transformer_forward.9} parent=0 // loop_exit
    _

// kernel: transformer_forward.8
$region0: #{transformer_forward.8}
  #allocation0 [shape = 'u32[]', space=smem, size = 0x4, offset = 0x4, fixed_abs, tag = 'smem constant byte address 0x4 - core index']
  #allocation1 [shape = 'u32[144,128]{1,0:T(1,128)}', space=vmem, size = 0x12000, scoped, tag = 'internal scratch']
  %s0 = inlined_call_operand.vmem [shape: f32[1024,128], index: 0, kind: input, shape index: {}]
  %s1 = inlined_call_operand.vmem [shape: f32[1024,128], index: 1, kind: input, shape index: {}]
  %s2 = inlined_call_operand.vmem [shape: f32[1,128], index: 2, kind: input, shape index: {}]
  %s3 = inlined_call_operand.vmem [shape: f32[1,128], index: 3, kind: input, shape index: {}]
  %s4 = inlined_call_operand.vmem [shape: bf16[128,512], index: 4, kind: input, shape index: {}]
  %s5 = inlined_call_operand.vmem [shape: f32[1,512], index: 5, kind: input, shape index: {}]
  %s6 = inlined_call_operand.vmem [shape: bf16[512,128], index: 6, kind: input, shape index: {}]
  %s7 = inlined_call_operand.vmem [shape: f32[1,128], index: 7, kind: input, shape index: {}]
  %s8 = inlined_call_operand.vmem [shape: f32[1024,128], index: 8, kind: output, shape index: {}]
  %s9 = sld [smem:[#allocation0]]
  $region65: #{transformer_forward.8} parent=0
    _
  %s11 = ssub.s32 1, %s9
  %s12 = scalar_select 0, %s11, %s9
  loop: start=0, step=1, limit=6
  $region2: #{transformer_forward.8} parent=0 // loop_pre_header
    _
  $region3: #{transformer_forward.8} parent=0 // loop_header
    %s14 = sphi 0, %s18
    %p15 = scmp.ge.s32.totalorder %s14, 6
    %s24 = sphi 0, %s26
    %s27 = sphi 0, %s24
    %s28 = sphi 0, %s27
    %s44 = sphi 0, %s28
    %s50 = sphi 0, %s52
    %s53 = sphi 0, %s50
    %s54 = sphi 0, %s53
    %s70 = sphi 0, %s54
    %s74 = sphi 0, %s74
    %s76 = sphi 0, %s74
    %s77 = sphi 0, %s76
    %s91 = sphi 0, %s77
    %s95 = sphi 0, %s95
    %s97 = sphi 0, %s95
    %s98 = sphi 0, %s97
    %s112 = sphi 0, %s98
    %s116 = sphi 0, %s116
    %s118 = sphi 0, %s116
    %s119 = sphi 0, %s118
    %s133 = sphi 0, %s119
    %s137 = sphi 0, %s137
    %s139 = sphi 0, %s137
    %s140 = sphi 0, %s139
    %s154 = sphi 0, %s140
    %s158 = sphi 0, %s158
    %s160 = sphi 0, %s158
    %s161 = sphi 0, %s160
    %s175 = sphi 0, %s161
    %s179 = sphi 0, %s179
    %s181 = sphi 0, %s179
    %s182 = sphi 0, %s181
    %s196 = sphi 0, %s182
    %s202 = sphi 0, %s204
    %s205 = sphi 0, %s202
    %s206 = sphi 0, %s205
    %s222 = sphi 0, %s206
  $region4: #{transformer_forward.8} parent=0 // loop_header_branch
    %17 = sbr.rel (%p15) target = $region8
  $region5: #{transformer_forward.8} parent=0 // loop_body
    %s19 = ssub.s32 %s14, 1
    %s20 = ssub.s32 %s14, 2
    %s21 = sadd.s32 %s14, 1
    %s22 = ssub.s32 %s14, %s21
    %p23 = scmp.eq.s32.totalorder %s22, 0
    %s25 = sadd.s32 %s24, 1
    %s26 = scalar_select %p23, %s24, %s25
    %p29 = pneg %p23
    %p30 = scmp.eq.s32.totalorder %s14, 3
    %p31 = por %p29, %p30
    %p32 = scmp.ne.s32.totalorder %s24, %s27
    %p33 = scmp.eq.s32.totalorder %s14, 0
    %p34 = por %p32, %p33
    %p35 = scmp.ne.s32.totalorder %s24, %s27
    %p36 = scmp.eq.s32.totalorder %s19, 3
    %p37 = por %p35, %p36
    %p38 = scmp.ne.s32.totalorder %s27, %s28
    %p39 = scmp.eq.s32.totalorder %s19, 0
    %p40 = por %p38, %p39
    %p41 = scmp.ne.s32.totalorder %s27, %s28
    %p42 = scmp.eq.s32.totalorder %s20, 3
    %p43 = por %p41, %p42
    %p45 = scmp.ne.s32.totalorder %s28, %s44
    %p46 = scmp.eq.s32.totalorder %s20, 0
    %p47 = por %p45, %p46
    %s48 = ssub.s32 %s14, %s21
    %p49 = scmp.eq.s32.totalorder %s48, 0
    %s51 = sadd.s32 %s50, 1
    %s52 = scalar_select %p49, %s50, %s51
    %p55 = pneg %p49
    %p56 = scmp.eq.s32.totalorder %s14, 3
    %p57 = por %p55, %p56
    %p58 = scmp.ne.s32.totalorder %s50, %s53
    %p59 = scmp.eq.s32.totalorder %s14, 0
    %p60 = por %p58, %p59
    %p61 = scmp.ne.s32.totalorder %s50, %s53
    %p62 = scmp.eq.s32.totalorder %s19, 3
    %p63 = por %p61, %p62
    %p64 = scmp.ne.s32.totalorder %s53, %s54
    %p65 = scmp.eq.s32.totalorder %s19, 0
    %p66 = por %p64, %p65
    %p67 = scmp.ne.s32.totalorder %s53, %s54
    %p68 = scmp.eq.s32.totalorder %s20, 3
    %p69 = por %p67, %p68
    %p71 = scmp.ne.s32.totalorder %s54, %s70
    %p72 = scmp.eq.s32.totalorder %s20, 0
    %p73 = por %p71, %p72
    %s75 = sadd.s32 %s74, 1
    %p78 = scmp.eq.s32.totalorder %s14, 3
    %p79 = scmp.ne.s32.totalorder %s74, %s76
    %p80 = scmp.eq.s32.totalorder %s14, 0
    %p81 = por %p79, %p80
    %p82 = scmp.ne.s32.totalorder %s74, %s76
    %p83 = scmp.eq.s32.totalorder %s19, 3
    %p84 = por %p82, %p83
    %p85 = scmp.ne.s32.totalorder %s76, %s77
    %p86 = scmp.eq.s32.totalorder %s19, 0
    %p87 = por %p85, %p86
    %p88 = scmp.ne.s32.totalorder %s76, %s77
    %p89 = scmp.eq.s32.totalorder %s20, 3
    %p90 = por %p88, %p89
    %p92 = scmp.ne.s32.totalorder %s77, %s91
    %p93 = scmp.eq.s32.totalorder %s20, 0
    %p94 = por %p92, %p93
    %s96 = sadd.s32 %s95, 1
    %p99 = scmp.eq.s32.totalorder %s14, 3
    %p100 = scmp.ne.s32.totalorder %s95, %s97
    %p101 = scmp.eq.s32.totalorder %s14, 0
    %p102 = por %p100, %p101
    %p103 = scmp.ne.s32.totalorder %s95, %s97
    %p104 = scmp.eq.s32.totalorder %s19, 3
    %p105 = por %p103, %p104
    %p106 = scmp.ne.s32.totalorder %s97, %s98
    %p107 = scmp.eq.s32.totalorder %s19, 0
    %p108 = por %p106, %p107
    %p109 = scmp.ne.s32.totalorder %s97, %s98
    %p110 = scmp.eq.s32.totalorder %s20, 3
    %p111 = por %p109, %p110
    %p113 = scmp.ne.s32.totalorder %s98, %s112
    %p114 = scmp.eq.s32.totalorder %s20, 0
    %p115 = por %p113, %p114
    %s117 = sadd.s32 %s116, 1
    %p120 = scmp.eq.s32.totalorder %s14, 3
    %p121 = scmp.ne.s32.totalorder %s116, %s118
    %p122 = scmp.eq.s32.totalorder %s14, 0
    %p123 = por %p121, %p122
    %p124 = scmp.ne.s32.totalorder %s116, %s118
    %p125 = scmp.eq.s32.totalorder %s19, 3
    %p126 = por %p124, %p125
    %p127 = scmp.ne.s32.totalorder %s118, %s119
    %p128 = scmp.eq.s32.totalorder %s19, 0
    %p129 = por %p127, %p128
    %p130 = scmp.ne.s32.totalorder %s118, %s119
    %p131 = scmp.eq.s32.totalorder %s20, 3
    %p132 = por %p130, %p131
    %p134 = scmp.ne.s32.totalorder %s119, %s133
    %p135 = scmp.eq.s32.totalorder %s20, 0
    %p136 = por %p134, %p135
    %s138 = sadd.s32 %s137, 1
    %p141 = scmp.eq.s32.totalorder %s14, 3
    %p142 = scmp.ne.s32.totalorder %s137, %s139
    %p143 = scmp.eq.s32.totalorder %s14, 0
    %p144 = por %p142, %p143
    %p145 = scmp.ne.s32.totalorder %s137, %s139
    %p146 = scmp.eq.s32.totalorder %s19, 3
    %p147 = por %p145, %p146
    %p148 = scmp.ne.s32.totalorder %s139, %s140
    %p149 = scmp.eq.s32.totalorder %s19, 0
    %p150 = por %p148, %p149
    %p151 = scmp.ne.s32.totalorder %s139, %s140
    %p152 = scmp.eq.s32.totalorder %s20, 3
    %p153 = por %p151, %p152
    %p155 = scmp.ne.s32.totalorder %s140, %s154
    %p156 = scmp.eq.s32.totalorder %s20, 0
    %p157 = por %p155, %p156
    %s159 = sadd.s32 %s158, 1
    %p162 = scmp.eq.s32.totalorder %s14, 3
    %p163 = scmp.ne.s32.totalorder %s158, %s160
    %p164 = scmp.eq.s32.totalorder %s14, 0
    %p165 = por %p163, %p164
    %p166 = scmp.ne.s32.totalorder %s158, %s160
    %p167 = scmp.eq.s32.totalorder %s19, 3
    %p168 = por %p166, %p167
    %p169 = scmp.ne.s32.totalorder %s160, %s161
    %p170 = scmp.eq.s32.totalorder %s19, 0
    %p171 = por %p169, %p170
    %p172 = scmp.ne.s32.totalorder %s160, %s161
    %p173 = scmp.eq.s32.totalorder %s20, 3
    %p174 = por %p172, %p173
    %p176 = scmp.ne.s32.totalorder %s161, %s175
    %p177 = scmp.eq.s32.totalorder %s20, 0
    %p178 = por %p176, %p177
    %s180 = sadd.s32 %s179, 1
    %p183 = scmp.eq.s32.totalorder %s14, 3
    %p184 = scmp.ne.s32.totalorder %s179, %s181
    %p185 = scmp.eq.s32.totalorder %s14, 0
    %p186 = por %p184, %p185
    %p187 = scmp.ne.s32.totalorder %s179, %s181
    %p188 = scmp.eq.s32.totalorder %s19, 3
    %p189 = por %p187, %p188
    %p190 = scmp.ne.s32.totalorder %s181, %s182
    %p191 = scmp.eq.s32.totalorder %s19, 0
    %p192 = por %p190, %p191
    %p193 = scmp.ne.s32.totalorder %s181, %s182
    %p194 = scmp.eq.s32.totalorder %s20, 3
    %p195 = por %p193, %p194
    %p197 = scmp.ne.s32.totalorder %s182, %s196
    %p198 = scmp.eq.s32.totalorder %s20, 0
    %p199 = por %p197, %p198
    %s200 = ssub.s32 %s14, %s21
    %p201 = scmp.eq.s32.totalorder %s200, 0
    %s203 = sadd.s32 %s202, 1
    %s204 = scalar_select %p201, %s202, %s203
    %p207 = pneg %p201
    %p208 = scmp.eq.s32.totalorder %s14, 3
    %p209 = por %p207, %p208
    %p210 = scmp.ne.s32.totalorder %s202, %s205
    %p211 = scmp.eq.s32.totalorder %s14, 0
    %p212 = por %p210, %p211
    %p213 = scmp.ne.s32.totalorder %s202, %s205
    %p214 = scmp.eq.s32.totalorder %s19, 3
    %p215 = por %p213, %p214
    %p216 = scmp.ne.s32.totalorder %s205, %s206
    %p217 = scmp.eq.s32.totalorder %s19, 0
    %p218 = por %p216, %p217
    %p219 = scmp.ne.s32.totalorder %s205, %s206
    %p220 = scmp.eq.s32.totalorder %s20, 3
    %p221 = por %p219, %p220
    %p223 = scmp.ne.s32.totalorder %s206, %s222
    %p224 = scmp.eq.s32.totalorder %s20, 0
    %p225 = por %p223, %p224
    %p226 = scmp.le.s32.totalorder 1, %s14
    %p227 = scmp.lt.s32.totalorder %s14, 5
    %p228 = pnand %p226, %p227
    %p229 = pneg %p228
    // Predicated region
    $region9: #{transformer_forward.8} parent=5 // pred_check
      _
    $region10: #{transformer_forward.8} parent=5 // pred_check_branch
      %231 = sbr.rel (%p228) target = $region12
    $region11: #{transformer_forward.8} parent=5 // pred_region
      %s232 = ssub.s32 %s14, 1
      // Predicated region
      $region13: #{transformer_forward.8} parent=11 // pred_check
        %p233 = pneg %p87
      $region14: #{transformer_forward.8} parent=11 // pred_check_branch
        %235 = sbr.rel (%p233) target = $region16
      $region15: #{transformer_forward.8} parent=11 // pred_region
        _
      $region16: #{transformer_forward.8} parent=11 // pred_fallthru
        _
      // Predicated region
      $region17: #{transformer_forward.8} parent=11 // pred_check
        %p236 = pneg %p108
      $region18: #{transformer_forward.8} parent=11 // pred_check_branch
        %238 = sbr.rel (%p236) target = $region20
      $region19: #{transformer_forward.8} parent=11 // pred_region
        _
      $region20: #{transformer_forward.8} parent=11 // pred_fallthru
        _
      // Predicated region
      $region21: #{transformer_forward.8} parent=11 // pred_check
        %p239 = pneg %p129
      $region22: #{transformer_forward.8} parent=11 // pred_check_branch
        %241 = sbr.rel (%p239) target = $region24
      $region23: #{transformer_forward.8} parent=11 // pred_region
        _
      $region24: #{transformer_forward.8} parent=11 // pred_fallthru
        _
      // Predicated region
      $region25: #{transformer_forward.8} parent=11 // pred_check
        %p242 = pneg %p150
      $region26: #{transformer_forward.8} parent=11 // pred_check_branch
        %244 = sbr.rel (%p242) target = $region28
      $region27: #{transformer_forward.8} parent=11 // pred_region
        _
      $region28: #{transformer_forward.8} parent=11 // pred_fallthru
        _
      // Predicated region
      $region29: #{transformer_forward.8} parent=11 // pred_check
        %p245 = pneg %p171
      $region30: #{transformer_forward.8} parent=11 // pred_check_branch
        %247 = sbr.rel (%p245) target = $region32
      $region31: #{transformer_forward.8} parent=11 // pred_region
        _
      $region32: #{transformer_forward.8} parent=11 // pred_fallthru
        _
      // Predicated region
      $region33: #{transformer_forward.8} parent=11 // pred_check
        %p248 = pneg %p192
      $region34: #{transformer_forward.8} parent=11 // pred_check_branch
        %250 = sbr.rel (%p248) target = $region36
      $region35: #{transformer_forward.8} parent=11 // pred_region
        _
      $region36: #{transformer_forward.8} parent=11 // pred_fallthru
        _
    $region12: #{transformer_forward.8} parent=5 // pred_fallthru
      _
    %p251 = scmp.lt.s32.totalorder %s14, 4
    // Predicated region
    $region37: #{transformer_forward.8} parent=5 // pred_check
      %p252 = pneg %p251
    $region38: #{transformer_forward.8} parent=5 // pred_check_branch
      %254 = sbr.rel (%p252) target = $region40
    $region39: #{transformer_forward.8} parent=5 // pred_region
      // Predicated region
      $region41: #{transformer_forward.8} parent=39 // pred_check
        %p255 = pneg %p34
      $region42: #{transformer_forward.8} parent=39 // pred_check_branch
        %257 = sbr.rel (%p255) target = $region44
      $region43: #{transformer_forward.8} parent=39 // pred_region
        %s258 = smul.u32 32, %s14
        %p259 = scmp.lt.s32.totalorder %s258, 127
        %s260 = scalar_select %p259, %s258, 127
        %s261 = smul.addr %s260, 8
        %s262 = scalar_lea.vmem %s0, %s261
        %s263 = smul.u32 32, %s14
      $region44: #{transformer_forward.8} parent=39 // pred_fallthru
        _
      // Predicated region
      $region45: #{transformer_forward.8} parent=39 // pred_check
        %p264 = pneg %p60
      $region46: #{transformer_forward.8} parent=39 // pred_check_branch
        %266 = sbr.rel (%p264) target = $region48
      $region47: #{transformer_forward.8} parent=39 // pred_region
        %s267 = smul.u32 32, %s14
        %p268 = scmp.lt.s32.totalorder %s267, 127
        %s269 = scalar_select %p268, %s267, 127
        %s270 = smul.addr %s269, 8
        %s271 = scalar_lea.vmem %s1, %s270
        %s272 = smul.u32 32, %s14
      $region48: #{transformer_forward.8} parent=39 // pred_fallthru
        _
    $region40: #{transformer_forward.8} parent=5 // pred_fallthru
      _
    %p273 = scmp.le.s32.totalorder 1, %s14
    %p274 = scmp.lt.s32.totalorder %s14, 5
    %p275 = pnand %p273, %p274
    %p276 = pneg %p275
    // Predicated region
    $region49: #{transformer_forward.8} parent=5 // pred_check
      _
    $region50: #{transformer_forward.8} parent=5 // pred_check_branch
      %278 = sbr.rel (%p275) target = $region52
    $region51: #{transformer_forward.8} parent=5 // pred_region
      %s279 = ssub.s32 %s14, 1
      %s280 = smul.u32 32, %s19
      %p281 = scmp.lt.s32.totalorder %s280, 127
      %s282 = scalar_select %p281, %s280, 127
      %s283 = smul.addr %s282, 8
      %s284 = scalar_lea.vmem %s0, %s283
      %p285 = pneg %p40
      %p286 = pneg %p37
      %s287 = smul.u32 32, %s19
      %p288 = scmp.lt.s32.totalorder %s287, 127
      %s289 = scalar_select %p288, %s287, 127
      %s290 = smul.addr %s289, 8
      %s291 = scalar_lea.vmem %s1, %s290
      %p292 = pneg %p66
      %p293 = pneg %p63
      %p294 = pneg %p87
      %p295 = pneg %p84
      %p296 = pneg %p108
      %p297 = pneg %p105
      %p298 = pneg %p129
      %p299 = pneg %p126
      %p300 = pneg %p150
      %p301 = pneg %p147
      %p302 = pneg %p171
      %p303 = pneg %p168
      %p304 = pneg %p192
      %p305 = pneg %p189
      %p306 = pneg %p218
      %p307 = pneg %p215
      %s308 = smul.u32 32, %s19
      %p309 = scmp.lt.s32.totalorder %s308, 127
      %s310 = scalar_select %p309, %s308, 127
      %s311 = smul.addr %s310, 8
      %s312 = scalar_lea.vmem %s8, %s311
      %s313 = smul.u32 32, %s19
      %p314 = scmp.lt.s32.totalorder %s313, 127
      %s315 = scalar_select %p314, %s313, 127
      %s316 = smul.addr %s315, 8
      %s317 = scalar_lea.vmem %s0, %s316
      %s318 = smul.u32 32, %s19
      %s319 = smul.u32 32, %s19
      %p320 = scmp.lt.s32.totalorder %s319, 127
      %s321 = scalar_select %p320, %s319, 127
      %s322 = smul.addr %s321, 8
      %s323 = scalar_lea.vmem %s1, %s322
      %s324 = smul.u32 32, %s19
      %s325 = smul.u32 32, %s19
      %p326 = scmp.lt.s32.totalorder %s325, 127
      %s327 = scalar_select %p326, %s325, 127
      %s328 = smul.addr %s327, 8
      %s329 = scalar_lea.vmem %s8, %s328
      %s330 = smul.u32 32, %s19
      %v332 = vld [vmem:[%s317] sm:$0xff]
      %v333 = vld [vmem:[%s317 + $0x8] sm:$0xff]
      %v334 = vld [vmem:[%s317 + $0x10] sm:$0xff]
      %v335 = vld [vmem:[%s317 + $0x18] sm:$0xff]
      %v336 = vld [vmem:[%s317 + $0x20] sm:$0xff]
      %v337 = vld [vmem:[%s317 + $0x28] sm:$0xff]
      %v338 = vld [vmem:[%s317 + $0x30] sm:$0xff]
      %v339 = vld [vmem:[%s317 + $0x38] sm:$0xff]
      %v340 = vld [vmem:[%s317 + $0x40] sm:$0xff]
      %v341 = vld [vmem:[%s317 + $0x48] sm:$0xff]
      %v342 = vld [vmem:[%s317 + $0x50] sm:$0xff]
      %v343 = vld [vmem:[%s317 + $0x58] sm:$0xff]
      %v344 = vld [vmem:[%s317 + $0x60] sm:$0xff]
      %v345 = vld [vmem:[%s317 + $0x68] sm:$0xff]
      %v346 = vld [vmem:[%s317 + $0x70] sm:$0xff]
      %v347 = vld [vmem:[%s317 + $0x78] sm:$0xff]
      %v348 = vld [vmem:[%s317 + $0x80] sm:$0xff]
      %v349 = vld [vmem:[%s317 + $0x88] sm:$0xff]
      %v350 = vld [vmem:[%s317 + $0x90] sm:$0xff]
      %v351 = vld [vmem:[%s317 + $0x98] sm:$0xff]
      %v352 = vld [vmem:[%s317 + $0xa0] sm:$0xff]
      %v353 = vld [vmem:[%s317 + $0xa8] sm:$0xff]
      %v354 = vld [vmem:[%s317 + $0xb0] sm:$0xff]
      %v355 = vld [vmem:[%s317 + $0xb8] sm:$0xff]
      %v356 = vld [vmem:[%s317 + $0xc0] sm:$0xff]
      %v357 = vld [vmem:[%s317 + $0xc8] sm:$0xff]
      %v358 = vld [vmem:[%s317 + $0xd0] sm:$0xff]
      %v359 = vld [vmem:[%s317 + $0xd8] sm:$0xff]
      %v360 = vld [vmem:[%s317 + $0xe0] sm:$0xff]
      %v361 = vld [vmem:[%s317 + $0xe8] sm:$0xff]
      %v362 = vld [vmem:[%s317 + $0xf0] sm:$0xff]
      %v363 = vld [vmem:[%s317 + $0xf8] sm:$0xff]
      %v364 = vld [vmem:[%s323] sm:$0xff]
      %v365 = vld [vmem:[%s323 + $0x8] sm:$0xff]
      %v366 = vld [vmem:[%s323 + $0x10] sm:$0xff]
      %v367 = vld [vmem:[%s323 + $0x18] sm:$0xff]
      %v368 = vld [vmem:[%s323 + $0x20] sm:$0xff]
      %v369 = vld [vmem:[%s323 + $0x28] sm:$0xff]
      %v370 = vld [vmem:[%s323 + $0x30] sm:$0xff]
      %v371 = vld [vmem:[%s323 + $0x38] sm:$0xff]
      %v372 = vld [vmem:[%s323 + $0x40] sm:$0xff]
      %v373 = vld [vmem:[%s323 + $0x48] sm:$0xff]
      %v374 = vld [vmem:[%s323 + $0x50] sm:$0xff]
      %v375 = vld [vmem:[%s323 + $0x58] sm:$0xff]
      %v376 = vld [vmem:[%s323 + $0x60] sm:$0xff]
      %v377 = vld [vmem:[%s323 + $0x68] sm:$0xff]
      %v378 = vld [vmem:[%s323 + $0x70] sm:$0xff]
      %v379 = vld [vmem:[%s323 + $0x78] sm:$0xff]
      %v380 = vld [vmem:[%s323 + $0x80] sm:$0xff]
      %v381 = vld [vmem:[%s323 + $0x88] sm:$0xff]
      %v382 = vld [vmem:[%s323 + $0x90] sm:$0xff]
      %v383 = vld [vmem:[%s323 + $0x98] sm:$0xff]
      %v384 = vld [vmem:[%s323 + $0xa0] sm:$0xff]
      %v385 = vld [vmem:[%s323 + $0xa8] sm:$0xff]
      %v386 = vld [vmem:[%s323 + $0xb0] sm:$0xff]
      %v387 = vld [vmem:[%s323 + $0xb8] sm:$0xff]
      %v388 = vld [vmem:[%s323 + $0xc0] sm:$0xff]
      %v389 = vld [vmem:[%s323 + $0xc8] sm:$0xff]
      %v390 = vld [vmem:[%s323 + $0xd0] sm:$0xff]
      %v391 = vld [vmem:[%s323 + $0xd8] sm:$0xff]
      %v392 = vld [vmem:[%s323 + $0xe0] sm:$0xff]
      %v393 = vld [vmem:[%s323 + $0xe8] sm:$0xff]
      %v394 = vld [vmem:[%s323 + $0xf0] sm:$0xff]
      %v395 = vld [vmem:[%s323 + $0xf8] sm:$0xff]
      %v396 = vadd.f32 %v332, %v364
      %v397 = vadd.f32 %v333, %v365
      %v398 = vadd.f32 %v334, %v366
      %v399 = vadd.f32 %v335, %v367
      %v400 = vadd.f32 %v336, %v368
      %v401 = vadd.f32 %v337, %v369
      %v402 = vadd.f32 %v338, %v370
      %v403 = vadd.f32 %v339, %v371
      %v404 = vadd.f32 %v340, %v372
      %v405 = vadd.f32 %v341, %v373
      %v406 = vadd.f32 %v342, %v374
      %v407 = vadd.f32 %v343, %v375
      %v408 = vadd.f32 %v344, %v376
      %v409 = vadd.f32 %v345, %v377
      %v410 = vadd.f32 %v346, %v378
      %v411 = vadd.f32 %v347, %v379
      %v412 = vadd.f32 %v348, %v380
      %v413 = vadd.f32 %v349, %v381
      %v414 = vadd.f32 %v350, %v382
      %v415 = vadd.f32 %v351, %v383
      %v416 = vadd.f32 %v352, %v384
      %v417 = vadd.f32 %v353, %v385
      %v418 = vadd.f32 %v354, %v386
      %v419 = vadd.f32 %v355, %v387
      %v420 = vadd.f32 %v356, %v388
      %v421 = vadd.f32 %v357, %v389
      %v422 = vadd.f32 %v358, %v390
      %v423 = vadd.f32 %v359, %v391
      %v424 = vadd.f32 %v360, %v392
      %v425 = vadd.f32 %v361, %v393
      %v426 = vadd.f32 %v362, %v394
      %v427 = vadd.f32 %v363, %v395
      %v428 = vld [vmem:[%s2] sm:$0x1]
      %v429 = vld [vmem:[%s3] sm:$0x1]
      %430 = vadd.xlane.f32.xlu0 %v396
      %v431 = vpop.xlane.xlu0 %430
      %432 = vadd.xlane.f32.xlu0 %v397
      %v433 = vpop.xlane.xlu0 %432
      %434 = vadd.xlane.f32.xlu0 %v398
      %v435 = vpop.xlane.xlu0 %434
      %436 = vadd.xlane.f32.xlu0 %v399
      %v437 = vpop.xlane.xlu0 %436
      %438 = vadd.xlane.f32.xlu0 %v400
      %v439 = vpop.xlane.xlu0 %438
      %440 = vadd.xlane.f32.xlu0 %v401
      %v441 = vpop.xlane.xlu0 %440
      %442 = vadd.xlane.f32.xlu0 %v402
      %v443 = vpop.xlane.xlu0 %442
      %444 = vadd.xlane.f32.xlu0 %v403
      %v445 = vpop.xlane.xlu0 %444
      %446 = vadd.xlane.f32.xlu0 %v404
      %v447 = vpop.xlane.xlu0 %446
      %448 = vadd.xlane.f32.xlu0 %v405
      %v449 = vpop.xlane.xlu0 %448
      %450 = vadd.xlane.f32.xlu0 %v406
      %v451 = vpop.xlane.xlu0 %450
      %452 = vadd.xlane.f32.xlu0 %v407
      %v453 = vpop.xlane.xlu0 %452
      %454 = vadd.xlane.f32.xlu0 %v408
      %v455 = vpop.xlane.xlu0 %454
      %456 = vadd.xlane.f32.xlu0 %v409
      %v457 = vpop.xlane.xlu0 %456
      %458 = vadd.xlane.f32.xlu0 %v410
      %v459 = vpop.xlane.xlu0 %458
      %460 = vadd.xlane.f32.xlu0 %v411
      %v461 = vpop.xlane.xlu0 %460
      %462 = vadd.xlane.f32.xlu0 %v412
      %v463 = vpop.xlane.xlu0 %462
      %464 = vadd.xlane.f32.xlu0 %v413
      %v465 = vpop.xlane.xlu0 %464
      %466 = vadd.xlane.f32.xlu0 %v414
      %v467 = vpop.xlane.xlu0 %466
      %468 = vadd.xlane.f32.xlu0 %v415
      %v469 = vpop.xlane.xlu0 %468
      %470 = vadd.xlane.f32.xlu0 %v416
      %v471 = vpop.xlane.xlu0 %470
      %472 = vadd.xlane.f32.xlu0 %v417
      %v473 = vpop.xlane.xlu0 %472
      %474 = vadd.xlane.f32.xlu0 %v418
      %v475 = vpop.xlane.xlu0 %474
      %476 = vadd.xlane.f32.xlu0 %v419
      %v477 = vpop.xlane.xlu0 %476
      %478 = vadd.xlane.f32.xlu0 %v420
      %v479 = vpop.xlane.xlu0 %478
      %480 = vadd.xlane.f32.xlu0 %v421
      %v481 = vpop.xlane.xlu0 %480
      %482 = vadd.xlane.f32.xlu0 %v422
      %v483 = vpop.xlane.xlu0 %482
      %484 = vadd.xlane.f32.xlu0 %v423
      %v485 = vpop.xlane.xlu0 %484
      %486 = vadd.xlane.f32.xlu0 %v424
      %v487 = vpop.xlane.xlu0 %486
      %488 = vadd.xlane.f32.xlu0 %v425
      %v489 = vpop.xlane.xlu0 %488
      %490 = vadd.xlane.f32.xlu0 %v426
      %v491 = vpop.xlane.xlu0 %490
      %492 = vadd.xlane.f32.xlu0 %v427
      %v493 = vpop.xlane.xlu0 %492
      %v494 = vmul.f32 %v396, %v396
      %v495 = vmul.f32 %v397, %v397
      %v496 = vmul.f32 %v398, %v398
      %v497 = vmul.f32 %v399, %v399
      %v498 = vmul.f32 %v400, %v400
      %v499 = vmul.f32 %v401, %v401
      %v500 = vmul.f32 %v402, %v402
      %v501 = vmul.f32 %v403, %v403
      %v502 = vmul.f32 %v404, %v404
      %v503 = vmul.f32 %v405, %v405
      %v504 = vmul.f32 %v406, %v406
      %v505 = vmul.f32 %v407, %v407
      %v506 = vmul.f32 %v408, %v408
      %v507 = vmul.f32 %v409, %v409
      %v508 = vmul.f32 %v410, %v410
      %v509 = vmul.f32 %v411, %v411
      %v510 = vmul.f32 %v412, %v412
      %v511 = vmul.f32 %v413, %v413
      %v512 = vmul.f32 %v414, %v414
      %v513 = vmul.f32 %v415, %v415
      %v514 = vmul.f32 %v416, %v416
      %v515 = vmul.f32 %v417, %v417
      %v516 = vmul.f32 %v418, %v418
      %v517 = vmul.f32 %v419, %v419
      %v518 = vmul.f32 %v420, %v420
      %v519 = vmul.f32 %v421, %v421
      %v520 = vmul.f32 %v422, %v422
      %v521 = vmul.f32 %v423, %v423
      %v522 = vmul.f32 %v424, %v424
      %v523 = vmul.f32 %v425, %v425
      %v524 = vmul.f32 %v426, %v426
      %v525 = vmul.f32 %v427, %v427
      %526 = vadd.xlane.f32.xlu0 %v494
      %v527 = vpop.xlane.xlu0 %526
      %528 = vadd.xlane.f32.xlu0 %v495
      %v529 = vpop.xlane.xlu0 %528
      %530 = vadd.xlane.f32.xlu0 %v496
      %v531 = vpop.xlane.xlu0 %530
      %532 = vadd.xlane.f32.xlu0 %v497
      %v533 = vpop.xlane.xlu0 %532
      %534 = vadd.xlane.f32.xlu0 %v498
      %v535 = vpop.xlane.xlu0 %534
      %536 = vadd.xlane.f32.xlu0 %v499
      %v537 = vpop.xlane.xlu0 %536
      %538 = vadd.xlane.f32.xlu0 %v500
      %v539 = vpop.xlane.xlu0 %538
      %540 = vadd.xlane.f32.xlu0 %v501
      %v541 = vpop.xlane.xlu0 %540
      %542 = vadd.xlane.f32.xlu0 %v502
      %v543 = vpop.xlane.xlu0 %542
      %544 = vadd.xlane.f32.xlu0 %v503
      %v545 = vpop.xlane.xlu0 %544
      %546 = vadd.xlane.f32.xlu0 %v504
      %v547 = vpop.xlane.xlu0 %546
      %548 = vadd.xlane.f32.xlu0 %v505
      %v549 = vpop.xlane.xlu0 %548
      %550 = vadd.xlane.f32.xlu0 %v506
      %v551 = vpop.xlane.xlu0 %550
      %552 = vadd.xlane.f32.xlu0 %v507
      %v553 = vpop.xlane.xlu0 %552
      %554 = vadd.xlane.f32.xlu0 %v508
      %v555 = vpop.xlane.xlu0 %554
      %556 = vadd.xlane.f32.xlu0 %v509
      %v557 = vpop.xlane.xlu0 %556
      %558 = vadd.xlane.f32.xlu0 %v510
      %v559 = vpop.xlane.xlu0 %558
      %560 = vadd.xlane.f32.xlu0 %v511
      %v561 = vpop.xlane.xlu0 %560
      %562 = vadd.xlane.f32.xlu0 %v512
      %v563 = vpop.xlane.xlu0 %562
      %564 = vadd.xlane.f32.xlu0 %v513
      %v565 = vpop.xlane.xlu0 %564
      %566 = vadd.xlane.f32.xlu0 %v514
      %v567 = vpop.xlane.xlu0 %566
      %568 = vadd.xlane.f32.xlu0 %v515
      %v569 = vpop.xlane.xlu0 %568
      %570 = vadd.xlane.f32.xlu0 %v516
      %v571 = vpop.xlane.xlu0 %570
      %572 = vadd.xlane.f32.xlu0 %v517
      %v573 = vpop.xlane.xlu0 %572
      %574 = vadd.xlane.f32.xlu0 %v518
      %v575 = vpop.xlane.xlu0 %574
      %576 = vadd.xlane.f32.xlu0 %v519
      %v577 = vpop.xlane.xlu0 %576
      %578 = vadd.xlane.f32.xlu0 %v520
      %v579 = vpop.xlane.xlu0 %578
      %580 = vadd.xlane.f32.xlu0 %v521
      %v581 = vpop.xlane.xlu0 %580
      %582 = vadd.xlane.f32.xlu0 %v522
      %v583 = vpop.xlane.xlu0 %582
      %584 = vadd.xlane.f32.xlu0 %v523
      %v585 = vpop.xlane.xlu0 %584
      %586 = vadd.xlane.f32.xlu0 %v524
      %v587 = vpop.xlane.xlu0 %586
      %588 = vadd.xlane.f32.xlu0 %v525
      %v589 = vpop.xlane.xlu0 %588
      %v590 = vmul.f32 %v431, 0.0078125
      %v591 = vmul.f32 %v433, 0.0078125
      %v592 = vmul.f32 %v435, 0.0078125
      %v593 = vmul.f32 %v437, 0.0078125
      %v594 = vmul.f32 %v439, 0.0078125
      %v595 = vmul.f32 %v441, 0.0078125
      %v596 = vmul.f32 %v443, 0.0078125
      %v597 = vmul.f32 %v445, 0.0078125
      %v598 = vmul.f32 %v447, 0.0078125
      %v599 = vmul.f32 %v449, 0.0078125
      %v600 = vmul.f32 %v451, 0.0078125
      %v601 = vmul.f32 %v453, 0.0078125
      %v602 = vmul.f32 %v455, 0.0078125
      %v603 = vmul.f32 %v457, 0.0078125
      %v604 = vmul.f32 %v459, 0.0078125
      %v605 = vmul.f32 %v461, 0.0078125
      %v606 = vmul.f32 %v463, 0.0078125
      %v607 = vmul.f32 %v465, 0.0078125
      %v608 = vmul.f32 %v467, 0.0078125
      %v609 = vmul.f32 %v469, 0.0078125
      %v610 = vmul.f32 %v471, 0.0078125
      %v611 = vmul.f32 %v473, 0.0078125
      %v612 = vmul.f32 %v475, 0.0078125
      %v613 = vmul.f32 %v477, 0.0078125
      %v614 = vmul.f32 %v479, 0.0078125
      %v615 = vmul.f32 %v481, 0.0078125
      %v616 = vmul.f32 %v483, 0.0078125
      %v617 = vmul.f32 %v485, 0.0078125
      %v618 = vmul.f32 %v487, 0.0078125
      %v619 = vmul.f32 %v489, 0.0078125
      %v620 = vmul.f32 %v491, 0.0078125
      %v621 = vmul.f32 %v493, 0.0078125
      %v622 = vmul.f32 %v527, 0.0078125
      %v623 = vmul.f32 %v529, 0.0078125
      %v624 = vmul.f32 %v531, 0.0078125
      %v625 = vmul.f32 %v533, 0.0078125
      %v626 = vmul.f32 %v535, 0.0078125
      %v627 = vmul.f32 %v537, 0.0078125
      %v628 = vmul.f32 %v539, 0.0078125
      %v629 = vmul.f32 %v541, 0.0078125
      %v630 = vmul.f32 %v543, 0.0078125
      %v631 = vmul.f32 %v545, 0.0078125
      %v632 = vmul.f32 %v547, 0.0078125
      %v633 = vmul.f32 %v549, 0.0078125
      %v634 = vmul.f32 %v551, 0.0078125
      %v635 = vmul.f32 %v553, 0.0078125
      %v636 = vmul.f32 %v555, 0.0078125
      %v637 = vmul.f32 %v557, 0.0078125
      %v638 = vmul.f32 %v559, 0.0078125
      %v639 = vmul.f32 %v561, 0.0078125
      %v640 = vmul.f32 %v563, 0.0078125
      %v641 = vmul.f32 %v565, 0.0078125
      %v642 = vmul.f32 %v567, 0.0078125
      %v643 = vmul.f32 %v569, 0.0078125
      %v644 = vmul.f32 %v571, 0.0078125
      %v645 = vmul.f32 %v573, 0.0078125
      %v646 = vmul.f32 %v575, 0.0078125
      %v647 = vmul.f32 %v577, 0.0078125
      %v648 = vmul.f32 %v579, 0.0078125
      %v649 = vmul.f32 %v581, 0.0078125
      %v650 = vmul.f32 %v583, 0.0078125
      %v651 = vmul.f32 %v585, 0.0078125
      %v652 = vmul.f32 %v587, 0.0078125
      %v653 = vmul.f32 %v589, 0.0078125
      %v654 = vmul.f32 %v590, %v590
      %v655 = vmul.f32 %v591, %v591
      %v656 = vmul.f32 %v592, %v592
      %v657 = vmul.f32 %v593, %v593
      %v658 = vmul.f32 %v594, %v594
      %v659 = vmul.f32 %v595, %v595
      %v660 = vmul.f32 %v596, %v596
      %v661 = vmul.f32 %v597, %v597
      %v662 = vmul.f32 %v598, %v598
      %v663 = vmul.f32 %v599, %v599
      %v664 = vmul.f32 %v600, %v600
      %v665 = vmul.f32 %v601, %v601
      %v666 = vmul.f32 %v602, %v602
      %v667 = vmul.f32 %v603, %v603
      %v668 = vmul.f32 %v604, %v604
      %v669 = vmul.f32 %v605, %v605
      %v670 = vmul.f32 %v606, %v606
      %v671 = vmul.f32 %v607, %v607
      %v672 = vmul.f32 %v608, %v608
      %v673 = vmul.f32 %v609, %v609
      %v674 = vmul.f32 %v610, %v610
      %v675 = vmul.f32 %v611, %v611
      %v676 = vmul.f32 %v612, %v612
      %v677 = vmul.f32 %v613, %v613
      %v678 = vmul.f32 %v614, %v614
      %v679 = vmul.f32 %v615, %v615
      %v680 = vmul.f32 %v616, %v616
      %v681 = vmul.f32 %v617, %v617
      %v682 = vmul.f32 %v618, %v618
      %v683 = vmul.f32 %v619, %v619
      %v684 = vmul.f32 %v620, %v620
      %v685 = vmul.f32 %v621, %v621
      %v686 = vsub.f32 %v622, %v654
      %v687 = vsub.f32 %v623, %v655
      %v688 = vsub.f32 %v624, %v656
      %v689 = vsub.f32 %v625, %v657
      %v690 = vsub.f32 %v626, %v658
      %v691 = vsub.f32 %v627, %v659
      %v692 = vsub.f32 %v628, %v660
      %v693 = vsub.f32 %v629, %v661
      %v694 = vsub.f32 %v630, %v662
      %v695 = vsub.f32 %v631, %v663
      %v696 = vsub.f32 %v632, %v664
      %v697 = vsub.f32 %v633, %v665
      %v698 = vsub.f32 %v634, %v666
      %v699 = vsub.f32 %v635, %v667
      %v700 = vsub.f32 %v636, %v668
      %v701 = vsub.f32 %v637, %v669
      %v702 = vsub.f32 %v638, %v670
      %v703 = vsub.f32 %v639, %v671
      %v704 = vsub.f32 %v640, %v672
      %v705 = vsub.f32 %v641, %v673
      %v706 = vsub.f32 %v642, %v674
      %v707 = vsub.f32 %v643, %v675
      %v708 = vsub.f32 %v644, %v676
      %v709 = vsub.f32 %v645, %v677
      %v710 = vsub.f32 %v646, %v678
      %v711 = vsub.f32 %v647, %v679
      %v712 = vsub.f32 %v648, %v680
      %v713 = vsub.f32 %v649, %v681
      %v714 = vsub.f32 %v650, %v682
      %v715 = vsub.f32 %v651, %v683
      %v716 = vsub.f32 %v652, %v684
      %v717 = vsub.f32 %v653, %v685
      %v718 = vsub.f32 %v396, %v590
      %v719 = vsub.f32 %v397, %v591
      %v720 = vsub.f32 %v398, %v592
      %v721 = vsub.f32 %v399, %v593
      %v722 = vsub.f32 %v400, %v594
      %v723 = vsub.f32 %v401, %v595
      %v724 = vsub.f32 %v402, %v596
      %v725 = vsub.f32 %v403, %v597
      %v726 = vsub.f32 %v404, %v598
      %v727 = vsub.f32 %v405, %v599
      %v728 = vsub.f32 %v406, %v600
      %v729 = vsub.f32 %v407, %v601
      %v730 = vsub.f32 %v408, %v602
      %v731 = vsub.f32 %v409, %v603
      %v732 = vsub.f32 %v410, %v604
      %v733 = vsub.f32 %v411, %v605
      %v734 = vsub.f32 %v412, %v606
      %v735 = vsub.f32 %v413, %v607
      %v736 = vsub.f32 %v414, %v608
      %v737 = vsub.f32 %v415, %v609
      %v738 = vsub.f32 %v416, %v610
      %v739 = vsub.f32 %v417, %v611
      %v740 = vsub.f32 %v418, %v612
      %v741 = vsub.f32 %v419, %v613
      %v742 = vsub.f32 %v420, %v614
      %v743 = vsub.f32 %v421, %v615
      %v744 = vsub.f32 %v422, %v616
      %v745 = vsub.f32 %v423, %v617
      %v746 = vsub.f32 %v424, %v618
      %v747 = vsub.f32 %v425, %v619
      %v748 = vsub.f32 %v426, %v620
      %v749 = vsub.f32 %v427, %v621
      %v750 = vadd.f32 %v686, 1e-05
      %v751 = vadd.f32 %v687, 1e-05
      %v752 = vadd.f32 %v688, 1e-05
      %v753 = vadd.f32 %v689, 1e-05
      %v754 = vadd.f32 %v690, 1e-05
      %v755 = vadd.f32 %v691, 1e-05
      %v756 = vadd.f32 %v692, 1e-05
      %v757 = vadd.f32 %v693, 1e-05
      %v758 = vadd.f32 %v694, 1e-05
      %v759 = vadd.f32 %v695, 1e-05
      %v760 = vadd.f32 %v696, 1e-05
      %v761 = vadd.f32 %v697, 1e-05
      %v762 = vadd.f32 %v698, 1e-05
      %v763 = vadd.f32 %v699, 1e-05
      %v764 = vadd.f32 %v700, 1e-05
      %v765 = vadd.f32 %v701, 1e-05
      %v766 = vadd.f32 %v702, 1e-05
      %v767 = vadd.f32 %v703, 1e-05
      %v768 = vadd.f32 %v704, 1e-05
      %v769 = vadd.f32 %v705, 1e-05
      %v770 = vadd.f32 %v706, 1e-05
      %v771 = vadd.f32 %v707, 1e-05
      %v772 = vadd.f32 %v708, 1e-05
      %v773 = vadd.f32 %v709, 1e-05
      %v774 = vadd.f32 %v710, 1e-05
      %v775 = vadd.f32 %v711, 1e-05
      %v776 = vadd.f32 %v712, 1e-05
      %v777 = vadd.f32 %v713, 1e-05
      %v778 = vadd.f32 %v714, 1e-05
      %v779 = vadd.f32 %v715, 1e-05
      %v780 = vadd.f32 %v716, 1e-05
      %v781 = vadd.f32 %v717, 1e-05
      %v782 = vrsqrt.pop %v750
      %v783 = vrsqrt.pop %v751
      %v784 = vrsqrt.pop %v752
      %v785 = vrsqrt.pop %v753
      %v786 = vrsqrt.pop %v754
      %v787 = vrsqrt.pop %v755
      %v788 = vrsqrt.pop %v756
      %v789 = vrsqrt.pop %v757
      %v790 = vrsqrt.pop %v758
      %v791 = vrsqrt.pop %v759
      %v792 = vrsqrt.pop %v760
      %v793 = vrsqrt.pop %v761
      %v794 = vrsqrt.pop %v762
      %v795 = vrsqrt.pop %v763
      %v796 = vrsqrt.pop %v764
      %v797 = vrsqrt.pop %v765
      %v798 = vrsqrt.pop %v766
      %v799 = vrsqrt.pop %v767
      %v800 = vrsqrt.pop %v768
      %v801 = vrsqrt.pop %v769
      %v802 = vrsqrt.pop %v770
      %v803 = vrsqrt.pop %v771
      %v804 = vrsqrt.pop %v772
      %v805 = vrsqrt.pop %v773
      %v806 = vrsqrt.pop %v774
      %v807 = vrsqrt.pop %v775
      %v808 = vrsqrt.pop %v776
      %v809 = vrsqrt.pop %v777
      %v810 = vrsqrt.pop %v778
      %v811 = vrsqrt.pop %v779
      %v812 = vrsqrt.pop %v780
      %v813 = vrsqrt.pop %v781
      %v814 = vmul.f32 %v718, %v782
      %v815 = vmul.f32 %v719, %v783
      %v816 = vmul.f32 %v720, %v784
      %v817 = vmul.f32 %v721, %v785
      %v818 = vmul.f32 %v722, %v786
      %v819 = vmul.f32 %v723, %v787
      %v820 = vmul.f32 %v724, %v788
      %v821 = vmul.f32 %v725, %v789
      %v822 = vmul.f32 %v726, %v790
      %v823 = vmul.f32 %v727, %v791
      %v824 = vmul.f32 %v728, %v792
      %v825 = vmul.f32 %v729, %v793
      %v826 = vmul.f32 %v730, %v794
      %v827 = vmul.f32 %v731, %v795
      %v828 = vmul.f32 %v732, %v796
      %v829 = vmul.f32 %v733, %v797
      %v830 = vmul.f32 %v734, %v798
      %v831 = vmul.f32 %v735, %v799
      %v832 = vmul.f32 %v736, %v800
      %v833 = vmul.f32 %v737, %v801
      %v834 = vmul.f32 %v738, %v802
      %v835 = vmul.f32 %v739, %v803
      %v836 = vmul.f32 %v740, %v804
      %v837 = vmul.f32 %v741, %v805
      %v838 = vmul.f32 %v742, %v806
      %v839 = vmul.f32 %v743, %v807
      %v840 = vmul.f32 %v744, %v808
      %v841 = vmul.f32 %v745, %v809
      %v842 = vmul.f32 %v746, %v810
      %v843 = vmul.f32 %v747, %v811
      %v844 = vmul.f32 %v748, %v812
      %v845 = vmul.f32 %v749, %v813
      %v847 = vlaneseq
      %v848 = vshrl.u32 %v847, 7
      %v849 = vsub.s32 0, %v848
      %v850 = vrot.slane %v428, %v849
      %v852 = vmul.f32 %v814, %v850
      %v853 = vmul.f32 %v815, %v850
      %v854 = vmul.f32 %v816, %v850
      %v855 = vmul.f32 %v817, %v850
      %v856 = vmul.f32 %v818, %v850
      %v857 = vmul.f32 %v819, %v850
      %v858 = vmul.f32 %v820, %v850
      %v859 = vmul.f32 %v821, %v850
      %v860 = vmul.f32 %v822, %v850
      %v861 = vmul.f32 %v823, %v850
      %v862 = vmul.f32 %v824, %v850
      %v863 = vmul.f32 %v825, %v850
      %v864 = vmul.f32 %v826, %v850
      %v865 = vmul.f32 %v827, %v850
      %v866 = vmul.f32 %v828, %v850
      %v867 = vmul.f32 %v829, %v850
      %v868 = vmul.f32 %v830, %v850
      %v869 = vmul.f32 %v831, %v850
      %v870 = vmul.f32 %v832, %v850
      %v871 = vmul.f32 %v833, %v850
      %v872 = vmul.f32 %v834, %v850
      %v873 = vmul.f32 %v835, %v850
      %v874 = vmul.f32 %v836, %v850
      %v875 = vmul.f32 %v837, %v850
      %v876 = vmul.f32 %v838, %v850
      %v877 = vmul.f32 %v839, %v850
      %v878 = vmul.f32 %v840, %v850
      %v879 = vmul.f32 %v841, %v850
      %v880 = vmul.f32 %v842, %v850
      %v881 = vmul.f32 %v843, %v850
      %v882 = vmul.f32 %v844, %v850
      %v883 = vmul.f32 %v845, %v850
      %v885 = vlaneseq
      %v886 = vshrl.u32 %v885, 7
      %v887 = vsub.s32 0, %v886
      %v888 = vrot.slane %v429, %v887
      %v890 = vadd.f32 %v852, %v888
      %v891 = vadd.f32 %v853, %v888
      %v892 = vadd.f32 %v854, %v888
      %v893 = vadd.f32 %v855, %v888
      %v894 = vadd.f32 %v856, %v888
      %v895 = vadd.f32 %v857, %v888
      %v896 = vadd.f32 %v858, %v888
      %v897 = vadd.f32 %v859, %v888
      %v898 = vadd.f32 %v860, %v888
      %v899 = vadd.f32 %v861, %v888
      %v900 = vadd.f32 %v862, %v888
      %v901 = vadd.f32 %v863, %v888
      %v902 = vadd.f32 %v864, %v888
      %v903 = vadd.f32 %v865, %v888
      %v904 = vadd.f32 %v866, %v888
      %v905 = vadd.f32 %v867, %v888
      %v906 = vadd.f32 %v868, %v888
      %v907 = vadd.f32 %v869, %v888
      %v908 = vadd.f32 %v870, %v888
      %v909 = vadd.f32 %v871, %v888
      %v910 = vadd.f32 %v872, %v888
      %v911 = vadd.f32 %v873, %v888
      %v912 = vadd.f32 %v874, %v888
      %v913 = vadd.f32 %v875, %v888
      %v914 = vadd.f32 %v876, %v888
      %v915 = vadd.f32 %v877, %v888
      %v916 = vadd.f32 %v878, %v888
      %v917 = vadd.f32 %v879, %v888
      %v918 = vadd.f32 %v880, %v888
      %v919 = vadd.f32 %v881, %v888
      %v920 = vadd.f32 %v882, %v888
      %v921 = vadd.f32 %v883, %v888
      %v922 = vpack.c.bf16 %v891, %v890
      %v923 = vpack.c.bf16 %v893, %v892
      %v924 = vpack.c.bf16 %v895, %v894
      %v925 = vpack.c.bf16 %v897, %v896
      %v926 = vpack.c.bf16 %v899, %v898
      %v927 = vpack.c.bf16 %v901, %v900
      %v928 = vpack.c.bf16 %v903, %v902
      %v929 = vpack.c.bf16 %v905, %v904
      %v930 = vpack.c.bf16 %v907, %v906
      %v931 = vpack.c.bf16 %v909, %v908
      %v932 = vpack.c.bf16 %v911, %v910
      %v933 = vpack.c.bf16 %v913, %v912
      %v934 = vpack.c.bf16 %v915, %v914
      %v935 = vpack.c.bf16 %v917, %v916
      %v936 = vpack.c.bf16 %v919, %v918
      %v937 = vpack.c.bf16 %v921, %v920
      %v938 = vld [vmem:[%s4] sm:$0xff]
      %v939 = vld [vmem:[%s4 + $0x8] sm:$0xff]
      %v940 = vld [vmem:[%s4 + $0x10] sm:$0xff]
      %v941 = vld [vmem:[%s4 + $0x18] sm:$0xff]
      %v942 = vld [vmem:[%s4 + $0x20] sm:$0xff]
      %v943 = vld [vmem:[%s4 + $0x28] sm:$0xff]
      %v944 = vld [vmem:[%s4 + $0x30] sm:$0xff]
      %v945 = vld [vmem:[%s4 + $0x38] sm:$0xff]
      %v946 = vld [vmem:[%s4 + $0x40] sm:$0xff]
      %v947 = vld [vmem:[%s4 + $0x48] sm:$0xff]
      %v948 = vld [vmem:[%s4 + $0x50] sm:$0xff]
      %v949 = vld [vmem:[%s4 + $0x58] sm:$0xff]
      %v950 = vld [vmem:[%s4 + $0x60] sm:$0xff]
      %v951 = vld [vmem:[%s4 + $0x68] sm:$0xff]
      %v952 = vld [vmem:[%s4 + $0x70] sm:$0xff]
      %v953 = vld [vmem:[%s4 + $0x78] sm:$0xff]
      %v954 = vld [vmem:[%s4 + $0x80] sm:$0xff]
      %v955 = vld [vmem:[%s4 + $0x88] sm:$0xff]
      %v956 = vld [vmem:[%s4 + $0x90] sm:$0xff]
      %v957 = vld [vmem:[%s4 + $0x98] sm:$0xff]
      %v958 = vld [vmem:[%s4 + $0xa0] sm:$0xff]
      %v959 = vld [vmem:[%s4 + $0xa8] sm:$0xff]
      %v960 = vld [vmem:[%s4 + $0xb0] sm:$0xff]
      %v961 = vld [vmem:[%s4 + $0xb8] sm:$0xff]
      %v962 = vld [vmem:[%s4 + $0xc0] sm:$0xff]
      %v963 = vld [vmem:[%s4 + $0xc8] sm:$0xff]
      %v964 = vld [vmem:[%s4 + $0xd0] sm:$0xff]
      %v965 = vld [vmem:[%s4 + $0xd8] sm:$0xff]
      %v966 = vld [vmem:[%s4 + $0xe0] sm:$0xff]
      %v967 = vld [vmem:[%s4 + $0xe8] sm:$0xff]
      %v968 = vld [vmem:[%s4 + $0xf0] sm:$0xff]
      %v969 = vld [vmem:[%s4 + $0xf8] sm:$0xff]
      %v970 = vld [vmem:[%s5] sm:$0xf]
      %v972 = vlaneseq
      %v973 = vshrl.u32 %v972, 7
      %v974 = vsub.s32 0, %v973
      %v975 = vrot.slane %v970, %v974
      %v976 = vlaneseq
      %v977 = vshrl.u32 %v976, 7
      %v978 = vsub.s32 1, %v977
      %v979 = vrot.slane %v970, %v978
      %v980 = vlaneseq
      %v981 = vshrl.u32 %v980, 7
      %v982 = vsub.s32 2, %v981
      %v983 = vrot.slane %v970, %v982
      %v984 = vlaneseq
      %v985 = vshrl.u32 %v984, 7
      %v986 = vsub.s32 3, %v985
      %v987 = vrot.slane %v970, %v986
      %v1024 = vunpack.c.l.b16 %v938
      %v1025 = vunpack.c.h.b16 %v938
      %v1026 = vunpack.c.l.b16 %v939
      %v1027 = vunpack.c.h.b16 %v939
      %v1028 = vunpack.c.l.b16 %v940
      %v1029 = vunpack.c.h.b16 %v940
      %v1030 = vunpack.c.l.b16 %v941
      %v1031 = vunpack.c.h.b16 %v941
      %v1032 = vunpack.c.l.b16 %v942
      %v1033 = vunpack.c.h.b16 %v942
      %v1034 = vunpack.c.l.b16 %v943
      %v1035 = vunpack.c.h.b16 %v943
      %v1036 = vunpack.c.l.b16 %v944
      %v1037 = vunpack.c.h.b16 %v944
      %v1038 = vunpack.c.l.b16 %v945
      %v1039 = vunpack.c.h.b16 %v945
      %v1040 = vunpack.c.l.b16 %v946
      %v1041 = vunpack.c.h.b16 %v946
      %v1042 = vunpack.c.l.b16 %v947
      %v1043 = vunpack.c.h.b16 %v947
      %v1044 = vunpack.c.l.b16 %v948
      %v1045 = vunpack.c.h.b16 %v948
      %v1046 = vunpack.c.l.b16 %v949
      %v1047 = vunpack.c.h.b16 %v949
      %v1048 = vunpack.c.l.b16 %v950
      %v1049 = vunpack.c.h.b16 %v950
      %v1050 = vunpack.c.l.b16 %v951
      %v1051 = vunpack.c.h.b16 %v951
      %v1052 = vunpack.c.l.b16 %v952
      %v1053 = vunpack.c.h.b16 %v952
      %v1054 = vunpack.c.l.b16 %v953
      %v1055 = vunpack.c.h.b16 %v953
      %v1056 = vunpack.c.l.b16 %v954
      %v1057 = vunpack.c.h.b16 %v954
      %v1058 = vunpack.c.l.b16 %v955
      %v1059 = vunpack.c.h.b16 %v955
      %v1060 = vunpack.c.l.b16 %v956
      %v1061 = vunpack.c.h.b16 %v956
      %v1062 = vunpack.c.l.b16 %v957
      %v1063 = vunpack.c.h.b16 %v957
      %v1064 = vunpack.c.l.b16 %v958
      %v1065 = vunpack.c.h.b16 %v958
      %v1066 = vunpack.c.l.b16 %v959
      %v1067 = vunpack.c.h.b16 %v959
      %v1068 = vunpack.c.l.b16 %v960
      %v1069 = vunpack.c.h.b16 %v960
      %v1070 = vunpack.c.l.b16 %v961
      %v1071 = vunpack.c.h.b16 %v961
      %v1072 = vunpack.c.l.b16 %v962
      %v1073 = vunpack.c.h.b16 %v962
      %v1074 = vunpack.c.l.b16 %v963
      %v1075 = vunpack.c.h.b16 %v963
      %v1076 = vunpack.c.l.b16 %v964
      %v1077 = vunpack.c.h.b16 %v964
      %v1078 = vunpack.c.l.b16 %v965
      %v1079 = vunpack.c.h.b16 %v965
      %v1080 = vunpack.c.l.b16 %v966
      %v1081 = vunpack.c.h.b16 %v966
      %v1082 = vunpack.c.l.b16 %v967
      %v1083 = vunpack.c.h.b16 %v967
      %v1084 = vunpack.c.l.b16 %v968
      %v1085 = vunpack.c.h.b16 %v968
      %v1086 = vunpack.c.l.b16 %v969
      %v1087 = vunpack.c.h.b16 %v969
      %v1088 = vpack.c.b16 %v1028, %v1024
      %v1089 = vpack.c.b16 %v1029, %v1025
      %v1090 = vpack.c.b16 %v1030, %v1026
      %v1091 = vpack.c.b16 %v1031, %v1027
      %v1092 = vpack.c.b16 %v1036, %v1032
      %v1093 = vpack.c.b16 %v1037, %v1033
      %v1094 = vpack.c.b16 %v1038, %v1034
      %v1095 = vpack.c.b16 %v1039, %v1035
      %v1096 = vpack.c.b16 %v1044, %v1040
      %v1097 = vpack.c.b16 %v1045, %v1041
      %v1098 = vpack.c.b16 %v1046, %v1042
      %v1099 = vpack.c.b16 %v1047, %v1043
      %v1100 = vpack.c.b16 %v1052, %v1048
      %v1101 = vpack.c.b16 %v1053, %v1049
      %v1102 = vpack.c.b16 %v1054, %v1050
      %v1103 = vpack.c.b16 %v1055, %v1051
      %v1104 = vpack.c.b16 %v1060, %v1056
      %v1105 = vpack.c.b16 %v1061, %v1057
      %v1106 = vpack.c.b16 %v1062, %v1058
      %v1107 = vpack.c.b16 %v1063, %v1059
      %v1108 = vpack.c.b16 %v1068, %v1064
      %v1109 = vpack.c.b16 %v1069, %v1065
      %v1110 = vpack.c.b16 %v1070, %v1066
      %v1111 = vpack.c.b16 %v1071, %v1067
      %v1112 = vpack.c.b16 %v1076, %v1072
      %v1113 = vpack.c.b16 %v1077, %v1073
      %v1114 = vpack.c.b16 %v1078, %v1074
      %v1115 = vpack.c.b16 %v1079, %v1075
      %v1116 = vpack.c.b16 %v1084, %v1080
      %v1117 = vpack.c.b16 %v1085, %v1081
      %v1118 = vpack.c.b16 %v1086, %v1082
      %v1119 = vpack.c.b16 %v1087, %v1083
      %1152 = vmatprep.subr.bf16.mxu0 %v1089
      %1153 = vmatpush1.bf16.msra.mxu0 %v1088
      %1154 = vmatprep.subr.bf16.mxu0 %v1093
      %1155 = vmatpush1.bf16.msra.mxu0 %v1092
      %1156 = vmatprep.subr.bf16.mxu0 %v1097
      %1157 = vmatpush1.bf16.msra.mxu0 %v1096
      %1158 = vmatprep.subr.bf16.mxu0 %v1101
      %1159 = vmatpush1.bf16.msra.mxu0 %v1100
      %1160 = vmatprep.subr.bf16.mxu0 %v1105
      %1161 = vmatpush1.bf16.msra.mxu0 %v1104
      %1162 = vmatprep.subr.bf16.mxu0 %v1109
      %1163 = vmatpush1.bf16.msra.mxu0 %v1108
      %1164 = vmatprep.subr.bf16.mxu0 %v1113
      %1165 = vmatpush1.bf16.msra.mxu0 %v1112
      %1166 = vmatprep.subr.bf16.mxu0 %v1117
      %1167 = vmatpush1.bf16.msra.mxu0 %v1116
      %1168 = vmatprep.subr.bf16.mxu0 0
      %1169 = vmatpush1.bf16.msra.mxu0 0
      %1170 = vmatprep.subr.bf16.mxu0 0
      %1171 = vmatpush1.bf16.msra.mxu0 0
      %1172 = vmatprep.subr.bf16.mxu0 0
      %1173 = vmatpush1.bf16.msra.mxu0 0
      %1174 = vmatprep.subr.bf16.mxu0 0
      %1175 = vmatpush1.bf16.msra.mxu0 0
      %1176 = vmatprep.subr.bf16.mxu0 0
      %1177 = vmatpush1.bf16.msra.mxu0 0
      %1178 = vmatprep.subr.bf16.mxu0 0
      %1179 = vmatpush1.bf16.msra.mxu0 0
      %1180 = vmatprep.subr.bf16.mxu0 0
      %1181 = vmatpush1.bf16.msra.mxu0 0
      %1182 = vmatprep.subr.bf16.mxu0 0
      %1183 = vmatpush1.bf16.msra.mxu0 0
      %1184 = vmatprep.mubr.bf16.mxu0 0
      %1185 = vmatmul.mubr.bf16.gmra.mrb[0].mxu0 %v922
      %v1186 = vpop.f32.mrb[0].mxu0
      %v1187 = vadd.f32 %v975, %v1186
      %v1188 = vpop.f32.mrb[0].mxu0
      %v1189 = vadd.f32 %v979, %v1188
      %v1190 = vpop.f32.mrb[0].mxu0
      %v1191 = vadd.f32 %v975, %v1190
      %v1192 = vpop.f32.mrb[0].mxu0
      %v1193 = vadd.f32 %v979, %v1192
      %1194 = vmatprep.mubr.bf16.mxu0 0
      %1195 = vmatmul.mubr.bf16.gmra.mrb[0].mxu0 %v923
      %v1196 = vpop.f32.mrb[0].mxu0
      %v1197 = vadd.f32 %v975, %v1196
      %v1198 = vpop.f32.mrb[0].mxu0
      %v1199 = vadd.f32 %v979, %v1198
      %v1200 = vpop.f32.mrb[0].mxu0
      %v1201 = vadd.f32 %v975, %v1200
      %v1202 = vpop.f32.mrb[0].mxu0
      %v1203 = vadd.f32 %v979, %v1202
      %1204 = vmatprep.mubr.bf16.mxu0 0
      %1205 = vmatmul.mubr.bf16.gmra.mrb[0].mxu0 %v924
      %v1206 = vpop.f32.mrb[0].mxu0
      %v1207 = vadd.f32 %v975, %v1206
      %v1208 = vpop.f32.mrb[0].mxu0
      %v1209 = vadd.f32 %v979, %v1208
      %v1210 = vpop.f32.mrb[0].mxu0
      %v1211 = vadd.f32 %v975, %v1210
      %v1212 = vpop.f32.mrb[0].mxu0
      %v1213 = vadd.f32 %v979, %v1212
      %1214 = vmatprep.mubr.bf16.mxu0 0
      %1215 = vmatmul.mubr.bf16.gmra.mrb[0].mxu0 %v925
      %v1216 = vpop.f32.mrb[0].mxu0
      %v1217 = vadd.f32 %v975, %v1216
      %v1218 = vpop.f32.mrb[0].mxu0
      %v1219 = vadd.f32 %v979, %v1218
      %v1220 = vpop.f32.mrb[0].mxu0
      %v1221 = vadd.f32 %v975, %v1220
      %v1222 = vpop.f32.mrb[0].mxu0
      %v1223 = vadd.f32 %v979, %v1222
      %1224 = vmatprep.mubr.bf16.mxu0 0
      %1225 = vmatmul.mubr.bf16.gmra.mrb[0].mxu0 %v926
      %v1226 = vpop.f32.mrb[0].mxu0
      %v1227 = vadd.f32 %v975, %v1226
      %v1228 = vpop.f32.mrb[0].mxu0
      %v1229 = vadd.f32 %v979, %v1228
      %v1230 = vpop.f32.mrb[0].mxu0
      %v1231 = vadd.f32 %v975, %v1230
      %v1232 = vpop.f32.mrb[0].mxu0
      %v1233 = vadd.f32 %v979, %v1232
      %1234 = vmatprep.mubr.bf16.mxu0 0
      %1235 = vmatmul.mubr.bf16.gmra.mrb[0].mxu0 %v927
      %v1236 = vpop.f32.mrb[0].mxu0
      %v1237 = vadd.f32 %v975, %v1236
      %v1238 = vpop.f32.mrb[0].mxu0
      %v1239 = vadd.f32 %v979, %v1238
      %v1240 = vpop.f32.mrb[0].mxu0
      %v1241 = vadd.f32 %v975, %v1240
      %v1242 = vpop.f32.mrb[0].mxu0
      %v1243 = vadd.f32 %v979, %v1242
      %1244 = vmatprep.mubr.bf16.mxu0 0
      %1245 = vmatmul.mubr.bf16.gmra.mrb[0].mxu0 %v928
      %v1246 = vpop.f32.mrb[0].mxu0
      %v1247 = vadd.f32 %v975, %v1246
      %v1248 = vpop.f32.mrb[0].mxu0
      %v1249 = vadd.f32 %v979, %v1248
      %v1250 = vpop.f32.mrb[0].mxu0
      %v1251 = vadd.f32 %v975, %v1250
      %v1252 = vpop.f32.mrb[0].mxu0
      %v1253 = vadd.f32 %v979, %v1252
      %1254 = vmatprep.mubr.bf16.mxu0 0
      %1255 = vmatmul.mubr.bf16.gmra.mrb[0].mxu0 %v929
      %v1256 = vpop.f32.mrb[0].mxu0
      %v1257 = vadd.f32 %v975, %v1256
      %v1258 = vpop.f32.mrb[0].mxu0
      %v1259 = vadd.f32 %v979, %v1258
      %v1260 = vpop.f32.mrb[0].mxu0
      %v1261 = vadd.f32 %v975, %v1260
      %v1262 = vpop.f32.mrb[0].mxu0
      %v1263 = vadd.f32 %v979, %v1262
      %1264 = vmatprep.mubr.bf16.mxu0 0
      %1265 = vmatmul.mubr.bf16.gmra.mrb[0].mxu0 %v930
      %v1266 = vpop.f32.mrb[0].mxu0
      %v1267 = vadd.f32 %v975, %v1266
      %v1268 = vpop.f32.mrb[0].mxu0
      %v1269 = vadd.f32 %v979, %v1268
      %v1270 = vpop.f32.mrb[0].mxu0
      %v1271 = vadd.f32 %v975, %v1270
      %v1272 = vpop.f32.mrb[0].mxu0
      %v1273 = vadd.f32 %v979, %v1272
      %1274 = vmatprep.mubr.bf16.mxu0 0
      %1275 = vmatmul.mubr.bf16.gmra.mrb[0].mxu0 %v931
      %v1276 = vpop.f32.mrb[0].mxu0
      %v1277 = vadd.f32 %v975, %v1276
      %v1278 = vpop.f32.mrb[0].mxu0
      %v1279 = vadd.f32 %v979, %v1278
      %v1280 = vpop.f32.mrb[0].mxu0
      %v1281 = vadd.f32 %v975, %v1280
      %v1282 = vpop.f32.mrb[0].mxu0
      %v1283 = vadd.f32 %v979, %v1282
      %1284 = vmatprep.mubr.bf16.mxu0 0
      %1285 = vmatmul.mubr.bf16.gmra.mrb[0].mxu0 %v932
      %v1286 = vpop.f32.mrb[0].mxu0
      %v1287 = vadd.f32 %v975, %v1286
      %v1288 = vpop.f32.mrb[0].mxu0
      %v1289 = vadd.f32 %v979, %v1288
      %v1290 = vpop.f32.mrb[0].mxu0
      %v1291 = vadd.f32 %v975, %v1290
      %v1292 = vpop.f32.mrb[0].mxu0
      %v1293 = vadd.f32 %v979, %v1292
      %1294 = vmatprep.mubr.bf16.mxu0 0
      %1295 = vmatmul.mubr.bf16.gmra.mrb[0].mxu0 %v933
      %v1296 = vpop.f32.mrb[0].mxu0
      %v1297 = vadd.f32 %v975, %v1296
      %v1298 = vpop.f32.mrb[0].mxu0
      %v1299 = vadd.f32 %v979, %v1298
      %v1300 = vpop.f32.mrb[0].mxu0
      %v1301 = vadd.f32 %v975, %v1300
      %v1302 = vpop.f32.mrb[0].mxu0
      %v1303 = vadd.f32 %v979, %v1302
      %1304 = vmatprep.mubr.bf16.mxu0 0
      %1305 = vmatmul.mubr.bf16.gmra.mrb[0].mxu0 %v934
      %v1306 = vpop.f32.mrb[0].mxu0
      %v1307 = vadd.f32 %v975, %v1306
      %v1308 = vpop.f32.mrb[0].mxu0
      %v1309 = vadd.f32 %v979, %v1308
      %v1310 = vpop.f32.mrb[0].mxu0
      %v1311 = vadd.f32 %v975, %v1310
      %v1312 = vpop.f32.mrb[0].mxu0
      %v1313 = vadd.f32 %v979, %v1312
      %1314 = vmatprep.mubr.bf16.mxu0 0
      %1315 = vmatmul.mubr.bf16.gmra.mrb[0].mxu0 %v935
      %v1316 = vpop.f32.mrb[0].mxu0
      %v1317 = vadd.f32 %v975, %v1316
      %v1318 = vpop.f32.mrb[0].mxu0
      %v1319 = vadd.f32 %v979, %v1318
      %v1320 = vpop.f32.mrb[0].mxu0
      %v1321 = vadd.f32 %v975, %v1320
      %v1322 = vpop.f32.mrb[0].mxu0
      %v1323 = vadd.f32 %v979, %v1322
      %1324 = vmatprep.mubr.bf16.mxu0 0
      %1325 = vmatmul.mubr.bf16.gmra.mrb[0].mxu0 %v936
      %v1326 = vpop.f32.mrb[0].mxu0
      %v1327 = vadd.f32 %v975, %v1326
      %v1328 = vpop.f32.mrb[0].mxu0
      %v1329 = vadd.f32 %v979, %v1328
      %v1330 = vpop.f32.mrb[0].mxu0
      %v1331 = vadd.f32 %v975, %v1330
      %v1332 = vpop.f32.mrb[0].mxu0
      %v1333 = vadd.f32 %v979, %v1332
      %1334 = vmatprep.mubr.bf16.mxu0 0
      %1335 = vmatmul.mubr.bf16.gmra.mrb[0].mxu0 %v937
      %v1336 = vpop.f32.mrb[0].mxu0
      %v1337 = vadd.f32 %v975, %v1336
      %v1338 = vpop.f32.mrb[0].mxu0
      %v1339 = vadd.f32 %v979, %v1338
      %v1340 = vpop.f32.mrb[0].mxu0
      %v1341 = vadd.f32 %v975, %v1340
      %v1342 = vpop.f32.mrb[0].mxu0
      %v1343 = vadd.f32 %v979, %v1342
      %1344 = vdwg.mxu0
      %1345 = vmatprep.subr.bf16.mxu0 %v1091
      %1346 = vmatpush1.bf16.msra.mxu0 %v1090
      %1347 = vmatprep.subr.bf16.mxu0 %v1095
      %1348 = vmatpush1.bf16.msra.mxu0 %v1094
      %1349 = vmatprep.subr.bf16.mxu0 %v1099
      %1350 = vmatpush1.bf16.msra.mxu0 %v1098
      %1351 = vmatprep.subr.bf16.mxu0 %v1103
      %1352 = vmatpush1.bf16.msra.mxu0 %v1102
      %1353 = vmatprep.subr.bf16.mxu0 %v1107
      %1354 = vmatpush1.bf16.msra.mxu0 %v1106
      %1355 = vmatprep.subr.bf16.mxu0 %v1111
      %1356 = vmatpush1.bf16.msra.mxu0 %v1110
      %1357 = vmatprep.subr.bf16.mxu0 %v1115
      %1358 = vmatpush1.bf16.msra.mxu0 %v1114
      %1359 = vmatprep.subr.bf16.mxu0 %v1119
      %1360 = vmatpush1.bf16.msra.mxu0 %v1118
      %1361 = vmatprep.subr.bf16.mxu0 0
      %1362 = vmatpush1.bf16.msra.mxu0 0
      %1363 = vmatprep.subr.bf16.mxu0 0
      %1364 = vmatpush1.bf16.msra.mxu0 0
      %1365 = vmatprep.subr.bf16.mxu0 0
      %1366 = vmatpush1.bf16.msra.mxu0 0
      %1367 = vmatprep.subr.bf16.mxu0 0
      %1368 = vmatpush1.bf16.msra.mxu0 0
      %1369 = vmatprep.subr.bf16.mxu0 0
      %1370 = vmatpush1.bf16.msra.mxu0 0
      %1371 = vmatprep.subr.bf16.mxu0 0
      %1372 = vmatpush1.bf16.msra.mxu0 0
      %1373 = vmatprep.subr.bf16.mxu0 0
      %1374 = vmatpush1.bf16.msra.mxu0 0
      %1375 = vmatprep.subr.bf16.mxu0 0
      %1376 = vmatpush1.bf16.msra.mxu0 0
      %1377 = vmatprep.mubr.bf16.mxu0 0
      %1378 = vmatmul.mubr.bf16.gmra.mrb[0].mxu0 %v922
      %v1379 = vpop.f32.mrb[0].mxu0
      %v1380 = vadd.f32 %v983, %v1379
      %v1381 = vpop.f32.mrb[0].mxu0
      %v1382 = vadd.f32 %v987, %v1381
      %v1383 = vpop.f32.mrb[0].mxu0
      %v1384 = vadd.f32 %v983, %v1383
      %v1385 = vpop.f32.mrb[0].mxu0
      %v1386 = vadd.f32 %v987, %v1385
      %1387 = vmatprep.mubr.bf16.mxu0 0
      %1388 = vmatmul.mubr.bf16.gmra.mrb[0].mxu0 %v923
      %v1389 = vpop.f32.mrb[0].mxu0
      %v1390 = vadd.f32 %v983, %v1389
      %v1391 = vpop.f32.mrb[0].mxu0
      %v1392 = vadd.f32 %v987, %v1391
      %v1393 = vpop.f32.mrb[0].mxu0
      %v1394 = vadd.f32 %v983, %v1393
      %v1395 = vpop.f32.mrb[0].mxu0
      %v1396 = vadd.f32 %v987, %v1395
      %1397 = vmatprep.mubr.bf16.mxu0 0
      %1398 = vmatmul.mubr.bf16.gmra.mrb[0].mxu0 %v924
      %v1399 = vpop.f32.mrb[0].mxu0
      %v1400 = vadd.f32 %v983, %v1399
      %v1401 = vpop.f32.mrb[0].mxu0
      %v1402 = vadd.f32 %v987, %v1401
      %v1403 = vpop.f32.mrb[0].mxu0
      %v1404 = vadd.f32 %v983, %v1403
      %v1405 = vpop.f32.mrb[0].mxu0
      %v1406 = vadd.f32 %v987, %v1405
      %1407 = vmatprep.mubr.bf16.mxu0 0
      %1408 = vmatmul.mubr.bf16.gmra.mrb[0].mxu0 %v925
      %v1409 = vpop.f32.mrb[0].mxu0
      %v1410 = vadd.f32 %v983, %v1409
      %v1411 = vpop.f32.mrb[0].mxu0
      %v1412 = vadd.f32 %v987, %v1411
      %v1413 = vpop.f32.mrb[0].mxu0
      %v1414 = vadd.f32 %v983, %v1413
      %v1415 = vpop.f32.mrb[0].mxu0
      %v1416 = vadd.f32 %v987, %v1415
      %1417 = vmatprep.mubr.bf16.mxu0 0
      %1418 = vmatmul.mubr.bf16.gmra.mrb[0].mxu0 %v926
      %v1419 = vpop.f32.mrb[0].mxu0
      %v1420 = vadd.f32 %v983, %v1419
      %v1421 = vpop.f32.mrb[0].mxu0
      %v1422 = vadd.f32 %v987, %v1421
      %v1423 = vpop.f32.mrb[0].mxu0
      %v1424 = vadd.f32 %v983, %v1423
      %v1425 = vpop.f32.mrb[0].mxu0
      %v1426 = vadd.f32 %v987, %v1425
      %1427 = vmatprep.mubr.bf16.mxu0 0
      %1428 = vmatmul.mubr.bf16.gmra.mrb[0].mxu0 %v927
      %v1429 = vpop.f32.mrb[0].mxu0
      %v1430 = vadd.f32 %v983, %v1429
      %v1431 = vpop.f32.mrb[0].mxu0
      %v1432 = vadd.f32 %v987, %v1431
      %v1433 = vpop.f32.mrb[0].mxu0
      %v1434 = vadd.f32 %v983, %v1433
      %v1435 = vpop.f32.mrb[0].mxu0
      %v1436 = vadd.f32 %v987, %v1435
      %1437 = vmatprep.mubr.bf16.mxu0 0
      %1438 = vmatmul.mubr.bf16.gmra.mrb[0].mxu0 %v928
      %v1439 = vpop.f32.mrb[0].mxu0
      %v1440 = vadd.f32 %v983, %v1439
      %v1441 = vpop.f32.mrb[0].mxu0
      %v1442 = vadd.f32 %v987, %v1441
      %v1443 = vpop.f32.mrb[0].mxu0
      %v1444 = vadd.f32 %v983, %v1443
      %v1445 = vpop.f32.mrb[0].mxu0
      %v1446 = vadd.f32 %v987, %v1445
      %1447 = vmatprep.mubr.bf16.mxu0 0
      %1448 = vmatmul.mubr.bf16.gmra.mrb[0].mxu0 %v929
      %v1449 = vpop.f32.mrb[0].mxu0
      %v1450 = vadd.f32 %v983, %v1449
      %v1451 = vpop.f32.mrb[0].mxu0
      %v1452 = vadd.f32 %v987, %v1451
      %v1453 = vpop.f32.mrb[0].mxu0
      %v1454 = vadd.f32 %v983, %v1453
      %v1455 = vpop.f32.mrb[0].mxu0
      %v1456 = vadd.f32 %v987, %v1455
      %1457 = vmatprep.mubr.bf16.mxu0 0
      %1458 = vmatmul.mubr.bf16.gmra.mrb[0].mxu0 %v930
      %v1459 = vpop.f32.mrb[0].mxu0
      %v1460 = vadd.f32 %v983, %v1459
      %v1461 = vpop.f32.mrb[0].mxu0
      %v1462 = vadd.f32 %v987, %v1461
      %v1463 = vpop.f32.mrb[0].mxu0
      %v1464 = vadd.f32 %v983, %v1463
      %v1465 = vpop.f32.mrb[0].mxu0
      %v1466 = vadd.f32 %v987, %v1465
      %1467 = vmatprep.mubr.bf16.mxu0 0
      %1468 = vmatmul.mubr.bf16.gmra.mrb[0].mxu0 %v931
      %v1469 = vpop.f32.mrb[0].mxu0
      %v1470 = vadd.f32 %v983, %v1469
      %v1471 = vpop.f32.mrb[0].mxu0
      %v1472 = vadd.f32 %v987, %v1471
      %v1473 = vpop.f32.mrb[0].mxu0
      %v1474 = vadd.f32 %v983, %v1473
      %v1475 = vpop.f32.mrb[0].mxu0
      %v1476 = vadd.f32 %v987, %v1475
      %1477 = vmatprep.mubr.bf16.mxu0 0
      %1478 = vmatmul.mubr.bf16.gmra.mrb[0].mxu0 %v932
      %v1479 = vpop.f32.mrb[0].mxu0
      %v1480 = vadd.f32 %v983, %v1479
      %v1481 = vpop.f32.mrb[0].mxu0
      %v1482 = vadd.f32 %v987, %v1481
      %v1483 = vpop.f32.mrb[0].mxu0
      %v1484 = vadd.f32 %v983, %v1483
      %v1485 = vpop.f32.mrb[0].mxu0
      %v1486 = vadd.f32 %v987, %v1485
      %1487 = vmatprep.mubr.bf16.mxu0 0
      %1488 = vmatmul.mubr.bf16.gmra.mrb[0].mxu0 %v933
      %v1489 = vpop.f32.mrb[0].mxu0
      %v1490 = vadd.f32 %v983, %v1489
      %v1491 = vpop.f32.mrb[0].mxu0
      %v1492 = vadd.f32 %v987, %v1491
      %v1493 = vpop.f32.mrb[0].mxu0
      %v1494 = vadd.f32 %v983, %v1493
      %v1495 = vpop.f32.mrb[0].mxu0
      %v1496 = vadd.f32 %v987, %v1495
      %1497 = vmatprep.mubr.bf16.mxu0 0
      %1498 = vmatmul.mubr.bf16.gmra.mrb[0].mxu0 %v934
      %v1499 = vpop.f32.mrb[0].mxu0
      %v1500 = vadd.f32 %v983, %v1499
      %v1501 = vpop.f32.mrb[0].mxu0
      %v1502 = vadd.f32 %v987, %v1501
      %v1503 = vpop.f32.mrb[0].mxu0
      %v1504 = vadd.f32 %v983, %v1503
      %v1505 = vpop.f32.mrb[0].mxu0
      %v1506 = vadd.f32 %v987, %v1505
      %1507 = vmatprep.mubr.bf16.mxu0 0
      %1508 = vmatmul.mubr.bf16.gmra.mrb[0].mxu0 %v935
      %v1509 = vpop.f32.mrb[0].mxu0
      %v1510 = vadd.f32 %v983, %v1509
      %v1511 = vpop.f32.mrb[0].mxu0
      %v1512 = vadd.f32 %v987, %v1511
      %v1513 = vpop.f32.mrb[0].mxu0
      %v1514 = vadd.f32 %v983, %v1513
      %v1515 = vpop.f32.mrb[0].mxu0
      %v1516 = vadd.f32 %v987, %v1515
      %1517 = vmatprep.mubr.bf16.mxu0 0
      %1518 = vmatmul.mubr.bf16.gmra.mrb[0].mxu0 %v936
      %v1519 = vpop.f32.mrb[0].mxu0
      %v1520 = vadd.f32 %v983, %v1519
      %v1521 = vpop.f32.mrb[0].mxu0
      %v1522 = vadd.f32 %v987, %v1521
      %v1523 = vpop.f32.mrb[0].mxu0
      %v1524 = vadd.f32 %v983, %v1523
      %v1525 = vpop.f32.mrb[0].mxu0
      %v1526 = vadd.f32 %v987, %v1525
      %1527 = vmatprep.mubr.bf16.mxu0 0
      %1528 = vmatmul.mubr.bf16.gmra.mrb[0].mxu0 %v937
      %v1529 = vpop.f32.mrb[0].mxu0
      %v1530 = vadd.f32 %v983, %v1529
      %v1531 = vpop.f32.mrb[0].mxu0
      %v1532 = vadd.f32 %v987, %v1531
      %v1533 = vpop.f32.mrb[0].mxu0
      %v1534 = vadd.f32 %v983, %v1533
      %v1535 = vpop.f32.mrb[0].mxu0
      %v1536 = vadd.f32 %v987, %v1535
      %1537 = vdwg.mxu0
      %v1538 = vmul.f32 %v1187, 1.702
      %v1539 = vmul.f32 %v1189, 1.702
      %v1540 = vmul.f32 %v1380, 1.702
      %v1541 = vmul.f32 %v1382, 1.702
      %v1542 = vmul.f32 %v1191, 1.702
      %v1543 = vmul.f32 %v1193, 1.702
      %v1544 = vmul.f32 %v1384, 1.702
      %v1545 = vmul.f32 %v1386, 1.702
      %v1546 = vmul.f32 %v1197, 1.702
      %v1547 = vmul.f32 %v1199, 1.702
      %v1548 = vmul.f32 %v1390, 1.702
      %v1549 = vmul.f32 %v1392, 1.702
      %v1550 = vmul.f32 %v1201, 1.702
      %v1551 = vmul.f32 %v1203, 1.702
      %v1552 = vmul.f32 %v1394, 1.702
      %v1553 = vmul.f32 %v1396, 1.702
      %v1554 = vmul.f32 %v1207, 1.702
      %v1555 = vmul.f32 %v1209, 1.702
      %v1556 = vmul.f32 %v1400, 1.702
      %v1557 = vmul.f32 %v1402, 1.702
      %v1558 = vmul.f32 %v1211, 1.702
      %v1559 = vmul.f32 %v1213, 1.702
      %v1560 = vmul.f32 %v1404, 1.702
      %v1561 = vmul.f32 %v1406, 1.702
      %v1562 = vmul.f32 %v1217, 1.702
      %v1563 = vmul.f32 %v1219, 1.702
      %v1564 = vmul.f32 %v1410, 1.702
      %v1565 = vmul.f32 %v1412, 1.702
      %v1566 = vmul.f32 %v1221, 1.702
      %v1567 = vmul.f32 %v1223, 1.702
      %v1568 = vmul.f32 %v1414, 1.702
      %v1569 = vmul.f32 %v1416, 1.702
      %v1570 = vmul.f32 %v1227, 1.702
      %v1571 = vmul.f32 %v1229, 1.702
      %v1572 = vmul.f32 %v1420, 1.702
      %v1573 = vmul.f32 %v1422, 1.702
      %v1574 = vmul.f32 %v1231, 1.702
      %v1575 = vmul.f32 %v1233, 1.702
      %v1576 = vmul.f32 %v1424, 1.702
      %v1577 = vmul.f32 %v1426, 1.702
      %v1578 = vmul.f32 %v1237, 1.702
      %v1579 = vmul.f32 %v1239, 1.702
      %v1580 = vmul.f32 %v1430, 1.702
      %v1581 = vmul.f32 %v1432, 1.702
      %v1582 = vmul.f32 %v1241, 1.702
      %v1583 = vmul.f32 %v1243, 1.702
      %v1584 = vmul.f32 %v1434, 1.702
      %v1585 = vmul.f32 %v1436, 1.702
      %v1586 = vmul.f32 %v1247, 1.702
      %v1587 = vmul.f32 %v1249, 1.702
      %v1588 = vmul.f32 %v1440, 1.702
      %v1589 = vmul.f32 %v1442, 1.702
      %v1590 = vmul.f32 %v1251, 1.702
      %v1591 = vmul.f32 %v1253, 1.702
      %v1592 = vmul.f32 %v1444, 1.702
      %v1593 = vmul.f32 %v1446, 1.702
      %v1594 = vmul.f32 %v1257, 1.702
      %v1595 = vmul.f32 %v1259, 1.702
      %v1596 = vmul.f32 %v1450, 1.702
      %v1597 = vmul.f32 %v1452, 1.702
      %v1598 = vmul.f32 %v1261, 1.702
      %v1599 = vmul.f32 %v1263, 1.702
      %v1600 = vmul.f32 %v1454, 1.702
      %v1601 = vmul.f32 %v1456, 1.702
      %v1602 = vmul.f32 %v1267, 1.702
      %v1603 = vmul.f32 %v1269, 1.702
      %v1604 = vmul.f32 %v1460, 1.702
      %v1605 = vmul.f32 %v1462, 1.702
      %v1606 = vmul.f32 %v1271, 1.702
      %v1607 = vmul.f32 %v1273, 1.702
      %v1608 = vmul.f32 %v1464, 1.702
      %v1609 = vmul.f32 %v1466, 1.702
      %v1610 = vmul.f32 %v1277, 1.702
      %v1611 = vmul.f32 %v1279, 1.702
      %v1612 = vmul.f32 %v1470, 1.702
      %v1613 = vmul.f32 %v1472, 1.702
      %v1614 = vmul.f32 %v1281, 1.702
      %v1615 = vmul.f32 %v1283, 1.702
      %v1616 = vmul.f32 %v1474, 1.702
      %v1617 = vmul.f32 %v1476, 1.702
      %v1618 = vmul.f32 %v1287, 1.702
      %v1619 = vmul.f32 %v1289, 1.702
      %v1620 = vmul.f32 %v1480, 1.702
      %v1621 = vmul.f32 %v1482, 1.702
      %v1622 = vmul.f32 %v1291, 1.702
      %v1623 = vmul.f32 %v1293, 1.702
      %v1624 = vmul.f32 %v1484, 1.702
      %v1625 = vmul.f32 %v1486, 1.702
      %v1626 = vmul.f32 %v1297, 1.702
      %v1627 = vmul.f32 %v1299, 1.702
      %v1628 = vmul.f32 %v1490, 1.702
      %v1629 = vmul.f32 %v1492, 1.702
      %v1630 = vmul.f32 %v1301, 1.702
      %v1631 = vmul.f32 %v1303, 1.702
      %v1632 = vmul.f32 %v1494, 1.702
      %v1633 = vmul.f32 %v1496, 1.702
      %v1634 = vmul.f32 %v1307, 1.702
      %v1635 = vmul.f32 %v1309, 1.702
      %v1636 = vmul.f32 %v1500, 1.702
      %v1637 = vmul.f32 %v1502, 1.702
      %v1638 = vmul.f32 %v1311, 1.702
      %v1639 = vmul.f32 %v1313, 1.702
      %v1640 = vmul.f32 %v1504, 1.702
      %v1641 = vmul.f32 %v1506, 1.702
      %v1642 = vmul.f32 %v1317, 1.702
      %v1643 = vmul.f32 %v1319, 1.702
      %v1644 = vmul.f32 %v1510, 1.702
      %v1645 = vmul.f32 %v1512, 1.702
      %v1646 = vmul.f32 %v1321, 1.702
      %v1647 = vmul.f32 %v1323, 1.702
      %v1648 = vmul.f32 %v1514, 1.702
      %v1649 = vmul.f32 %v1516, 1.702
      %v1650 = vmul.f32 %v1327, 1.702
      %v1651 = vmul.f32 %v1329, 1.702
      %v1652 = vmul.f32 %v1520, 1.702
      %v1653 = vmul.f32 %v1522, 1.702
      %v1654 = vmul.f32 %v1331, 1.702
      %v1655 = vmul.f32 %v1333, 1.702
      %v1656 = vmul.f32 %v1524, 1.702
      %v1657 = vmul.f32 %v1526, 1.702
      %v1658 = vmul.f32 %v1337, 1.702
      %v1659 = vmul.f32 %v1339, 1.702
      %v1660 = vmul.f32 %v1530, 1.702
      %v1661 = vmul.f32 %v1532, 1.702
      %v1662 = vmul.f32 %v1341, 1.702
      %v1663 = vmul.f32 %v1343, 1.702
      %v1664 = vmul.f32 %v1534, 1.702
      %v1665 = vmul.f32 %v1536, 1.702
      %v1666 = vxor.u32 %v1538, 2147483648
      %v1667 = vxor.u32 %v1539, 2147483648
      %v1668 = vxor.u32 %v1540, 2147483648
      %v1669 = vxor.u32 %v1541, 2147483648
      %v1670 = vxor.u32 %v1542, 2147483648
      %v1671 = vxor.u32 %v1543, 2147483648
      %v1672 = vxor.u32 %v1544, 2147483648
      %v1673 = vxor.u32 %v1545, 2147483648
      %v1674 = vxor.u32 %v1546, 2147483648
      %v1675 = vxor.u32 %v1547, 2147483648
      %v1676 = vxor.u32 %v1548, 2147483648
      %v1677 = vxor.u32 %v1549, 2147483648
      %v1678 = vxor.u32 %v1550, 2147483648
      %v1679 = vxor.u32 %v1551, 2147483648
      %v1680 = vxor.u32 %v1552, 2147483648
      %v1681 = vxor.u32 %v1553, 2147483648
      %v1682 = vxor.u32 %v1554, 2147483648
      %v1683 = vxor.u32 %v1555, 2147483648
      %v1684 = vxor.u32 %v1556, 2147483648
      %v1685 = vxor.u32 %v1557, 2147483648
      %v1686 = vxor.u32 %v1558, 2147483648
      %v1687 = vxor.u32 %v1559, 2147483648
      %v1688 = vxor.u32 %v1560, 2147483648
      %v1689 = vxor.u32 %v1561, 2147483648
      %v1690 = vxor.u32 %v1562, 2147483648
      %v1691 = vxor.u32 %v1563, 2147483648
      %v1692 = vxor.u32 %v1564, 2147483648
      %v1693 = vxor.u32 %v1565, 2147483648
      %v1694 = vxor.u32 %v1566, 2147483648
      %v1695 = vxor.u32 %v1567, 2147483648
      %v1696 = vxor.u32 %v1568, 2147483648
      %v1697 = vxor.u32 %v1569, 2147483648
      %v1698 = vxor.u32 %v1570, 2147483648
      %v1699 = vxor.u32 %v1571, 2147483648
      %v1700 = vxor.u32 %v1572, 2147483648
      %v1701 = vxor.u32 %v1573, 2147483648
      %v1702 = vxor.u32 %v1574, 2147483648
      %v1703 = vxor.u32 %v1575, 2147483648
      %v1704 = vxor.u32 %v1576, 2147483648
      %v1705 = vxor.u32 %v1577, 2147483648
      %v1706 = vxor.u32 %v1578, 2147483648
      %v1707 = vxor.u32 %v1579, 2147483648
      %v1708 = vxor.u32 %v1580, 2147483648
      %v1709 = vxor.u32 %v1581, 2147483648
      %v1710 = vxor.u32 %v1582, 2147483648
      %v1711 = vxor.u32 %v1583, 2147483648
      %v1712 = vxor.u32 %v1584, 2147483648
      %v1713 = vxor.u32 %v1585, 2147483648
      %v1714 = vxor.u32 %v1586, 2147483648
      %v1715 = vxor.u32 %v1587, 2147483648
      %v1716 = vxor.u32 %v1588, 2147483648
      %v1717 = vxor.u32 %v1589, 2147483648
      %v1718 = vxor.u32 %v1590, 2147483648
      %v1719 = vxor.u32 %v1591, 2147483648
      %v1720 = vxor.u32 %v1592, 2147483648
      %v1721 = vxor.u32 %v1593, 2147483648
      %v1722 = vxor.u32 %v1594, 2147483648
      %v1723 = vxor.u32 %v1595, 2147483648
      %v1724 = vxor.u32 %v1596, 2147483648
      %v1725 = vxor.u32 %v1597, 2147483648
      %v1726 = vxor.u32 %v1598, 2147483648
      %v1727 = vxor.u32 %v1599, 2147483648
      %v1728 = vxor.u32 %v1600, 2147483648
      %v1729 = vxor.u32 %v1601, 2147483648
      %v1730 = vxor.u32 %v1602, 2147483648
      %v1731 = vxor.u32 %v1603, 2147483648
      %v1732 = vxor.u32 %v1604, 2147483648
      %v1733 = vxor.u32 %v1605, 2147483648
      %v1734 = vxor.u32 %v1606, 2147483648
      %v1735 = vxor.u32 %v1607, 2147483648
      %v1736 = vxor.u32 %v1608, 2147483648
      %v1737 = vxor.u32 %v1609, 2147483648
      %v1738 = vxor.u32 %v1610, 2147483648
      %v1739 = vxor.u32 %v1611, 2147483648
      %v1740 = vxor.u32 %v1612, 2147483648
      %v1741 = vxor.u32 %v1613, 2147483648
      %v1742 = vxor.u32 %v1614, 2147483648
      %v1743 = vxor.u32 %v1615, 2147483648
      %v1744 = vxor.u32 %v1616, 2147483648
      %v1745 = vxor.u32 %v1617, 2147483648
      %v1746 = vxor.u32 %v1618, 2147483648
      %v1747 = vxor.u32 %v1619, 2147483648
      %v1748 = vxor.u32 %v1620, 2147483648
      %v1749 = vxor.u32 %v1621, 2147483648
      %v1750 = vxor.u32 %v1622, 2147483648
      %v1751 = vxor.u32 %v1623, 2147483648
      %v1752 = vxor.u32 %v1624, 2147483648
      %v1753 = vxor.u32 %v1625, 2147483648
      %v1754 = vxor.u32 %v1626, 2147483648
      %v1755 = vxor.u32 %v1627, 2147483648
      %v1756 = vxor.u32 %v1628, 2147483648
      %v1757 = vxor.u32 %v1629, 2147483648
      %v1758 = vxor.u32 %v1630, 2147483648
      %v1759 = vxor.u32 %v1631, 2147483648
      %v1760 = vxor.u32 %v1632, 2147483648
      %v1761 = vxor.u32 %v1633, 2147483648
      %v1762 = vxor.u32 %v1634, 2147483648
      %v1763 = vxor.u32 %v1635, 2147483648
      %v1764 = vxor.u32 %v1636, 2147483648
      %v1765 = vxor.u32 %v1637, 2147483648
      %v1766 = vxor.u32 %v1638, 2147483648
      %v1767 = vxor.u32 %v1639, 2147483648
      %v1768 = vxor.u32 %v1640, 2147483648
      %v1769 = vxor.u32 %v1641, 2147483648
      %v1770 = vxor.u32 %v1642, 2147483648
      %v1771 = vxor.u32 %v1643, 2147483648
      %v1772 = vxor.u32 %v1644, 2147483648
      %v1773 = vxor.u32 %v1645, 2147483648
      %v1774 = vxor.u32 %v1646, 2147483648
      %v1775 = vxor.u32 %v1647, 2147483648
      %v1776 = vxor.u32 %v1648, 2147483648
      %v1777 = vxor.u32 %v1649, 2147483648
      %v1778 = vxor.u32 %v1650, 2147483648
      %v1779 = vxor.u32 %v1651, 2147483648
      %v1780 = vxor.u32 %v1652, 2147483648
      %v1781 = vxor.u32 %v1653, 2147483648
      %v1782 = vxor.u32 %v1654, 2147483648
      %v1783 = vxor.u32 %v1655, 2147483648
      %v1784 = vxor.u32 %v1656, 2147483648
      %v1785 = vxor.u32 %v1657, 2147483648
      %v1786 = vxor.u32 %v1658, 2147483648
      %v1787 = vxor.u32 %v1659, 2147483648
      %v1788 = vxor.u32 %v1660, 2147483648
      %v1789 = vxor.u32 %v1661, 2147483648
      %v1790 = vxor.u32 %v1662, 2147483648
      %v1791 = vxor.u32 %v1663, 2147483648
      %v1792 = vxor.u32 %v1664, 2147483648
      %v1793 = vxor.u32 %v1665, 2147483648
      %v1794 = vmul.f32 %v1666, 1.442695
      %v1795 = vpow.pop %v1794
      %v1796 = vmul.f32 %v1667, 1.442695
      %v1797 = vpow.pop %v1796
      %v1798 = vmul.f32 %v1668, 1.442695
      %v1799 = vpow.pop %v1798
      %v1800 = vmul.f32 %v1669, 1.442695
      %v1801 = vpow.pop %v1800
      %v1802 = vmul.f32 %v1670, 1.442695
      %v1803 = vpow.pop %v1802
      %v1804 = vmul.f32 %v1671, 1.442695
      %v1805 = vpow.pop %v1804
      %v1806 = vmul.f32 %v1672, 1.442695
      %v1807 = vpow.pop %v1806
      %v1808 = vmul.f32 %v1673, 1.442695
      %v1809 = vpow.pop %v1808
      %v1810 = vmul.f32 %v1674, 1.442695
      %v1811 = vpow.pop %v1810
      %v1812 = vmul.f32 %v1675, 1.442695
      %v1813 = vpow.pop %v1812
      %v1814 = vmul.f32 %v1676, 1.442695
      %v1815 = vpow.pop %v1814
      %v1816 = vmul.f32 %v1677, 1.442695
      %v1817 = vpow.pop %v1816
      %v1818 = vmul.f32 %v1678, 1.442695
      %v1819 = vpow.pop %v1818
      %v1820 = vmul.f32 %v1679, 1.442695
      %v1821 = vpow.pop %v1820
      %v1822 = vmul.f32 %v1680, 1.442695
      %v1823 = vpow.pop %v1822
      %v1824 = vmul.f32 %v1681, 1.442695
      %v1825 = vpow.pop %v1824
      %v1826 = vmul.f32 %v1682, 1.442695
      %v1827 = vpow.pop %v1826
      %v1828 = vmul.f32 %v1683, 1.442695
      %v1829 = vpow.pop %v1828
      %v1830 = vmul.f32 %v1684, 1.442695
      %v1831 = vpow.pop %v1830
      %v1832 = vmul.f32 %v1685, 1.442695
      %v1833 = vpow.pop %v1832
      %v1834 = vmul.f32 %v1686, 1.442695
      %v1835 = vpow.pop %v1834
      %v1836 = vmul.f32 %v1687, 1.442695
      %v1837 = vpow.pop %v1836
      %v1838 = vmul.f32 %v1688, 1.442695
      %v1839 = vpow.pop %v1838
      %v1840 = vmul.f32 %v1689, 1.442695
      %v1841 = vpow.pop %v1840
      %v1842 = vmul.f32 %v1690, 1.442695
      %v1843 = vpow.pop %v1842
      %v1844 = vmul.f32 %v1691, 1.442695
      %v1845 = vpow.pop %v1844
      %v1846 = vmul.f32 %v1692, 1.442695
      %v1847 = vpow.pop %v1846
      %v1848 = vmul.f32 %v1693, 1.442695
      %v1849 = vpow.pop %v1848
      %v1850 = vmul.f32 %v1694, 1.442695
      %v1851 = vpow.pop %v1850
      %v1852 = vmul.f32 %v1695, 1.442695
      %v1853 = vpow.pop %v1852
      %v1854 = vmul.f32 %v1696, 1.442695
      %v1855 = vpow.pop %v1854
      %v1856 = vmul.f32 %v1697, 1.442695
      %v1857 = vpow.pop %v1856
      %v1858 = vmul.f32 %v1698, 1.442695
      %v1859 = vpow.pop %v1858
      %v1860 = vmul.f32 %v1699, 1.442695
      %v1861 = vpow.pop %v1860
      %v1862 = vmul.f32 %v1700, 1.442695
      %v1863 = vpow.pop %v1862
      %v1864 = vmul.f32 %v1701, 1.442695
      %v1865 = vpow.pop %v1864
      %v1866 = vmul.f32 %v1702, 1.442695
      %v1867 = vpow.pop %v1866
      %v1868 = vmul.f32 %v1703, 1.442695
      %v1869 = vpow.pop %v1868
      %v1870 = vmul.f32 %v1704, 1.442695
      %v1871 = vpow.pop %v1870
      %v1872 = vmul.f32 %v1705, 1.442695
      %v1873 = vpow.pop %v1872
      %v1874 = vmul.f32 %v1706, 1.442695
      %v1875 = vpow.pop %v1874
      %v1876 = vmul.f32 %v1707, 1.442695
      %v1877 = vpow.pop %v1876
      %v1878 = vmul.f32 %v1708, 1.442695
      %v1879 = vpow.pop %v1878
      %v1880 = vmul.f32 %v1709, 1.442695
      %v1881 = vpow.pop %v1880
      %v1882 = vmul.f32 %v1710, 1.442695
      %v1883 = vpow.pop %v1882
      %v1884 = vmul.f32 %v1711, 1.442695
      %v1885 = vpow.pop %v1884
      %v1886 = vmul.f32 %v1712, 1.442695
      %v1887 = vpow.pop %v1886
      %v1888 = vmul.f32 %v1713, 1.442695
      %v1889 = vpow.pop %v1888
      %v1890 = vmul.f32 %v1714, 1.442695
      %v1891 = vpow.pop %v1890
      %v1892 = vmul.f32 %v1715, 1.442695
      %v1893 = vpow.pop %v1892
      %v1894 = vmul.f32 %v1716, 1.442695
      %v1895 = vpow.pop %v1894
      %v1896 = vmul.f32 %v1717, 1.442695
      %v1897 = vpow.pop %v1896
      %v1898 = vmul.f32 %v1718, 1.442695
      %v1899 = vpow.pop %v1898
      %v1900 = vmul.f32 %v1719, 1.442695
      %v1901 = vpow.pop %v1900
      %v1902 = vmul.f32 %v1720, 1.442695
      %v1903 = vpow.pop %v1902
      %v1904 = vmul.f32 %v1721, 1.442695
      %v1905 = vpow.pop %v1904
      %v1906 = vmul.f32 %v1722, 1.442695
      %v1907 = vpow.pop %v1906
      %v1908 = vmul.f32 %v1723, 1.442695
      %v1909 = vpow.pop %v1908
      %v1910 = vmul.f32 %v1724, 1.442695
      %v1911 = vpow.pop %v1910
      %v1912 = vmul.f32 %v1725, 1.442695
      %v1913 = vpow.pop %v1912
      %v1914 = vmul.f32 %v1726, 1.442695
      %v1915 = vpow.pop %v1914
      %v1916 = vmul.f32 %v1727, 1.442695
      %v1917 = vpow.pop %v1916
      %v1918 = vmul.f32 %v1728, 1.442695
      %v1919 = vpow.pop %v1918
      %v1920 = vmul.f32 %v1729, 1.442695
      %v1921 = vpow.pop %v1920
      %v1922 = vmul.f32 %v1730, 1.442695
      %v1923 = vpow.pop %v1922
      %v1924 = vmul.f32 %v1731, 1.442695
      %v1925 = vpow.pop %v1924
      %v1926 = vmul.f32 %v1732, 1.442695
      %v1927 = vpow.pop %v1926
      %v1928 = vmul.f32 %v1733, 1.442695
      %v1929 = vpow.pop %v1928
      %v1930 = vmul.f32 %v1734, 1.442695
      %v1931 = vpow.pop %v1930
      %v1932 = vmul.f32 %v1735, 1.442695
      %v1933 = vpow.pop %v1932
      %v1934 = vmul.f32 %v1736, 1.442695
      %v1935 = vpow.pop %v1934
      %v1936 = vmul.f32 %v1737, 1.442695
      %v1937 = vpow.pop %v1936
      %v1938 = vmul.f32 %v1738, 1.442695
      %v1939 = vpow.pop %v1938
      %v1940 = vmul.f32 %v1739, 1.442695
      %v1941 = vpow.pop %v1940
      %v1942 = vmul.f32 %v1740, 1.442695
      %v1943 = vpow.pop %v1942
      %v1944 = vmul.f32 %v1741, 1.442695
      %v1945 = vpow.pop %v1944
      %v1946 = vmul.f32 %v1742, 1.442695
      %v1947 = vpow.pop %v1946
      %v1948 = vmul.f32 %v1743, 1.442695
      %v1949 = vpow.pop %v1948
      %v1950 = vmul.f32 %v1744, 1.442695
      %v1951 = vpow.pop %v1950
      %v1952 = vmul.f32 %v1745, 1.442695
      %v1953 = vpow.pop %v1952
      %v1954 = vmul.f32 %v1746, 1.442695
      %v1955 = vpow.pop %v1954
      %v1956 = vmul.f32 %v1747, 1.442695
      %v1957 = vpow.pop %v1956
      %v1958 = vmul.f32 %v1748, 1.442695
      %v1959 = vpow.pop %v1958
      %v1960 = vmul.f32 %v1749, 1.442695
      %v1961 = vpow.pop %v1960
      %v1962 = vmul.f32 %v1750, 1.442695
      %v1963 = vpow.pop %v1962
      %v1964 = vmul.f32 %v1751, 1.442695
      %v1965 = vpow.pop %v1964
      %v1966 = vmul.f32 %v1752, 1.442695
      %v1967 = vpow.pop %v1966
      %v1968 = vmul.f32 %v1753, 1.442695
      %v1969 = vpow.pop %v1968
      %v1970 = vmul.f32 %v1754, 1.442695
      %v1971 = vpow.pop %v1970
      %v1972 = vmul.f32 %v1755, 1.442695
      %v1973 = vpow.pop %v1972
      %v1974 = vmul.f32 %v1756, 1.442695
      %v1975 = vpow.pop %v1974
      %v1976 = vmul.f32 %v1757, 1.442695
      %v1977 = vpow.pop %v1976
      %v1978 = vmul.f32 %v1758, 1.442695
      %v1979 = vpow.pop %v1978
      %v1980 = vmul.f32 %v1759, 1.442695
      %v1981 = vpow.pop %v1980
      %v1982 = vmul.f32 %v1760, 1.442695
      %v1983 = vpow.pop %v1982
      %v1984 = vmul.f32 %v1761, 1.442695
      %v1985 = vpow.pop %v1984
      %v1986 = vmul.f32 %v1762, 1.442695
      %v1987 = vpow.pop %v1986
      %v1988 = vmul.f32 %v1763, 1.442695
      %v1989 = vpow.pop %v1988
      %v1990 = vmul.f32 %v1764, 1.442695
      %v1991 = vpow.pop %v1990
      %v1992 = vmul.f32 %v1765, 1.442695
      %v1993 = vpow.pop %v1992
      %v1994 = vmul.f32 %v1766, 1.442695
      %v1995 = vpow.pop %v1994
      %v1996 = vmul.f32 %v1767, 1.442695
      %v1997 = vpow.pop %v1996
      %v1998 = vmul.f32 %v1768, 1.442695
      %v1999 = vpow.pop %v1998
      %v2000 = vmul.f32 %v1769, 1.442695
      %v2001 = vpow.pop %v2000
      %v2002 = vmul.f32 %v1770, 1.442695
      %v2003 = vpow.pop %v2002
      %v2004 = vmul.f32 %v1771, 1.442695
      %v2005 = vpow.pop %v2004
      %v2006 = vmul.f32 %v1772, 1.442695
      %v2007 = vpow.pop %v2006
      %v2008 = vmul.f32 %v1773, 1.442695
      %v2009 = vpow.pop %v2008
      %v2010 = vmul.f32 %v1774, 1.442695
      %v2011 = vpow.pop %v2010
      %v2012 = vmul.f32 %v1775, 1.442695
      %v2013 = vpow.pop %v2012
      %v2014 = vmul.f32 %v1776, 1.442695
      %v2015 = vpow.pop %v2014
      %v2016 = vmul.f32 %v1777, 1.442695
      %v2017 = vpow.pop %v2016
      %v2018 = vmul.f32 %v1778, 1.442695
      %v2019 = vpow.pop %v2018
      %v2020 = vmul.f32 %v1779, 1.442695
      %v2021 = vpow.pop %v2020
      %v2022 = vmul.f32 %v1780, 1.442695
      %v2023 = vpow.pop %v2022
      %v2024 = vmul.f32 %v1781, 1.442695
      %v2025 = vpow.pop %v2024
      %v2026 = vmul.f32 %v1782, 1.442695
      %v2027 = vpow.pop %v2026
      %v2028 = vmul.f32 %v1783, 1.442695
      %v2029 = vpow.pop %v2028
      %v2030 = vmul.f32 %v1784, 1.442695
      %v2031 = vpow.pop %v2030
      %v2032 = vmul.f32 %v1785, 1.442695
      %v2033 = vpow.pop %v2032
      %v2034 = vmul.f32 %v1786, 1.442695
      %v2035 = vpow.pop %v2034
      %v2036 = vmul.f32 %v1787, 1.442695
      %v2037 = vpow.pop %v2036
      %v2038 = vmul.f32 %v1788, 1.442695
      %v2039 = vpow.pop %v2038
      %v2040 = vmul.f32 %v1789, 1.442695
      %v2041 = vpow.pop %v2040
      %v2042 = vmul.f32 %v1790, 1.442695
      %v2043 = vpow.pop %v2042
      %v2044 = vmul.f32 %v1791, 1.442695
      %v2045 = vpow.pop %v2044
      %v2046 = vmul.f32 %v1792, 1.442695
      %v2047 = vpow.pop %v2046
      %v2048 = vmul.f32 %v1793, 1.442695
      %v2049 = vpow.pop %v2048
      %v2050 = vadd.f32 %v1795, 1.0
      %v2051 = vadd.f32 %v1797, 1.0
      %v2052 = vadd.f32 %v1799, 1.0
      %v2053 = vadd.f32 %v1801, 1.0
      %v2054 = vadd.f32 %v1803, 1.0
      %v2055 = vadd.f32 %v1805, 1.0
      %v2056 = vadd.f32 %v1807, 1.0
      %v2057 = vadd.f32 %v1809, 1.0
      %v2058 = vadd.f32 %v1811, 1.0
      %v2059 = vadd.f32 %v1813, 1.0
      %v2060 = vadd.f32 %v1815, 1.0
      %v2061 = vadd.f32 %v1817, 1.0
      %v2062 = vadd.f32 %v1819, 1.0
      %v2063 = vadd.f32 %v1821, 1.0
      %v2064 = vadd.f32 %v1823, 1.0
      %v2065 = vadd.f32 %v1825, 1.0
      %v2066 = vadd.f32 %v1827, 1.0
      %v2067 = vadd.f32 %v1829, 1.0
      %v2068 = vadd.f32 %v1831, 1.0
      %v2069 = vadd.f32 %v1833, 1.0
      %v2070 = vadd.f32 %v1835, 1.0
      %v2071 = vadd.f32 %v1837, 1.0
      %v2072 = vadd.f32 %v1839, 1.0
      %v2073 = vadd.f32 %v1841, 1.0
      %v2074 = vadd.f32 %v1843, 1.0
      %v2075 = vadd.f32 %v1845, 1.0
      %v2076 = vadd.f32 %v1847, 1.0
      %v2077 = vadd.f32 %v1849, 1.0
      %v2078 = vadd.f32 %v1851, 1.0
      %v2079 = vadd.f32 %v1853, 1.0
      %v2080 = vadd.f32 %v1855, 1.0
      %v2081 = vadd.f32 %v1857, 1.0
      %v2082 = vadd.f32 %v1859, 1.0
      %v2083 = vadd.f32 %v1861, 1.0
      %v2084 = vadd.f32 %v1863, 1.0
      %v2085 = vadd.f32 %v1865, 1.0
      %v2086 = vadd.f32 %v1867, 1.0
      %v2087 = vadd.f32 %v1869, 1.0
      %v2088 = vadd.f32 %v1871, 1.0
      %v2089 = vadd.f32 %v1873, 1.0
      %v2090 = vadd.f32 %v1875, 1.0
      %v2091 = vadd.f32 %v1877, 1.0
      %v2092 = vadd.f32 %v1879, 1.0
      %v2093 = vadd.f32 %v1881, 1.0
      %v2094 = vadd.f32 %v1883, 1.0
      %v2095 = vadd.f32 %v1885, 1.0
      %v2096 = vadd.f32 %v1887, 1.0
      %v2097 = vadd.f32 %v1889, 1.0
      %v2098 = vadd.f32 %v1891, 1.0
      %v2099 = vadd.f32 %v1893, 1.0
      %v2100 = vadd.f32 %v1895, 1.0
      %v2101 = vadd.f32 %v1897, 1.0
      %v2102 = vadd.f32 %v1899, 1.0
      %v2103 = vadd.f32 %v1901, 1.0
      %v2104 = vadd.f32 %v1903, 1.0
      %v2105 = vadd.f32 %v1905, 1.0
      %v2106 = vadd.f32 %v1907, 1.0
      %v2107 = vadd.f32 %v1909, 1.0
      %v2108 = vadd.f32 %v1911, 1.0
      %v2109 = vadd.f32 %v1913, 1.0
      %v2110 = vadd.f32 %v1915, 1.0
      %v2111 = vadd.f32 %v1917, 1.0
      %v2112 = vadd.f32 %v1919, 1.0
      %v2113 = vadd.f32 %v1921, 1.0
      %v2114 = vadd.f32 %v1923, 1.0
      %v2115 = vadd.f32 %v1925, 1.0
      %v2116 = vadd.f32 %v1927, 1.0
      %v2117 = vadd.f32 %v1929, 1.0
      %v2118 = vadd.f32 %v1931, 1.0
      %v2119 = vadd.f32 %v1933, 1.0
      %v2120 = vadd.f32 %v1935, 1.0
      %v2121 = vadd.f32 %v1937, 1.0
      %v2122 = vadd.f32 %v1939, 1.0
      %v2123 = vadd.f32 %v1941, 1.0
      %v2124 = vadd.f32 %v1943, 1.0
      %v2125 = vadd.f32 %v1945, 1.0
      %v2126 = vadd.f32 %v1947, 1.0
      %v2127 = vadd.f32 %v1949, 1.0
      %v2128 = vadd.f32 %v1951, 1.0
      %v2129 = vadd.f32 %v1953, 1.0
      %v2130 = vadd.f32 %v1955, 1.0
      %v2131 = vadd.f32 %v1957, 1.0
      %v2132 = vadd.f32 %v1959, 1.0
      %v2133 = vadd.f32 %v1961, 1.0
      %v2134 = vadd.f32 %v1963, 1.0
      %v2135 = vadd.f32 %v1965, 1.0
      %v2136 = vadd.f32 %v1967, 1.0
      %v2137 = vadd.f32 %v1969, 1.0
      %v2138 = vadd.f32 %v1971, 1.0
      %v2139 = vadd.f32 %v1973, 1.0
      %v2140 = vadd.f32 %v1975, 1.0
      %v2141 = vadd.f32 %v1977, 1.0
      %v2142 = vadd.f32 %v1979, 1.0
      %v2143 = vadd.f32 %v1981, 1.0
      %v2144 = vadd.f32 %v1983, 1.0
      %v2145 = vadd.f32 %v1985, 1.0
      %v2146 = vadd.f32 %v1987, 1.0
      %v2147 = vadd.f32 %v1989, 1.0
      %v2148 = vadd.f32 %v1991, 1.0
      %v2149 = vadd.f32 %v1993, 1.0
      %v2150 = vadd.f32 %v1995, 1.0
      %v2151 = vadd.f32 %v1997, 1.0
      %v2152 = vadd.f32 %v1999, 1.0
      %v2153 = vadd.f32 %v2001, 1.0
      %v2154 = vadd.f32 %v2003, 1.0
      %v2155 = vadd.f32 %v2005, 1.0
      %v2156 = vadd.f32 %v2007, 1.0
      %v2157 = vadd.f32 %v2009, 1.0
      %v2158 = vadd.f32 %v2011, 1.0
      %v2159 = vadd.f32 %v2013, 1.0
      %v2160 = vadd.f32 %v2015, 1.0
      %v2161 = vadd.f32 %v2017, 1.0
      %v2162 = vadd.f32 %v2019, 1.0
      %v2163 = vadd.f32 %v2021, 1.0
      %v2164 = vadd.f32 %v2023, 1.0
      %v2165 = vadd.f32 %v2025, 1.0
      %v2166 = vadd.f32 %v2027, 1.0
      %v2167 = vadd.f32 %v2029, 1.0
      %v2168 = vadd.f32 %v2031, 1.0
      %v2169 = vadd.f32 %v2033, 1.0
      %v2170 = vadd.f32 %v2035, 1.0
      %v2171 = vadd.f32 %v2037, 1.0
      %v2172 = vadd.f32 %v2039, 1.0
      %v2173 = vadd.f32 %v2041, 1.0
      %v2174 = vadd.f32 %v2043, 1.0
      %v2175 = vadd.f32 %v2045, 1.0
      %v2176 = vadd.f32 %v2047, 1.0
      %v2177 = vadd.f32 %v2049, 1.0
      %v2178 = vrcp.pop %v2050
      %v2179 = vmul.f32 1.0, %v2178
      %v2180 = vrcp.pop %v2051
      %v2181 = vmul.f32 1.0, %v2180
      %v2182 = vrcp.pop %v2052
      %v2183 = vmul.f32 1.0, %v2182
      %v2184 = vrcp.pop %v2053
      %v2185 = vmul.f32 1.0, %v2184
      %v2186 = vrcp.pop %v2054
      %v2187 = vmul.f32 1.0, %v2186
      %v2188 = vrcp.pop %v2055
      %v2189 = vmul.f32 1.0, %v2188
      %v2190 = vrcp.pop %v2056
      %v2191 = vmul.f32 1.0, %v2190
      %v2192 = vrcp.pop %v2057
      %v2193 = vmul.f32 1.0, %v2192
      %v2194 = vrcp.pop %v2058
      %v2195 = vmul.f32 1.0, %v2194
      %v2196 = vrcp.pop %v2059
      %v2197 = vmul.f32 1.0, %v2196
      %v2198 = vrcp.pop %v2060
      %v2199 = vmul.f32 1.0, %v2198
      %v2200 = vrcp.pop %v2061
      %v2201 = vmul.f32 1.0, %v2200
      %v2202 = vrcp.pop %v2062
      %v2203 = vmul.f32 1.0, %v2202
      %v2204 = vrcp.pop %v2063
      %v2205 = vmul.f32 1.0, %v2204
      %v2206 = vrcp.pop %v2064
      %v2207 = vmul.f32 1.0, %v2206
      %v2208 = vrcp.pop %v2065
      %v2209 = vmul.f32 1.0, %v2208
      %v2210 = vrcp.pop %v2066
      %v2211 = vmul.f32 1.0, %v2210
      %v2212 = vrcp.pop %v2067
      %v2213 = vmul.f32 1.0, %v2212
      %v2214 = vrcp.pop %v2068
      %v2215 = vmul.f32 1.0, %v2214
      %v2216 = vrcp.pop %v2069
      %v2217 = vmul.f32 1.0, %v2216
      %v2218 = vrcp.pop %v2070
      %v2219 = vmul.f32 1.0, %v2218
      %v2220 = vrcp.pop %v2071
      %v2221 = vmul.f32 1.0, %v2220
      %v2222 = vrcp.pop %v2072
      %v2223 = vmul.f32 1.0, %v2222
      %v2224 = vrcp.pop %v2073
      %v2225 = vmul.f32 1.0, %v2224
      %v2226 = vrcp.pop %v2074
      %v2227 = vmul.f32 1.0, %v2226
      %v2228 = vrcp.pop %v2075
      %v2229 = vmul.f32 1.0, %v2228
      %v2230 = vrcp.pop %v2076
      %v2231 = vmul.f32 1.0, %v2230
      %v2232 = vrcp.pop %v2077
      %v2233 = vmul.f32 1.0, %v2232
      %v2234 = vrcp.pop %v2078
      %v2235 = vmul.f32 1.0, %v2234
      %v2236 = vrcp.pop %v2079
      %v2237 = vmul.f32 1.0, %v2236
      %v2238 = vrcp.pop %v2080
      %v2239 = vmul.f32 1.0, %v2238
      %v2240 = vrcp.pop %v2081
      %v2241 = vmul.f32 1.0, %v2240
      %v2242 = vrcp.pop %v2082
      %v2243 = vmul.f32 1.0, %v2242
      %v2244 = vrcp.pop %v2083
      %v2245 = vmul.f32 1.0, %v2244
      %v2246 = vrcp.pop %v2084
      %v2247 = vmul.f32 1.0, %v2246
      %v2248 = vrcp.pop %v2085
      %v2249 = vmul.f32 1.0, %v2248
      %v2250 = vrcp.pop %v2086
      %v2251 = vmul.f32 1.0, %v2250
      %v2252 = vrcp.pop %v2087
      %v2253 = vmul.f32 1.0, %v2252
      %v2254 = vrcp.pop %v2088
      %v2255 = vmul.f32 1.0, %v2254
      %v2256 = vrcp.pop %v2089
      %v2257 = vmul.f32 1.0, %v2256
      %v2258 = vrcp.pop %v2090
      %v2259 = vmul.f32 1.0, %v2258
      %v2260 = vrcp.pop %v2091
      %v2261 = vmul.f32 1.0, %v2260
      %v2262 = vrcp.pop %v2092
      %v2263 = vmul.f32 1.0, %v2262
      %v2264 = vrcp.pop %v2093
      %v2265 = vmul.f32 1.0, %v2264
      %v2266 = vrcp.pop %v2094
      %v2267 = vmul.f32 1.0, %v2266
      %v2268 = vrcp.pop %v2095
      %v2269 = vmul.f32 1.0, %v2268
      %v2270 = vrcp.pop %v2096
      %v2271 = vmul.f32 1.0, %v2270
      %v2272 = vrcp.pop %v2097
      %v2273 = vmul.f32 1.0, %v2272
      %v2274 = vrcp.pop %v2098
      %v2275 = vmul.f32 1.0, %v2274
      %v2276 = vrcp.pop %v2099
      %v2277 = vmul.f32 1.0, %v2276
      %v2278 = vrcp.pop %v2100
      %v2279 = vmul.f32 1.0, %v2278
      %v2280 = vrcp.pop %v2101
      %v2281 = vmul.f32 1.0, %v2280
      %v2282 = vrcp.pop %v2102
      %v2283 = vmul.f32 1.0, %v2282
      %v2284 = vrcp.pop %v2103
      %v2285 = vmul.f32 1.0, %v2284
      %v2286 = vrcp.pop %v2104
      %v2287 = vmul.f32 1.0, %v2286
      %v2288 = vrcp.pop %v2105
      %v2289 = vmul.f32 1.0, %v2288
      %v2290 = vrcp.pop %v2106
      %v2291 = vmul.f32 1.0, %v2290
      %v2292 = vrcp.pop %v2107
      %v2293 = vmul.f32 1.0, %v2292
      %v2294 = vrcp.pop %v2108
      %v2295 = vmul.f32 1.0, %v2294
      %v2296 = vrcp.pop %v2109
      %v2297 = vmul.f32 1.0, %v2296
      %v2298 = vrcp.pop %v2110
      %v2299 = vmul.f32 1.0, %v2298
      %v2300 = vrcp.pop %v2111
      %v2301 = vmul.f32 1.0, %v2300
      %v2302 = vrcp.pop %v2112
      %v2303 = vmul.f32 1.0, %v2302
      %v2304 = vrcp.pop %v2113
      %v2305 = vmul.f32 1.0, %v2304
      %v2306 = vrcp.pop %v2114
      %v2307 = vmul.f32 1.0, %v2306
      %v2308 = vrcp.pop %v2115
      %v2309 = vmul.f32 1.0, %v2308
      %v2310 = vrcp.pop %v2116
      %v2311 = vmul.f32 1.0, %v2310
      %v2312 = vrcp.pop %v2117
      %v2313 = vmul.f32 1.0, %v2312
      %v2314 = vrcp.pop %v2118
      %v2315 = vmul.f32 1.0, %v2314
      %v2316 = vrcp.pop %v2119
      %v2317 = vmul.f32 1.0, %v2316
      %v2318 = vrcp.pop %v2120
      %v2319 = vmul.f32 1.0, %v2318
      %v2320 = vrcp.pop %v2121
      %v2321 = vmul.f32 1.0, %v2320
      %v2322 = vrcp.pop %v2122
      %v2323 = vmul.f32 1.0, %v2322
      %v2324 = vrcp.pop %v2123
      %v2325 = vmul.f32 1.0, %v2324
      %v2326 = vrcp.pop %v2124
      %v2327 = vmul.f32 1.0, %v2326
      %v2328 = vrcp.pop %v2125
      %v2329 = vmul.f32 1.0, %v2328
      %v2330 = vrcp.pop %v2126
      %v2331 = vmul.f32 1.0, %v2330
      %v2332 = vrcp.pop %v2127
      %v2333 = vmul.f32 1.0, %v2332
      %v2334 = vrcp.pop %v2128
      %v2335 = vmul.f32 1.0, %v2334
      %v2336 = vrcp.pop %v2129
      %v2337 = vmul.f32 1.0, %v2336
      %v2338 = vrcp.pop %v2130
      %v2339 = vmul.f32 1.0, %v2338
      %v2340 = vrcp.pop %v2131
      %v2341 = vmul.f32 1.0, %v2340
      %v2342 = vrcp.pop %v2132
      %v2343 = vmul.f32 1.0, %v2342
      %v2344 = vrcp.pop %v2133
      %v2345 = vmul.f32 1.0, %v2344
      %v2346 = vrcp.pop %v2134
      %v2347 = vmul.f32 1.0, %v2346
      %v2348 = vrcp.pop %v2135
      %v2349 = vmul.f32 1.0, %v2348
      %v2350 = vrcp.pop %v2136
      %v2351 = vmul.f32 1.0, %v2350
      %v2352 = vrcp.pop %v2137
      %v2353 = vmul.f32 1.0, %v2352
      %v2354 = vrcp.pop %v2138
      %v2355 = vmul.f32 1.0, %v2354
      %v2356 = vrcp.pop %v2139
      %v2357 = vmul.f32 1.0, %v2356
      %v2358 = vrcp.pop %v2140
      %v2359 = vmul.f32 1.0, %v2358
      %v2360 = vrcp.pop %v2141
      %v2361 = vmul.f32 1.0, %v2360
      %v2362 = vrcp.pop %v2142
      %v2363 = vmul.f32 1.0, %v2362
      %v2364 = vrcp.pop %v2143
      %v2365 = vmul.f32 1.0, %v2364
      %v2366 = vrcp.pop %v2144
      %v2367 = vmul.f32 1.0, %v2366
      %v2368 = vrcp.pop %v2145
      %v2369 = vmul.f32 1.0, %v2368
      %v2370 = vrcp.pop %v2146
      %v2371 = vmul.f32 1.0, %v2370
      %v2372 = vrcp.pop %v2147
      %v2373 = vmul.f32 1.0, %v2372
      %v2374 = vrcp.pop %v2148
      %v2375 = vmul.f32 1.0, %v2374
      %v2376 = vrcp.pop %v2149
      %v2377 = vmul.f32 1.0, %v2376
      %v2378 = vrcp.pop %v2150
      %v2379 = vmul.f32 1.0, %v2378
      %v2380 = vrcp.pop %v2151
      %v2381 = vmul.f32 1.0, %v2380
      %v2382 = vrcp.pop %v2152
      %v2383 = vmul.f32 1.0, %v2382
      %v2384 = vrcp.pop %v2153
      %v2385 = vmul.f32 1.0, %v2384
      %v2386 = vrcp.pop %v2154
      %v2387 = vmul.f32 1.0, %v2386
      %v2388 = vrcp.pop %v2155
      %v2389 = vmul.f32 1.0, %v2388
      %v2390 = vrcp.pop %v2156
      %v2391 = vmul.f32 1.0, %v2390
      %v2392 = vrcp.pop %v2157
      %v2393 = vmul.f32 1.0, %v2392
      %v2394 = vrcp.pop %v2158
      %v2395 = vmul.f32 1.0, %v2394
      %v2396 = vrcp.pop %v2159
      %v2397 = vmul.f32 1.0, %v2396
      %v2398 = vrcp.pop %v2160
      %v2399 = vmul.f32 1.0, %v2398
      %v2400 = vrcp.pop %v2161
      %v2401 = vmul.f32 1.0, %v2400
      %v2402 = vrcp.pop %v2162
      %v2403 = vmul.f32 1.0, %v2402
      %v2404 = vrcp.pop %v2163
      %v2405 = vmul.f32 1.0, %v2404
      %v2406 = vrcp.pop %v2164
      %v2407 = vmul.f32 1.0, %v2406
      %v2408 = vrcp.pop %v2165
      %v2409 = vmul.f32 1.0, %v2408
      %v2410 = vrcp.pop %v2166
      %v2411 = vmul.f32 1.0, %v2410
      %v2412 = vrcp.pop %v2167
      %v2413 = vmul.f32 1.0, %v2412
      %v2414 = vrcp.pop %v2168
      %v2415 = vmul.f32 1.0, %v2414
      %v2416 = vrcp.pop %v2169
      %v2417 = vmul.f32 1.0, %v2416
      %v2418 = vrcp.pop %v2170
      %v2419 = vmul.f32 1.0, %v2418
      %v2420 = vrcp.pop %v2171
      %v2421 = vmul.f32 1.0, %v2420
      %v2422 = vrcp.pop %v2172
      %v2423 = vmul.f32 1.0, %v2422
      %v2424 = vrcp.pop %v2173
      %v2425 = vmul.f32 1.0, %v2424
      %v2426 = vrcp.pop %v2174
      %v2427 = vmul.f32 1.0, %v2426
      %v2428 = vrcp.pop %v2175
      %v2429 = vmul.f32 1.0, %v2428
      %v2430 = vrcp.pop %v2176
      %v2431 = vmul.f32 1.0, %v2430
      %v2432 = vrcp.pop %v2177
      %v2433 = vmul.f32 1.0, %v2432
      %v2434 = vmul.f32 %v1187, %v2179
      %v2435 = vmul.f32 %v1189, %v2181
      %v2436 = vmul.f32 %v1380, %v2183
      %v2437 = vmul.f32 %v1382, %v2185
      %v2438 = vmul.f32 %v1191, %v2187
      %v2439 = vmul.f32 %v1193, %v2189
      %v2440 = vmul.f32 %v1384, %v2191
      %v2441 = vmul.f32 %v1386, %v2193
      %v2442 = vmul.f32 %v1197, %v2195
      %v2443 = vmul.f32 %v1199, %v2197
      %v2444 = vmul.f32 %v1390, %v2199
      %v2445 = vmul.f32 %v1392, %v2201
      %v2446 = vmul.f32 %v1201, %v2203
      %v2447 = vmul.f32 %v1203, %v2205
      %v2448 = vmul.f32 %v1394, %v2207
      %v2449 = vmul.f32 %v1396, %v2209
      %v2450 = vmul.f32 %v1207, %v2211
      %v2451 = vmul.f32 %v1209, %v2213
      %v2452 = vmul.f32 %v1400, %v2215
      %v2453 = vmul.f32 %v1402, %v2217
      %v2454 = vmul.f32 %v1211, %v2219
      %v2455 = vmul.f32 %v1213, %v2221
      %v2456 = vmul.f32 %v1404, %v2223
      %v2457 = vmul.f32 %v1406, %v2225
      %v2458 = vmul.f32 %v1217, %v2227
      %v2459 = vmul.f32 %v1219, %v2229
      %v2460 = vmul.f32 %v1410, %v2231
      %v2461 = vmul.f32 %v1412, %v2233
      %v2462 = vmul.f32 %v1221, %v2235
      %v2463 = vmul.f32 %v1223, %v2237
      %v2464 = vmul.f32 %v1414, %v2239
      %v2465 = vmul.f32 %v1416, %v2241
      %v2466 = vmul.f32 %v1227, %v2243
      %v2467 = vmul.f32 %v1229, %v2245
      %v2468 = vmul.f32 %v1420, %v2247
      %v2469 = vmul.f32 %v1422, %v2249
      %v2470 = vmul.f32 %v1231, %v2251
      %v2471 = vmul.f32 %v1233, %v2253
      %v2472 = vmul.f32 %v1424, %v2255
      %v2473 = vmul.f32 %v1426, %v2257
      %v2474 = vmul.f32 %v1237, %v2259
      %v2475 = vmul.f32 %v1239, %v2261
      %v2476 = vmul.f32 %v1430, %v2263
      %v2477 = vmul.f32 %v1432, %v2265
      %v2478 = vmul.f32 %v1241, %v2267
      %v2479 = vmul.f32 %v1243, %v2269
      %v2480 = vmul.f32 %v1434, %v2271
      %v2481 = vmul.f32 %v1436, %v2273
      %v2482 = vmul.f32 %v1247, %v2275
      %v2483 = vmul.f32 %v1249, %v2277
      %v2484 = vmul.f32 %v1440, %v2279
      %v2485 = vmul.f32 %v1442, %v2281
      %v2486 = vmul.f32 %v1251, %v2283
      %v2487 = vmul.f32 %v1253, %v2285
      %v2488 = vmul.f32 %v1444, %v2287
      %v2489 = vmul.f32 %v1446, %v2289
      %v2490 = vmul.f32 %v1257, %v2291
      %v2491 = vmul.f32 %v1259, %v2293
      %v2492 = vmul.f32 %v1450, %v2295
      %v2493 = vmul.f32 %v1452, %v2297
      %v2494 = vmul.f32 %v1261, %v2299
      %v2495 = vmul.f32 %v1263, %v2301
      %v2496 = vmul.f32 %v1454, %v2303
      %v2497 = vmul.f32 %v1456, %v2305
      %v2498 = vmul.f32 %v1267, %v2307
      %v2499 = vmul.f32 %v1269, %v2309
      %v2500 = vmul.f32 %v1460, %v2311
      %v2501 = vmul.f32 %v1462, %v2313
      %v2502 = vmul.f32 %v1271, %v2315
      %v2503 = vmul.f32 %v1273, %v2317
      %v2504 = vmul.f32 %v1464, %v2319
      %v2505 = vmul.f32 %v1466, %v2321
      %v2506 = vmul.f32 %v1277, %v2323
      %v2507 = vmul.f32 %v1279, %v2325
      %v2508 = vmul.f32 %v1470, %v2327
      %v2509 = vmul.f32 %v1472, %v2329
      %v2510 = vmul.f32 %v1281, %v2331
      %v2511 = vmul.f32 %v1283, %v2333
      %v2512 = vmul.f32 %v1474, %v2335
      %v2513 = vmul.f32 %v1476, %v2337
      %v2514 = vmul.f32 %v1287, %v2339
      %v2515 = vmul.f32 %v1289, %v2341
      %v2516 = vmul.f32 %v1480, %v2343
      %v2517 = vmul.f32 %v1482, %v2345
      %v2518 = vmul.f32 %v1291, %v2347
      %v2519 = vmul.f32 %v1293, %v2349
      %v2520 = vmul.f32 %v1484, %v2351
      %v2521 = vmul.f32 %v1486, %v2353
      %v2522 = vmul.f32 %v1297, %v2355
      %v2523 = vmul.f32 %v1299, %v2357
      %v2524 = vmul.f32 %v1490, %v2359
      %v2525 = vmul.f32 %v1492, %v2361
      %v2526 = vmul.f32 %v1301, %v2363
      %v2527 = vmul.f32 %v1303, %v2365
      %v2528 = vmul.f32 %v1494, %v2367
      %v2529 = vmul.f32 %v1496, %v2369
      %v2530 = vmul.f32 %v1307, %v2371
      %v2531 = vmul.f32 %v1309, %v2373
      %v2532 = vmul.f32 %v1500, %v2375
      %v2533 = vmul.f32 %v1502, %v2377
      %v2534 = vmul.f32 %v1311, %v2379
      %v2535 = vmul.f32 %v1313, %v2381
      %v2536 = vmul.f32 %v1504, %v2383
      %v2537 = vmul.f32 %v1506, %v2385
      %v2538 = vmul.f32 %v1317, %v2387
      %v2539 = vmul.f32 %v1319, %v2389
      %v2540 = vmul.f32 %v1510, %v2391
      %v2541 = vmul.f32 %v1512, %v2393
      %v2542 = vmul.f32 %v1321, %v2395
      %v2543 = vmul.f32 %v1323, %v2397
      %v2544 = vmul.f32 %v1514, %v2399
      %v2545 = vmul.f32 %v1516, %v2401
      %v2546 = vmul.f32 %v1327, %v2403
      %v2547 = vmul.f32 %v1329, %v2405
      %v2548 = vmul.f32 %v1520, %v2407
      %v2549 = vmul.f32 %v1522, %v2409
      %v2550 = vmul.f32 %v1331, %v2411
      %v2551 = vmul.f32 %v1333, %v2413
      %v2552 = vmul.f32 %v1524, %v2415
      %v2553 = vmul.f32 %v1526, %v2417
      %v2554 = vmul.f32 %v1337, %v2419
      %v2555 = vmul.f32 %v1339, %v2421
      %v2556 = vmul.f32 %v1530, %v2423
      %v2557 = vmul.f32 %v1532, %v2425
      %v2558 = vmul.f32 %v1341, %v2427
      %v2559 = vmul.f32 %v1343, %v2429
      %v2560 = vmul.f32 %v1534, %v2431
      %v2561 = vmul.f32 %v1536, %v2433
      %v2562 = vpack.c.bf16 %v2438, %v2434
      %v2563 = vpack.c.bf16 %v2439, %v2435
      %v2564 = vpack.c.bf16 %v2440, %v2436
      %v2565 = vpack.c.bf16 %v2441, %v2437
      %v2566 = vpack.c.bf16 %v2446, %v2442
      %v2567 = vpack.c.bf16 %v2447, %v2443
      %v2568 = vpack.c.bf16 %v2448, %v2444
      %v2569 = vpack.c.bf16 %v2449, %v2445
      %v2570 = vpack.c.bf16 %v2454, %v2450
      %v2571 = vpack.c.bf16 %v2455, %v2451
      %v2572 = vpack.c.bf16 %v2456, %v2452
      %v2573 = vpack.c.bf16 %v2457, %v2453
      %v2574 = vpack.c.bf16 %v2462, %v2458
      %v2575 = vpack.c.bf16 %v2463, %v2459
      %v2576 = vpack.c.bf16 %v2464, %v2460
      %v2577 = vpack.c.bf16 %v2465, %v2461
      %v2578 = vpack.c.bf16 %v2470, %v2466
      %v2579 = vpack.c.bf16 %v2471, %v2467
      %v2580 = vpack.c.bf16 %v2472, %v2468
      %v2581 = vpack.c.bf16 %v2473, %v2469
      %v2582 = vpack.c.bf16 %v2478, %v2474
      %v2583 = vpack.c.bf16 %v2479, %v2475
      %v2584 = vpack.c.bf16 %v2480, %v2476
      %v2585 = vpack.c.bf16 %v2481, %v2477
      %v2586 = vpack.c.bf16 %v2486, %v2482
      %v2587 = vpack.c.bf16 %v2487, %v2483
      %v2588 = vpack.c.bf16 %v2488, %v2484
      %v2589 = vpack.c.bf16 %v2489, %v2485
      %v2590 = vpack.c.bf16 %v2494, %v2490
      %v2591 = vpack.c.bf16 %v2495, %v2491
      %v2592 = vpack.c.bf16 %v2496, %v2492
      %v2593 = vpack.c.bf16 %v2497, %v2493
      %v2594 = vpack.c.bf16 %v2502, %v2498
      %v2595 = vpack.c.bf16 %v2503, %v2499
      %v2596 = vpack.c.bf16 %v2504, %v2500
      %v2597 = vpack.c.bf16 %v2505, %v2501
      %v2598 = vpack.c.bf16 %v2510, %v2506
      %v2599 = vpack.c.bf16 %v2511, %v2507
      %v2600 = vpack.c.bf16 %v2512, %v2508
      %v2601 = vpack.c.bf16 %v2513, %v2509
      %v2602 = vpack.c.bf16 %v2518, %v2514
      %v2603 = vpack.c.bf16 %v2519, %v2515
      %v2604 = vpack.c.bf16 %v2520, %v2516
      %v2605 = vpack.c.bf16 %v2521, %v2517
      %v2606 = vpack.c.bf16 %v2526, %v2522
      %v2607 = vpack.c.bf16 %v2527, %v2523
      %v2608 = vpack.c.bf16 %v2528, %v2524
      %v2609 = vpack.c.bf16 %v2529, %v2525
      %v2610 = vpack.c.bf16 %v2534, %v2530
      %v2611 = vpack.c.bf16 %v2535, %v2531
      %v2612 = vpack.c.bf16 %v2536, %v2532
      %v2613 = vpack.c.bf16 %v2537, %v2533
      %v2614 = vpack.c.bf16 %v2542, %v2538
      %v2615 = vpack.c.bf16 %v2543, %v2539
      %v2616 = vpack.c.bf16 %v2544, %v2540
      %v2617 = vpack.c.bf16 %v2545, %v2541
      %v2618 = vpack.c.bf16 %v2550, %v2546
      %v2619 = vpack.c.bf16 %v2551, %v2547
      %v2620 = vpack.c.bf16 %v2552, %v2548
      %v2621 = vpack.c.bf16 %v2553, %v2549
      %v2622 = vpack.c.bf16 %v2558, %v2554
      %v2623 = vpack.c.bf16 %v2559, %v2555
      %v2624 = vpack.c.bf16 %v2560, %v2556
      %v2625 = vpack.c.bf16 %v2561, %v2557
      %v2626 = vld [vmem:[%s6] sm:$0xf]
      %v2627 = vld [vmem:[%s6 + $0x4] sm:$0xf]
      %v2628 = vld [vmem:[%s6 + $0x8] sm:$0xf]
      %v2629 = vld [vmem:[%s6 + $0xc] sm:$0xf]
      %v2630 = vld [vmem:[%s6 + $0x10] sm:$0xf]
      %v2631 = vld [vmem:[%s6 + $0x14] sm:$0xf]
      %v2632 = vld [vmem:[%s6 + $0x18] sm:$0xf]
      %v2633 = vld [vmem:[%s6 + $0x1c] sm:$0xf]
      %v2634 = vld [vmem:[%s6 + $0x20] sm:$0xf]
      %v2635 = vld [vmem:[%s6 + $0x24] sm:$0xf]
      %v2636 = vld [vmem:[%s6 + $0x28] sm:$0xf]
      %v2637 = vld [vmem:[%s6 + $0x2c] sm:$0xf]
      %v2638 = vld [vmem:[%s6 + $0x30] sm:$0xf]
      %v2639 = vld [vmem:[%s6 + $0x34] sm:$0xf]
      %v2640 = vld [vmem:[%s6 + $0x38] sm:$0xf]
      %v2641 = vld [vmem:[%s6 + $0x3c] sm:$0xf]
      %v2642 = vld [vmem:[%s6 + $0x40] sm:$0xf]
      %v2643 = vld [vmem:[%s6 + $0x44] sm:$0xf]
      %v2644 = vld [vmem:[%s6 + $0x48] sm:$0xf]
      %v2645 = vld [vmem:[%s6 + $0x4c] sm:$0xf]
      %v2646 = vld [vmem:[%s6 + $0x50] sm:$0xf]
      %v2647 = vld [vmem:[%s6 + $0x54] sm:$0xf]
      %v2648 = vld [vmem:[%s6 + $0x58] sm:$0xf]
      %v2649 = vld [vmem:[%s6 + $0x5c] sm:$0xf]
      %v2650 = vld [vmem:[%s6 + $0x60] sm:$0xf]
      %v2651 = vld [vmem:[%s6 + $0x64] sm:$0xf]
      %v2652 = vld [vmem:[%s6 + $0x68] sm:$0xf]
      %v2653 = vld [vmem:[%s6 + $0x6c] sm:$0xf]
      %v2654 = vld [vmem:[%s6 + $0x70] sm:$0xf]
      %v2655 = vld [vmem:[%s6 + $0x74] sm:$0xf]
      %v2656 = vld [vmem:[%s6 + $0x78] sm:$0xf]
      %v2657 = vld [vmem:[%s6 + $0x7c] sm:$0xf]
      %v2658 = vld [vmem:[%s6 + $0x80] sm:$0xf]
      %v2659 = vld [vmem:[%s6 + $0x84] sm:$0xf]
      %v2660 = vld [vmem:[%s6 + $0x88] sm:$0xf]
      %v2661 = vld [vmem:[%s6 + $0x8c] sm:$0xf]
      %v2662 = vld [vmem:[%s6 + $0x90] sm:$0xf]
      %v2663 = vld [vmem:[%s6 + $0x94] sm:$0xf]
      %v2664 = vld [vmem:[%s6 + $0x98] sm:$0xf]
      %v2665 = vld [vmem:[%s6 + $0x9c] sm:$0xf]
      %v2666 = vld [vmem:[%s6 + $0xa0] sm:$0xf]
      %v2667 = vld [vmem:[%s6 + $0xa4] sm:$0xf]
      %v2668 = vld [vmem:[%s6 + $0xa8] sm:$0xf]
      %v2669 = vld [vmem:[%s6 + $0xac] sm:$0xf]
      %v2670 = vld [vmem:[%s6 + $0xb0] sm:$0xf]
      %v2671 = vld [vmem:[%s6 + $0xb4] sm:$0xf]
      %v2672 = vld [vmem:[%s6 + $0xb8] sm:$0xf]
      %v2673 = vld [vmem:[%s6 + $0xbc] sm:$0xf]
      %v2674 = vld [vmem:[%s6 + $0xc0] sm:$0xf]
      %v2675 = vld [vmem:[%s6 + $0xc4] sm:$0xf]
      %v2676 = vld [vmem:[%s6 + $0xc8] sm:$0xf]
      %v2677 = vld [vmem:[%s6 + $0xcc] sm:$0xf]
      %v2678 = vld [vmem:[%s6 + $0xd0] sm:$0xf]
      %v2679 = vld [vmem:[%s6 + $0xd4] sm:$0xf]
      %v2680 = vld [vmem:[%s6 + $0xd8] sm:$0xf]
      %v2681 = vld [vmem:[%s6 + $0xdc] sm:$0xf]
      %v2682 = vld [vmem:[%s6 + $0xe0] sm:$0xf]
      %v2683 = vld [vmem:[%s6 + $0xe4] sm:$0xf]
      %v2684 = vld [vmem:[%s6 + $0xe8] sm:$0xf]
      %v2685 = vld [vmem:[%s6 + $0xec] sm:$0xf]
      %v2686 = vld [vmem:[%s6 + $0xf0] sm:$0xf]
      %v2687 = vld [vmem:[%s6 + $0xf4] sm:$0xf]
      %v2688 = vld [vmem:[%s6 + $0xf8] sm:$0xf]
      %v2689 = vld [vmem:[%s6 + $0xfc] sm:$0xf]
      %v2690 = vld [vmem:[%s7] sm:$0x1]
      %v2692 = vlaneseq
      %v2693 = vshrl.u32 %v2692, 7
      %v2694 = vsub.s32 0, %v2693
      %v2695 = vrot.slane %v2690, %v2694
      %v2761 = vunpack.c.l.b16 %v2626
      %v2762 = vunpack.c.l.b16 %v2627
      %v2763 = vunpack.c.l.b16 %v2628
      %v2764 = vunpack.c.l.b16 %v2629
      %v2765 = vunpack.c.l.b16 %v2630
      %v2766 = vunpack.c.l.b16 %v2631
      %v2767 = vunpack.c.l.b16 %v2632
      %v2768 = vunpack.c.l.b16 %v2633
      %v2769 = vunpack.c.l.b16 %v2634
      %v2770 = vunpack.c.l.b16 %v2635
      %v2771 = vunpack.c.l.b16 %v2636
      %v2772 = vunpack.c.l.b16 %v2637
      %v2773 = vunpack.c.l.b16 %v2638
      %v2774 = vunpack.c.l.b16 %v2639
      %v2775 = vunpack.c.l.b16 %v2640
      %v2776 = vunpack.c.l.b16 %v2641
      %v2777 = vunpack.c.l.b16 %v2642
      %v2778 = vunpack.c.l.b16 %v2643
      %v2779 = vunpack.c.l.b16 %v2644
      %v2780 = vunpack.c.l.b16 %v2645
      %v2781 = vunpack.c.l.b16 %v2646
      %v2782 = vunpack.c.l.b16 %v2647
      %v2783 = vunpack.c.l.b16 %v2648
      %v2784 = vunpack.c.l.b16 %v2649
      %v2785 = vunpack.c.l.b16 %v2650
      %v2786 = vunpack.c.l.b16 %v2651
      %v2787 = vunpack.c.l.b16 %v2652
      %v2788 = vunpack.c.l.b16 %v2653
      %v2789 = vunpack.c.l.b16 %v2654
      %v2790 = vunpack.c.l.b16 %v2655
      %v2791 = vunpack.c.l.b16 %v2656
      %v2792 = vunpack.c.l.b16 %v2657
      %v2793 = vunpack.c.l.b16 %v2658
      %v2794 = vunpack.c.l.b16 %v2659
      %v2795 = vunpack.c.l.b16 %v2660
      %v2796 = vunpack.c.l.b16 %v2661
      %v2797 = vunpack.c.l.b16 %v2662
      %v2798 = vunpack.c.l.b16 %v2663
      %v2799 = vunpack.c.l.b16 %v2664
      %v2800 = vunpack.c.l.b16 %v2665
      %v2801 = vunpack.c.l.b16 %v2666
      %v2802 = vunpack.c.l.b16 %v2667
      %v2803 = vunpack.c.l.b16 %v2668
      %v2804 = vunpack.c.l.b16 %v2669
      %v2805 = vunpack.c.l.b16 %v2670
      %v2806 = vunpack.c.l.b16 %v2671
      %v2807 = vunpack.c.l.b16 %v2672
      %v2808 = vunpack.c.l.b16 %v2673
      %v2809 = vunpack.c.l.b16 %v2674
      %v2810 = vunpack.c.l.b16 %v2675
      %v2811 = vunpack.c.l.b16 %v2676
      %v2812 = vunpack.c.l.b16 %v2677
      %v2813 = vunpack.c.l.b16 %v2678
      %v2814 = vunpack.c.l.b16 %v2679
      %v2815 = vunpack.c.l.b16 %v2680
      %v2816 = vunpack.c.l.b16 %v2681
      %v2817 = vunpack.c.l.b16 %v2682
      %v2818 = vunpack.c.l.b16 %v2683
      %v2819 = vunpack.c.l.b16 %v2684
      %v2820 = vunpack.c.l.b16 %v2685
      %v2821 = vunpack.c.l.b16 %v2686
      %v2822 = vunpack.c.l.b16 %v2687
      %v2823 = vunpack.c.l.b16 %v2688
      %v2824 = vunpack.c.l.b16 %v2689
      %v2825 = vpack.c.b16 %v2762, %v2761
      %v2826 = vpack.c.b16 %v2764, %v2763
      %v2827 = vpack.c.b16 %v2766, %v2765
      %v2828 = vpack.c.b16 %v2768, %v2767
      %v2829 = vpack.c.b16 %v2770, %v2769
      %v2830 = vpack.c.b16 %v2772, %v2771
      %v2831 = vpack.c.b16 %v2774, %v2773
      %v2832 = vpack.c.b16 %v2776, %v2775
      %v2833 = vpack.c.b16 %v2778, %v2777
      %v2834 = vpack.c.b16 %v2780, %v2779
      %v2835 = vpack.c.b16 %v2782, %v2781
      %v2836 = vpack.c.b16 %v2784, %v2783
      %v2837 = vpack.c.b16 %v2786, %v2785
      %v2838 = vpack.c.b16 %v2788, %v2787
      %v2839 = vpack.c.b16 %v2790, %v2789
      %v2840 = vpack.c.b16 %v2792, %v2791
      %v2841 = vpack.c.b16 %v2794, %v2793
      %v2842 = vpack.c.b16 %v2796, %v2795
      %v2843 = vpack.c.b16 %v2798, %v2797
      %v2844 = vpack.c.b16 %v2800, %v2799
      %v2845 = vpack.c.b16 %v2802, %v2801
      %v2846 = vpack.c.b16 %v2804, %v2803
      %v2847 = vpack.c.b16 %v2806, %v2805
      %v2848 = vpack.c.b16 %v2808, %v2807
      %v2849 = vpack.c.b16 %v2810, %v2809
      %v2850 = vpack.c.b16 %v2812, %v2811
      %v2851 = vpack.c.b16 %v2814, %v2813
      %v2852 = vpack.c.b16 %v2816, %v2815
      %v2853 = vpack.c.b16 %v2818, %v2817
      %v2854 = vpack.c.b16 %v2820, %v2819
      %v2855 = vpack.c.b16 %v2822, %v2821
      %v2856 = vpack.c.b16 %v2824, %v2823
      %2889 = vmatprep.subr.bf16.mxu0 0
      %2890 = vmatpush1.bf16.msra.mxu0 %v2825
      %2891 = vmatprep.subr.bf16.mxu0 0
      %2892 = vmatpush1.bf16.msra.mxu0 %v2826
      %2893 = vmatprep.subr.bf16.mxu0 0
      %2894 = vmatpush1.bf16.msra.mxu0 %v2827
      %2895 = vmatprep.subr.bf16.mxu0 0
      %2896 = vmatpush1.bf16.msra.mxu0 %v2828
      %2897 = vmatprep.subr.bf16.mxu0 0
      %2898 = vmatpush1.bf16.msra.mxu0 %v2829
      %2899 = vmatprep.subr.bf16.mxu0 0
      %2900 = vmatpush1.bf16.msra.mxu0 %v2830
      %2901 = vmatprep.subr.bf16.mxu0 0
      %2902 = vmatpush1.bf16.msra.mxu0 %v2831
      %2903 = vmatprep.subr.bf16.mxu0 0
      %2904 = vmatpush1.bf16.msra.mxu0 %v2832
      %2905 = vmatprep.subr.bf16.mxu0 0
      %2906 = vmatpush1.bf16.msra.mxu0 %v2833
      %2907 = vmatprep.subr.bf16.mxu0 0
      %2908 = vmatpush1.bf16.msra.mxu0 %v2834
      %2909 = vmatprep.subr.bf16.mxu0 0
      %2910 = vmatpush1.bf16.msra.mxu0 %v2835
      %2911 = vmatprep.subr.bf16.mxu0 0
      %2912 = vmatpush1.bf16.msra.mxu0 %v2836
      %2913 = vmatprep.subr.bf16.mxu0 0
      %2914 = vmatpush1.bf16.msra.mxu0 %v2837
      %2915 = vmatprep.subr.bf16.mxu0 0
      %2916 = vmatpush1.bf16.msra.mxu0 %v2838
      %2917 = vmatprep.subr.bf16.mxu0 0
      %2918 = vmatpush1.bf16.msra.mxu0 %v2839
      %2919 = vmatprep.subr.bf16.mxu0 0
      %2920 = vmatpush1.bf16.msra.mxu0 %v2840
      %2921 = vmatprep.mubr.bf16.mxu0 %v2563
      %2922 = vmatmul.mubr.bf16.gmra.mrb[0].mxu0 %v2562
      %v2923 = vpop.f32.mrb[0].mxu0
      %v2924 = vadd.f32 %v2695, %v2923
      %v2925 = vpop.f32.mrb[0].mxu0
      %v2926 = vpop.f32.mrb[0].mxu0
      %v2927 = vadd.f32 %v2695, %v2926
      %v2928 = vpop.f32.mrb[0].mxu0
      %2929 = vmatprep.mubr.bf16.mxu0 %v2567
      %2930 = vmatmul.mubr.bf16.gmra.mrb[0].mxu0 %v2566
      %v2931 = vpop.f32.mrb[0].mxu0
      %v2932 = vadd.f32 %v2695, %v2931
      %v2933 = vpop.f32.mrb[0].mxu0
      %v2934 = vpop.f32.mrb[0].mxu0
      %v2935 = vadd.f32 %v2695, %v2934
      %v2936 = vpop.f32.mrb[0].mxu0
      %2937 = vmatprep.mubr.bf16.mxu0 %v2571
      %2938 = vmatmul.mubr.bf16.gmra.mrb[0].mxu0 %v2570
      %v2939 = vpop.f32.mrb[0].mxu0
      %v2940 = vadd.f32 %v2695, %v2939
      %v2941 = vpop.f32.mrb[0].mxu0
      %v2942 = vpop.f32.mrb[0].mxu0
      %v2943 = vadd.f32 %v2695, %v2942
      %v2944 = vpop.f32.mrb[0].mxu0
      %2945 = vmatprep.mubr.bf16.mxu0 %v2575
      %2946 = vmatmul.mubr.bf16.gmra.mrb[0].mxu0 %v2574
      %v2947 = vpop.f32.mrb[0].mxu0
      %v2948 = vadd.f32 %v2695, %v2947
      %v2949 = vpop.f32.mrb[0].mxu0
      %v2950 = vpop.f32.mrb[0].mxu0
      %v2951 = vadd.f32 %v2695, %v2950
      %v2952 = vpop.f32.mrb[0].mxu0
      %2953 = vmatprep.mubr.bf16.mxu0 %v2579
      %2954 = vmatmul.mubr.bf16.gmra.mrb[0].mxu0 %v2578
      %v2955 = vpop.f32.mrb[0].mxu0
      %v2956 = vadd.f32 %v2695, %v2955
      %v2957 = vpop.f32.mrb[0].mxu0
      %v2958 = vpop.f32.mrb[0].mxu0
      %v2959 = vadd.f32 %v2695, %v2958
      %v2960 = vpop.f32.mrb[0].mxu0
      %2961 = vmatprep.mubr.bf16.mxu0 %v2583
      %2962 = vmatmul.mubr.bf16.gmra.mrb[0].mxu0 %v2582
      %v2963 = vpop.f32.mrb[0].mxu0
      %v2964 = vadd.f32 %v2695, %v2963
      %v2965 = vpop.f32.mrb[0].mxu0
      %v2966 = vpop.f32.mrb[0].mxu0
      %v2967 = vadd.f32 %v2695, %v2966
      %v2968 = vpop.f32.mrb[0].mxu0
      %2969 = vmatprep.mubr.bf16.mxu0 %v2587
      %2970 = vmatmul.mubr.bf16.gmra.mrb[0].mxu0 %v2586
      %v2971 = vpop.f32.mrb[0].mxu0
      %v2972 = vadd.f32 %v2695, %v2971
      %v2973 = vpop.f32.mrb[0].mxu0
      %v2974 = vpop.f32.mrb[0].mxu0
      %v2975 = vadd.f32 %v2695, %v2974
      %v2976 = vpop.f32.mrb[0].mxu0
      %2977 = vmatprep.mubr.bf16.mxu0 %v2591
      %2978 = vmatmul.mubr.bf16.gmra.mrb[0].mxu0 %v2590
      %v2979 = vpop.f32.mrb[0].mxu0
      %v2980 = vadd.f32 %v2695, %v2979
      %v2981 = vpop.f32.mrb[0].mxu0
      %v2982 = vpop.f32.mrb[0].mxu0
      %v2983 = vadd.f32 %v2695, %v2982
      %v2984 = vpop.f32.mrb[0].mxu0
      %2985 = vmatprep.mubr.bf16.mxu0 %v2595
      %2986 = vmatmul.mubr.bf16.gmra.mrb[0].mxu0 %v2594
      %v2987 = vpop.f32.mrb[0].mxu0
      %v2988 = vadd.f32 %v2695, %v2987
      %v2989 = vpop.f32.mrb[0].mxu0
      %v2990 = vpop.f32.mrb[0].mxu0
      %v2991 = vadd.f32 %v2695, %v2990
      %v2992 = vpop.f32.mrb[0].mxu0
      %2993 = vmatprep.mubr.bf16.mxu0 %v2599
      %2994 = vmatmul.mubr.bf16.gmra.mrb[0].mxu0 %v2598
      %v2995 = vpop.f32.mrb[0].mxu0
      %v2996 = vadd.f32 %v2695, %v2995
      %v2997 = vpop.f32.mrb[0].mxu0
      %v2998 = vpop.f32.mrb[0].mxu0
      %v2999 = vadd.f32 %v2695, %v2998
      %v3000 = vpop.f32.mrb[0].mxu0
      %3001 = vmatprep.mubr.bf16.mxu0 %v2603
      %3002 = vmatmul.mubr.bf16.gmra.mrb[0].mxu0 %v2602
      %v3003 = vpop.f32.mrb[0].mxu0
      %v3004 = vadd.f32 %v2695, %v3003
      %v3005 = vpop.f32.mrb[0].mxu0
      %v3006 = vpop.f32.mrb[0].mxu0
      %v3007 = vadd.f32 %v2695, %v3006
      %v3008 = vpop.f32.mrb[0].mxu0
      %3009 = vmatprep.mubr.bf16.mxu0 %v2607
      %3010 = vmatmul.mubr.bf16.gmra.mrb[0].mxu0 %v2606
      %v3011 = vpop.f32.mrb[0].mxu0
      %v3012 = vadd.f32 %v2695, %v3011
      %v3013 = vpop.f32.mrb[0].mxu0
      %v3014 = vpop.f32.mrb[0].mxu0
      %v3015 = vadd.f32 %v2695, %v3014
      %v3016 = vpop.f32.mrb[0].mxu0
      %3017 = vmatprep.mubr.bf16.mxu0 %v2611
      %3018 = vmatmul.mubr.bf16.gmra.mrb[0].mxu0 %v2610
      %v3019 = vpop.f32.mrb[0].mxu0
      %v3020 = vadd.f32 %v2695, %v3019
      %v3021 = vpop.f32.mrb[0].mxu0
      %v3022 = vpop.f32.mrb[0].mxu0
      %v3023 = vadd.f32 %v2695, %v3022
      %v3024 = vpop.f32.mrb[0].mxu0
      %3025 = vmatprep.mubr.bf16.mxu0 %v2615
      %3026 = vmatmul.mubr.bf16.gmra.mrb[0].mxu0 %v2614
      %v3027 = vpop.f32.mrb[0].mxu0
      %v3028 = vadd.f32 %v2695, %v3027
      %v3029 = vpop.f32.mrb[0].mxu0
      %v3030 = vpop.f32.mrb[0].mxu0
      %v3031 = vadd.f32 %v2695, %v3030
      %v3032 = vpop.f32.mrb[0].mxu0
      %3033 = vmatprep.mubr.bf16.mxu0 %v2619
      %3034 = vmatmul.mubr.bf16.gmra.mrb[0].mxu0 %v2618
      %v3035 = vpop.f32.mrb[0].mxu0
      %v3036 = vadd.f32 %v2695, %v3035
      %v3037 = vpop.f32.mrb[0].mxu0
      %v3038 = vpop.f32.mrb[0].mxu0
      %v3039 = vadd.f32 %v2695, %v3038
      %v3040 = vpop.f32.mrb[0].mxu0
      %3041 = vmatprep.mubr.bf16.mxu0 %v2623
      %3042 = vmatmul.mubr.bf16.gmra.mrb[0].mxu0 %v2622
      %v3043 = vpop.f32.mrb[0].mxu0
      %v3044 = vadd.f32 %v2695, %v3043
      %v3045 = vpop.f32.mrb[0].mxu0
      %v3046 = vpop.f32.mrb[0].mxu0
      %v3047 = vadd.f32 %v2695, %v3046
      %v3048 = vpop.f32.mrb[0].mxu0
      %3049 = vdwg.mxu0
      %3050 = vmatprep.subr.bf16.mxu0 0
      %3051 = vmatpush1.bf16.msra.mxu0 %v2841
      %3052 = vmatprep.subr.bf16.mxu0 0
      %3053 = vmatpush1.bf16.msra.mxu0 %v2842
      %3054 = vmatprep.subr.bf16.mxu0 0
      %3055 = vmatpush1.bf16.msra.mxu0 %v2843
      %3056 = vmatprep.subr.bf16.mxu0 0
      %3057 = vmatpush1.bf16.msra.mxu0 %v2844
      %3058 = vmatprep.subr.bf16.mxu0 0
      %3059 = vmatpush1.bf16.msra.mxu0 %v2845
      %3060 = vmatprep.subr.bf16.mxu0 0
      %3061 = vmatpush1.bf16.msra.mxu0 %v2846
      %3062 = vmatprep.subr.bf16.mxu0 0
      %3063 = vmatpush1.bf16.msra.mxu0 %v2847
      %3064 = vmatprep.subr.bf16.mxu0 0
      %3065 = vmatpush1.bf16.msra.mxu0 %v2848
      %3066 = vmatprep.subr.bf16.mxu0 0
      %3067 = vmatpush1.bf16.msra.mxu0 %v2849
      %3068 = vmatprep.subr.bf16.mxu0 0
      %3069 = vmatpush1.bf16.msra.mxu0 %v2850
      %3070 = vmatprep.subr.bf16.mxu0 0
      %3071 = vmatpush1.bf16.msra.mxu0 %v2851
      %3072 = vmatprep.subr.bf16.mxu0 0
      %3073 = vmatpush1.bf16.msra.mxu0 %v2852
      %3074 = vmatprep.subr.bf16.mxu0 0
      %3075 = vmatpush1.bf16.msra.mxu0 %v2853
      %3076 = vmatprep.subr.bf16.mxu0 0
      %3077 = vmatpush1.bf16.msra.mxu0 %v2854
      %3078 = vmatprep.subr.bf16.mxu0 0
      %3079 = vmatpush1.bf16.msra.mxu0 %v2855
      %3080 = vmatprep.subr.bf16.mxu0 0
      %3081 = vmatpush1.bf16.msra.mxu0 %v2856
      %3082 = vmatprep.mubr.bf16.mxu0 %v2565
      %3083 = vmatmul.mubr.bf16.gmra.mrb[0].mxu0 %v2564
      %v3084 = vpop.f32.mrb[0].mxu0
      %v3085 = vadd.f32 %v2924, %v3084
      %v3086 = vpop.f32.mrb[0].mxu0
      %v3087 = vpop.f32.mrb[0].mxu0
      %v3088 = vadd.f32 %v2927, %v3087
      %v3089 = vpop.f32.mrb[0].mxu0
      %3090 = vmatprep.mubr.bf16.mxu0 %v2569
      %3091 = vmatmul.mubr.bf16.gmra.mrb[0].mxu0 %v2568
      %v3092 = vpop.f32.mrb[0].mxu0
      %v3093 = vadd.f32 %v2932, %v3092
      %v3094 = vpop.f32.mrb[0].mxu0
      %v3095 = vpop.f32.mrb[0].mxu0
      %v3096 = vadd.f32 %v2935, %v3095
      %v3097 = vpop.f32.mrb[0].mxu0
      %3098 = vmatprep.mubr.bf16.mxu0 %v2573
      %3099 = vmatmul.mubr.bf16.gmra.mrb[0].mxu0 %v2572
      %v3100 = vpop.f32.mrb[0].mxu0
      %v3101 = vadd.f32 %v2940, %v3100
      %v3102 = vpop.f32.mrb[0].mxu0
      %v3103 = vpop.f32.mrb[0].mxu0
      %v3104 = vadd.f32 %v2943, %v3103
      %v3105 = vpop.f32.mrb[0].mxu0
      %3106 = vmatprep.mubr.bf16.mxu0 %v2577
      %3107 = vmatmul.mubr.bf16.gmra.mrb[0].mxu0 %v2576
      %v3108 = vpop.f32.mrb[0].mxu0
      %v3109 = vadd.f32 %v2948, %v3108
      %v3110 = vpop.f32.mrb[0].mxu0
      %v3111 = vpop.f32.mrb[0].mxu0
      %v3112 = vadd.f32 %v2951, %v3111
      %v3113 = vpop.f32.mrb[0].mxu0
      %3114 = vmatprep.mubr.bf16.mxu0 %v2581
      %3115 = vmatmul.mubr.bf16.gmra.mrb[0].mxu0 %v2580
      %v3116 = vpop.f32.mrb[0].mxu0
      %v3117 = vadd.f32 %v2956, %v3116
      %v3118 = vpop.f32.mrb[0].mxu0
      %v3119 = vpop.f32.mrb[0].mxu0
      %v3120 = vadd.f32 %v2959, %v3119
      %v3121 = vpop.f32.mrb[0].mxu0
      %3122 = vmatprep.mubr.bf16.mxu0 %v2585
      %3123 = vmatmul.mubr.bf16.gmra.mrb[0].mxu0 %v2584
      %v3124 = vpop.f32.mrb[0].mxu0
      %v3125 = vadd.f32 %v2964, %v3124
      %v3126 = vpop.f32.mrb[0].mxu0
      %v3127 = vpop.f32.mrb[0].mxu0
      %v3128 = vadd.f32 %v2967, %v3127
      %v3129 = vpop.f32.mrb[0].mxu0
      %3130 = vmatprep.mubr.bf16.mxu0 %v2589
      %3131 = vmatmul.mubr.bf16.gmra.mrb[0].mxu0 %v2588
      %v3132 = vpop.f32.mrb[0].mxu0
      %v3133 = vadd.f32 %v2972, %v3132
      %v3134 = vpop.f32.mrb[0].mxu0
      %v3135 = vpop.f32.mrb[0].mxu0
      %v3136 = vadd.f32 %v2975, %v3135
      %v3137 = vpop.f32.mrb[0].mxu0
      %3138 = vmatprep.mubr.bf16.mxu0 %v2593
      %3139 = vmatmul.mubr.bf16.gmra.mrb[0].mxu0 %v2592
      %v3140 = vpop.f32.mrb[0].mxu0
      %v3141 = vadd.f32 %v2980, %v3140
      %v3142 = vpop.f32.mrb[0].mxu0
      %v3143 = vpop.f32.mrb[0].mxu0
      %v3144 = vadd.f32 %v2983, %v3143
      %v3145 = vpop.f32.mrb[0].mxu0
      %3146 = vmatprep.mubr.bf16.mxu0 %v2597
      %3147 = vmatmul.mubr.bf16.gmra.mrb[0].mxu0 %v2596
      %v3148 = vpop.f32.mrb[0].mxu0
      %v3149 = vadd.f32 %v2988, %v3148
      %v3150 = vpop.f32.mrb[0].mxu0
      %v3151 = vpop.f32.mrb[0].mxu0
      %v3152 = vadd.f32 %v2991, %v3151
      %v3153 = vpop.f32.mrb[0].mxu0
      %3154 = vmatprep.mubr.bf16.mxu0 %v2601
      %3155 = vmatmul.mubr.bf16.gmra.mrb[0].mxu0 %v2600
      %v3156 = vpop.f32.mrb[0].mxu0
      %v3157 = vadd.f32 %v2996, %v3156
      %v3158 = vpop.f32.mrb[0].mxu0
      %v3159 = vpop.f32.mrb[0].mxu0
      %v3160 = vadd.f32 %v2999, %v3159
      %v3161 = vpop.f32.mrb[0].mxu0
      %3162 = vmatprep.mubr.bf16.mxu0 %v2605
      %3163 = vmatmul.mubr.bf16.gmra.mrb[0].mxu0 %v2604
      %v3164 = vpop.f32.mrb[0].mxu0
      %v3165 = vadd.f32 %v3004, %v3164
      %v3166 = vpop.f32.mrb[0].mxu0
      %v3167 = vpop.f32.mrb[0].mxu0
      %v3168 = vadd.f32 %v3007, %v3167
      %v3169 = vpop.f32.mrb[0].mxu0
      %3170 = vmatprep.mubr.bf16.mxu0 %v2609
      %3171 = vmatmul.mubr.bf16.gmra.mrb[0].mxu0 %v2608
      %v3172 = vpop.f32.mrb[0].mxu0
      %v3173 = vadd.f32 %v3012, %v3172
      %v3174 = vpop.f32.mrb[0].mxu0
      %v3175 = vpop.f32.mrb[0].mxu0
      %v3176 = vadd.f32 %v3015, %v3175
      %v3177 = vpop.f32.mrb[0].mxu0
      %3178 = vmatprep.mubr.bf16.mxu0 %v2613
      %3179 = vmatmul.mubr.bf16.gmra.mrb[0].mxu0 %v2612
      %v3180 = vpop.f32.mrb[0].mxu0
      %v3181 = vadd.f32 %v3020, %v3180
      %v3182 = vpop.f32.mrb[0].mxu0
      %v3183 = vpop.f32.mrb[0].mxu0
      %v3184 = vadd.f32 %v3023, %v3183
      %v3185 = vpop.f32.mrb[0].mxu0
      %3186 = vmatprep.mubr.bf16.mxu0 %v2617
      %3187 = vmatmul.mubr.bf16.gmra.mrb[0].mxu0 %v2616
      %v3188 = vpop.f32.mrb[0].mxu0
      %v3189 = vadd.f32 %v3028, %v3188
      %v3190 = vpop.f32.mrb[0].mxu0
      %v3191 = vpop.f32.mrb[0].mxu0
      %v3192 = vadd.f32 %v3031, %v3191
      %v3193 = vpop.f32.mrb[0].mxu0
      %3194 = vmatprep.mubr.bf16.mxu0 %v2621
      %3195 = vmatmul.mubr.bf16.gmra.mrb[0].mxu0 %v2620
      %v3196 = vpop.f32.mrb[0].mxu0
      %v3197 = vadd.f32 %v3036, %v3196
      %v3198 = vpop.f32.mrb[0].mxu0
      %v3199 = vpop.f32.mrb[0].mxu0
      %v3200 = vadd.f32 %v3039, %v3199
      %v3201 = vpop.f32.mrb[0].mxu0
      %3202 = vmatprep.mubr.bf16.mxu0 %v2625
      %3203 = vmatmul.mubr.bf16.gmra.mrb[0].mxu0 %v2624
      %v3204 = vpop.f32.mrb[0].mxu0
      %v3205 = vadd.f32 %v3044, %v3204
      %v3206 = vpop.f32.mrb[0].mxu0
      %v3207 = vpop.f32.mrb[0].mxu0
      %v3208 = vadd.f32 %v3047, %v3207
      %v3209 = vpop.f32.mrb[0].mxu0
      %3210 = vdwg.mxu0
      %v3211 = vadd.f32 %v396, %v3085
      %v3212 = vadd.f32 %v397, %v3088
      %v3213 = vadd.f32 %v398, %v3093
      %v3214 = vadd.f32 %v399, %v3096
      %v3215 = vadd.f32 %v400, %v3101
      %v3216 = vadd.f32 %v401, %v3104
      %v3217 = vadd.f32 %v402, %v3109
      %v3218 = vadd.f32 %v403, %v3112
      %v3219 = vadd.f32 %v404, %v3117
      %v3220 = vadd.f32 %v405, %v3120
      %v3221 = vadd.f32 %v406, %v3125
      %v3222 = vadd.f32 %v407, %v3128
      %v3223 = vadd.f32 %v408, %v3133
      %v3224 = vadd.f32 %v409, %v3136
      %v3225 = vadd.f32 %v410, %v3141
      %v3226 = vadd.f32 %v411, %v3144
      %v3227 = vadd.f32 %v412, %v3149
      %v3228 = vadd.f32 %v413, %v3152
      %v3229 = vadd.f32 %v414, %v3157
      %v3230 = vadd.f32 %v415, %v3160
      %v3231 = vadd.f32 %v416, %v3165
      %v3232 = vadd.f32 %v417, %v3168
      %v3233 = vadd.f32 %v418, %v3173
      %v3234 = vadd.f32 %v419, %v3176
      %v3235 = vadd.f32 %v420, %v3181
      %v3236 = vadd.f32 %v421, %v3184
      %v3237 = vadd.f32 %v422, %v3189
      %v3238 = vadd.f32 %v423, %v3192
      %v3239 = vadd.f32 %v424, %v3197
      %v3240 = vadd.f32 %v425, %v3200
      %v3241 = vadd.f32 %v426, %v3205
      %v3242 = vadd.f32 %v427, %v3208
      %3243 = vst [vmem:[%s329] sm:$0xff] %v3211
      %3244 = vst [vmem:[%s329 + $0x8] sm:$0xff] %v3212
      %3245 = vst [vmem:[%s329 + $0x10] sm:$0xff] %v3213
      %3246 = vst [vmem:[%s329 + $0x18] sm:$0xff] %v3214
      %3247 = vst [vmem:[%s329 + $0x20] sm:$0xff] %v3215
      %3248 = vst [vmem:[%s329 + $0x28] sm:$0xff] %v3216
      %3249 = vst [vmem:[%s329 + $0x30] sm:$0xff] %v3217
      %3250 = vst [vmem:[%s329 + $0x38] sm:$0xff] %v3218
      %3251 = vst [vmem:[%s329 + $0x40] sm:$0xff] %v3219
      %3252 = vst [vmem:[%s329 + $0x48] sm:$0xff] %v3220
      %3253 = vst [vmem:[%s329 + $0x50] sm:$0xff] %v3221
      %3254 = vst [vmem:[%s329 + $0x58] sm:$0xff] %v3222
      %3255 = vst [vmem:[%s329 + $0x60] sm:$0xff] %v3223
      %3256 = vst [vmem:[%s329 + $0x68] sm:$0xff] %v3224
      %3257 = vst [vmem:[%s329 + $0x70] sm:$0xff] %v3225
      %3258 = vst [vmem:[%s329 + $0x78] sm:$0xff] %v3226
      %3259 = vst [vmem:[%s329 + $0x80] sm:$0xff] %v3227
      %3260 = vst [vmem:[%s329 + $0x88] sm:$0xff] %v3228
      %3261 = vst [vmem:[%s329 + $0x90] sm:$0xff] %v3229
      %3262 = vst [vmem:[%s329 + $0x98] sm:$0xff] %v3230
      %3263 = vst [vmem:[%s329 + $0xa0] sm:$0xff] %v3231
      %3264 = vst [vmem:[%s329 + $0xa8] sm:$0xff] %v3232
      %3265 = vst [vmem:[%s329 + $0xb0] sm:$0xff] %v3233
      %3266 = vst [vmem:[%s329 + $0xb8] sm:$0xff] %v3234
      %3267 = vst [vmem:[%s329 + $0xc0] sm:$0xff] %v3235
      %3268 = vst [vmem:[%s329 + $0xc8] sm:$0xff] %v3236
      %3269 = vst [vmem:[%s329 + $0xd0] sm:$0xff] %v3237
      %3270 = vst [vmem:[%s329 + $0xd8] sm:$0xff] %v3238
      %3271 = vst [vmem:[%s329 + $0xe0] sm:$0xff] %v3239
      %3272 = vst [vmem:[%s329 + $0xe8] sm:$0xff] %v3240
      %3273 = vst [vmem:[%s329 + $0xf0] sm:$0xff] %v3241
      %3274 = vst [vmem:[%s329 + $0xf8] sm:$0xff] %v3242
      %s3275 = smul.u32 32, %s19
      %p3276 = scmp.lt.s32.totalorder %s3275, 127
      %s3277 = scalar_select %p3276, %s3275, 127
      %s3278 = smul.addr %s3277, 8
      %s3279 = scalar_lea.vmem %s8, %s3278
      // Predicated region
      $region53: #{transformer_forward.8} parent=51 // pred_check
        %p3280 = pneg %p215
      $region54: #{transformer_forward.8} parent=51 // pred_check_branch
        %3282 = sbr.rel (%p3280) target = $region56
      $region55: #{transformer_forward.8} parent=51 // pred_region
        %s3283 = smul.u32 32, %s19
      $region56: #{transformer_forward.8} parent=51 // pred_fallthru
        _
    $region52: #{transformer_forward.8} parent=5 // pred_fallthru
      _
    %p3284 = scmp.le.s32.totalorder 2, %s14
    // Predicated region
    $region57: #{transformer_forward.8} parent=5 // pred_check
      %p3285 = pneg %p3284
    $region58: #{transformer_forward.8} parent=5 // pred_check_branch
      %3287 = sbr.rel (%p3285) target = $region60
    $region59: #{transformer_forward.8} parent=5 // pred_region
      %s3288 = ssub.s32 %s14, 2
      // Predicated region
      $region61: #{transformer_forward.8} parent=59 // pred_check
        %p3289 = pneg %p221
      $region62: #{transformer_forward.8} parent=59 // pred_check_branch
        %3291 = sbr.rel (%p3289) target = $region64
      $region63: #{transformer_forward.8} parent=59 // pred_region
        %s3292 = smul.u32 32, %s20
        %p3293 = scmp.lt.s32.totalorder %s3292, 127
        %s3294 = scalar_select %p3293, %s3292, 127
        %s3295 = smul.addr %s3294, 8
        %s3296 = scalar_lea.vmem %s8, %s3295
      $region64: #{transformer_forward.8} parent=59 // pred_fallthru
        _
    $region60: #{transformer_forward.8} parent=5 // pred_fallthru
      _
  $region6: #{transformer_forward.8} parent=0 // loop_footer
    %s18 = sadd.s32 1, %s14
  $region7: #{transformer_forward.8} parent=0 // loop_footer_branch
    %13 = sbr.rel target = $region3
  $region8: #{transformer_forward.8} parent=0 // loop_exit
    _

</llo_original>
